<compile_context>
chip_gen: v7x
topology: tpu7x:2x2x1
jax: 0.10.0
libtpu: 0.0.40
codegen_flags: <defaults>
</compile_context>

<pallas_src>
import jax
import jax.numpy as jnp
from jax.experimental import pallas as pl
from jax.experimental.pallas import tpu as pltpu

NEG_SLOPE = 0.1   # LeakyReLU(0.1)
BN_EPS = 1e-5
OUT_PAD = 128     # lane-dense padded logits width


# ----------------------------------------------------------------------------
# In-kernel layer helper (one conv layer on one sample's activations)
# ----------------------------------------------------------------------------

def _conv3x3_lrelu_bn(x, H, W, Cin, Cout, w_off, li, w_ref, p_ref, pad_ref):
    """Conv2d(3x3,'same') + bias -> LeakyReLU(0.1) -> BatchNorm2d (eval, folded).

    x       : (H, W, Cin) f32 value
    w_ref   : (K_tot, C_max) bf16 ref -- all conv weights packed; this layer's
              (9*Cin, Cout) block starts at static row offset `w_off`
    p_ref   : (n_layers, 3, C_max) f32 ref -- rows = [bias, bn_scale, bn_shift]
    pad_ref : (H+2, W+2, Cin) f32 VMEM scratch used for in-kernel 'same' padding
    """
    # --- 'same' padding: zero ONLY the 1-wide halo strips (interior is fully
    #     overwritten below) -- no full-buffer zero pass per layer. ---
    zrow = jnp.zeros((1, W + 2, Cin), jnp.float32)
    pad_ref[0:1, :, :] = zrow
    pad_ref[H + 1:H + 2, :, :] = zrow
    zcol = jnp.zeros((H, 1, Cin), jnp.float32)
    pad_ref[1:H + 1, 0:1, :] = zcol
    pad_ref[1:H + 1, W + 1:W + 2, :] = zcol
    pad_ref[1:H + 1, 1:W + 1, :] = x

    # --- im2col: concatenate the 9 shifted windows along channels and do a
    #     single MXU dot with contraction dim K = 9*Cin. ---
    taps = []
    for t in range(9):
        dy, dx = t // 3, t % 3
        taps.append(pad_ref[dy:dy + H, dx:dx + W, :])
    col = jnp.concatenate(taps, axis=-1).reshape(H * W, 9 * Cin)

    w = w_ref[w_off:w_off + 9 * Cin, 0:Cout]                  # (9*Cin, Cout) bf16
    acc = jnp.dot(col.astype(jnp.bfloat16), w,
                  preferred_element_type=jnp.float32)         # (H*W, Cout) f32

    p = p_ref[li]                                             # (3, C_max) f32
    y = acc + p[0:1, 0:Cout]                                  # conv bias
    y = jnp.where(y > 0.0, y, NEG_SLOPE * y)                  # LeakyReLU(0.1)
    y = y * p[1:2, 0:Cout] + p[2:3, 0:Cout]                   # BatchNorm (eval)
    return y.reshape(H, W, Cout)


def _make_kernel(layer_meta):
    """layer_meta: tuple of (H, W, Cin, Cout, w_off) for the 8 conv layers."""

    def kernel(x_ref, w_ref, p_ref, fc1w_ref, fc1p_ref, fc2w_ref, fc2b_ref,
               o_ref, *pad_refs):
        x = x_ref[0]                                          # (H0, W0, Cin0) f32
        for li, (H, W, Cin, Cout, w_off) in enumerate(layer_meta):
            x = _conv3x3_lrelu_bn(x, H, W, Cin, Cout, w_off, li,
                                  w_ref, p_ref, pad_refs[li])
            if li % 2 == 1:                                   # end of block
                Hc, Wc, C = x.shape                           # MaxPool2d(2)
                x = jnp.max(x.reshape(Hc // 2, 2, Wc, C), axis=1)
                x = jnp.max(x.reshape(Hc // 2, Wc // 2, 2, C), axis=2)
                # Dropout: identity in eval mode

        # AdaptiveAvgPool2d(1) + Flatten
        C = x.shape[-1]
        feat = jnp.mean(x.reshape(-1, C), axis=0, keepdims=True)   # (1, C)

        # Linear(C, 512) -> LeakyReLU(0.1) -> BatchNorm1d (eval, folded)
        h = jnp.dot(feat.astype(jnp.bfloat16), fc1w_ref[...],
                    preferred_element_type=jnp.float32) + fc1p_ref[0:1, :]
        h = jnp.where(h > 0.0, h, NEG_SLOPE * h)
        h = h * fc1p_ref[1:2, :] + fc1p_ref[2:3, :]
        # Dropout(0.6): identity in eval mode

        # Linear(512, out) -- padded to 128 lanes for an unmasked store
        out = jnp.dot(h.astype(jnp.bfloat16), fc2w_ref[...],
                      preferred_element_type=jnp.float32) + fc2b_ref[...]
        o_ref[0] = out

    return kernel


# ----------------------------------------------------------------------------
# Wrapper: single pallas_call for the whole network
# ----------------------------------------------------------------------------

def fused_forward(x_nhwc, params):
    N, H0, W0, C0 = x_nhwc.shape
    layer_meta = params["layer_meta"]
    w_all, p_all = params["w_all"], params["p_all"]
    fc1_w, fc1_p = params["fc1_w"], params["fc1_p"]
    fc2_w, fc2_b = params["fc2_w"], params["fc2_b"]

    pad_shapes = [(h + 2, w + 2, cin) for (h, w, cin, _, _) in layer_meta]

    out = pl.pallas_call(
        _make_kernel(layer_meta),
        out_shape=jax.ShapeDtypeStruct((N, 1, OUT_PAD), jnp.float32),
        grid=(N,),
        in_specs=[
            pl.BlockSpec((1, H0, W0, C0), lambda n: (n, 0, 0, 0)),
            pl.BlockSpec(w_all.shape, lambda n: (0, 0)),
            pl.BlockSpec(p_all.shape, lambda n: (0, 0, 0)),
            pl.BlockSpec(fc1_w.shape, lambda n: (0, 0)),
            pl.BlockSpec(fc1_p.shape, lambda n: (0, 0)),
            pl.BlockSpec(fc2_w.shape, lambda n: (0, 0)),
            pl.BlockSpec(fc2_b.shape, lambda n: (0, 0)),
        ],
        out_specs=pl.BlockSpec((1, 1, OUT_PAD), lambda n: (n, 0, 0)),
        scratch_shapes=[pltpu.VMEM(s, jnp.float32) for s in pad_shapes],
        compiler_params=pltpu.CompilerParams(
            dimension_semantics=("parallel",)),
    )(x_nhwc, w_all, p_all, fc1_w, fc1_p, fc2_w, fc2_b)

    return out.reshape(N, OUT_PAD)[:, :params["out_dim"]]


def forward(x_nchw, params):
    # NCHW (PyTorch) -> NHWC (kernel layout), done once at the boundary.
    x = jnp.transpose(x_nchw, (0, 2, 3, 1)).astype(jnp.float32)
    return fused_forward(x, params)


# ----------------------------------------------------------------------------
# Deterministic parameter construction (shapes from DR_Classifierv2.__init__)
# ----------------------------------------------------------------------------

def _fold_bn(key, c):
    k1, k2, k3, k4 = jax.random.split(key, 4)
    gamma = 1.0 + 0.1 * jax.random.normal(k1, (c,), jnp.float32)
    beta = 0.1 * jax.random.normal(k2, (c,), jnp.float32)
    mean = 0.01 * jax.random.normal(k3, (c,), jnp.float32)
    var = 1.0 + 0.1 * jnp.abs(jax.random.normal(k4, (c,), jnp.float32))
    scale = gamma / jnp.sqrt(var + BN_EPS)
    shift = beta - mean * scale
    return scale, shift


def init_params(key, in_ch, hidden, out_dim, H0, W0):
    chans = [in_ch, hidden, hidden * 2, hidden * 4, hidden * 8]
    c_max = hidden * 8
    keys = jax.random.split(key, 16)
    ki = 0

    conv_w, conv_p, dims = [], [], []
    H, W = H0, W0
    for b in range(4):
        for (cin, cout) in ((chans[b], chans[b + 1]), (chans[b + 1], chans[b + 1])):
            kw, kb, kbn = jax.random.split(keys[ki], 3); ki += 1
            # HWIO conv weight (PyTorch OIHW would be transposed (2,3,1,0) here)
            w = jax.random.normal(kw, (3, 3, cin, cout), jnp.float32) / jnp.sqrt(9.0 * cin)
            bias = 0.01 * jax.random.normal(kb, (cout,), jnp.float32)
            scale, shift = _fold_bn(kbn, cout)
            conv_w.append(w.reshape(9 * cin, cout))                    # tap-major K
            conv_p.append(jnp.stack([bias, scale, shift], axis=0))     # (3, Cout)
            dims.append((H, W, cin, cout))
        H //= 2
        W //= 2

    # Pack all conv weights into ONE bf16 buffer (rows 16-aligned per layer) and
    # all bias/scale/shift triples into ONE f32 buffer.
    rows, offs, off = [], [], 0
    for w in conv_w:
        k, c = w.shape
        k_pad = ((k + 15) // 16) * 16
        rows.append(jnp.zeros((k_pad, c_max), jnp.float32).at[:k, :c].set(w))
        offs.append(off)
        off += k_pad
    w_all = jnp.concatenate(rows, axis=0).astype(jnp.bfloat16)          # (K_tot, c_max)

    p_all = jnp.stack(
        [jnp.zeros((3, c_max), jnp.float32).at[:, :p.shape[1]].set(p) for p in conv_p],
        axis=0)                                                          # (8, 3, c_max)

    layer_meta = tuple((h, w_, cin, cout, o)
                       for (h, w_, cin, cout), o in zip(dims, offs))

    # Classifier: Linear(c_max, 512) + BN1d (folded), Linear(512, out_dim)
    k1w, k1b, k1bn = jax.random.split(keys[ki], 3)
    fc1_w = (jax.random.normal(k1w, (c_max, 512), jnp.float32)
             / jnp.sqrt(float(c_max))).astype(jnp.bfloat16)
    b1 = 0.01 * jax.random.normal(k1b, (512,), jnp.float32)
    s1, sh1 = _fold_bn(k1bn, 512)
    fc1_p = jnp.stack([b1, s1, sh1], axis=0)                            # (3, 512)

    k2w, k2b = jax.random.split(keys[ki + 1], 2)
    fc2_w_raw = jax.random.normal(k2w, (512, out_dim), jnp.float32) / jnp.sqrt(512.0)
    fc2_b_raw = 0.01 * jax.random.normal(k2b, (out_dim,), jnp.float32)
    fc2_w = jnp.zeros((512, OUT_PAD), jnp.float32).at[:, :out_dim].set(
        fc2_w_raw).astype(jnp.bfloat16)
    fc2_b = jnp.zeros((1, OUT_PAD), jnp.float32).at[0, :out_dim].set(fc2_b_raw)

    return dict(w_all=w_all, p_all=p_all, fc1_w=fc1_w, fc1_p=fc1_p,
                fc2_w=fc2_w, fc2_b=fc2_b, layer_meta=layer_meta, out_dim=out_dim)


if __name__ == "__main__":
    key = jax.random.PRNGKey(0)
    kx, kp = jax.random.split(key)

    hidden_units = 8
    output_shape = 5
    # Input consistent with nn.Conv2d(3, ...) and 4x MaxPool2d(2): spatial 16 -> 1
    x = jax.random.normal(kx, (2, 3, 16, 16), jnp.float32)   # NCHW, as PyTorch

    params = init_params(kp, in_ch=3, hidden=hidden_units, out_dim=output_shape,
                         H0=16, W0=16)
    y = forward(x, params)
    jax.block_until_ready(y)
    assert y.shape == (2, output_shape), y.shape
    print("KERNEL_OK")
</pallas_src>

<mosaic_0001>
module attributes {stable_mosaic.version = 11 : i64} {
  func.func @kernel(%arg0: i32, %arg1: memref<1x16x16x3xf32, #tpu.memory_space<vmem>>, %arg2: memref<1632x64xbf16, #tpu.memory_space<vmem>>, %arg3: memref<8x3x64xf32, #tpu.memory_space<vmem>>, %arg4: memref<64x512xbf16, #tpu.memory_space<vmem>>, %arg5: memref<3x512xf32, #tpu.memory_space<vmem>>, %arg6: memref<512x128xbf16, #tpu.memory_space<vmem>>, %arg7: memref<1x128xf32, #tpu.memory_space<vmem>>, %arg8: memref<1x1x128xf32, #tpu.memory_space<vmem>>, %arg9: memref<18x18x3xf32, #tpu.memory_space<vmem>>, %arg10: memref<18x18x8xf32, #tpu.memory_space<vmem>>, %arg11: memref<10x10x8xf32, #tpu.memory_space<vmem>>, %arg12: memref<10x10x16xf32, #tpu.memory_space<vmem>>, %arg13: memref<6x6x16xf32, #tpu.memory_space<vmem>>, %arg14: memref<6x6x32xf32, #tpu.memory_space<vmem>>, %arg15: memref<4x4x32xf32, #tpu.memory_space<vmem>>, %arg16: memref<4x4x64xf32, #tpu.memory_space<vmem>>) attributes {dimension_semantics = [#tpu.dimension_semantics<parallel>], iteration_bounds = array<i64: 2>, scalar_prefetch = 0 : i64, scratch_operands = 8 : i64, tpu.core_type = #tpu.core_type<tc>, window_params = [{transform_indices = @transform_0, window_bounds = array<i64: 1, 16, 16, 3>}, {pipeline_mode = #tpu.pipeline_mode<synchronous>, transform_indices = @transform_1, window_bounds = array<i64: 1632, 64>}, {pipeline_mode = #tpu.pipeline_mode<synchronous>, transform_indices = @transform_2, window_bounds = array<i64: 8, 3, 64>}, {pipeline_mode = #tpu.pipeline_mode<synchronous>, transform_indices = @transform_3, window_bounds = array<i64: 64, 512>}, {pipeline_mode = #tpu.pipeline_mode<synchronous>, transform_indices = @transform_4, window_bounds = array<i64: 3, 512>}, {pipeline_mode = #tpu.pipeline_mode<synchronous>, transform_indices = @transform_5, window_bounds = array<i64: 512, 128>}, {pipeline_mode = #tpu.pipeline_mode<synchronous>, transform_indices = @transform_6, window_bounds = array<i64: 1, 128>}, {transform_indices = @transform_7, window_bounds = array<i64: 1, 1, 128>}]} {
    %c0 = arith.constant 0 : index
    %c0_0 = arith.constant 0 : index
    %c0_1 = arith.constant 0 : index
    %c0_2 = arith.constant 0 : index
    %0 = vector.load %arg1[%c0, %c0_0, %c0_1, %c0_2] : memref<1x16x16x3xf32, #tpu.memory_space<vmem>>, vector<1x16x16x3xf32>
    %1 = vector.shape_cast %0 : vector<1x16x16x3xf32> to vector<16x16x3xf32>
    %cst = arith.constant 0.000000e+00 : f32
    %2 = vector.broadcast %cst : f32 to vector<1x18x3xf32>
    %c0_3 = arith.constant 0 : index
    %c0_4 = arith.constant 0 : index
    %c0_5 = arith.constant 0 : index
    %3 = vector.load %arg9[%c0_3, %c0_4, %c0_5] : memref<18x18x3xf32, #tpu.memory_space<vmem>>, vector<1x18x3xf32>
    tpu.vector_store %arg9[%c0_3, %c0_4, %c0_5], %2 {strides = array<i32>} : memref<18x18x3xf32, #tpu.memory_space<vmem>>, vector<1x18x3xf32>,
    %c17 = arith.constant 17 : index
    %c0_6 = arith.constant 0 : index
    %c0_7 = arith.constant 0 : index
    %4 = vector.load %arg9[%c17, %c0_6, %c0_7] : memref<18x18x3xf32, #tpu.memory_space<vmem>>, vector<1x18x3xf32>
    tpu.vector_store %arg9[%c17, %c0_6, %c0_7], %2 {strides = array<i32>} : memref<18x18x3xf32, #tpu.memory_space<vmem>>, vector<1x18x3xf32>,
    %cst_8 = arith.constant 0.000000e+00 : f32
    %5 = vector.broadcast %cst_8 : f32 to vector<16x1x3xf32>
    %c1 = arith.constant 1 : index
    %c0_9 = arith.constant 0 : index
    %c0_10 = arith.constant 0 : index
    %6 = vector.load %arg9[%c1, %c0_9, %c0_10] : memref<18x18x3xf32, #tpu.memory_space<vmem>>, vector<16x1x3xf32>
    tpu.vector_store %arg9[%c1, %c0_9, %c0_10], %5 {strides = array<i32>} : memref<18x18x3xf32, #tpu.memory_space<vmem>>, vector<16x1x3xf32>,
    %c1_11 = arith.constant 1 : index
    %c17_12 = arith.constant 17 : index
    %c0_13 = arith.constant 0 : index
    %7 = vector.load %arg9[%c1_11, %c17_12, %c0_13] : memref<18x18x3xf32, #tpu.memory_space<vmem>>, vector<16x1x3xf32>
    tpu.vector_store %arg9[%c1_11, %c17_12, %c0_13], %5 {strides = array<i32>} : memref<18x18x3xf32, #tpu.memory_space<vmem>>, vector<16x1x3xf32>,
    %c1_14 = arith.constant 1 : index
    %c1_15 = arith.constant 1 : index
    %c0_16 = arith.constant 0 : index
    %8 = vector.load %arg9[%c1_14, %c1_15, %c0_16] : memref<18x18x3xf32, #tpu.memory_space<vmem>>, vector<16x16x3xf32>
    tpu.vector_store %arg9[%c1_14, %c1_15, %c0_16], %1 {strides = array<i32>} : memref<18x18x3xf32, #tpu.memory_space<vmem>>, vector<16x16x3xf32>,
    %c0_17 = arith.constant 0 : index
    %c0_18 = arith.constant 0 : index
    %c0_19 = arith.constant 0 : index
    %9 = vector.load %arg9[%c0_17, %c0_18, %c0_19] : memref<18x18x3xf32, #tpu.memory_space<vmem>>, vector<16x16x3xf32>
    %c0_20 = arith.constant 0 : index
    %c1_21 = arith.constant 1 : index
    %c0_22 = arith.constant 0 : index
    %10 = vector.load %arg9[%c0_20, %c1_21, %c0_22] : memref<18x18x3xf32, #tpu.memory_space<vmem>>, vector<16x16x3xf32>
    %c0_23 = arith.constant 0 : index
    %c2 = arith.constant 2 : index
    %c0_24 = arith.constant 0 : index
    %11 = vector.load %arg9[%c0_23, %c2, %c0_24] : memref<18x18x3xf32, #tpu.memory_space<vmem>>, vector<16x16x3xf32>
    %c1_25 = arith.constant 1 : index
    %c0_26 = arith.constant 0 : index
    %c0_27 = arith.constant 0 : index
    %12 = vector.load %arg9[%c1_25, %c0_26, %c0_27] : memref<18x18x3xf32, #tpu.memory_space<vmem>>, vector<16x16x3xf32>
    %c1_28 = arith.constant 1 : index
    %c1_29 = arith.constant 1 : index
    %c0_30 = arith.constant 0 : index
    %13 = vector.load %arg9[%c1_28, %c1_29, %c0_30] : memref<18x18x3xf32, #tpu.memory_space<vmem>>, vector<16x16x3xf32>
    %c1_31 = arith.constant 1 : index
    %c2_32 = arith.constant 2 : index
    %c0_33 = arith.constant 0 : index
    %14 = vector.load %arg9[%c1_31, %c2_32, %c0_33] : memref<18x18x3xf32, #tpu.memory_space<vmem>>, vector<16x16x3xf32>
    %c2_34 = arith.constant 2 : index
    %c0_35 = arith.constant 0 : index
    %c0_36 = arith.constant 0 : index
    %15 = vector.load %arg9[%c2_34, %c0_35, %c0_36] : memref<18x18x3xf32, #tpu.memory_space<vmem>>, vector<16x16x3xf32>
    %c2_37 = arith.constant 2 : index
    %c1_38 = arith.constant 1 : index
    %c0_39 = arith.constant 0 : index
    %16 = vector.load %arg9[%c2_37, %c1_38, %c0_39] : memref<18x18x3xf32, #tpu.memory_space<vmem>>, vector<16x16x3xf32>
    %c2_40 = arith.constant 2 : index
    %c2_41 = arith.constant 2 : index
    %c0_42 = arith.constant 0 : index
    %17 = vector.load %arg9[%c2_40, %c2_41, %c0_42] : memref<18x18x3xf32, #tpu.memory_space<vmem>>, vector<16x16x3xf32>
    %18 = tpu.concatenate %9, %10, %11, %12, %13, %14, %15, %16, %17 in 2 : vector<16x16x3xf32>, vector<16x16x3xf32>, vector<16x16x3xf32>, vector<16x16x3xf32>, vector<16x16x3xf32>, vector<16x16x3xf32>, vector<16x16x3xf32>, vector<16x16x3xf32>, vector<16x16x3xf32> -> vector<16x16x27xf32>
    %19 = vector.shape_cast %18 : vector<16x16x27xf32> to vector<256x27xf32>
    %c0_43 = arith.constant 0 : index
    %c0_44 = arith.constant 0 : index
    %20 = vector.load %arg2[%c0_43, %c0_44] : memref<1632x64xbf16, #tpu.memory_space<vmem>>, vector<27x8xbf16>
    %21 = arith.truncf %19 : vector<256x27xf32> to vector<256x27xbf16>
    %cst_45 = arith.constant dense<0.000000e+00> : vector<256x8xf32>
    %22 = tpu.matmul %21, %20, %cst_45 {dimension_numbers = #tpu.dot_dimension_numbers<[1], [0], [0], [1], [0, 0, 1, 1], [], []>} : vector<256x27xbf16>, vector<27x8xbf16>, vector<256x8xf32> -> vector<256x8xf32>
    %c0_46 = arith.constant 0 : index
    %c0_47 = arith.constant 0 : index
    %c0_48 = arith.constant 0 : index
    %23 = vector.load %arg3[%c0_46, %c0_47, %c0_48] : memref<8x3x64xf32, #tpu.memory_space<vmem>>, vector<1x3x64xf32>
    %24 = vector.shape_cast %23 : vector<1x3x64xf32> to vector<3x64xf32>
    %25 = vector.extract_strided_slice %24 {offsets = [0, 0], sizes = [1, 8], strides = [1, 1]} : vector<3x64xf32> to vector<1x8xf32>
    %26 = vector.broadcast %25 : vector<1x8xf32> to vector<256x8xf32>
    %27 = arith.addf %22, %26 : vector<256x8xf32>
    %cst_49 = arith.constant 0.000000e+00 : f32
    %28 = vector.broadcast %cst_49 : f32 to vector<256x8xf32>
    %29 = arith.cmpf ogt, %27, %28 : vector<256x8xf32>
    %cst_50 = arith.constant 1.000000e-01 : f32
    %30 = vector.broadcast %cst_50 : f32 to vector<256x8xf32>
    %31 = arith.mulf %30, %27 : vector<256x8xf32>
    %32 = arith.select %29, %27, %31 : vector<256x8xi1>, vector<256x8xf32>
    %33 = vector.extract_strided_slice %24 {offsets = [1, 0], sizes = [1, 8], strides = [1, 1]} : vector<3x64xf32> to vector<1x8xf32>
    %34 = vector.broadcast %33 : vector<1x8xf32> to vector<256x8xf32>
    %35 = arith.mulf %32, %34 : vector<256x8xf32>
    %36 = vector.extract_strided_slice %24 {offsets = [2, 0], sizes = [1, 8], strides = [1, 1]} : vector<3x64xf32> to vector<1x8xf32>
    %37 = vector.broadcast %36 : vector<1x8xf32> to vector<256x8xf32>
    %38 = arith.addf %35, %37 : vector<256x8xf32>
    %39 = vector.shape_cast %38 : vector<256x8xf32> to vector<16x16x8xf32>
    %cst_51 = arith.constant 0.000000e+00 : f32
    %40 = vector.broadcast %cst_51 : f32 to vector<1x18x8xf32>
    %c0_52 = arith.constant 0 : index
    %c0_53 = arith.constant 0 : index
    %c0_54 = arith.constant 0 : index
    %41 = vector.load %arg10[%c0_52, %c0_53, %c0_54] : memref<18x18x8xf32, #tpu.memory_space<vmem>>, vector<1x18x8xf32>
    tpu.vector_store %arg10[%c0_52, %c0_53, %c0_54], %40 {strides = array<i32>} : memref<18x18x8xf32, #tpu.memory_space<vmem>>, vector<1x18x8xf32>,
    %c17_55 = arith.constant 17 : index
    %c0_56 = arith.constant 0 : index
    %c0_57 = arith.constant 0 : index
    %42 = vector.load %arg10[%c17_55, %c0_56, %c0_57] : memref<18x18x8xf32, #tpu.memory_space<vmem>>, vector<1x18x8xf32>
    tpu.vector_store %arg10[%c17_55, %c0_56, %c0_57], %40 {strides = array<i32>} : memref<18x18x8xf32, #tpu.memory_space<vmem>>, vector<1x18x8xf32>,
    %cst_58 = arith.constant 0.000000e+00 : f32
    %43 = vector.broadcast %cst_58 : f32 to vector<16x1x8xf32>
    %c1_59 = arith.constant 1 : index
    %c0_60 = arith.constant 0 : index
    %c0_61 = arith.constant 0 : index
    %44 = vector.load %arg10[%c1_59, %c0_60, %c0_61] : memref<18x18x8xf32, #tpu.memory_space<vmem>>, vector<16x1x8xf32>
    tpu.vector_store %arg10[%c1_59, %c0_60, %c0_61], %43 {strides = array<i32>} : memref<18x18x8xf32, #tpu.memory_space<vmem>>, vector<16x1x8xf32>,
    %c1_62 = arith.constant 1 : index
    %c17_63 = arith.constant 17 : index
    %c0_64 = arith.constant 0 : index
    %45 = vector.load %arg10[%c1_62, %c17_63, %c0_64] : memref<18x18x8xf32, #tpu.memory_space<vmem>>, vector<16x1x8xf32>
    tpu.vector_store %arg10[%c1_62, %c17_63, %c0_64], %43 {strides = array<i32>} : memref<18x18x8xf32, #tpu.memory_space<vmem>>, vector<16x1x8xf32>,
    %c1_65 = arith.constant 1 : index
    %c1_66 = arith.constant 1 : index
    %c0_67 = arith.constant 0 : index
    %46 = vector.load %arg10[%c1_65, %c1_66, %c0_67] : memref<18x18x8xf32, #tpu.memory_space<vmem>>, vector<16x16x8xf32>
    tpu.vector_store %arg10[%c1_65, %c1_66, %c0_67], %39 {strides = array<i32>} : memref<18x18x8xf32, #tpu.memory_space<vmem>>, vector<16x16x8xf32>,
    %c0_68 = arith.constant 0 : index
    %c0_69 = arith.constant 0 : index
    %c0_70 = arith.constant 0 : index
    %47 = vector.load %arg10[%c0_68, %c0_69, %c0_70] : memref<18x18x8xf32, #tpu.memory_space<vmem>>, vector<16x16x8xf32>
    %c0_71 = arith.constant 0 : index
    %c1_72 = arith.constant 1 : index
    %c0_73 = arith.constant 0 : index
    %48 = vector.load %arg10[%c0_71, %c1_72, %c0_73] : memref<18x18x8xf32, #tpu.memory_space<vmem>>, vector<16x16x8xf32>
    %c0_74 = arith.constant 0 : index
    %c2_75 = arith.constant 2 : index
    %c0_76 = arith.constant 0 : index
    %49 = vector.load %arg10[%c0_74, %c2_75, %c0_76] : memref<18x18x8xf32, #tpu.memory_space<vmem>>, vector<16x16x8xf32>
    %c1_77 = arith.constant 1 : index
    %c0_78 = arith.constant 0 : index
    %c0_79 = arith.constant 0 : index
    %50 = vector.load %arg10[%c1_77, %c0_78, %c0_79] : memref<18x18x8xf32, #tpu.memory_space<vmem>>, vector<16x16x8xf32>
    %c1_80 = arith.constant 1 : index
    %c1_81 = arith.constant 1 : index
    %c0_82 = arith.constant 0 : index
    %51 = vector.load %arg10[%c1_80, %c1_81, %c0_82] : memref<18x18x8xf32, #tpu.memory_space<vmem>>, vector<16x16x8xf32>
    %c1_83 = arith.constant 1 : index
    %c2_84 = arith.constant 2 : index
    %c0_85 = arith.constant 0 : index
    %52 = vector.load %arg10[%c1_83, %c2_84, %c0_85] : memref<18x18x8xf32, #tpu.memory_space<vmem>>, vector<16x16x8xf32>
    %c2_86 = arith.constant 2 : index
    %c0_87 = arith.constant 0 : index
    %c0_88 = arith.constant 0 : index
    %53 = vector.load %arg10[%c2_86, %c0_87, %c0_88] : memref<18x18x8xf32, #tpu.memory_space<vmem>>, vector<16x16x8xf32>
    %c2_89 = arith.constant 2 : index
    %c1_90 = arith.constant 1 : index
    %c0_91 = arith.constant 0 : index
    %54 = vector.load %arg10[%c2_89, %c1_90, %c0_91] : memref<18x18x8xf32, #tpu.memory_space<vmem>>, vector<16x16x8xf32>
    %c2_92 = arith.constant 2 : index
    %c2_93 = arith.constant 2 : index
    %c0_94 = arith.constant 0 : index
    %55 = vector.load %arg10[%c2_92, %c2_93, %c0_94] : memref<18x18x8xf32, #tpu.memory_space<vmem>>, vector<16x16x8xf32>
    %56 = tpu.concatenate %47, %48, %49, %50, %51, %52, %53, %54, %55 in 2 : vector<16x16x8xf32>, vector<16x16x8xf32>, vector<16x16x8xf32>, vector<16x16x8xf32>, vector<16x16x8xf32>, vector<16x16x8xf32>, vector<16x16x8xf32>, vector<16x16x8xf32>, vector<16x16x8xf32> -> vector<16x16x72xf32>
    %57 = vector.shape_cast %56 : vector<16x16x72xf32> to vector<256x72xf32>
    %c32 = arith.constant 32 : index
    %c0_95 = arith.constant 0 : index
    %58 = vector.load %arg2[%c32, %c0_95] : memref<1632x64xbf16, #tpu.memory_space<vmem>>, vector<72x8xbf16>
    %59 = arith.truncf %57 : vector<256x72xf32> to vector<256x72xbf16>
    %cst_96 = arith.constant dense<0.000000e+00> : vector<256x8xf32>
    %60 = tpu.matmul %59, %58, %cst_96 {dimension_numbers = #tpu.dot_dimension_numbers<[1], [0], [0], [1], [0, 0, 1, 1], [], []>} : vector<256x72xbf16>, vector<72x8xbf16>, vector<256x8xf32> -> vector<256x8xf32>
    %c1_97 = arith.constant 1 : index
    %c0_98 = arith.constant 0 : index
    %c0_99 = arith.constant 0 : index
    %61 = vector.load %arg3[%c1_97, %c0_98, %c0_99] : memref<8x3x64xf32, #tpu.memory_space<vmem>>, vector<1x3x64xf32>
    %62 = vector.shape_cast %61 : vector<1x3x64xf32> to vector<3x64xf32>
    %63 = vector.extract_strided_slice %62 {offsets = [0, 0], sizes = [1, 8], strides = [1, 1]} : vector<3x64xf32> to vector<1x8xf32>
    %64 = vector.broadcast %63 : vector<1x8xf32> to vector<256x8xf32>
    %65 = arith.addf %60, %64 : vector<256x8xf32>
    %cst_100 = arith.constant 0.000000e+00 : f32
    %66 = vector.broadcast %cst_100 : f32 to vector<256x8xf32>
    %67 = arith.cmpf ogt, %65, %66 : vector<256x8xf32>
    %cst_101 = arith.constant 1.000000e-01 : f32
    %68 = vector.broadcast %cst_101 : f32 to vector<256x8xf32>
    %69 = arith.mulf %68, %65 : vector<256x8xf32>
    %70 = arith.select %67, %65, %69 : vector<256x8xi1>, vector<256x8xf32>
    %71 = vector.extract_strided_slice %62 {offsets = [1, 0], sizes = [1, 8], strides = [1, 1]} : vector<3x64xf32> to vector<1x8xf32>
    %72 = vector.broadcast %71 : vector<1x8xf32> to vector<256x8xf32>
    %73 = arith.mulf %70, %72 : vector<256x8xf32>
    %74 = vector.extract_strided_slice %62 {offsets = [2, 0], sizes = [1, 8], strides = [1, 1]} : vector<3x64xf32> to vector<1x8xf32>
    %75 = vector.broadcast %74 : vector<1x8xf32> to vector<256x8xf32>
    %76 = arith.addf %73, %75 : vector<256x8xf32>
    %77 = vector.shape_cast %76 : vector<256x8xf32> to vector<16x16x8xf32>
    %78 = vector.shape_cast %77 : vector<16x16x8xf32> to vector<8x2x16x8xf32>
    %cst_102 = arith.constant dense<0xFF800000> : vector<8x16x8xf32>
    %79 = vector.multi_reduction <maximumf>, %78, %cst_102 [1] : vector<8x2x16x8xf32> to vector<8x16x8xf32>
    %80 = vector.shape_cast %79 : vector<8x16x8xf32> to vector<8x8x2x8xf32>
    %cst_103 = arith.constant dense<0xFF800000> : vector<8x8x8xf32>
    %81 = vector.multi_reduction <maximumf>, %80, %cst_103 [2] : vector<8x8x2x8xf32> to vector<8x8x8xf32>
    %cst_104 = arith.constant 0.000000e+00 : f32
    %82 = vector.broadcast %cst_104 : f32 to vector<1x10x8xf32>
    %c0_105 = arith.constant 0 : index
    %c0_106 = arith.constant 0 : index
    %c0_107 = arith.constant 0 : index
    %83 = vector.load %arg11[%c0_105, %c0_106, %c0_107] : memref<10x10x8xf32, #tpu.memory_space<vmem>>, vector<1x10x8xf32>
    tpu.vector_store %arg11[%c0_105, %c0_106, %c0_107], %82 {strides = array<i32>} : memref<10x10x8xf32, #tpu.memory_space<vmem>>, vector<1x10x8xf32>,
    %c9 = arith.constant 9 : index
    %c0_108 = arith.constant 0 : index
    %c0_109 = arith.constant 0 : index
    %84 = vector.load %arg11[%c9, %c0_108, %c0_109] : memref<10x10x8xf32, #tpu.memory_space<vmem>>, vector<1x10x8xf32>
    tpu.vector_store %arg11[%c9, %c0_108, %c0_109], %82 {strides = array<i32>} : memref<10x10x8xf32, #tpu.memory_space<vmem>>, vector<1x10x8xf32>,
    %cst_110 = arith.constant 0.000000e+00 : f32
    %85 = vector.broadcast %cst_110 : f32 to vector<8x1x8xf32>
    %c1_111 = arith.constant 1 : index
    %c0_112 = arith.constant 0 : index
    %c0_113 = arith.constant 0 : index
    %86 = vector.load %arg11[%c1_111, %c0_112, %c0_113] : memref<10x10x8xf32, #tpu.memory_space<vmem>>, vector<8x1x8xf32>
    tpu.vector_store %arg11[%c1_111, %c0_112, %c0_113], %85 {strides = array<i32>} : memref<10x10x8xf32, #tpu.memory_space<vmem>>, vector<8x1x8xf32>,
    %c1_114 = arith.constant 1 : index
    %c9_115 = arith.constant 9 : index
    %c0_116 = arith.constant 0 : index
    %87 = vector.load %arg11[%c1_114, %c9_115, %c0_116] : memref<10x10x8xf32, #tpu.memory_space<vmem>>, vector<8x1x8xf32>
    tpu.vector_store %arg11[%c1_114, %c9_115, %c0_116], %85 {strides = array<i32>} : memref<10x10x8xf32, #tpu.memory_space<vmem>>, vector<8x1x8xf32>,
    %c1_117 = arith.constant 1 : index
    %c1_118 = arith.constant 1 : index
    %c0_119 = arith.constant 0 : index
    %88 = vector.load %arg11[%c1_117, %c1_118, %c0_119] : memref<10x10x8xf32, #tpu.memory_space<vmem>>, vector<8x8x8xf32>
    tpu.vector_store %arg11[%c1_117, %c1_118, %c0_119], %81 {strides = array<i32>} : memref<10x10x8xf32, #tpu.memory_space<vmem>>, vector<8x8x8xf32>,
    %c0_120 = arith.constant 0 : index
    %c0_121 = arith.constant 0 : index
    %c0_122 = arith.constant 0 : index
    %89 = vector.load %arg11[%c0_120, %c0_121, %c0_122] : memref<10x10x8xf32, #tpu.memory_space<vmem>>, vector<8x8x8xf32>
    %c0_123 = arith.constant 0 : index
    %c1_124 = arith.constant 1 : index
    %c0_125 = arith.constant 0 : index
    %90 = vector.load %arg11[%c0_123, %c1_124, %c0_125] : memref<10x10x8xf32, #tpu.memory_space<vmem>>, vector<8x8x8xf32>
    %c0_126 = arith.constant 0 : index
    %c2_127 = arith.constant 2 : index
    %c0_128 = arith.constant 0 : index
    %91 = vector.load %arg11[%c0_126, %c2_127, %c0_128] : memref<10x10x8xf32, #tpu.memory_space<vmem>>, vector<8x8x8xf32>
    %c1_129 = arith.constant 1 : index
    %c0_130 = arith.constant 0 : index
    %c0_131 = arith.constant 0 : index
    %92 = vector.load %arg11[%c1_129, %c0_130, %c0_131] : memref<10x10x8xf32, #tpu.memory_space<vmem>>, vector<8x8x8xf32>
    %c1_132 = arith.constant 1 : index
    %c1_133 = arith.constant 1 : index
    %c0_134 = arith.constant 0 : index
    %93 = vector.load %arg11[%c1_132, %c1_133, %c0_134] : memref<10x10x8xf32, #tpu.memory_space<vmem>>, vector<8x8x8xf32>
    %c1_135 = arith.constant 1 : index
    %c2_136 = arith.constant 2 : index
    %c0_137 = arith.constant 0 : index
    %94 = vector.load %arg11[%c1_135, %c2_136, %c0_137] : memref<10x10x8xf32, #tpu.memory_space<vmem>>, vector<8x8x8xf32>
    %c2_138 = arith.constant 2 : index
    %c0_139 = arith.constant 0 : index
    %c0_140 = arith.constant 0 : index
    %95 = vector.load %arg11[%c2_138, %c0_139, %c0_140] : memref<10x10x8xf32, #tpu.memory_space<vmem>>, vector<8x8x8xf32>
    %c2_141 = arith.constant 2 : index
    %c1_142 = arith.constant 1 : index
    %c0_143 = arith.constant 0 : index
    %96 = vector.load %arg11[%c2_141, %c1_142, %c0_143] : memref<10x10x8xf32, #tpu.memory_space<vmem>>, vector<8x8x8xf32>
    %c2_144 = arith.constant 2 : index
    %c2_145 = arith.constant 2 : index
    %c0_146 = arith.constant 0 : index
    %97 = vector.load %arg11[%c2_144, %c2_145, %c0_146] : memref<10x10x8xf32, #tpu.memory_space<vmem>>, vector<8x8x8xf32>
    %98 = tpu.concatenate %89, %90, %91, %92, %93, %94, %95, %96, %97 in 2 : vector<8x8x8xf32>, vector<8x8x8xf32>, vector<8x8x8xf32>, vector<8x8x8xf32>, vector<8x8x8xf32>, vector<8x8x8xf32>, vector<8x8x8xf32>, vector<8x8x8xf32>, vector<8x8x8xf32> -> vector<8x8x72xf32>
    %99 = vector.shape_cast %98 : vector<8x8x72xf32> to vector<64x72xf32>
    %c112 = arith.constant 112 : index
    %c0_147 = arith.constant 0 : index
    %100 = vector.load %arg2[%c112, %c0_147] : memref<1632x64xbf16, #tpu.memory_space<vmem>>, vector<72x16xbf16>
    %101 = arith.truncf %99 : vector<64x72xf32> to vector<64x72xbf16>
    %cst_148 = arith.constant dense<0.000000e+00> : vector<64x16xf32>
    %102 = tpu.matmul %101, %100, %cst_148 {dimension_numbers = #tpu.dot_dimension_numbers<[1], [0], [0], [1], [0, 0, 1, 1], [], []>} : vector<64x72xbf16>, vector<72x16xbf16>, vector<64x16xf32> -> vector<64x16xf32>
    %c2_149 = arith.constant 2 : index
    %c0_150 = arith.constant 0 : index
    %c0_151 = arith.constant 0 : index
    %103 = vector.load %arg3[%c2_149, %c0_150, %c0_151] : memref<8x3x64xf32, #tpu.memory_space<vmem>>, vector<1x3x64xf32>
    %104 = vector.shape_cast %103 : vector<1x3x64xf32> to vector<3x64xf32>
    %105 = vector.extract_strided_slice %104 {offsets = [0, 0], sizes = [1, 16], strides = [1, 1]} : vector<3x64xf32> to vector<1x16xf32>
    %106 = vector.broadcast %105 : vector<1x16xf32> to vector<64x16xf32>
    %107 = arith.addf %102, %106 : vector<64x16xf32>
    %cst_152 = arith.constant 0.000000e+00 : f32
    %108 = vector.broadcast %cst_152 : f32 to vector<64x16xf32>
    %109 = arith.cmpf ogt, %107, %108 : vector<64x16xf32>
    %cst_153 = arith.constant 1.000000e-01 : f32
    %110 = vector.broadcast %cst_153 : f32 to vector<64x16xf32>
    %111 = arith.mulf %110, %107 : vector<64x16xf32>
    %112 = arith.select %109, %107, %111 : vector<64x16xi1>, vector<64x16xf32>
    %113 = vector.extract_strided_slice %104 {offsets = [1, 0], sizes = [1, 16], strides = [1, 1]} : vector<3x64xf32> to vector<1x16xf32>
    %114 = vector.broadcast %113 : vector<1x16xf32> to vector<64x16xf32>
    %115 = arith.mulf %112, %114 : vector<64x16xf32>
    %116 = vector.extract_strided_slice %104 {offsets = [2, 0], sizes = [1, 16], strides = [1, 1]} : vector<3x64xf32> to vector<1x16xf32>
    %117 = vector.broadcast %116 : vector<1x16xf32> to vector<64x16xf32>
    %118 = arith.addf %115, %117 : vector<64x16xf32>
    %119 = vector.shape_cast %118 : vector<64x16xf32> to vector<8x8x16xf32>
    %cst_154 = arith.constant 0.000000e+00 : f32
    %120 = vector.broadcast %cst_154 : f32 to vector<1x10x16xf32>
    %c0_155 = arith.constant 0 : index
    %c0_156 = arith.constant 0 : index
    %c0_157 = arith.constant 0 : index
    %121 = vector.load %arg12[%c0_155, %c0_156, %c0_157] : memref<10x10x16xf32, #tpu.memory_space<vmem>>, vector<1x10x16xf32>
    tpu.vector_store %arg12[%c0_155, %c0_156, %c0_157], %120 {strides = array<i32>} : memref<10x10x16xf32, #tpu.memory_space<vmem>>, vector<1x10x16xf32>,
    %c9_158 = arith.constant 9 : index
    %c0_159 = arith.constant 0 : index
    %c0_160 = arith.constant 0 : index
    %122 = vector.load %arg12[%c9_158, %c0_159, %c0_160] : memref<10x10x16xf32, #tpu.memory_space<vmem>>, vector<1x10x16xf32>
    tpu.vector_store %arg12[%c9_158, %c0_159, %c0_160], %120 {strides = array<i32>} : memref<10x10x16xf32, #tpu.memory_space<vmem>>, vector<1x10x16xf32>,
    %cst_161 = arith.constant 0.000000e+00 : f32
    %123 = vector.broadcast %cst_161 : f32 to vector<8x1x16xf32>
    %c1_162 = arith.constant 1 : index
    %c0_163 = arith.constant 0 : index
    %c0_164 = arith.constant 0 : index
    %124 = vector.load %arg12[%c1_162, %c0_163, %c0_164] : memref<10x10x16xf32, #tpu.memory_space<vmem>>, vector<8x1x16xf32>
    tpu.vector_store %arg12[%c1_162, %c0_163, %c0_164], %123 {strides = array<i32>} : memref<10x10x16xf32, #tpu.memory_space<vmem>>, vector<8x1x16xf32>,
    %c1_165 = arith.constant 1 : index
    %c9_166 = arith.constant 9 : index
    %c0_167 = arith.constant 0 : index
    %125 = vector.load %arg12[%c1_165, %c9_166, %c0_167] : memref<10x10x16xf32, #tpu.memory_space<vmem>>, vector<8x1x16xf32>
    tpu.vector_store %arg12[%c1_165, %c9_166, %c0_167], %123 {strides = array<i32>} : memref<10x10x16xf32, #tpu.memory_space<vmem>>, vector<8x1x16xf32>,
    %c1_168 = arith.constant 1 : index
    %c1_169 = arith.constant 1 : index
    %c0_170 = arith.constant 0 : index
    %126 = vector.load %arg12[%c1_168, %c1_169, %c0_170] : memref<10x10x16xf32, #tpu.memory_space<vmem>>, vector<8x8x16xf32>
    tpu.vector_store %arg12[%c1_168, %c1_169, %c0_170], %119 {strides = array<i32>} : memref<10x10x16xf32, #tpu.memory_space<vmem>>, vector<8x8x16xf32>,
    %c0_171 = arith.constant 0 : index
    %c0_172 = arith.constant 0 : index
    %c0_173 = arith.constant 0 : index
    %127 = vector.load %arg12[%c0_171, %c0_172, %c0_173] : memref<10x10x16xf32, #tpu.memory_space<vmem>>, vector<8x8x16xf32>
    %c0_174 = arith.constant 0 : index
    %c1_175 = arith.constant 1 : index
    %c0_176 = arith.constant 0 : index
    %128 = vector.load %arg12[%c0_174, %c1_175, %c0_176] : memref<10x10x16xf32, #tpu.memory_space<vmem>>, vector<8x8x16xf32>
    %c0_177 = arith.constant 0 : index
    %c2_178 = arith.constant 2 : index
    %c0_179 = arith.constant 0 : index
    %129 = vector.load %arg12[%c0_177, %c2_178, %c0_179] : memref<10x10x16xf32, #tpu.memory_space<vmem>>, vector<8x8x16xf32>
    %c1_180 = arith.constant 1 : index
    %c0_181 = arith.constant 0 : index
    %c0_182 = arith.constant 0 : index
    %130 = vector.load %arg12[%c1_180, %c0_181, %c0_182] : memref<10x10x16xf32, #tpu.memory_space<vmem>>, vector<8x8x16xf32>
    %c1_183 = arith.constant 1 : index
    %c1_184 = arith.constant 1 : index
    %c0_185 = arith.constant 0 : index
    %131 = vector.load %arg12[%c1_183, %c1_184, %c0_185] : memref<10x10x16xf32, #tpu.memory_space<vmem>>, vector<8x8x16xf32>
    %c1_186 = arith.constant 1 : index
    %c2_187 = arith.constant 2 : index
    %c0_188 = arith.constant 0 : index
    %132 = vector.load %arg12[%c1_186, %c2_187, %c0_188] : memref<10x10x16xf32, #tpu.memory_space<vmem>>, vector<8x8x16xf32>
    %c2_189 = arith.constant 2 : index
    %c0_190 = arith.constant 0 : index
    %c0_191 = arith.constant 0 : index
    %133 = vector.load %arg12[%c2_189, %c0_190, %c0_191] : memref<10x10x16xf32, #tpu.memory_space<vmem>>, vector<8x8x16xf32>
    %c2_192 = arith.constant 2 : index
    %c1_193 = arith.constant 1 : index
    %c0_194 = arith.constant 0 : index
    %134 = vector.load %arg12[%c2_192, %c1_193, %c0_194] : memref<10x10x16xf32, #tpu.memory_space<vmem>>, vector<8x8x16xf32>
    %c2_195 = arith.constant 2 : index
    %c2_196 = arith.constant 2 : index
    %c0_197 = arith.constant 0 : index
    %135 = vector.load %arg12[%c2_195, %c2_196, %c0_197] : memref<10x10x16xf32, #tpu.memory_space<vmem>>, vector<8x8x16xf32>
    %136 = tpu.concatenate %127, %128, %129, %130, %131, %132, %133, %134, %135 in 2 : vector<8x8x16xf32>, vector<8x8x16xf32>, vector<8x8x16xf32>, vector<8x8x16xf32>, vector<8x8x16xf32>, vector<8x8x16xf32>, vector<8x8x16xf32>, vector<8x8x16xf32>, vector<8x8x16xf32> -> vector<8x8x144xf32>
    %137 = vector.shape_cast %136 : vector<8x8x144xf32> to vector<64x144xf32>
    %c192 = arith.constant 192 : index
    %c0_198 = arith.constant 0 : index
    %138 = vector.load %arg2[%c192, %c0_198] : memref<1632x64xbf16, #tpu.memory_space<vmem>>, vector<144x16xbf16>
    %139 = arith.truncf %137 : vector<64x144xf32> to vector<64x144xbf16>
    %cst_199 = arith.constant dense<0.000000e+00> : vector<64x16xf32>
    %140 = tpu.matmul %139, %138, %cst_199 {dimension_numbers = #tpu.dot_dimension_numbers<[1], [0], [0], [1], [0, 0, 1, 1], [], []>} : vector<64x144xbf16>, vector<144x16xbf16>, vector<64x16xf32> -> vector<64x16xf32>
    %c3 = arith.constant 3 : index
    %c0_200 = arith.constant 0 : index
    %c0_201 = arith.constant 0 : index
    %141 = vector.load %arg3[%c3, %c0_200, %c0_201] : memref<8x3x64xf32, #tpu.memory_space<vmem>>, vector<1x3x64xf32>
    %142 = vector.shape_cast %141 : vector<1x3x64xf32> to vector<3x64xf32>
    %143 = vector.extract_strided_slice %142 {offsets = [0, 0], sizes = [1, 16], strides = [1, 1]} : vector<3x64xf32> to vector<1x16xf32>
    %144 = vector.broadcast %143 : vector<1x16xf32> to vector<64x16xf32>
    %145 = arith.addf %140, %144 : vector<64x16xf32>
    %cst_202 = arith.constant 0.000000e+00 : f32
    %146 = vector.broadcast %cst_202 : f32 to vector<64x16xf32>
    %147 = arith.cmpf ogt, %145, %146 : vector<64x16xf32>
    %cst_203 = arith.constant 1.000000e-01 : f32
    %148 = vector.broadcast %cst_203 : f32 to vector<64x16xf32>
    %149 = arith.mulf %148, %145 : vector<64x16xf32>
    %150 = arith.select %147, %145, %149 : vector<64x16xi1>, vector<64x16xf32>
    %151 = vector.extract_strided_slice %142 {offsets = [1, 0], sizes = [1, 16], strides = [1, 1]} : vector<3x64xf32> to vector<1x16xf32>
    %152 = vector.broadcast %151 : vector<1x16xf32> to vector<64x16xf32>
    %153 = arith.mulf %150, %152 : vector<64x16xf32>
    %154 = vector.extract_strided_slice %142 {offsets = [2, 0], sizes = [1, 16], strides = [1, 1]} : vector<3x64xf32> to vector<1x16xf32>
    %155 = vector.broadcast %154 : vector<1x16xf32> to vector<64x16xf32>
    %156 = arith.addf %153, %155 : vector<64x16xf32>
    %157 = vector.shape_cast %156 : vector<64x16xf32> to vector<8x8x16xf32>
    %158 = vector.shape_cast %157 : vector<8x8x16xf32> to vector<4x2x8x16xf32>
    %cst_204 = arith.constant dense<0xFF800000> : vector<4x8x16xf32>
    %159 = vector.multi_reduction <maximumf>, %158, %cst_204 [1] : vector<4x2x8x16xf32> to vector<4x8x16xf32>
    %160 = vector.shape_cast %159 : vector<4x8x16xf32> to vector<4x4x2x16xf32>
    %cst_205 = arith.constant dense<0xFF800000> : vector<4x4x16xf32>
    %161 = vector.multi_reduction <maximumf>, %160, %cst_205 [2] : vector<4x4x2x16xf32> to vector<4x4x16xf32>
    %cst_206 = arith.constant 0.000000e+00 : f32
    %162 = vector.broadcast %cst_206 : f32 to vector<1x6x16xf32>
    %c0_207 = arith.constant 0 : index
    %c0_208 = arith.constant 0 : index
    %c0_209 = arith.constant 0 : index
    %163 = vector.load %arg13[%c0_207, %c0_208, %c0_209] : memref<6x6x16xf32, #tpu.memory_space<vmem>>, vector<1x6x16xf32>
    tpu.vector_store %arg13[%c0_207, %c0_208, %c0_209], %162 {strides = array<i32>} : memref<6x6x16xf32, #tpu.memory_space<vmem>>, vector<1x6x16xf32>,
    %c5 = arith.constant 5 : index
    %c0_210 = arith.constant 0 : index
    %c0_211 = arith.constant 0 : index
    %164 = vector.load %arg13[%c5, %c0_210, %c0_211] : memref<6x6x16xf32, #tpu.memory_space<vmem>>, vector<1x6x16xf32>
    tpu.vector_store %arg13[%c5, %c0_210, %c0_211], %162 {strides = array<i32>} : memref<6x6x16xf32, #tpu.memory_space<vmem>>, vector<1x6x16xf32>,
    %cst_212 = arith.constant 0.000000e+00 : f32
    %165 = vector.broadcast %cst_212 : f32 to vector<4x1x16xf32>
    %c1_213 = arith.constant 1 : index
    %c0_214 = arith.constant 0 : index
    %c0_215 = arith.constant 0 : index
    %166 = vector.load %arg13[%c1_213, %c0_214, %c0_215] : memref<6x6x16xf32, #tpu.memory_space<vmem>>, vector<4x1x16xf32>
    tpu.vector_store %arg13[%c1_213, %c0_214, %c0_215], %165 {strides = array<i32>} : memref<6x6x16xf32, #tpu.memory_space<vmem>>, vector<4x1x16xf32>,
    %c1_216 = arith.constant 1 : index
    %c5_217 = arith.constant 5 : index
    %c0_218 = arith.constant 0 : index
    %167 = vector.load %arg13[%c1_216, %c5_217, %c0_218] : memref<6x6x16xf32, #tpu.memory_space<vmem>>, vector<4x1x16xf32>
    tpu.vector_store %arg13[%c1_216, %c5_217, %c0_218], %165 {strides = array<i32>} : memref<6x6x16xf32, #tpu.memory_space<vmem>>, vector<4x1x16xf32>,
    %c1_219 = arith.constant 1 : index
    %c1_220 = arith.constant 1 : index
    %c0_221 = arith.constant 0 : index
    %168 = vector.load %arg13[%c1_219, %c1_220, %c0_221] : memref<6x6x16xf32, #tpu.memory_space<vmem>>, vector<4x4x16xf32>
    tpu.vector_store %arg13[%c1_219, %c1_220, %c0_221], %161 {strides = array<i32>} : memref<6x6x16xf32, #tpu.memory_space<vmem>>, vector<4x4x16xf32>,
    %c0_222 = arith.constant 0 : index
    %c0_223 = arith.constant 0 : index
    %c0_224 = arith.constant 0 : index
    %169 = vector.load %arg13[%c0_222, %c0_223, %c0_224] : memref<6x6x16xf32, #tpu.memory_space<vmem>>, vector<4x4x16xf32>
    %c0_225 = arith.constant 0 : index
    %c1_226 = arith.constant 1 : index
    %c0_227 = arith.constant 0 : index
    %170 = vector.load %arg13[%c0_225, %c1_226, %c0_227] : memref<6x6x16xf32, #tpu.memory_space<vmem>>, vector<4x4x16xf32>
    %c0_228 = arith.constant 0 : index
    %c2_229 = arith.constant 2 : index
    %c0_230 = arith.constant 0 : index
    %171 = vector.load %arg13[%c0_228, %c2_229, %c0_230] : memref<6x6x16xf32, #tpu.memory_space<vmem>>, vector<4x4x16xf32>
    %c1_231 = arith.constant 1 : index
    %c0_232 = arith.constant 0 : index
    %c0_233 = arith.constant 0 : index
    %172 = vector.load %arg13[%c1_231, %c0_232, %c0_233] : memref<6x6x16xf32, #tpu.memory_space<vmem>>, vector<4x4x16xf32>
    %c1_234 = arith.constant 1 : index
    %c1_235 = arith.constant 1 : index
    %c0_236 = arith.constant 0 : index
    %173 = vector.load %arg13[%c1_234, %c1_235, %c0_236] : memref<6x6x16xf32, #tpu.memory_space<vmem>>, vector<4x4x16xf32>
    %c1_237 = arith.constant 1 : index
    %c2_238 = arith.constant 2 : index
    %c0_239 = arith.constant 0 : index
    %174 = vector.load %arg13[%c1_237, %c2_238, %c0_239] : memref<6x6x16xf32, #tpu.memory_space<vmem>>, vector<4x4x16xf32>
    %c2_240 = arith.constant 2 : index
    %c0_241 = arith.constant 0 : index
    %c0_242 = arith.constant 0 : index
    %175 = vector.load %arg13[%c2_240, %c0_241, %c0_242] : memref<6x6x16xf32, #tpu.memory_space<vmem>>, vector<4x4x16xf32>
    %c2_243 = arith.constant 2 : index
    %c1_244 = arith.constant 1 : index
    %c0_245 = arith.constant 0 : index
    %176 = vector.load %arg13[%c2_243, %c1_244, %c0_245] : memref<6x6x16xf32, #tpu.memory_space<vmem>>, vector<4x4x16xf32>
    %c2_246 = arith.constant 2 : index
    %c2_247 = arith.constant 2 : index
    %c0_248 = arith.constant 0 : index
    %177 = vector.load %arg13[%c2_246, %c2_247, %c0_248] : memref<6x6x16xf32, #tpu.memory_space<vmem>>, vector<4x4x16xf32>
    %178 = tpu.concatenate %169, %170, %171, %172, %173, %174, %175, %176, %177 in 2 : vector<4x4x16xf32>, vector<4x4x16xf32>, vector<4x4x16xf32>, vector<4x4x16xf32>, vector<4x4x16xf32>, vector<4x4x16xf32>, vector<4x4x16xf32>, vector<4x4x16xf32>, vector<4x4x16xf32> -> vector<4x4x144xf32>
    %179 = vector.shape_cast %178 : vector<4x4x144xf32> to vector<16x144xf32>
    %c336 = arith.constant 336 : index
    %c0_249 = arith.constant 0 : index
    %180 = vector.load %arg2[%c336, %c0_249] : memref<1632x64xbf16, #tpu.memory_space<vmem>>, vector<144x32xbf16>
    %181 = arith.truncf %179 : vector<16x144xf32> to vector<16x144xbf16>
    %cst_250 = arith.constant dense<0.000000e+00> : vector<16x32xf32>
    %182 = tpu.matmul %181, %180, %cst_250 {dimension_numbers = #tpu.dot_dimension_numbers<[1], [0], [0], [1], [0, 0, 1, 1], [], []>} : vector<16x144xbf16>, vector<144x32xbf16>, vector<16x32xf32> -> vector<16x32xf32>
    %c4 = arith.constant 4 : index
    %c0_251 = arith.constant 0 : index
    %c0_252 = arith.constant 0 : index
    %183 = vector.load %arg3[%c4, %c0_251, %c0_252] : memref<8x3x64xf32, #tpu.memory_space<vmem>>, vector<1x3x64xf32>
    %184 = vector.shape_cast %183 : vector<1x3x64xf32> to vector<3x64xf32>
    %185 = vector.extract_strided_slice %184 {offsets = [0, 0], sizes = [1, 32], strides = [1, 1]} : vector<3x64xf32> to vector<1x32xf32>
    %186 = vector.broadcast %185 : vector<1x32xf32> to vector<16x32xf32>
    %187 = arith.addf %182, %186 : vector<16x32xf32>
    %cst_253 = arith.constant 0.000000e+00 : f32
    %188 = vector.broadcast %cst_253 : f32 to vector<16x32xf32>
    %189 = arith.cmpf ogt, %187, %188 : vector<16x32xf32>
    %cst_254 = arith.constant 1.000000e-01 : f32
    %190 = vector.broadcast %cst_254 : f32 to vector<16x32xf32>
    %191 = arith.mulf %190, %187 : vector<16x32xf32>
    %192 = arith.select %189, %187, %191 : vector<16x32xi1>, vector<16x32xf32>
    %193 = vector.extract_strided_slice %184 {offsets = [1, 0], sizes = [1, 32], strides = [1, 1]} : vector<3x64xf32> to vector<1x32xf32>
    %194 = vector.broadcast %193 : vector<1x32xf32> to vector<16x32xf32>
    %195 = arith.mulf %192, %194 : vector<16x32xf32>
    %196 = vector.extract_strided_slice %184 {offsets = [2, 0], sizes = [1, 32], strides = [1, 1]} : vector<3x64xf32> to vector<1x32xf32>
    %197 = vector.broadcast %196 : vector<1x32xf32> to vector<16x32xf32>
    %198 = arith.addf %195, %197 : vector<16x32xf32>
    %199 = vector.shape_cast %198 : vector<16x32xf32> to vector<4x4x32xf32>
    %cst_255 = arith.constant 0.000000e+00 : f32
    %200 = vector.broadcast %cst_255 : f32 to vector<1x6x32xf32>
    %c0_256 = arith.constant 0 : index
    %c0_257 = arith.constant 0 : index
    %c0_258 = arith.constant 0 : index
    %201 = vector.load %arg14[%c0_256, %c0_257, %c0_258] : memref<6x6x32xf32, #tpu.memory_space<vmem>>, vector<1x6x32xf32>
    tpu.vector_store %arg14[%c0_256, %c0_257, %c0_258], %200 {strides = array<i32>} : memref<6x6x32xf32, #tpu.memory_space<vmem>>, vector<1x6x32xf32>,
    %c5_259 = arith.constant 5 : index
    %c0_260 = arith.constant 0 : index
    %c0_261 = arith.constant 0 : index
    %202 = vector.load %arg14[%c5_259, %c0_260, %c0_261] : memref<6x6x32xf32, #tpu.memory_space<vmem>>, vector<1x6x32xf32>
    tpu.vector_store %arg14[%c5_259, %c0_260, %c0_261], %200 {strides = array<i32>} : memref<6x6x32xf32, #tpu.memory_space<vmem>>, vector<1x6x32xf32>,
    %cst_262 = arith.constant 0.000000e+00 : f32
    %203 = vector.broadcast %cst_262 : f32 to vector<4x1x32xf32>
    %c1_263 = arith.constant 1 : index
    %c0_264 = arith.constant 0 : index
    %c0_265 = arith.constant 0 : index
    %204 = vector.load %arg14[%c1_263, %c0_264, %c0_265] : memref<6x6x32xf32, #tpu.memory_space<vmem>>, vector<4x1x32xf32>
    tpu.vector_store %arg14[%c1_263, %c0_264, %c0_265], %203 {strides = array<i32>} : memref<6x6x32xf32, #tpu.memory_space<vmem>>, vector<4x1x32xf32>,
    %c1_266 = arith.constant 1 : index
    %c5_267 = arith.constant 5 : index
    %c0_268 = arith.constant 0 : index
    %205 = vector.load %arg14[%c1_266, %c5_267, %c0_268] : memref<6x6x32xf32, #tpu.memory_space<vmem>>, vector<4x1x32xf32>
    tpu.vector_store %arg14[%c1_266, %c5_267, %c0_268], %203 {strides = array<i32>} : memref<6x6x32xf32, #tpu.memory_space<vmem>>, vector<4x1x32xf32>,
    %c1_269 = arith.constant 1 : index
    %c1_270 = arith.constant 1 : index
    %c0_271 = arith.constant 0 : index
    %206 = vector.load %arg14[%c1_269, %c1_270, %c0_271] : memref<6x6x32xf32, #tpu.memory_space<vmem>>, vector<4x4x32xf32>
    tpu.vector_store %arg14[%c1_269, %c1_270, %c0_271], %199 {strides = array<i32>} : memref<6x6x32xf32, #tpu.memory_space<vmem>>, vector<4x4x32xf32>,
    %c0_272 = arith.constant 0 : index
    %c0_273 = arith.constant 0 : index
    %c0_274 = arith.constant 0 : index
    %207 = vector.load %arg14[%c0_272, %c0_273, %c0_274] : memref<6x6x32xf32, #tpu.memory_space<vmem>>, vector<4x4x32xf32>
    %c0_275 = arith.constant 0 : index
    %c1_276 = arith.constant 1 : index
    %c0_277 = arith.constant 0 : index
    %208 = vector.load %arg14[%c0_275, %c1_276, %c0_277] : memref<6x6x32xf32, #tpu.memory_space<vmem>>, vector<4x4x32xf32>
    %c0_278 = arith.constant 0 : index
    %c2_279 = arith.constant 2 : index
    %c0_280 = arith.constant 0 : index
    %209 = vector.load %arg14[%c0_278, %c2_279, %c0_280] : memref<6x6x32xf32, #tpu.memory_space<vmem>>, vector<4x4x32xf32>
    %c1_281 = arith.constant 1 : index
    %c0_282 = arith.constant 0 : index
    %c0_283 = arith.constant 0 : index
    %210 = vector.load %arg14[%c1_281, %c0_282, %c0_283] : memref<6x6x32xf32, #tpu.memory_space<vmem>>, vector<4x4x32xf32>
    %c1_284 = arith.constant 1 : index
    %c1_285 = arith.constant 1 : index
    %c0_286 = arith.constant 0 : index
    %211 = vector.load %arg14[%c1_284, %c1_285, %c0_286] : memref<6x6x32xf32, #tpu.memory_space<vmem>>, vector<4x4x32xf32>
    %c1_287 = arith.constant 1 : index
    %c2_288 = arith.constant 2 : index
    %c0_289 = arith.constant 0 : index
    %212 = vector.load %arg14[%c1_287, %c2_288, %c0_289] : memref<6x6x32xf32, #tpu.memory_space<vmem>>, vector<4x4x32xf32>
    %c2_290 = arith.constant 2 : index
    %c0_291 = arith.constant 0 : index
    %c0_292 = arith.constant 0 : index
    %213 = vector.load %arg14[%c2_290, %c0_291, %c0_292] : memref<6x6x32xf32, #tpu.memory_space<vmem>>, vector<4x4x32xf32>
    %c2_293 = arith.constant 2 : index
    %c1_294 = arith.constant 1 : index
    %c0_295 = arith.constant 0 : index
    %214 = vector.load %arg14[%c2_293, %c1_294, %c0_295] : memref<6x6x32xf32, #tpu.memory_space<vmem>>, vector<4x4x32xf32>
    %c2_296 = arith.constant 2 : index
    %c2_297 = arith.constant 2 : index
    %c0_298 = arith.constant 0 : index
    %215 = vector.load %arg14[%c2_296, %c2_297, %c0_298] : memref<6x6x32xf32, #tpu.memory_space<vmem>>, vector<4x4x32xf32>
    %216 = tpu.concatenate %207, %208, %209, %210, %211, %212, %213, %214, %215 in 2 : vector<4x4x32xf32>, vector<4x4x32xf32>, vector<4x4x32xf32>, vector<4x4x32xf32>, vector<4x4x32xf32>, vector<4x4x32xf32>, vector<4x4x32xf32>, vector<4x4x32xf32>, vector<4x4x32xf32> -> vector<4x4x288xf32>
    %217 = vector.shape_cast %216 : vector<4x4x288xf32> to vector<16x288xf32>
    %c480 = arith.constant 480 : index
    %c0_299 = arith.constant 0 : index
    %218 = vector.load %arg2[%c480, %c0_299] : memref<1632x64xbf16, #tpu.memory_space<vmem>>, vector<288x32xbf16>
    %219 = arith.truncf %217 : vector<16x288xf32> to vector<16x288xbf16>
    %cst_300 = arith.constant dense<0.000000e+00> : vector<16x32xf32>
    %220 = tpu.matmul %219, %218, %cst_300 {dimension_numbers = #tpu.dot_dimension_numbers<[1], [0], [0], [1], [0, 0, 1, 1], [], []>} : vector<16x288xbf16>, vector<288x32xbf16>, vector<16x32xf32> -> vector<16x32xf32>
    %c5_301 = arith.constant 5 : index
    %c0_302 = arith.constant 0 : index
    %c0_303 = arith.constant 0 : index
    %221 = vector.load %arg3[%c5_301, %c0_302, %c0_303] : memref<8x3x64xf32, #tpu.memory_space<vmem>>, vector<1x3x64xf32>
    %222 = vector.shape_cast %221 : vector<1x3x64xf32> to vector<3x64xf32>
    %223 = vector.extract_strided_slice %222 {offsets = [0, 0], sizes = [1, 32], strides = [1, 1]} : vector<3x64xf32> to vector<1x32xf32>
    %224 = vector.broadcast %223 : vector<1x32xf32> to vector<16x32xf32>
    %225 = arith.addf %220, %224 : vector<16x32xf32>
    %cst_304 = arith.constant 0.000000e+00 : f32
    %226 = vector.broadcast %cst_304 : f32 to vector<16x32xf32>
    %227 = arith.cmpf ogt, %225, %226 : vector<16x32xf32>
    %cst_305 = arith.constant 1.000000e-01 : f32
    %228 = vector.broadcast %cst_305 : f32 to vector<16x32xf32>
    %229 = arith.mulf %228, %225 : vector<16x32xf32>
    %230 = arith.select %227, %225, %229 : vector<16x32xi1>, vector<16x32xf32>
    %231 = vector.extract_strided_slice %222 {offsets = [1, 0], sizes = [1, 32], strides = [1, 1]} : vector<3x64xf32> to vector<1x32xf32>
    %232 = vector.broadcast %231 : vector<1x32xf32> to vector<16x32xf32>
    %233 = arith.mulf %230, %232 : vector<16x32xf32>
    %234 = vector.extract_strided_slice %222 {offsets = [2, 0], sizes = [1, 32], strides = [1, 1]} : vector<3x64xf32> to vector<1x32xf32>
    %235 = vector.broadcast %234 : vector<1x32xf32> to vector<16x32xf32>
    %236 = arith.addf %233, %235 : vector<16x32xf32>
    %237 = vector.shape_cast %236 : vector<16x32xf32> to vector<4x4x32xf32>
    %238 = vector.shape_cast %237 : vector<4x4x32xf32> to vector<2x2x4x32xf32>
    %cst_306 = arith.constant dense<0xFF800000> : vector<2x4x32xf32>
    %239 = vector.multi_reduction <maximumf>, %238, %cst_306 [1] : vector<2x2x4x32xf32> to vector<2x4x32xf32>
    %240 = vector.shape_cast %239 : vector<2x4x32xf32> to vector<2x2x2x32xf32>
    %cst_307 = arith.constant dense<0xFF800000> : vector<2x2x32xf32>
    %241 = vector.multi_reduction <maximumf>, %240, %cst_307 [2] : vector<2x2x2x32xf32> to vector<2x2x32xf32>
    %cst_308 = arith.constant 0.000000e+00 : f32
    %242 = vector.broadcast %cst_308 : f32 to vector<1x4x32xf32>
    %c0_309 = arith.constant 0 : index
    %c0_310 = arith.constant 0 : index
    %c0_311 = arith.constant 0 : index
    %243 = vector.load %arg15[%c0_309, %c0_310, %c0_311] : memref<4x4x32xf32, #tpu.memory_space<vmem>>, vector<1x4x32xf32>
    tpu.vector_store %arg15[%c0_309, %c0_310, %c0_311], %242 {strides = array<i32>} : memref<4x4x32xf32, #tpu.memory_space<vmem>>, vector<1x4x32xf32>,
    %c3_312 = arith.constant 3 : index
    %c0_313 = arith.constant 0 : index
    %c0_314 = arith.constant 0 : index
    %244 = vector.load %arg15[%c3_312, %c0_313, %c0_314] : memref<4x4x32xf32, #tpu.memory_space<vmem>>, vector<1x4x32xf32>
    tpu.vector_store %arg15[%c3_312, %c0_313, %c0_314], %242 {strides = array<i32>} : memref<4x4x32xf32, #tpu.memory_space<vmem>>, vector<1x4x32xf32>,
    %cst_315 = arith.constant 0.000000e+00 : f32
    %245 = vector.broadcast %cst_315 : f32 to vector<2x1x32xf32>
    %c1_316 = arith.constant 1 : index
    %c0_317 = arith.constant 0 : index
    %c0_318 = arith.constant 0 : index
    %246 = vector.load %arg15[%c1_316, %c0_317, %c0_318] : memref<4x4x32xf32, #tpu.memory_space<vmem>>, vector<2x1x32xf32>
    tpu.vector_store %arg15[%c1_316, %c0_317, %c0_318], %245 {strides = array<i32>} : memref<4x4x32xf32, #tpu.memory_space<vmem>>, vector<2x1x32xf32>,
    %c1_319 = arith.constant 1 : index
    %c3_320 = arith.constant 3 : index
    %c0_321 = arith.constant 0 : index
    %247 = vector.load %arg15[%c1_319, %c3_320, %c0_321] : memref<4x4x32xf32, #tpu.memory_space<vmem>>, vector<2x1x32xf32>
    tpu.vector_store %arg15[%c1_319, %c3_320, %c0_321], %245 {strides = array<i32>} : memref<4x4x32xf32, #tpu.memory_space<vmem>>, vector<2x1x32xf32>,
    %c1_322 = arith.constant 1 : index
    %c1_323 = arith.constant 1 : index
    %c0_324 = arith.constant 0 : index
    %248 = vector.load %arg15[%c1_322, %c1_323, %c0_324] : memref<4x4x32xf32, #tpu.memory_space<vmem>>, vector<2x2x32xf32>
    tpu.vector_store %arg15[%c1_322, %c1_323, %c0_324], %241 {strides = array<i32>} : memref<4x4x32xf32, #tpu.memory_space<vmem>>, vector<2x2x32xf32>,
    %c0_325 = arith.constant 0 : index
    %c0_326 = arith.constant 0 : index
    %c0_327 = arith.constant 0 : index
    %249 = vector.load %arg15[%c0_325, %c0_326, %c0_327] : memref<4x4x32xf32, #tpu.memory_space<vmem>>, vector<2x2x32xf32>
    %c0_328 = arith.constant 0 : index
    %c1_329 = arith.constant 1 : index
    %c0_330 = arith.constant 0 : index
    %250 = vector.load %arg15[%c0_328, %c1_329, %c0_330] : memref<4x4x32xf32, #tpu.memory_space<vmem>>, vector<2x2x32xf32>
    %c0_331 = arith.constant 0 : index
    %c2_332 = arith.constant 2 : index
    %c0_333 = arith.constant 0 : index
    %251 = vector.load %arg15[%c0_331, %c2_332, %c0_333] : memref<4x4x32xf32, #tpu.memory_space<vmem>>, vector<2x2x32xf32>
    %c1_334 = arith.constant 1 : index
    %c0_335 = arith.constant 0 : index
    %c0_336 = arith.constant 0 : index
    %252 = vector.load %arg15[%c1_334, %c0_335, %c0_336] : memref<4x4x32xf32, #tpu.memory_space<vmem>>, vector<2x2x32xf32>
    %c1_337 = arith.constant 1 : index
    %c1_338 = arith.constant 1 : index
    %c0_339 = arith.constant 0 : index
    %253 = vector.load %arg15[%c1_337, %c1_338, %c0_339] : memref<4x4x32xf32, #tpu.memory_space<vmem>>, vector<2x2x32xf32>
    %c1_340 = arith.constant 1 : index
    %c2_341 = arith.constant 2 : index
    %c0_342 = arith.constant 0 : index
    %254 = vector.load %arg15[%c1_340, %c2_341, %c0_342] : memref<4x4x32xf32, #tpu.memory_space<vmem>>, vector<2x2x32xf32>
    %c2_343 = arith.constant 2 : index
    %c0_344 = arith.constant 0 : index
    %c0_345 = arith.constant 0 : index
    %255 = vector.load %arg15[%c2_343, %c0_344, %c0_345] : memref<4x4x32xf32, #tpu.memory_space<vmem>>, vector<2x2x32xf32>
    %c2_346 = arith.constant 2 : index
    %c1_347 = arith.constant 1 : index
    %c0_348 = arith.constant 0 : index
    %256 = vector.load %arg15[%c2_346, %c1_347, %c0_348] : memref<4x4x32xf32, #tpu.memory_space<vmem>>, vector<2x2x32xf32>
    %c2_349 = arith.constant 2 : index
    %c2_350 = arith.constant 2 : index
    %c0_351 = arith.constant 0 : index
    %257 = vector.load %arg15[%c2_349, %c2_350, %c0_351] : memref<4x4x32xf32, #tpu.memory_space<vmem>>, vector<2x2x32xf32>
    %258 = tpu.concatenate %249, %250, %251, %252, %253, %254, %255, %256, %257 in 2 : vector<2x2x32xf32>, vector<2x2x32xf32>, vector<2x2x32xf32>, vector<2x2x32xf32>, vector<2x2x32xf32>, vector<2x2x32xf32>, vector<2x2x32xf32>, vector<2x2x32xf32>, vector<2x2x32xf32> -> vector<2x2x288xf32>
    %259 = vector.shape_cast %258 : vector<2x2x288xf32> to vector<4x288xf32>
    %c768 = arith.constant 768 : index
    %c0_352 = arith.constant 0 : index
    %260 = vector.load %arg2[%c768, %c0_352] : memref<1632x64xbf16, #tpu.memory_space<vmem>>, vector<288x64xbf16>
    %261 = arith.truncf %259 : vector<4x288xf32> to vector<4x288xbf16>
    %cst_353 = arith.constant dense<0.000000e+00> : vector<4x64xf32>
    %262 = tpu.matmul %261, %260, %cst_353 {dimension_numbers = #tpu.dot_dimension_numbers<[1], [0], [0], [1], [0, 0, 1, 1], [], []>} : vector<4x288xbf16>, vector<288x64xbf16>, vector<4x64xf32> -> vector<4x64xf32>
    %c6 = arith.constant 6 : index
    %c0_354 = arith.constant 0 : index
    %c0_355 = arith.constant 0 : index
    %263 = vector.load %arg3[%c6, %c0_354, %c0_355] : memref<8x3x64xf32, #tpu.memory_space<vmem>>, vector<1x3x64xf32>
    %264 = vector.shape_cast %263 : vector<1x3x64xf32> to vector<3x64xf32>
    %265 = vector.extract_strided_slice %264 {offsets = [0, 0], sizes = [1, 64], strides = [1, 1]} : vector<3x64xf32> to vector<1x64xf32>
    %266 = vector.broadcast %265 : vector<1x64xf32> to vector<4x64xf32>
    %267 = arith.addf %262, %266 : vector<4x64xf32>
    %cst_356 = arith.constant 0.000000e+00 : f32
    %268 = vector.broadcast %cst_356 : f32 to vector<4x64xf32>
    %269 = arith.cmpf ogt, %267, %268 : vector<4x64xf32>
    %cst_357 = arith.constant 1.000000e-01 : f32
    %270 = vector.broadcast %cst_357 : f32 to vector<4x64xf32>
    %271 = arith.mulf %270, %267 : vector<4x64xf32>
    %272 = arith.select %269, %267, %271 : vector<4x64xi1>, vector<4x64xf32>
    %273 = vector.extract_strided_slice %264 {offsets = [1, 0], sizes = [1, 64], strides = [1, 1]} : vector<3x64xf32> to vector<1x64xf32>
    %274 = vector.broadcast %273 : vector<1x64xf32> to vector<4x64xf32>
    %275 = arith.mulf %272, %274 : vector<4x64xf32>
    %276 = vector.extract_strided_slice %264 {offsets = [2, 0], sizes = [1, 64], strides = [1, 1]} : vector<3x64xf32> to vector<1x64xf32>
    %277 = vector.broadcast %276 : vector<1x64xf32> to vector<4x64xf32>
    %278 = arith.addf %275, %277 : vector<4x64xf32>
    %279 = vector.shape_cast %278 : vector<4x64xf32> to vector<2x2x64xf32>
    %cst_358 = arith.constant 0.000000e+00 : f32
    %280 = vector.broadcast %cst_358 : f32 to vector<1x4x64xf32>
    %c0_359 = arith.constant 0 : index
    %c0_360 = arith.constant 0 : index
    %c0_361 = arith.constant 0 : index
    %281 = vector.load %arg16[%c0_359, %c0_360, %c0_361] : memref<4x4x64xf32, #tpu.memory_space<vmem>>, vector<1x4x64xf32>
    tpu.vector_store %arg16[%c0_359, %c0_360, %c0_361], %280 {strides = array<i32>} : memref<4x4x64xf32, #tpu.memory_space<vmem>>, vector<1x4x64xf32>,
    %c3_362 = arith.constant 3 : index
    %c0_363 = arith.constant 0 : index
    %c0_364 = arith.constant 0 : index
    %282 = vector.load %arg16[%c3_362, %c0_363, %c0_364] : memref<4x4x64xf32, #tpu.memory_space<vmem>>, vector<1x4x64xf32>
    tpu.vector_store %arg16[%c3_362, %c0_363, %c0_364], %280 {strides = array<i32>} : memref<4x4x64xf32, #tpu.memory_space<vmem>>, vector<1x4x64xf32>,
    %cst_365 = arith.constant 0.000000e+00 : f32
    %283 = vector.broadcast %cst_365 : f32 to vector<2x1x64xf32>
    %c1_366 = arith.constant 1 : index
    %c0_367 = arith.constant 0 : index
    %c0_368 = arith.constant 0 : index
    %284 = vector.load %arg16[%c1_366, %c0_367, %c0_368] : memref<4x4x64xf32, #tpu.memory_space<vmem>>, vector<2x1x64xf32>
    tpu.vector_store %arg16[%c1_366, %c0_367, %c0_368], %283 {strides = array<i32>} : memref<4x4x64xf32, #tpu.memory_space<vmem>>, vector<2x1x64xf32>,
    %c1_369 = arith.constant 1 : index
    %c3_370 = arith.constant 3 : index
    %c0_371 = arith.constant 0 : index
    %285 = vector.load %arg16[%c1_369, %c3_370, %c0_371] : memref<4x4x64xf32, #tpu.memory_space<vmem>>, vector<2x1x64xf32>
    tpu.vector_store %arg16[%c1_369, %c3_370, %c0_371], %283 {strides = array<i32>} : memref<4x4x64xf32, #tpu.memory_space<vmem>>, vector<2x1x64xf32>,
    %c1_372 = arith.constant 1 : index
    %c1_373 = arith.constant 1 : index
    %c0_374 = arith.constant 0 : index
    %286 = vector.load %arg16[%c1_372, %c1_373, %c0_374] : memref<4x4x64xf32, #tpu.memory_space<vmem>>, vector<2x2x64xf32>
    tpu.vector_store %arg16[%c1_372, %c1_373, %c0_374], %279 {strides = array<i32>} : memref<4x4x64xf32, #tpu.memory_space<vmem>>, vector<2x2x64xf32>,
    %c0_375 = arith.constant 0 : index
    %c0_376 = arith.constant 0 : index
    %c0_377 = arith.constant 0 : index
    %287 = vector.load %arg16[%c0_375, %c0_376, %c0_377] : memref<4x4x64xf32, #tpu.memory_space<vmem>>, vector<2x2x64xf32>
    %c0_378 = arith.constant 0 : index
    %c1_379 = arith.constant 1 : index
    %c0_380 = arith.constant 0 : index
    %288 = vector.load %arg16[%c0_378, %c1_379, %c0_380] : memref<4x4x64xf32, #tpu.memory_space<vmem>>, vector<2x2x64xf32>
    %c0_381 = arith.constant 0 : index
    %c2_382 = arith.constant 2 : index
    %c0_383 = arith.constant 0 : index
    %289 = vector.load %arg16[%c0_381, %c2_382, %c0_383] : memref<4x4x64xf32, #tpu.memory_space<vmem>>, vector<2x2x64xf32>
    %c1_384 = arith.constant 1 : index
    %c0_385 = arith.constant 0 : index
    %c0_386 = arith.constant 0 : index
    %290 = vector.load %arg16[%c1_384, %c0_385, %c0_386] : memref<4x4x64xf32, #tpu.memory_space<vmem>>, vector<2x2x64xf32>
    %c1_387 = arith.constant 1 : index
    %c1_388 = arith.constant 1 : index
    %c0_389 = arith.constant 0 : index
    %291 = vector.load %arg16[%c1_387, %c1_388, %c0_389] : memref<4x4x64xf32, #tpu.memory_space<vmem>>, vector<2x2x64xf32>
    %c1_390 = arith.constant 1 : index
    %c2_391 = arith.constant 2 : index
    %c0_392 = arith.constant 0 : index
    %292 = vector.load %arg16[%c1_390, %c2_391, %c0_392] : memref<4x4x64xf32, #tpu.memory_space<vmem>>, vector<2x2x64xf32>
    %c2_393 = arith.constant 2 : index
    %c0_394 = arith.constant 0 : index
    %c0_395 = arith.constant 0 : index
    %293 = vector.load %arg16[%c2_393, %c0_394, %c0_395] : memref<4x4x64xf32, #tpu.memory_space<vmem>>, vector<2x2x64xf32>
    %c2_396 = arith.constant 2 : index
    %c1_397 = arith.constant 1 : index
    %c0_398 = arith.constant 0 : index
    %294 = vector.load %arg16[%c2_396, %c1_397, %c0_398] : memref<4x4x64xf32, #tpu.memory_space<vmem>>, vector<2x2x64xf32>
    %c2_399 = arith.constant 2 : index
    %c2_400 = arith.constant 2 : index
    %c0_401 = arith.constant 0 : index
    %295 = vector.load %arg16[%c2_399, %c2_400, %c0_401] : memref<4x4x64xf32, #tpu.memory_space<vmem>>, vector<2x2x64xf32>
    %296 = tpu.concatenate %287, %288, %289, %290, %291, %292, %293, %294, %295 in 2 : vector<2x2x64xf32>, vector<2x2x64xf32>, vector<2x2x64xf32>, vector<2x2x64xf32>, vector<2x2x64xf32>, vector<2x2x64xf32>, vector<2x2x64xf32>, vector<2x2x64xf32>, vector<2x2x64xf32> -> vector<2x2x576xf32>
    %297 = vector.shape_cast %296 : vector<2x2x576xf32> to vector<4x576xf32>
    %c1056 = arith.constant 1056 : index
    %c0_402 = arith.constant 0 : index
    %298 = vector.load %arg2[%c1056, %c0_402] : memref<1632x64xbf16, #tpu.memory_space<vmem>>, vector<576x64xbf16>
    %299 = arith.truncf %297 : vector<4x576xf32> to vector<4x576xbf16>
    %cst_403 = arith.constant dense<0.000000e+00> : vector<4x64xf32>
    %300 = tpu.matmul %299, %298, %cst_403 {dimension_numbers = #tpu.dot_dimension_numbers<[1], [0], [0], [1], [0, 0, 1, 1], [], []>} : vector<4x576xbf16>, vector<576x64xbf16>, vector<4x64xf32> -> vector<4x64xf32>
    %c7 = arith.constant 7 : index
    %c0_404 = arith.constant 0 : index
    %c0_405 = arith.constant 0 : index
    %301 = vector.load %arg3[%c7, %c0_404, %c0_405] : memref<8x3x64xf32, #tpu.memory_space<vmem>>, vector<1x3x64xf32>
    %302 = vector.shape_cast %301 : vector<1x3x64xf32> to vector<3x64xf32>
    %303 = vector.extract_strided_slice %302 {offsets = [0, 0], sizes = [1, 64], strides = [1, 1]} : vector<3x64xf32> to vector<1x64xf32>
    %304 = vector.broadcast %303 : vector<1x64xf32> to vector<4x64xf32>
    %305 = arith.addf %300, %304 : vector<4x64xf32>
    %cst_406 = arith.constant 0.000000e+00 : f32
    %306 = vector.broadcast %cst_406 : f32 to vector<4x64xf32>
    %307 = arith.cmpf ogt, %305, %306 : vector<4x64xf32>
    %cst_407 = arith.constant 1.000000e-01 : f32
    %308 = vector.broadcast %cst_407 : f32 to vector<4x64xf32>
    %309 = arith.mulf %308, %305 : vector<4x64xf32>
    %310 = arith.select %307, %305, %309 : vector<4x64xi1>, vector<4x64xf32>
    %311 = vector.extract_strided_slice %302 {offsets = [1, 0], sizes = [1, 64], strides = [1, 1]} : vector<3x64xf32> to vector<1x64xf32>
    %312 = vector.broadcast %311 : vector<1x64xf32> to vector<4x64xf32>
    %313 = arith.mulf %310, %312 : vector<4x64xf32>
    %314 = vector.extract_strided_slice %302 {offsets = [2, 0], sizes = [1, 64], strides = [1, 1]} : vector<3x64xf32> to vector<1x64xf32>
    %315 = vector.broadcast %314 : vector<1x64xf32> to vector<4x64xf32>
    %316 = arith.addf %313, %315 : vector<4x64xf32>
    %317 = vector.shape_cast %316 : vector<4x64xf32> to vector<2x2x64xf32>
    %318 = vector.shape_cast %317 : vector<2x2x64xf32> to vector<1x2x2x64xf32>
    %cst_408 = arith.constant dense<0xFF800000> : vector<1x2x64xf32>
    %319 = vector.multi_reduction <maximumf>, %318, %cst_408 [1] : vector<1x2x2x64xf32> to vector<1x2x64xf32>
    %320 = vector.shape_cast %319 : vector<1x2x64xf32> to vector<1x1x2x64xf32>
    %cst_409 = arith.constant dense<0xFF800000> : vector<1x1x64xf32>
    %321 = vector.multi_reduction <maximumf>, %320, %cst_409 [2] : vector<1x1x2x64xf32> to vector<1x1x64xf32>
    %322 = vector.shape_cast %321 : vector<1x1x64xf32> to vector<1x64xf32>
    %cst_410 = arith.constant dense<0.000000e+00> : vector<64xf32>
    %323 = vector.multi_reduction <add>, %322, %cst_410 [0] : vector<1x64xf32> to vector<64xf32>
    %324 = vector.shape_cast %323 : vector<64xf32> to vector<1x64xf32>
    %cst_411 = arith.constant 1.000000e+00 : f32
    %325 = vector.broadcast %cst_411 : f32 to vector<1x64xf32>
    %326 = arith.divf %324, %325 : vector<1x64xf32>
    %327 = arith.truncf %326 : vector<1x64xf32> to vector<1x64xbf16>
    %c0_412 = arith.constant 0 : index
    %c0_413 = arith.constant 0 : index
    %328 = vector.load %arg4[%c0_412, %c0_413] : memref<64x512xbf16, #tpu.memory_space<vmem>>, vector<64x512xbf16>
    %cst_414 = arith.constant dense<0.000000e+00> : vector<1x512xf32>
    %329 = tpu.matmul %327, %328, %cst_414 {dimension_numbers = #tpu.dot_dimension_numbers<[1], [0], [0], [1], [0, 0, 1, 1], [], []>} : vector<1x64xbf16>, vector<64x512xbf16>, vector<1x512xf32> -> vector<1x512xf32>
    %c0_415 = arith.constant 0 : index
    %c0_416 = arith.constant 0 : index
    %330 = vector.load %arg5[%c0_415, %c0_416] : memref<3x512xf32, #tpu.memory_space<vmem>>, vector<1x512xf32>
    %331 = arith.addf %329, %330 : vector<1x512xf32>
    %cst_417 = arith.constant 0.000000e+00 : f32
    %332 = vector.broadcast %cst_417 : f32 to vector<1x512xf32>
    %333 = arith.cmpf ogt, %331, %332 : vector<1x512xf32>
    %cst_418 = arith.constant 1.000000e-01 : f32
    %334 = vector.broadcast %cst_418 : f32 to vector<1x512xf32>
    %335 = arith.mulf %334, %331 : vector<1x512xf32>
    %336 = arith.select %333, %331, %335 : vector<1x512xi1>, vector<1x512xf32>
    %c1_419 = arith.constant 1 : index
    %c0_420 = arith.constant 0 : index
    %337 = vector.load %arg5[%c1_419, %c0_420] : memref<3x512xf32, #tpu.memory_space<vmem>>, vector<1x512xf32>
    %338 = arith.mulf %336, %337 : vector<1x512xf32>
    %c2_421 = arith.constant 2 : index
    %c0_422 = arith.constant 0 : index
    %339 = vector.load %arg5[%c2_421, %c0_422] : memref<3x512xf32, #tpu.memory_space<vmem>>, vector<1x512xf32>
    %340 = arith.addf %338, %339 : vector<1x512xf32>
    %341 = arith.truncf %340 : vector<1x512xf32> to vector<1x512xbf16>
    %c0_423 = arith.constant 0 : index
    %c0_424 = arith.constant 0 : index
    %342 = vector.load %arg6[%c0_423, %c0_424] : memref<512x128xbf16, #tpu.memory_space<vmem>>, vector<512x128xbf16>
    %cst_425 = arith.constant dense<0.000000e+00> : vector<1x128xf32>
    %343 = tpu.matmul %341, %342, %cst_425 {dimension_numbers = #tpu.dot_dimension_numbers<[1], [0], [0], [1], [0, 0, 1, 1], [], []>} : vector<1x512xbf16>, vector<512x128xbf16>, vector<1x128xf32> -> vector<1x128xf32>
    %c0_426 = arith.constant 0 : index
    %c0_427 = arith.constant 0 : index
    %344 = vector.load %arg7[%c0_426, %c0_427] : memref<1x128xf32, #tpu.memory_space<vmem>>, vector<1x128xf32>
    %345 = arith.addf %343, %344 : vector<1x128xf32>
    %c0_428 = arith.constant 0 : index
    %c0_429 = arith.constant 0 : index
    %c0_430 = arith.constant 0 : index
    %346 = vector.load %arg8[%c0_428, %c0_429, %c0_430] : memref<1x1x128xf32, #tpu.memory_space<vmem>>, vector<1x1x128xf32>
    %347 = vector.shape_cast %346 : vector<1x1x128xf32> to vector<1x128xf32>
    %348 = vector.shape_cast %345 : vector<1x128xf32> to vector<1x1x128xf32>
    tpu.vector_store %arg8[%c0_428, %c0_429, %c0_430], %348 {strides = array<i32>} : memref<1x1x128xf32, #tpu.memory_space<vmem>>, vector<1x1x128xf32>,
    return
  }
  func.func @transform_0(%arg0: i32) -> (i32, i32, i32, i32) {
    %c0_i32 = arith.constant 0 : i32
    %c0_i32_0 = arith.constant 0 : i32
    %c0_i32_1 = arith.constant 0 : i32
    %c0_i32_2 = arith.constant 0 : i32
    return %arg0, %c0_i32, %c0_i32_0, %c0_i32_1 : i32, i32, i32, i32
  }
  func.func @transform_1(%arg0: i32) -> (i32, i32) {
    %c0_i32 = arith.constant 0 : i32
    %c0_i32_0 = arith.constant 0 : i32
    %c0_i32_1 = arith.constant 0 : i32
    return %c0_i32, %c0_i32_0 : i32, i32
  }
  func.func @transform_2(%arg0: i32) -> (i32, i32, i32) {
    %c0_i32 = arith.constant 0 : i32
    %c0_i32_0 = arith.constant 0 : i32
    %c0_i32_1 = arith.constant 0 : i32
    %c0_i32_2 = arith.constant 0 : i32
    return %c0_i32, %c0_i32_0, %c0_i32_1 : i32, i32, i32
  }
  func.func @transform_3(%arg0: i32) -> (i32, i32) {
    %c0_i32 = arith.constant 0 : i32
    %c0_i32_0 = arith.constant 0 : i32
    %c0_i32_1 = arith.constant 0 : i32
    return %c0_i32, %c0_i32_0 : i32, i32
  }
  func.func @transform_4(%arg0: i32) -> (i32, i32) {
    %c0_i32 = arith.constant 0 : i32
    %c0_i32_0 = arith.constant 0 : i32
    %c0_i32_1 = arith.constant 0 : i32
    return %c0_i32, %c0_i32_0 : i32, i32
  }
  func.func @transform_5(%arg0: i32) -> (i32, i32) {
    %c0_i32 = arith.constant 0 : i32
    %c0_i32_0 = arith.constant 0 : i32
    %c0_i32_1 = arith.constant 0 : i32
    return %c0_i32, %c0_i32_0 : i32, i32
  }
  func.func @transform_6(%arg0: i32) -> (i32, i32) {
    %c0_i32 = arith.constant 0 : i32
    %c0_i32_0 = arith.constant 0 : i32
    %c0_i32_1 = arith.constant 0 : i32
    return %c0_i32, %c0_i32_0 : i32, i32
  }
  func.func @transform_7(%arg0: i32) -> (i32, i32, i32) {
    %c0_i32 = arith.constant 0 : i32
    %c0_i32_0 = arith.constant 0 : i32
    %c0_i32_1 = arith.constant 0 : i32
    return %arg0, %c0_i32, %c0_i32_0 : i32, i32, i32
  }
}

</mosaic_0001>

<llo_original>
// kernel: tpu_custom_call.1
$region0: #{tpu_custom_call.1}
  #allocation0 [shape = 'u32[]', space=smem, size = 0x4, offset = 0x4, fixed_abs, tag = 'smem constant byte address 0x4 - core index']
  #allocation1 [shape = 'u32[144,128]{1,0:T(1,128)}', space=vmem, size = 0x12000, scoped, tag = 'internal scratch']
  #allocation2 [shape = 'f32[18,18,3]{2,1,0:T(8,128)}', space=vmem, size = 0x36000, scoped, tag = 'scratch operand']
  #allocation3 [shape = 'f32[18,18,8]{2,1,0:T(8,128)}', space=vmem, size = 0x36000, scoped, tag = 'scratch operand']
  #allocation4 [shape = 'f32[10,10,8]{2,1,0:T(8,128)}', space=vmem, size = 0x14000, scoped, tag = 'scratch operand']
  #allocation5 [shape = 'f32[10,10,16]{2,1,0:T(8,128)}', space=vmem, size = 0x14000, scoped, tag = 'scratch operand']
  #allocation6 [shape = 'f32[6,6,16]{2,1,0:T(8,128)}', space=vmem, size = 0x6000, scoped, tag = 'scratch operand']
  #allocation7 [shape = 'f32[6,6,32]{2,1,0:T(8,128)}', space=vmem, size = 0x6000, scoped, tag = 'scratch operand']
  #allocation8 [shape = 'f32[4,4,32]{2,1,0:T(4,128)}', space=vmem, size = 0x2000, scoped, tag = 'scratch operand']
  #allocation9 [shape = 'f32[4,4,64]{2,1,0:T(4,128)}', space=vmem, size = 0x2000, scoped, tag = 'scratch operand']
  %s0 = inlined_call_operand.vmem [shape: f32[2,16,16,3], index: 0, kind: input, shape index: {}]
  %s1 = inlined_call_operand.vmem [shape: bf16[1632,64], index: 1, kind: input, shape index: {}]
  %s2 = inlined_call_operand.vmem [shape: f32[8,3,64], index: 2, kind: input, shape index: {}]
  %s3 = inlined_call_operand.vmem [shape: bf16[64,512], index: 3, kind: input, shape index: {}]
  %s4 = inlined_call_operand.vmem [shape: f32[3,512], index: 4, kind: input, shape index: {}]
  %s5 = inlined_call_operand.vmem [shape: bf16[512,128], index: 5, kind: input, shape index: {}]
  %s6 = inlined_call_operand.vmem [shape: f32[1,128], index: 6, kind: input, shape index: {}]
  %s7 = inlined_call_operand.hbm [shape: f32[2,1,128], index: 7, kind: output, shape index: {}]
  %s8 = sld [smem:[#allocation0]]
  $region61: #{tpu_custom_call.1} parent=0
    _
  %s10 = ssub.s32 1, %s8
  %s11 = scalar_select 0, %s10, %s8
  $region1: #{tpu_custom_call.1} parent=0
    #allocation10 [shape = 'u8[1024]{0}', space=vmem, size = 0x400, scoped, tag = 'output window, operand 0']
    #allocation11 [shape = 's32[2]{0}', space=sflag, size = 0x8, scoped, tag = 'scoped memory for tpu_custom_call.1']
    %12 = vsyncpa [#allocation11], 0
    %s13 = scalar_lea.sflag [#allocation11], 1
    %14 = vsyncpa %s13, 0
    loop: start=0, step=1, limit=4
    $region2: #{tpu_custom_call.1} parent=1 // loop_pre_header
      _
    $region3: #{tpu_custom_call.1} parent=1 // loop_header
      %s16 = sphi 0, %s20
      %p17 = scmp.ge.s32.totalorder %s16, 4
      %s26 = sphi 0, %s28
      %s29 = sphi 0, %s26
      %s30 = sphi 0, %s29
      %s46 = sphi 0, %s30
      %s50 = sphi 0, %s50
      %s52 = sphi 0, %s50
      %s53 = sphi 0, %s52
      %s67 = sphi 0, %s53
      %s71 = sphi 0, %s71
      %s73 = sphi 0, %s71
      %s74 = sphi 0, %s73
      %s88 = sphi 0, %s74
      %s92 = sphi 0, %s92
      %s94 = sphi 0, %s92
      %s95 = sphi 0, %s94
      %s109 = sphi 0, %s95
      %s113 = sphi 0, %s113
      %s115 = sphi 0, %s113
      %s116 = sphi 0, %s115
      %s130 = sphi 0, %s116
      %s134 = sphi 0, %s134
      %s136 = sphi 0, %s134
      %s137 = sphi 0, %s136
      %s151 = sphi 0, %s137
      %s155 = sphi 0, %s155
      %s157 = sphi 0, %s155
      %s158 = sphi 0, %s157
      %s172 = sphi 0, %s158
      %s178 = sphi 0, %s180
      %s181 = sphi 0, %s178
      %s182 = sphi 0, %s181
      %s198 = sphi 0, %s182
    $region4: #{tpu_custom_call.1} parent=1 // loop_header_branch
      %19 = sbr.rel (%p17) target = $region8
    $region5: #{tpu_custom_call.1} parent=1 // loop_body
      %s21 = ssub.s32 %s16, 1
      %s22 = ssub.s32 %s16, 2
      %s23 = sadd.s32 %s16, 1
      %s24 = ssub.s32 %s16, %s23
      %p25 = scmp.eq.s32.totalorder %s24, 0
      %s27 = sadd.s32 %s26, 1
      %s28 = scalar_select %p25, %s26, %s27
      %p31 = pneg %p25
      %p32 = scmp.eq.s32.totalorder %s16, 1
      %p33 = por %p31, %p32
      %p34 = scmp.ne.s32.totalorder %s26, %s29
      %p35 = scmp.eq.s32.totalorder %s16, 0
      %p36 = por %p34, %p35
      %p37 = scmp.ne.s32.totalorder %s26, %s29
      %p38 = scmp.eq.s32.totalorder %s21, 1
      %p39 = por %p37, %p38
      %p40 = scmp.ne.s32.totalorder %s29, %s30
      %p41 = scmp.eq.s32.totalorder %s21, 0
      %p42 = por %p40, %p41
      %p43 = scmp.ne.s32.totalorder %s29, %s30
      %p44 = scmp.eq.s32.totalorder %s22, 1
      %p45 = por %p43, %p44
      %p47 = scmp.ne.s32.totalorder %s30, %s46
      %p48 = scmp.eq.s32.totalorder %s22, 0
      %p49 = por %p47, %p48
      %s51 = sadd.s32 %s50, 1
      %p54 = scmp.eq.s32.totalorder %s16, 1
      %p55 = scmp.ne.s32.totalorder %s50, %s52
      %p56 = scmp.eq.s32.totalorder %s16, 0
      %p57 = por %p55, %p56
      %p58 = scmp.ne.s32.totalorder %s50, %s52
      %p59 = scmp.eq.s32.totalorder %s21, 1
      %p60 = por %p58, %p59
      %p61 = scmp.ne.s32.totalorder %s52, %s53
      %p62 = scmp.eq.s32.totalorder %s21, 0
      %p63 = por %p61, %p62
      %p64 = scmp.ne.s32.totalorder %s52, %s53
      %p65 = scmp.eq.s32.totalorder %s22, 1
      %p66 = por %p64, %p65
      %p68 = scmp.ne.s32.totalorder %s53, %s67
      %p69 = scmp.eq.s32.totalorder %s22, 0
      %p70 = por %p68, %p69
      %s72 = sadd.s32 %s71, 1
      %p75 = scmp.eq.s32.totalorder %s16, 1
      %p76 = scmp.ne.s32.totalorder %s71, %s73
      %p77 = scmp.eq.s32.totalorder %s16, 0
      %p78 = por %p76, %p77
      %p79 = scmp.ne.s32.totalorder %s71, %s73
      %p80 = scmp.eq.s32.totalorder %s21, 1
      %p81 = por %p79, %p80
      %p82 = scmp.ne.s32.totalorder %s73, %s74
      %p83 = scmp.eq.s32.totalorder %s21, 0
      %p84 = por %p82, %p83
      %p85 = scmp.ne.s32.totalorder %s73, %s74
      %p86 = scmp.eq.s32.totalorder %s22, 1
      %p87 = por %p85, %p86
      %p89 = scmp.ne.s32.totalorder %s74, %s88
      %p90 = scmp.eq.s32.totalorder %s22, 0
      %p91 = por %p89, %p90
      %s93 = sadd.s32 %s92, 1
      %p96 = scmp.eq.s32.totalorder %s16, 1
      %p97 = scmp.ne.s32.totalorder %s92, %s94
      %p98 = scmp.eq.s32.totalorder %s16, 0
      %p99 = por %p97, %p98
      %p100 = scmp.ne.s32.totalorder %s92, %s94
      %p101 = scmp.eq.s32.totalorder %s21, 1
      %p102 = por %p100, %p101
      %p103 = scmp.ne.s32.totalorder %s94, %s95
      %p104 = scmp.eq.s32.totalorder %s21, 0
      %p105 = por %p103, %p104
      %p106 = scmp.ne.s32.totalorder %s94, %s95
      %p107 = scmp.eq.s32.totalorder %s22, 1
      %p108 = por %p106, %p107
      %p110 = scmp.ne.s32.totalorder %s95, %s109
      %p111 = scmp.eq.s32.totalorder %s22, 0
      %p112 = por %p110, %p111
      %s114 = sadd.s32 %s113, 1
      %p117 = scmp.eq.s32.totalorder %s16, 1
      %p118 = scmp.ne.s32.totalorder %s113, %s115
      %p119 = scmp.eq.s32.totalorder %s16, 0
      %p120 = por %p118, %p119
      %p121 = scmp.ne.s32.totalorder %s113, %s115
      %p122 = scmp.eq.s32.totalorder %s21, 1
      %p123 = por %p121, %p122
      %p124 = scmp.ne.s32.totalorder %s115, %s116
      %p125 = scmp.eq.s32.totalorder %s21, 0
      %p126 = por %p124, %p125
      %p127 = scmp.ne.s32.totalorder %s115, %s116
      %p128 = scmp.eq.s32.totalorder %s22, 1
      %p129 = por %p127, %p128
      %p131 = scmp.ne.s32.totalorder %s116, %s130
      %p132 = scmp.eq.s32.totalorder %s22, 0
      %p133 = por %p131, %p132
      %s135 = sadd.s32 %s134, 1
      %p138 = scmp.eq.s32.totalorder %s16, 1
      %p139 = scmp.ne.s32.totalorder %s134, %s136
      %p140 = scmp.eq.s32.totalorder %s16, 0
      %p141 = por %p139, %p140
      %p142 = scmp.ne.s32.totalorder %s134, %s136
      %p143 = scmp.eq.s32.totalorder %s21, 1
      %p144 = por %p142, %p143
      %p145 = scmp.ne.s32.totalorder %s136, %s137
      %p146 = scmp.eq.s32.totalorder %s21, 0
      %p147 = por %p145, %p146
      %p148 = scmp.ne.s32.totalorder %s136, %s137
      %p149 = scmp.eq.s32.totalorder %s22, 1
      %p150 = por %p148, %p149
      %p152 = scmp.ne.s32.totalorder %s137, %s151
      %p153 = scmp.eq.s32.totalorder %s22, 0
      %p154 = por %p152, %p153
      %s156 = sadd.s32 %s155, 1
      %p159 = scmp.eq.s32.totalorder %s16, 1
      %p160 = scmp.ne.s32.totalorder %s155, %s157
      %p161 = scmp.eq.s32.totalorder %s16, 0
      %p162 = por %p160, %p161
      %p163 = scmp.ne.s32.totalorder %s155, %s157
      %p164 = scmp.eq.s32.totalorder %s21, 1
      %p165 = por %p163, %p164
      %p166 = scmp.ne.s32.totalorder %s157, %s158
      %p167 = scmp.eq.s32.totalorder %s21, 0
      %p168 = por %p166, %p167
      %p169 = scmp.ne.s32.totalorder %s157, %s158
      %p170 = scmp.eq.s32.totalorder %s22, 1
      %p171 = por %p169, %p170
      %p173 = scmp.ne.s32.totalorder %s158, %s172
      %p174 = scmp.eq.s32.totalorder %s22, 0
      %p175 = por %p173, %p174
      %s176 = ssub.s32 %s16, %s23
      %p177 = scmp.eq.s32.totalorder %s176, 0
      %s179 = sadd.s32 %s178, 1
      %s180 = scalar_select %p177, %s178, %s179
      %p183 = pneg %p177
      %p184 = scmp.eq.s32.totalorder %s16, 1
      %p185 = por %p183, %p184
      %p186 = scmp.ne.s32.totalorder %s178, %s181
      %p187 = scmp.eq.s32.totalorder %s16, 0
      %p188 = por %p186, %p187
      %p189 = scmp.ne.s32.totalorder %s178, %s181
      %p190 = scmp.eq.s32.totalorder %s21, 1
      %p191 = por %p189, %p190
      %p192 = scmp.ne.s32.totalorder %s181, %s182
      %p193 = scmp.eq.s32.totalorder %s21, 0
      %p194 = por %p192, %p193
      %p195 = scmp.ne.s32.totalorder %s181, %s182
      %p196 = scmp.eq.s32.totalorder %s22, 1
      %p197 = por %p195, %p196
      %p199 = scmp.ne.s32.totalorder %s182, %s198
      %p200 = scmp.eq.s32.totalorder %s22, 0
      %p201 = por %p199, %p200
      %p202 = scmp.le.s32.totalorder 1, %s16
      %p203 = scmp.lt.s32.totalorder %s16, 3
      %p204 = pnand %p202, %p203
      %p205 = pneg %p204
      // Predicated region
      $region9: #{tpu_custom_call.1} parent=5 // pred_check
        _
      $region10: #{tpu_custom_call.1} parent=5 // pred_check_branch
        %207 = sbr.rel (%p204) target = $region12
      $region11: #{tpu_custom_call.1} parent=5 // pred_region
        %s208 = ssub.s32 %s16, 1
        // Predicated region
        $region13: #{tpu_custom_call.1} parent=11 // pred_check
          %p209 = pneg %p63
        $region14: #{tpu_custom_call.1} parent=11 // pred_check_branch
          %211 = sbr.rel (%p209) target = $region16
        $region15: #{tpu_custom_call.1} parent=11 // pred_region
          _
        $region16: #{tpu_custom_call.1} parent=11 // pred_fallthru
          _
        // Predicated region
        $region17: #{tpu_custom_call.1} parent=11 // pred_check
          %p212 = pneg %p84
        $region18: #{tpu_custom_call.1} parent=11 // pred_check_branch
          %214 = sbr.rel (%p212) target = $region20
        $region19: #{tpu_custom_call.1} parent=11 // pred_region
          _
        $region20: #{tpu_custom_call.1} parent=11 // pred_fallthru
          _
        // Predicated region
        $region21: #{tpu_custom_call.1} parent=11 // pred_check
          %p215 = pneg %p105
        $region22: #{tpu_custom_call.1} parent=11 // pred_check_branch
          %217 = sbr.rel (%p215) target = $region24
        $region23: #{tpu_custom_call.1} parent=11 // pred_region
          _
        $region24: #{tpu_custom_call.1} parent=11 // pred_fallthru
          _
        // Predicated region
        $region25: #{tpu_custom_call.1} parent=11 // pred_check
          %p218 = pneg %p126
        $region26: #{tpu_custom_call.1} parent=11 // pred_check_branch
          %220 = sbr.rel (%p218) target = $region28
        $region27: #{tpu_custom_call.1} parent=11 // pred_region
          _
        $region28: #{tpu_custom_call.1} parent=11 // pred_fallthru
          _
        // Predicated region
        $region29: #{tpu_custom_call.1} parent=11 // pred_check
          %p221 = pneg %p147
        $region30: #{tpu_custom_call.1} parent=11 // pred_check_branch
          %223 = sbr.rel (%p221) target = $region32
        $region31: #{tpu_custom_call.1} parent=11 // pred_region
          _
        $region32: #{tpu_custom_call.1} parent=11 // pred_fallthru
          _
        // Predicated region
        $region33: #{tpu_custom_call.1} parent=11 // pred_check
          %p224 = pneg %p168
        $region34: #{tpu_custom_call.1} parent=11 // pred_check_branch
          %226 = sbr.rel (%p224) target = $region36
        $region35: #{tpu_custom_call.1} parent=11 // pred_region
          _
        $region36: #{tpu_custom_call.1} parent=11 // pred_fallthru
          _
      $region12: #{tpu_custom_call.1} parent=5 // pred_fallthru
        _
      %p227 = scmp.lt.s32.totalorder %s16, 2
      // Predicated region
      $region37: #{tpu_custom_call.1} parent=5 // pred_check
        %p228 = pneg %p227
      $region38: #{tpu_custom_call.1} parent=5 // pred_check_branch
        %230 = sbr.rel (%p228) target = $region40
      $region39: #{tpu_custom_call.1} parent=5 // pred_region
        // Predicated region
        $region41: #{tpu_custom_call.1} parent=39 // pred_check
          %p231 = pneg %p36
        $region42: #{tpu_custom_call.1} parent=39 // pred_check_branch
          %233 = sbr.rel (%p231) target = $region44
        $region43: #{tpu_custom_call.1} parent=39 // pred_region
          %p234 = scmp.lt.s32.totalorder %s16, 1
          %s235 = scalar_select %p234, %s16, 1
          %s236 = smul.addr %s235, 32
          %s237 = smul.addr %s236, 8
          %s238 = scalar_lea.vmem %s0, %s237
        $region44: #{tpu_custom_call.1} parent=39 // pred_fallthru
          _
      $region40: #{tpu_custom_call.1} parent=5 // pred_fallthru
        _
      %p239 = scmp.le.s32.totalorder 1, %s16
      %p240 = scmp.lt.s32.totalorder %s16, 3
      %p241 = pnand %p239, %p240
      %p242 = pneg %p241
      // Predicated region
      $region45: #{tpu_custom_call.1} parent=5 // pred_check
        _
      $region46: #{tpu_custom_call.1} parent=5 // pred_check_branch
        %244 = sbr.rel (%p241) target = $region48
      $region47: #{tpu_custom_call.1} parent=5 // pred_region
        %s245 = ssub.s32 %s16, 1
        %p246 = scmp.lt.s32.totalorder %s21, 1
        %s247 = scalar_select %p246, %s21, 1
        %s248 = smul.addr %s247, 32
        %s249 = smul.addr %s248, 8
        %s250 = scalar_lea.vmem %s0, %s249
        %p251 = pneg %p42
        %p252 = pneg %p39
        %p253 = pneg %p63
        %p254 = pneg %p60
        %p255 = pneg %p84
        %p256 = pneg %p81
        %p257 = pneg %p105
        %p258 = pneg %p102
        %p259 = pneg %p126
        %p260 = pneg %p123
        %p261 = pneg %p147
        %p262 = pneg %p144
        %p263 = pneg %p168
        %p264 = pneg %p165
        %p265 = pneg %p194
        %p266 = pneg %p191
        %s267 = sand.u32 %s181, 1
        %s268 = scalar_lea.sflag [#allocation11], %s267
        %s269 = sand.u32 %s181, 1
        %s270 = scalar_lea.vmem [#allocation10], %s269
        %p271 = scmp.lt.s32.totalorder %s21, 1
        %s272 = scalar_select %p271, %s21, 1
        %s273 = smul.addr %s272, 32
        %s274 = smul.addr %s273, 8
        %s275 = scalar_lea.vmem %s0, %s274
        %v277 = vld [vmem:[%s275] sm:$0xff]
        %v278 = vld [vmem:[%s275 + $0x8] sm:$0xff]
        %v279 = vld [vmem:[%s275 + $0x10] sm:$0xff]
        %v280 = vld [vmem:[%s275 + $0x18] sm:$0xff]
        %v281 = vld [vmem:[%s275 + $0x20] sm:$0xff]
        %v282 = vld [vmem:[%s275 + $0x28] sm:$0xff]
        %v283 = vld [vmem:[%s275 + $0x30] sm:$0xff]
        %v284 = vld [vmem:[%s275 + $0x38] sm:$0xff]
        %v285 = vld [vmem:[%s275 + $0x40] sm:$0xff]
        %v286 = vld [vmem:[%s275 + $0x48] sm:$0xff]
        %v287 = vld [vmem:[%s275 + $0x50] sm:$0xff]
        %v288 = vld [vmem:[%s275 + $0x58] sm:$0xff]
        %v289 = vld [vmem:[%s275 + $0x60] sm:$0xff]
        %v290 = vld [vmem:[%s275 + $0x68] sm:$0xff]
        %v291 = vld [vmem:[%s275 + $0x70] sm:$0xff]
        %v292 = vld [vmem:[%s275 + $0x78] sm:$0xff]
        %v293 = vld [vmem:[%s275 + $0x80] sm:$0xff]
        %v294 = vld [vmem:[%s275 + $0x88] sm:$0xff]
        %v295 = vld [vmem:[%s275 + $0x90] sm:$0xff]
        %v296 = vld [vmem:[%s275 + $0x98] sm:$0xff]
        %v297 = vld [vmem:[%s275 + $0xa0] sm:$0xff]
        %v298 = vld [vmem:[%s275 + $0xa8] sm:$0xff]
        %v299 = vld [vmem:[%s275 + $0xb0] sm:$0xff]
        %v300 = vld [vmem:[%s275 + $0xb8] sm:$0xff]
        %v301 = vld [vmem:[%s275 + $0xc0] sm:$0xff]
        %v302 = vld [vmem:[%s275 + $0xc8] sm:$0xff]
        %v303 = vld [vmem:[%s275 + $0xd0] sm:$0xff]
        %v304 = vld [vmem:[%s275 + $0xd8] sm:$0xff]
        %v305 = vld [vmem:[%s275 + $0xe0] sm:$0xff]
        %v306 = vld [vmem:[%s275 + $0xe8] sm:$0xff]
        %v307 = vld [vmem:[%s275 + $0xf0] sm:$0xff]
        %v308 = vld [vmem:[%s275 + $0xf8] sm:$0xff]
        %vm309 = vcmask 23552
        %310 = vst.msk [vmem:[#allocation2] sm:$0xff] %vm309, 0.0
        %311 = vst.msk [vmem:[#allocation2 + $0x8] sm:$0xff] %vm309, 0.0
        %vm312 = vcmask 17408
        %313 = vst.msk [vmem:[#allocation2 + $0x10] sm:$0x3] %vm312, 0.0
        %s314 = scalar_lea.vmem [#allocation2], 408
        %315 = vst.msk [vmem:[%s314] sm:$0xff] %vm309, 0.0
        %316 = vst.msk [vmem:[%s314 + $0x8] sm:$0xff] %vm309, 0.0
        %317 = vst.msk [vmem:[%s314 + $0x10] sm:$0x3] %vm312, 0.0
        %s318 = scalar_lea.vmem [#allocation2], 24
        %vm319 = vcmask 16384
        %320 = vst.msk [vmem:[%s318] sm:$0x1] %vm319, 0.0
        %321 = vst.msk [vmem:[%s318 + $0x18] sm:$0x1] %vm319, 0.0
        %322 = vst.msk [vmem:[%s318 + $0x30] sm:$0x1] %vm319, 0.0
        %323 = vst.msk [vmem:[%s318 + $0x48] sm:$0x1] %vm319, 0.0
        %324 = vst.msk [vmem:[%s318 + $0x60] sm:$0x1] %vm319, 0.0
        %325 = vst.msk [vmem:[%s318 + $0x78] sm:$0x1] %vm319, 0.0
        %326 = vst.msk [vmem:[%s318 + $0x90] sm:$0x1] %vm319, 0.0
        %327 = vst.msk [vmem:[%s318 + $0xa8] sm:$0x1] %vm319, 0.0
        %328 = vst.msk [vmem:[%s318 + $0xc0] sm:$0x1] %vm319, 0.0
        %329 = vst.msk [vmem:[%s318 + $0xd8] sm:$0x1] %vm319, 0.0
        %330 = vst.msk [vmem:[%s318 + $0xf0] sm:$0x1] %vm319, 0.0
        %331 = vst.msk [vmem:[%s318 + $0x108] sm:$0x1] %vm319, 0.0
        %332 = vst.msk [vmem:[%s318 + $0x120] sm:$0x1] %vm319, 0.0
        %333 = vst.msk [vmem:[%s318 + $0x138] sm:$0x1] %vm319, 0.0
        %334 = vst.msk [vmem:[%s318 + $0x150] sm:$0x1] %vm319, 0.0
        %335 = vst.msk [vmem:[%s318 + $0x168] sm:$0x1] %vm319, 0.0
        %336 = vst.msk [vmem:[%s318 + $0x11] sm:$0x1] %vm319, 0.0
        %337 = vst.msk [vmem:[%s318 + $0x29] sm:$0x1] %vm319, 0.0
        %338 = vst.msk [vmem:[%s318 + $0x41] sm:$0x1] %vm319, 0.0
        %339 = vst.msk [vmem:[%s318 + $0x59] sm:$0x1] %vm319, 0.0
        %340 = vst.msk [vmem:[%s318 + $0x71] sm:$0x1] %vm319, 0.0
        %341 = vst.msk [vmem:[%s318 + $0x89] sm:$0x1] %vm319, 0.0
        %342 = vst.msk [vmem:[%s318 + $0xa1] sm:$0x1] %vm319, 0.0
        %343 = vst.msk [vmem:[%s318 + $0xb9] sm:$0x1] %vm319, 0.0
        %344 = vst.msk [vmem:[%s318 + $0xd1] sm:$0x1] %vm319, 0.0
        %345 = vst.msk [vmem:[%s318 + $0xe9] sm:$0x1] %vm319, 0.0
        %346 = vst.msk [vmem:[%s318 + $0x101] sm:$0x1] %vm319, 0.0
        %347 = vst.msk [vmem:[%s318 + $0x119] sm:$0x1] %vm319, 0.0
        %348 = vst.msk [vmem:[%s318 + $0x131] sm:$0x1] %vm319, 0.0
        %349 = vst.msk [vmem:[%s318 + $0x149] sm:$0x1] %vm319, 0.0
        %350 = vst.msk [vmem:[%s318 + $0x161] sm:$0x1] %vm319, 0.0
        %351 = vst.msk [vmem:[%s318 + $0x179] sm:$0x1] %vm319, 0.0
        %352 = vst.msk [vmem:[%s318 + $0x1] sm:$0xff] %vm309, %v277
        %353 = vst.msk [vmem:[%s318 + $0x9] sm:$0xff] %vm309, %v278
        %354 = vst.msk [vmem:[%s318 + $0x19] sm:$0xff] %vm309, %v279
        %355 = vst.msk [vmem:[%s318 + $0x21] sm:$0xff] %vm309, %v280
        %356 = vst.msk [vmem:[%s318 + $0x31] sm:$0xff] %vm309, %v281
        %357 = vst.msk [vmem:[%s318 + $0x39] sm:$0xff] %vm309, %v282
        %358 = vst.msk [vmem:[%s318 + $0x49] sm:$0xff] %vm309, %v283
        %359 = vst.msk [vmem:[%s318 + $0x51] sm:$0xff] %vm309, %v284
        %360 = vst.msk [vmem:[%s318 + $0x61] sm:$0xff] %vm309, %v285
        %361 = vst.msk [vmem:[%s318 + $0x69] sm:$0xff] %vm309, %v286
        %362 = vst.msk [vmem:[%s318 + $0x79] sm:$0xff] %vm309, %v287
        %363 = vst.msk [vmem:[%s318 + $0x81] sm:$0xff] %vm309, %v288
        %364 = vst.msk [vmem:[%s318 + $0x91] sm:$0xff] %vm309, %v289
        %365 = vst.msk [vmem:[%s318 + $0x99] sm:$0xff] %vm309, %v290
        %366 = vst.msk [vmem:[%s318 + $0xa9] sm:$0xff] %vm309, %v291
        %367 = vst.msk [vmem:[%s318 + $0xb1] sm:$0xff] %vm309, %v292
        %368 = vst.msk [vmem:[%s318 + $0xc1] sm:$0xff] %vm309, %v293
        %369 = vst.msk [vmem:[%s318 + $0xc9] sm:$0xff] %vm309, %v294
        %370 = vst.msk [vmem:[%s318 + $0xd9] sm:$0xff] %vm309, %v295
        %371 = vst.msk [vmem:[%s318 + $0xe1] sm:$0xff] %vm309, %v296
        %372 = vst.msk [vmem:[%s318 + $0xf1] sm:$0xff] %vm309, %v297
        %373 = vst.msk [vmem:[%s318 + $0xf9] sm:$0xff] %vm309, %v298
        %374 = vst.msk [vmem:[%s318 + $0x109] sm:$0xff] %vm309, %v299
        %375 = vst.msk [vmem:[%s318 + $0x111] sm:$0xff] %vm309, %v300
        %376 = vst.msk [vmem:[%s318 + $0x121] sm:$0xff] %vm309, %v301
        %377 = vst.msk [vmem:[%s318 + $0x129] sm:$0xff] %vm309, %v302
        %378 = vst.msk [vmem:[%s318 + $0x139] sm:$0xff] %vm309, %v303
        %379 = vst.msk [vmem:[%s318 + $0x141] sm:$0xff] %vm309, %v304
        %380 = vst.msk [vmem:[%s318 + $0x151] sm:$0xff] %vm309, %v305
        %381 = vst.msk [vmem:[%s318 + $0x159] sm:$0xff] %vm309, %v306
        %382 = vst.msk [vmem:[%s318 + $0x169] sm:$0xff] %vm309, %v307
        %383 = vst.msk [vmem:[%s318 + $0x171] sm:$0xff] %vm309, %v308
        %v384 = vld [vmem:[#allocation2] sm:$0xff]
        %v385 = vld [vmem:[#allocation2 + $0x8] sm:$0xff]
        %v386 = vld [vmem:[#allocation2 + $0x18] sm:$0xff]
        %v387 = vld [vmem:[#allocation2 + $0x20] sm:$0xff]
        %v388 = vld [vmem:[#allocation2 + $0x30] sm:$0xff]
        %v389 = vld [vmem:[#allocation2 + $0x38] sm:$0xff]
        %v390 = vld [vmem:[#allocation2 + $0x48] sm:$0xff]
        %v391 = vld [vmem:[#allocation2 + $0x50] sm:$0xff]
        %v392 = vld [vmem:[#allocation2 + $0x60] sm:$0xff]
        %v393 = vld [vmem:[#allocation2 + $0x68] sm:$0xff]
        %v394 = vld [vmem:[#allocation2 + $0x78] sm:$0xff]
        %v395 = vld [vmem:[#allocation2 + $0x80] sm:$0xff]
        %v396 = vld [vmem:[#allocation2 + $0x90] sm:$0xff]
        %v397 = vld [vmem:[#allocation2 + $0x98] sm:$0xff]
        %v398 = vld [vmem:[#allocation2 + $0xa8] sm:$0xff]
        %v399 = vld [vmem:[#allocation2 + $0xb0] sm:$0xff]
        %v400 = vld [vmem:[#allocation2 + $0xc0] sm:$0xff]
        %v401 = vld [vmem:[#allocation2 + $0xc8] sm:$0xff]
        %v402 = vld [vmem:[#allocation2 + $0xd8] sm:$0xff]
        %v403 = vld [vmem:[#allocation2 + $0xe0] sm:$0xff]
        %v404 = vld [vmem:[#allocation2 + $0xf0] sm:$0xff]
        %v405 = vld [vmem:[#allocation2 + $0xf8] sm:$0xff]
        %v406 = vld [vmem:[#allocation2 + $0x108] sm:$0xff]
        %v407 = vld [vmem:[#allocation2 + $0x110] sm:$0xff]
        %v408 = vld [vmem:[#allocation2 + $0x120] sm:$0xff]
        %v409 = vld [vmem:[#allocation2 + $0x128] sm:$0xff]
        %v410 = vld [vmem:[#allocation2 + $0x138] sm:$0xff]
        %v411 = vld [vmem:[#allocation2 + $0x140] sm:$0xff]
        %v412 = vld [vmem:[#allocation2 + $0x150] sm:$0xff]
        %v413 = vld [vmem:[#allocation2 + $0x158] sm:$0xff]
        %v414 = vld [vmem:[#allocation2 + $0x168] sm:$0xff]
        %v415 = vld [vmem:[#allocation2 + $0x170] sm:$0xff]
        %v416 = vld [vmem:[#allocation2 + $0x1] sm:$0xff]
        %v417 = vld [vmem:[#allocation2 + $0x9] sm:$0xff]
        %v418 = vld [vmem:[#allocation2 + $0x19] sm:$0xff]
        %v419 = vld [vmem:[#allocation2 + $0x21] sm:$0xff]
        %v420 = vld [vmem:[#allocation2 + $0x31] sm:$0xff]
        %v421 = vld [vmem:[#allocation2 + $0x39] sm:$0xff]
        %v422 = vld [vmem:[#allocation2 + $0x49] sm:$0xff]
        %v423 = vld [vmem:[#allocation2 + $0x51] sm:$0xff]
        %v424 = vld [vmem:[#allocation2 + $0x61] sm:$0xff]
        %v425 = vld [vmem:[#allocation2 + $0x69] sm:$0xff]
        %v426 = vld [vmem:[#allocation2 + $0x79] sm:$0xff]
        %v427 = vld [vmem:[#allocation2 + $0x81] sm:$0xff]
        %v428 = vld [vmem:[#allocation2 + $0x91] sm:$0xff]
        %v429 = vld [vmem:[#allocation2 + $0x99] sm:$0xff]
        %v430 = vld [vmem:[#allocation2 + $0xa9] sm:$0xff]
        %v431 = vld [vmem:[#allocation2 + $0xb1] sm:$0xff]
        %v432 = vld [vmem:[#allocation2 + $0xc1] sm:$0xff]
        %v433 = vld [vmem:[#allocation2 + $0xc9] sm:$0xff]
        %v434 = vld [vmem:[#allocation2 + $0xd9] sm:$0xff]
        %v435 = vld [vmem:[#allocation2 + $0xe1] sm:$0xff]
        %v436 = vld [vmem:[#allocation2 + $0xf1] sm:$0xff]
        %v437 = vld [vmem:[#allocation2 + $0xf9] sm:$0xff]
        %v438 = vld [vmem:[#allocation2 + $0x109] sm:$0xff]
        %v439 = vld [vmem:[#allocation2 + $0x111] sm:$0xff]
        %v440 = vld [vmem:[#allocation2 + $0x121] sm:$0xff]
        %v441 = vld [vmem:[#allocation2 + $0x129] sm:$0xff]
        %v442 = vld [vmem:[#allocation2 + $0x139] sm:$0xff]
        %v443 = vld [vmem:[#allocation2 + $0x141] sm:$0xff]
        %v444 = vld [vmem:[#allocation2 + $0x151] sm:$0xff]
        %v445 = vld [vmem:[#allocation2 + $0x159] sm:$0xff]
        %v446 = vld [vmem:[#allocation2 + $0x169] sm:$0xff]
        %v447 = vld [vmem:[#allocation2 + $0x171] sm:$0xff]
        %v448 = vld [vmem:[#allocation2 + $0x2] sm:$0xff]
        %v449 = vld [vmem:[#allocation2 + $0xa] sm:$0xff]
        %v450 = vld [vmem:[#allocation2 + $0x1a] sm:$0xff]
        %v451 = vld [vmem:[#allocation2 + $0x22] sm:$0xff]
        %v452 = vld [vmem:[#allocation2 + $0x32] sm:$0xff]
        %v453 = vld [vmem:[#allocation2 + $0x3a] sm:$0xff]
        %v454 = vld [vmem:[#allocation2 + $0x4a] sm:$0xff]
        %v455 = vld [vmem:[#allocation2 + $0x52] sm:$0xff]
        %v456 = vld [vmem:[#allocation2 + $0x62] sm:$0xff]
        %v457 = vld [vmem:[#allocation2 + $0x6a] sm:$0xff]
        %v458 = vld [vmem:[#allocation2 + $0x7a] sm:$0xff]
        %v459 = vld [vmem:[#allocation2 + $0x82] sm:$0xff]
        %v460 = vld [vmem:[#allocation2 + $0x92] sm:$0xff]
        %v461 = vld [vmem:[#allocation2 + $0x9a] sm:$0xff]
        %v462 = vld [vmem:[#allocation2 + $0xaa] sm:$0xff]
        %v463 = vld [vmem:[#allocation2 + $0xb2] sm:$0xff]
        %v464 = vld [vmem:[#allocation2 + $0xc2] sm:$0xff]
        %v465 = vld [vmem:[#allocation2 + $0xca] sm:$0xff]
        %v466 = vld [vmem:[#allocation2 + $0xda] sm:$0xff]
        %v467 = vld [vmem:[#allocation2 + $0xe2] sm:$0xff]
        %v468 = vld [vmem:[#allocation2 + $0xf2] sm:$0xff]
        %v469 = vld [vmem:[#allocation2 + $0xfa] sm:$0xff]
        %v470 = vld [vmem:[#allocation2 + $0x10a] sm:$0xff]
        %v471 = vld [vmem:[#allocation2 + $0x112] sm:$0xff]
        %v472 = vld [vmem:[#allocation2 + $0x122] sm:$0xff]
        %v473 = vld [vmem:[#allocation2 + $0x12a] sm:$0xff]
        %v474 = vld [vmem:[#allocation2 + $0x13a] sm:$0xff]
        %v475 = vld [vmem:[#allocation2 + $0x142] sm:$0xff]
        %v476 = vld [vmem:[#allocation2 + $0x152] sm:$0xff]
        %v477 = vld [vmem:[#allocation2 + $0x15a] sm:$0xff]
        %v478 = vld [vmem:[#allocation2 + $0x16a] sm:$0xff]
        %v479 = vld [vmem:[#allocation2 + $0x172] sm:$0xff]
        %v480 = vld [vmem:[%s318] sm:$0xff]
        %v481 = vld [vmem:[%s318 + $0x8] sm:$0xff]
        %v482 = vld [vmem:[%s318 + $0x18] sm:$0xff]
        %v483 = vld [vmem:[%s318 + $0x20] sm:$0xff]
        %v484 = vld [vmem:[%s318 + $0x30] sm:$0xff]
        %v485 = vld [vmem:[%s318 + $0x38] sm:$0xff]
        %v486 = vld [vmem:[%s318 + $0x48] sm:$0xff]
        %v487 = vld [vmem:[%s318 + $0x50] sm:$0xff]
        %v488 = vld [vmem:[%s318 + $0x60] sm:$0xff]
        %v489 = vld [vmem:[%s318 + $0x68] sm:$0xff]
        %v490 = vld [vmem:[%s318 + $0x78] sm:$0xff]
        %v491 = vld [vmem:[%s318 + $0x80] sm:$0xff]
        %v492 = vld [vmem:[%s318 + $0x90] sm:$0xff]
        %v493 = vld [vmem:[%s318 + $0x98] sm:$0xff]
        %v494 = vld [vmem:[%s318 + $0xa8] sm:$0xff]
        %v495 = vld [vmem:[%s318 + $0xb0] sm:$0xff]
        %v496 = vld [vmem:[%s318 + $0xc0] sm:$0xff]
        %v497 = vld [vmem:[%s318 + $0xc8] sm:$0xff]
        %v498 = vld [vmem:[%s318 + $0xd8] sm:$0xff]
        %v499 = vld [vmem:[%s318 + $0xe0] sm:$0xff]
        %v500 = vld [vmem:[%s318 + $0xf0] sm:$0xff]
        %v501 = vld [vmem:[%s318 + $0xf8] sm:$0xff]
        %v502 = vld [vmem:[%s318 + $0x108] sm:$0xff]
        %v503 = vld [vmem:[%s318 + $0x110] sm:$0xff]
        %v504 = vld [vmem:[%s318 + $0x120] sm:$0xff]
        %v505 = vld [vmem:[%s318 + $0x128] sm:$0xff]
        %v506 = vld [vmem:[%s318 + $0x138] sm:$0xff]
        %v507 = vld [vmem:[%s318 + $0x140] sm:$0xff]
        %v508 = vld [vmem:[%s318 + $0x150] sm:$0xff]
        %v509 = vld [vmem:[%s318 + $0x158] sm:$0xff]
        %v510 = vld [vmem:[%s318 + $0x168] sm:$0xff]
        %v511 = vld [vmem:[%s318 + $0x170] sm:$0xff]
        %v512 = vld [vmem:[%s318 + $0x1] sm:$0xff]
        %v513 = vld [vmem:[%s318 + $0x9] sm:$0xff]
        %v514 = vld [vmem:[%s318 + $0x19] sm:$0xff]
        %v515 = vld [vmem:[%s318 + $0x21] sm:$0xff]
        %v516 = vld [vmem:[%s318 + $0x31] sm:$0xff]
        %v517 = vld [vmem:[%s318 + $0x39] sm:$0xff]
        %v518 = vld [vmem:[%s318 + $0x49] sm:$0xff]
        %v519 = vld [vmem:[%s318 + $0x51] sm:$0xff]
        %v520 = vld [vmem:[%s318 + $0x61] sm:$0xff]
        %v521 = vld [vmem:[%s318 + $0x69] sm:$0xff]
        %v522 = vld [vmem:[%s318 + $0x79] sm:$0xff]
        %v523 = vld [vmem:[%s318 + $0x81] sm:$0xff]
        %v524 = vld [vmem:[%s318 + $0x91] sm:$0xff]
        %v525 = vld [vmem:[%s318 + $0x99] sm:$0xff]
        %v526 = vld [vmem:[%s318 + $0xa9] sm:$0xff]
        %v527 = vld [vmem:[%s318 + $0xb1] sm:$0xff]
        %v528 = vld [vmem:[%s318 + $0xc1] sm:$0xff]
        %v529 = vld [vmem:[%s318 + $0xc9] sm:$0xff]
        %v530 = vld [vmem:[%s318 + $0xd9] sm:$0xff]
        %v531 = vld [vmem:[%s318 + $0xe1] sm:$0xff]
        %v532 = vld [vmem:[%s318 + $0xf1] sm:$0xff]
        %v533 = vld [vmem:[%s318 + $0xf9] sm:$0xff]
        %v534 = vld [vmem:[%s318 + $0x109] sm:$0xff]
        %v535 = vld [vmem:[%s318 + $0x111] sm:$0xff]
        %v536 = vld [vmem:[%s318 + $0x121] sm:$0xff]
        %v537 = vld [vmem:[%s318 + $0x129] sm:$0xff]
        %v538 = vld [vmem:[%s318 + $0x139] sm:$0xff]
        %v539 = vld [vmem:[%s318 + $0x141] sm:$0xff]
        %v540 = vld [vmem:[%s318 + $0x151] sm:$0xff]
        %v541 = vld [vmem:[%s318 + $0x159] sm:$0xff]
        %v542 = vld [vmem:[%s318 + $0x169] sm:$0xff]
        %v543 = vld [vmem:[%s318 + $0x171] sm:$0xff]
        %v544 = vld [vmem:[%s318 + $0x2] sm:$0xff]
        %v545 = vld [vmem:[%s318 + $0xa] sm:$0xff]
        %v546 = vld [vmem:[%s318 + $0x1a] sm:$0xff]
        %v547 = vld [vmem:[%s318 + $0x22] sm:$0xff]
        %v548 = vld [vmem:[%s318 + $0x32] sm:$0xff]
        %v549 = vld [vmem:[%s318 + $0x3a] sm:$0xff]
        %v550 = vld [vmem:[%s318 + $0x4a] sm:$0xff]
        %v551 = vld [vmem:[%s318 + $0x52] sm:$0xff]
        %v552 = vld [vmem:[%s318 + $0x62] sm:$0xff]
        %v553 = vld [vmem:[%s318 + $0x6a] sm:$0xff]
        %v554 = vld [vmem:[%s318 + $0x7a] sm:$0xff]
        %v555 = vld [vmem:[%s318 + $0x82] sm:$0xff]
        %v556 = vld [vmem:[%s318 + $0x92] sm:$0xff]
        %v557 = vld [vmem:[%s318 + $0x9a] sm:$0xff]
        %v558 = vld [vmem:[%s318 + $0xaa] sm:$0xff]
        %v559 = vld [vmem:[%s318 + $0xb2] sm:$0xff]
        %v560 = vld [vmem:[%s318 + $0xc2] sm:$0xff]
        %v561 = vld [vmem:[%s318 + $0xca] sm:$0xff]
        %v562 = vld [vmem:[%s318 + $0xda] sm:$0xff]
        %v563 = vld [vmem:[%s318 + $0xe2] sm:$0xff]
        %v564 = vld [vmem:[%s318 + $0xf2] sm:$0xff]
        %v565 = vld [vmem:[%s318 + $0xfa] sm:$0xff]
        %v566 = vld [vmem:[%s318 + $0x10a] sm:$0xff]
        %v567 = vld [vmem:[%s318 + $0x112] sm:$0xff]
        %v568 = vld [vmem:[%s318 + $0x122] sm:$0xff]
        %v569 = vld [vmem:[%s318 + $0x12a] sm:$0xff]
        %v570 = vld [vmem:[%s318 + $0x13a] sm:$0xff]
        %v571 = vld [vmem:[%s318 + $0x142] sm:$0xff]
        %v572 = vld [vmem:[%s318 + $0x152] sm:$0xff]
        %v573 = vld [vmem:[%s318 + $0x15a] sm:$0xff]
        %v574 = vld [vmem:[%s318 + $0x16a] sm:$0xff]
        %v575 = vld [vmem:[%s318 + $0x172] sm:$0xff]
        %s576 = scalar_lea.vmem [#allocation2], 48
        %v577 = vld [vmem:[%s576] sm:$0xff]
        %v578 = vld [vmem:[%s576 + $0x8] sm:$0xff]
        %v579 = vld [vmem:[%s576 + $0x18] sm:$0xff]
        %v580 = vld [vmem:[%s576 + $0x20] sm:$0xff]
        %v581 = vld [vmem:[%s576 + $0x30] sm:$0xff]
        %v582 = vld [vmem:[%s576 + $0x38] sm:$0xff]
        %v583 = vld [vmem:[%s576 + $0x48] sm:$0xff]
        %v584 = vld [vmem:[%s576 + $0x50] sm:$0xff]
        %v585 = vld [vmem:[%s576 + $0x60] sm:$0xff]
        %v586 = vld [vmem:[%s576 + $0x68] sm:$0xff]
        %v587 = vld [vmem:[%s576 + $0x78] sm:$0xff]
        %v588 = vld [vmem:[%s576 + $0x80] sm:$0xff]
        %v589 = vld [vmem:[%s576 + $0x90] sm:$0xff]
        %v590 = vld [vmem:[%s576 + $0x98] sm:$0xff]
        %v591 = vld [vmem:[%s576 + $0xa8] sm:$0xff]
        %v592 = vld [vmem:[%s576 + $0xb0] sm:$0xff]
        %v593 = vld [vmem:[%s576 + $0xc0] sm:$0xff]
        %v594 = vld [vmem:[%s576 + $0xc8] sm:$0xff]
        %v595 = vld [vmem:[%s576 + $0xd8] sm:$0xff]
        %v596 = vld [vmem:[%s576 + $0xe0] sm:$0xff]
        %v597 = vld [vmem:[%s576 + $0xf0] sm:$0xff]
        %v598 = vld [vmem:[%s576 + $0xf8] sm:$0xff]
        %v599 = vld [vmem:[%s576 + $0x108] sm:$0xff]
        %v600 = vld [vmem:[%s576 + $0x110] sm:$0xff]
        %v601 = vld [vmem:[%s576 + $0x120] sm:$0xff]
        %v602 = vld [vmem:[%s576 + $0x128] sm:$0xff]
        %v603 = vld [vmem:[%s576 + $0x138] sm:$0xff]
        %v604 = vld [vmem:[%s576 + $0x140] sm:$0xff]
        %v605 = vld [vmem:[%s576 + $0x150] sm:$0xff]
        %v606 = vld [vmem:[%s576 + $0x158] sm:$0xff]
        %v607 = vld [vmem:[%s576 + $0x168] sm:$0xff]
        %v608 = vld [vmem:[%s576 + $0x170] sm:$0xff]
        %v609 = vld [vmem:[%s576 + $0x1] sm:$0xff]
        %v610 = vld [vmem:[%s576 + $0x9] sm:$0xff]
        %v611 = vld [vmem:[%s576 + $0x19] sm:$0xff]
        %v612 = vld [vmem:[%s576 + $0x21] sm:$0xff]
        %v613 = vld [vmem:[%s576 + $0x31] sm:$0xff]
        %v614 = vld [vmem:[%s576 + $0x39] sm:$0xff]
        %v615 = vld [vmem:[%s576 + $0x49] sm:$0xff]
        %v616 = vld [vmem:[%s576 + $0x51] sm:$0xff]
        %v617 = vld [vmem:[%s576 + $0x61] sm:$0xff]
        %v618 = vld [vmem:[%s576 + $0x69] sm:$0xff]
        %v619 = vld [vmem:[%s576 + $0x79] sm:$0xff]
        %v620 = vld [vmem:[%s576 + $0x81] sm:$0xff]
        %v621 = vld [vmem:[%s576 + $0x91] sm:$0xff]
        %v622 = vld [vmem:[%s576 + $0x99] sm:$0xff]
        %v623 = vld [vmem:[%s576 + $0xa9] sm:$0xff]
        %v624 = vld [vmem:[%s576 + $0xb1] sm:$0xff]
        %v625 = vld [vmem:[%s576 + $0xc1] sm:$0xff]
        %v626 = vld [vmem:[%s576 + $0xc9] sm:$0xff]
        %v627 = vld [vmem:[%s576 + $0xd9] sm:$0xff]
        %v628 = vld [vmem:[%s576 + $0xe1] sm:$0xff]
        %v629 = vld [vmem:[%s576 + $0xf1] sm:$0xff]
        %v630 = vld [vmem:[%s576 + $0xf9] sm:$0xff]
        %v631 = vld [vmem:[%s576 + $0x109] sm:$0xff]
        %v632 = vld [vmem:[%s576 + $0x111] sm:$0xff]
        %v633 = vld [vmem:[%s576 + $0x121] sm:$0xff]
        %v634 = vld [vmem:[%s576 + $0x129] sm:$0xff]
        %v635 = vld [vmem:[%s576 + $0x139] sm:$0xff]
        %v636 = vld [vmem:[%s576 + $0x141] sm:$0xff]
        %v637 = vld [vmem:[%s576 + $0x151] sm:$0xff]
        %v638 = vld [vmem:[%s576 + $0x159] sm:$0xff]
        %v639 = vld [vmem:[%s576 + $0x169] sm:$0xff]
        %v640 = vld [vmem:[%s576 + $0x171] sm:$0xff]
        %v641 = vld [vmem:[%s576 + $0x2] sm:$0xff]
        %v642 = vld [vmem:[%s576 + $0xa] sm:$0xff]
        %v643 = vld [vmem:[%s576 + $0x1a] sm:$0xff]
        %v644 = vld [vmem:[%s576 + $0x22] sm:$0xff]
        %v645 = vld [vmem:[%s576 + $0x32] sm:$0xff]
        %v646 = vld [vmem:[%s576 + $0x3a] sm:$0xff]
        %v647 = vld [vmem:[%s576 + $0x4a] sm:$0xff]
        %v648 = vld [vmem:[%s576 + $0x52] sm:$0xff]
        %v649 = vld [vmem:[%s576 + $0x62] sm:$0xff]
        %v650 = vld [vmem:[%s576 + $0x6a] sm:$0xff]
        %v651 = vld [vmem:[%s576 + $0x7a] sm:$0xff]
        %v652 = vld [vmem:[%s576 + $0x82] sm:$0xff]
        %v653 = vld [vmem:[%s576 + $0x92] sm:$0xff]
        %v654 = vld [vmem:[%s576 + $0x9a] sm:$0xff]
        %v655 = vld [vmem:[%s576 + $0xaa] sm:$0xff]
        %v656 = vld [vmem:[%s576 + $0xb2] sm:$0xff]
        %v657 = vld [vmem:[%s576 + $0xc2] sm:$0xff]
        %v658 = vld [vmem:[%s576 + $0xca] sm:$0xff]
        %v659 = vld [vmem:[%s576 + $0xda] sm:$0xff]
        %v660 = vld [vmem:[%s576 + $0xe2] sm:$0xff]
        %v661 = vld [vmem:[%s576 + $0xf2] sm:$0xff]
        %v662 = vld [vmem:[%s576 + $0xfa] sm:$0xff]
        %v663 = vld [vmem:[%s576 + $0x10a] sm:$0xff]
        %v664 = vld [vmem:[%s576 + $0x112] sm:$0xff]
        %v665 = vld [vmem:[%s576 + $0x122] sm:$0xff]
        %v666 = vld [vmem:[%s576 + $0x12a] sm:$0xff]
        %v667 = vld [vmem:[%s576 + $0x13a] sm:$0xff]
        %v668 = vld [vmem:[%s576 + $0x142] sm:$0xff]
        %v669 = vld [vmem:[%s576 + $0x152] sm:$0xff]
        %v670 = vld [vmem:[%s576 + $0x15a] sm:$0xff]
        %v671 = vld [vmem:[%s576 + $0x16a] sm:$0xff]
        %v672 = vld [vmem:[%s576 + $0x172] sm:$0xff]
        %705 = vrot.lane.b32.xlu0 %v416, 3
        %v706 = vpop.permute.xlu0 %705
        %707 = vrot.lane.b32.xlu0 %v417, 3
        %v708 = vpop.permute.xlu0 %707
        %709 = vrot.lane.b32.xlu0 %v418, 3
        %v710 = vpop.permute.xlu0 %709
        %711 = vrot.lane.b32.xlu0 %v419, 3
        %v712 = vpop.permute.xlu0 %711
        %713 = vrot.lane.b32.xlu0 %v420, 3
        %v714 = vpop.permute.xlu0 %713
        %715 = vrot.lane.b32.xlu0 %v421, 3
        %v716 = vpop.permute.xlu0 %715
        %717 = vrot.lane.b32.xlu0 %v422, 3
        %v718 = vpop.permute.xlu0 %717
        %719 = vrot.lane.b32.xlu0 %v423, 3
        %v720 = vpop.permute.xlu0 %719
        %721 = vrot.lane.b32.xlu0 %v424, 3
        %v722 = vpop.permute.xlu0 %721
        %723 = vrot.lane.b32.xlu0 %v425, 3
        %v724 = vpop.permute.xlu0 %723
        %725 = vrot.lane.b32.xlu0 %v426, 3
        %v726 = vpop.permute.xlu0 %725
        %727 = vrot.lane.b32.xlu0 %v427, 3
        %v728 = vpop.permute.xlu0 %727
        %729 = vrot.lane.b32.xlu0 %v428, 3
        %v730 = vpop.permute.xlu0 %729
        %731 = vrot.lane.b32.xlu0 %v429, 3
        %v732 = vpop.permute.xlu0 %731
        %733 = vrot.lane.b32.xlu0 %v430, 3
        %v734 = vpop.permute.xlu0 %733
        %735 = vrot.lane.b32.xlu0 %v431, 3
        %v736 = vpop.permute.xlu0 %735
        %737 = vrot.lane.b32.xlu0 %v432, 3
        %v738 = vpop.permute.xlu0 %737
        %739 = vrot.lane.b32.xlu0 %v433, 3
        %v740 = vpop.permute.xlu0 %739
        %741 = vrot.lane.b32.xlu0 %v434, 3
        %v742 = vpop.permute.xlu0 %741
        %743 = vrot.lane.b32.xlu0 %v435, 3
        %v744 = vpop.permute.xlu0 %743
        %745 = vrot.lane.b32.xlu0 %v436, 3
        %v746 = vpop.permute.xlu0 %745
        %747 = vrot.lane.b32.xlu0 %v437, 3
        %v748 = vpop.permute.xlu0 %747
        %749 = vrot.lane.b32.xlu0 %v438, 3
        %v750 = vpop.permute.xlu0 %749
        %751 = vrot.lane.b32.xlu0 %v439, 3
        %v752 = vpop.permute.xlu0 %751
        %753 = vrot.lane.b32.xlu0 %v440, 3
        %v754 = vpop.permute.xlu0 %753
        %755 = vrot.lane.b32.xlu0 %v441, 3
        %v756 = vpop.permute.xlu0 %755
        %757 = vrot.lane.b32.xlu0 %v442, 3
        %v758 = vpop.permute.xlu0 %757
        %759 = vrot.lane.b32.xlu0 %v443, 3
        %v760 = vpop.permute.xlu0 %759
        %761 = vrot.lane.b32.xlu0 %v444, 3
        %v762 = vpop.permute.xlu0 %761
        %763 = vrot.lane.b32.xlu0 %v445, 3
        %v764 = vpop.permute.xlu0 %763
        %765 = vrot.lane.b32.xlu0 %v446, 3
        %v766 = vpop.permute.xlu0 %765
        %767 = vrot.lane.b32.xlu0 %v447, 3
        %v768 = vpop.permute.xlu0 %767
        %833 = vrot.lane.b32.xlu0 %v448, 6
        %v834 = vpop.permute.xlu0 %833
        %835 = vrot.lane.b32.xlu0 %v449, 6
        %v836 = vpop.permute.xlu0 %835
        %837 = vrot.lane.b32.xlu0 %v450, 6
        %v838 = vpop.permute.xlu0 %837
        %839 = vrot.lane.b32.xlu0 %v451, 6
        %v840 = vpop.permute.xlu0 %839
        %841 = vrot.lane.b32.xlu0 %v452, 6
        %v842 = vpop.permute.xlu0 %841
        %843 = vrot.lane.b32.xlu0 %v453, 6
        %v844 = vpop.permute.xlu0 %843
        %845 = vrot.lane.b32.xlu0 %v454, 6
        %v846 = vpop.permute.xlu0 %845
        %847 = vrot.lane.b32.xlu0 %v455, 6
        %v848 = vpop.permute.xlu0 %847
        %849 = vrot.lane.b32.xlu0 %v456, 6
        %v850 = vpop.permute.xlu0 %849
        %851 = vrot.lane.b32.xlu0 %v457, 6
        %v852 = vpop.permute.xlu0 %851
        %853 = vrot.lane.b32.xlu0 %v458, 6
        %v854 = vpop.permute.xlu0 %853
        %855 = vrot.lane.b32.xlu0 %v459, 6
        %v856 = vpop.permute.xlu0 %855
        %857 = vrot.lane.b32.xlu0 %v460, 6
        %v858 = vpop.permute.xlu0 %857
        %859 = vrot.lane.b32.xlu0 %v461, 6
        %v860 = vpop.permute.xlu0 %859
        %861 = vrot.lane.b32.xlu0 %v462, 6
        %v862 = vpop.permute.xlu0 %861
        %863 = vrot.lane.b32.xlu0 %v463, 6
        %v864 = vpop.permute.xlu0 %863
        %865 = vrot.lane.b32.xlu0 %v464, 6
        %v866 = vpop.permute.xlu0 %865
        %867 = vrot.lane.b32.xlu0 %v465, 6
        %v868 = vpop.permute.xlu0 %867
        %869 = vrot.lane.b32.xlu0 %v466, 6
        %v870 = vpop.permute.xlu0 %869
        %871 = vrot.lane.b32.xlu0 %v467, 6
        %v872 = vpop.permute.xlu0 %871
        %873 = vrot.lane.b32.xlu0 %v468, 6
        %v874 = vpop.permute.xlu0 %873
        %875 = vrot.lane.b32.xlu0 %v469, 6
        %v876 = vpop.permute.xlu0 %875
        %877 = vrot.lane.b32.xlu0 %v470, 6
        %v878 = vpop.permute.xlu0 %877
        %879 = vrot.lane.b32.xlu0 %v471, 6
        %v880 = vpop.permute.xlu0 %879
        %881 = vrot.lane.b32.xlu0 %v472, 6
        %v882 = vpop.permute.xlu0 %881
        %883 = vrot.lane.b32.xlu0 %v473, 6
        %v884 = vpop.permute.xlu0 %883
        %885 = vrot.lane.b32.xlu0 %v474, 6
        %v886 = vpop.permute.xlu0 %885
        %887 = vrot.lane.b32.xlu0 %v475, 6
        %v888 = vpop.permute.xlu0 %887
        %889 = vrot.lane.b32.xlu0 %v476, 6
        %v890 = vpop.permute.xlu0 %889
        %891 = vrot.lane.b32.xlu0 %v477, 6
        %v892 = vpop.permute.xlu0 %891
        %893 = vrot.lane.b32.xlu0 %v478, 6
        %v894 = vpop.permute.xlu0 %893
        %895 = vrot.lane.b32.xlu0 %v479, 6
        %v896 = vpop.permute.xlu0 %895
        %961 = vrot.lane.b32.xlu0 %v480, 9
        %v962 = vpop.permute.xlu0 %961
        %963 = vrot.lane.b32.xlu0 %v481, 9
        %v964 = vpop.permute.xlu0 %963
        %965 = vrot.lane.b32.xlu0 %v482, 9
        %v966 = vpop.permute.xlu0 %965
        %967 = vrot.lane.b32.xlu0 %v483, 9
        %v968 = vpop.permute.xlu0 %967
        %969 = vrot.lane.b32.xlu0 %v484, 9
        %v970 = vpop.permute.xlu0 %969
        %971 = vrot.lane.b32.xlu0 %v485, 9
        %v972 = vpop.permute.xlu0 %971
        %973 = vrot.lane.b32.xlu0 %v486, 9
        %v974 = vpop.permute.xlu0 %973
        %975 = vrot.lane.b32.xlu0 %v487, 9
        %v976 = vpop.permute.xlu0 %975
        %977 = vrot.lane.b32.xlu0 %v488, 9
        %v978 = vpop.permute.xlu0 %977
        %979 = vrot.lane.b32.xlu0 %v489, 9
        %v980 = vpop.permute.xlu0 %979
        %981 = vrot.lane.b32.xlu0 %v490, 9
        %v982 = vpop.permute.xlu0 %981
        %983 = vrot.lane.b32.xlu0 %v491, 9
        %v984 = vpop.permute.xlu0 %983
        %985 = vrot.lane.b32.xlu0 %v492, 9
        %v986 = vpop.permute.xlu0 %985
        %987 = vrot.lane.b32.xlu0 %v493, 9
        %v988 = vpop.permute.xlu0 %987
        %989 = vrot.lane.b32.xlu0 %v494, 9
        %v990 = vpop.permute.xlu0 %989
        %991 = vrot.lane.b32.xlu0 %v495, 9
        %v992 = vpop.permute.xlu0 %991
        %993 = vrot.lane.b32.xlu0 %v496, 9
        %v994 = vpop.permute.xlu0 %993
        %995 = vrot.lane.b32.xlu0 %v497, 9
        %v996 = vpop.permute.xlu0 %995
        %997 = vrot.lane.b32.xlu0 %v498, 9
        %v998 = vpop.permute.xlu0 %997
        %999 = vrot.lane.b32.xlu0 %v499, 9
        %v1000 = vpop.permute.xlu0 %999
        %1001 = vrot.lane.b32.xlu0 %v500, 9
        %v1002 = vpop.permute.xlu0 %1001
        %1003 = vrot.lane.b32.xlu0 %v501, 9
        %v1004 = vpop.permute.xlu0 %1003
        %1005 = vrot.lane.b32.xlu0 %v502, 9
        %v1006 = vpop.permute.xlu0 %1005
        %1007 = vrot.lane.b32.xlu0 %v503, 9
        %v1008 = vpop.permute.xlu0 %1007
        %1009 = vrot.lane.b32.xlu0 %v504, 9
        %v1010 = vpop.permute.xlu0 %1009
        %1011 = vrot.lane.b32.xlu0 %v505, 9
        %v1012 = vpop.permute.xlu0 %1011
        %1013 = vrot.lane.b32.xlu0 %v506, 9
        %v1014 = vpop.permute.xlu0 %1013
        %1015 = vrot.lane.b32.xlu0 %v507, 9
        %v1016 = vpop.permute.xlu0 %1015
        %1017 = vrot.lane.b32.xlu0 %v508, 9
        %v1018 = vpop.permute.xlu0 %1017
        %1019 = vrot.lane.b32.xlu0 %v509, 9
        %v1020 = vpop.permute.xlu0 %1019
        %1021 = vrot.lane.b32.xlu0 %v510, 9
        %v1022 = vpop.permute.xlu0 %1021
        %1023 = vrot.lane.b32.xlu0 %v511, 9
        %v1024 = vpop.permute.xlu0 %1023
        %1089 = vrot.lane.b32.xlu0 %v512, 12
        %v1090 = vpop.permute.xlu0 %1089
        %1091 = vrot.lane.b32.xlu0 %v513, 12
        %v1092 = vpop.permute.xlu0 %1091
        %1093 = vrot.lane.b32.xlu0 %v514, 12
        %v1094 = vpop.permute.xlu0 %1093
        %1095 = vrot.lane.b32.xlu0 %v515, 12
        %v1096 = vpop.permute.xlu0 %1095
        %1097 = vrot.lane.b32.xlu0 %v516, 12
        %v1098 = vpop.permute.xlu0 %1097
        %1099 = vrot.lane.b32.xlu0 %v517, 12
        %v1100 = vpop.permute.xlu0 %1099
        %1101 = vrot.lane.b32.xlu0 %v518, 12
        %v1102 = vpop.permute.xlu0 %1101
        %1103 = vrot.lane.b32.xlu0 %v519, 12
        %v1104 = vpop.permute.xlu0 %1103
        %1105 = vrot.lane.b32.xlu0 %v520, 12
        %v1106 = vpop.permute.xlu0 %1105
        %1107 = vrot.lane.b32.xlu0 %v521, 12
        %v1108 = vpop.permute.xlu0 %1107
        %1109 = vrot.lane.b32.xlu0 %v522, 12
        %v1110 = vpop.permute.xlu0 %1109
        %1111 = vrot.lane.b32.xlu0 %v523, 12
        %v1112 = vpop.permute.xlu0 %1111
        %1113 = vrot.lane.b32.xlu0 %v524, 12
        %v1114 = vpop.permute.xlu0 %1113
        %1115 = vrot.lane.b32.xlu0 %v525, 12
        %v1116 = vpop.permute.xlu0 %1115
        %1117 = vrot.lane.b32.xlu0 %v526, 12
        %v1118 = vpop.permute.xlu0 %1117
        %1119 = vrot.lane.b32.xlu0 %v527, 12
        %v1120 = vpop.permute.xlu0 %1119
        %1121 = vrot.lane.b32.xlu0 %v528, 12
        %v1122 = vpop.permute.xlu0 %1121
        %1123 = vrot.lane.b32.xlu0 %v529, 12
        %v1124 = vpop.permute.xlu0 %1123
        %1125 = vrot.lane.b32.xlu0 %v530, 12
        %v1126 = vpop.permute.xlu0 %1125
        %1127 = vrot.lane.b32.xlu0 %v531, 12
        %v1128 = vpop.permute.xlu0 %1127
        %1129 = vrot.lane.b32.xlu0 %v532, 12
        %v1130 = vpop.permute.xlu0 %1129
        %1131 = vrot.lane.b32.xlu0 %v533, 12
        %v1132 = vpop.permute.xlu0 %1131
        %1133 = vrot.lane.b32.xlu0 %v534, 12
        %v1134 = vpop.permute.xlu0 %1133
        %1135 = vrot.lane.b32.xlu0 %v535, 12
        %v1136 = vpop.permute.xlu0 %1135
        %1137 = vrot.lane.b32.xlu0 %v536, 12
        %v1138 = vpop.permute.xlu0 %1137
        %1139 = vrot.lane.b32.xlu0 %v537, 12
        %v1140 = vpop.permute.xlu0 %1139
        %1141 = vrot.lane.b32.xlu0 %v538, 12
        %v1142 = vpop.permute.xlu0 %1141
        %1143 = vrot.lane.b32.xlu0 %v539, 12
        %v1144 = vpop.permute.xlu0 %1143
        %1145 = vrot.lane.b32.xlu0 %v540, 12
        %v1146 = vpop.permute.xlu0 %1145
        %1147 = vrot.lane.b32.xlu0 %v541, 12
        %v1148 = vpop.permute.xlu0 %1147
        %1149 = vrot.lane.b32.xlu0 %v542, 12
        %v1150 = vpop.permute.xlu0 %1149
        %1151 = vrot.lane.b32.xlu0 %v543, 12
        %v1152 = vpop.permute.xlu0 %1151
        %1217 = vrot.lane.b32.xlu0 %v544, 15
        %v1218 = vpop.permute.xlu0 %1217
        %1219 = vrot.lane.b32.xlu0 %v545, 15
        %v1220 = vpop.permute.xlu0 %1219
        %1221 = vrot.lane.b32.xlu0 %v546, 15
        %v1222 = vpop.permute.xlu0 %1221
        %1223 = vrot.lane.b32.xlu0 %v547, 15
        %v1224 = vpop.permute.xlu0 %1223
        %1225 = vrot.lane.b32.xlu0 %v548, 15
        %v1226 = vpop.permute.xlu0 %1225
        %1227 = vrot.lane.b32.xlu0 %v549, 15
        %v1228 = vpop.permute.xlu0 %1227
        %1229 = vrot.lane.b32.xlu0 %v550, 15
        %v1230 = vpop.permute.xlu0 %1229
        %1231 = vrot.lane.b32.xlu0 %v551, 15
        %v1232 = vpop.permute.xlu0 %1231
        %1233 = vrot.lane.b32.xlu0 %v552, 15
        %v1234 = vpop.permute.xlu0 %1233
        %1235 = vrot.lane.b32.xlu0 %v553, 15
        %v1236 = vpop.permute.xlu0 %1235
        %1237 = vrot.lane.b32.xlu0 %v554, 15
        %v1238 = vpop.permute.xlu0 %1237
        %1239 = vrot.lane.b32.xlu0 %v555, 15
        %v1240 = vpop.permute.xlu0 %1239
        %1241 = vrot.lane.b32.xlu0 %v556, 15
        %v1242 = vpop.permute.xlu0 %1241
        %1243 = vrot.lane.b32.xlu0 %v557, 15
        %v1244 = vpop.permute.xlu0 %1243
        %1245 = vrot.lane.b32.xlu0 %v558, 15
        %v1246 = vpop.permute.xlu0 %1245
        %1247 = vrot.lane.b32.xlu0 %v559, 15
        %v1248 = vpop.permute.xlu0 %1247
        %1249 = vrot.lane.b32.xlu0 %v560, 15
        %v1250 = vpop.permute.xlu0 %1249
        %1251 = vrot.lane.b32.xlu0 %v561, 15
        %v1252 = vpop.permute.xlu0 %1251
        %1253 = vrot.lane.b32.xlu0 %v562, 15
        %v1254 = vpop.permute.xlu0 %1253
        %1255 = vrot.lane.b32.xlu0 %v563, 15
        %v1256 = vpop.permute.xlu0 %1255
        %1257 = vrot.lane.b32.xlu0 %v564, 15
        %v1258 = vpop.permute.xlu0 %1257
        %1259 = vrot.lane.b32.xlu0 %v565, 15
        %v1260 = vpop.permute.xlu0 %1259
        %1261 = vrot.lane.b32.xlu0 %v566, 15
        %v1262 = vpop.permute.xlu0 %1261
        %1263 = vrot.lane.b32.xlu0 %v567, 15
        %v1264 = vpop.permute.xlu0 %1263
        %1265 = vrot.lane.b32.xlu0 %v568, 15
        %v1266 = vpop.permute.xlu0 %1265
        %1267 = vrot.lane.b32.xlu0 %v569, 15
        %v1268 = vpop.permute.xlu0 %1267
        %1269 = vrot.lane.b32.xlu0 %v570, 15
        %v1270 = vpop.permute.xlu0 %1269
        %1271 = vrot.lane.b32.xlu0 %v571, 15
        %v1272 = vpop.permute.xlu0 %1271
        %1273 = vrot.lane.b32.xlu0 %v572, 15
        %v1274 = vpop.permute.xlu0 %1273
        %1275 = vrot.lane.b32.xlu0 %v573, 15
        %v1276 = vpop.permute.xlu0 %1275
        %1277 = vrot.lane.b32.xlu0 %v574, 15
        %v1278 = vpop.permute.xlu0 %1277
        %1279 = vrot.lane.b32.xlu0 %v575, 15
        %v1280 = vpop.permute.xlu0 %1279
        %1345 = vrot.lane.b32.xlu0 %v577, 18
        %v1346 = vpop.permute.xlu0 %1345
        %1347 = vrot.lane.b32.xlu0 %v578, 18
        %v1348 = vpop.permute.xlu0 %1347
        %1349 = vrot.lane.b32.xlu0 %v579, 18
        %v1350 = vpop.permute.xlu0 %1349
        %1351 = vrot.lane.b32.xlu0 %v580, 18
        %v1352 = vpop.permute.xlu0 %1351
        %1353 = vrot.lane.b32.xlu0 %v581, 18
        %v1354 = vpop.permute.xlu0 %1353
        %1355 = vrot.lane.b32.xlu0 %v582, 18
        %v1356 = vpop.permute.xlu0 %1355
        %1357 = vrot.lane.b32.xlu0 %v583, 18
        %v1358 = vpop.permute.xlu0 %1357
        %1359 = vrot.lane.b32.xlu0 %v584, 18
        %v1360 = vpop.permute.xlu0 %1359
        %1361 = vrot.lane.b32.xlu0 %v585, 18
        %v1362 = vpop.permute.xlu0 %1361
        %1363 = vrot.lane.b32.xlu0 %v586, 18
        %v1364 = vpop.permute.xlu0 %1363
        %1365 = vrot.lane.b32.xlu0 %v587, 18
        %v1366 = vpop.permute.xlu0 %1365
        %1367 = vrot.lane.b32.xlu0 %v588, 18
        %v1368 = vpop.permute.xlu0 %1367
        %1369 = vrot.lane.b32.xlu0 %v589, 18
        %v1370 = vpop.permute.xlu0 %1369
        %1371 = vrot.lane.b32.xlu0 %v590, 18
        %v1372 = vpop.permute.xlu0 %1371
        %1373 = vrot.lane.b32.xlu0 %v591, 18
        %v1374 = vpop.permute.xlu0 %1373
        %1375 = vrot.lane.b32.xlu0 %v592, 18
        %v1376 = vpop.permute.xlu0 %1375
        %1377 = vrot.lane.b32.xlu0 %v593, 18
        %v1378 = vpop.permute.xlu0 %1377
        %1379 = vrot.lane.b32.xlu0 %v594, 18
        %v1380 = vpop.permute.xlu0 %1379
        %1381 = vrot.lane.b32.xlu0 %v595, 18
        %v1382 = vpop.permute.xlu0 %1381
        %1383 = vrot.lane.b32.xlu0 %v596, 18
        %v1384 = vpop.permute.xlu0 %1383
        %1385 = vrot.lane.b32.xlu0 %v597, 18
        %v1386 = vpop.permute.xlu0 %1385
        %1387 = vrot.lane.b32.xlu0 %v598, 18
        %v1388 = vpop.permute.xlu0 %1387
        %1389 = vrot.lane.b32.xlu0 %v599, 18
        %v1390 = vpop.permute.xlu0 %1389
        %1391 = vrot.lane.b32.xlu0 %v600, 18
        %v1392 = vpop.permute.xlu0 %1391
        %1393 = vrot.lane.b32.xlu0 %v601, 18
        %v1394 = vpop.permute.xlu0 %1393
        %1395 = vrot.lane.b32.xlu0 %v602, 18
        %v1396 = vpop.permute.xlu0 %1395
        %1397 = vrot.lane.b32.xlu0 %v603, 18
        %v1398 = vpop.permute.xlu0 %1397
        %1399 = vrot.lane.b32.xlu0 %v604, 18
        %v1400 = vpop.permute.xlu0 %1399
        %1401 = vrot.lane.b32.xlu0 %v605, 18
        %v1402 = vpop.permute.xlu0 %1401
        %1403 = vrot.lane.b32.xlu0 %v606, 18
        %v1404 = vpop.permute.xlu0 %1403
        %1405 = vrot.lane.b32.xlu0 %v607, 18
        %v1406 = vpop.permute.xlu0 %1405
        %1407 = vrot.lane.b32.xlu0 %v608, 18
        %v1408 = vpop.permute.xlu0 %1407
        %1473 = vrot.lane.b32.xlu0 %v609, 21
        %v1474 = vpop.permute.xlu0 %1473
        %1475 = vrot.lane.b32.xlu0 %v610, 21
        %v1476 = vpop.permute.xlu0 %1475
        %1477 = vrot.lane.b32.xlu0 %v611, 21
        %v1478 = vpop.permute.xlu0 %1477
        %1479 = vrot.lane.b32.xlu0 %v612, 21
        %v1480 = vpop.permute.xlu0 %1479
        %1481 = vrot.lane.b32.xlu0 %v613, 21
        %v1482 = vpop.permute.xlu0 %1481
        %1483 = vrot.lane.b32.xlu0 %v614, 21
        %v1484 = vpop.permute.xlu0 %1483
        %1485 = vrot.lane.b32.xlu0 %v615, 21
        %v1486 = vpop.permute.xlu0 %1485
        %1487 = vrot.lane.b32.xlu0 %v616, 21
        %v1488 = vpop.permute.xlu0 %1487
        %1489 = vrot.lane.b32.xlu0 %v617, 21
        %v1490 = vpop.permute.xlu0 %1489
        %1491 = vrot.lane.b32.xlu0 %v618, 21
        %v1492 = vpop.permute.xlu0 %1491
        %1493 = vrot.lane.b32.xlu0 %v619, 21
        %v1494 = vpop.permute.xlu0 %1493
        %1495 = vrot.lane.b32.xlu0 %v620, 21
        %v1496 = vpop.permute.xlu0 %1495
        %1497 = vrot.lane.b32.xlu0 %v621, 21
        %v1498 = vpop.permute.xlu0 %1497
        %1499 = vrot.lane.b32.xlu0 %v622, 21
        %v1500 = vpop.permute.xlu0 %1499
        %1501 = vrot.lane.b32.xlu0 %v623, 21
        %v1502 = vpop.permute.xlu0 %1501
        %1503 = vrot.lane.b32.xlu0 %v624, 21
        %v1504 = vpop.permute.xlu0 %1503
        %1505 = vrot.lane.b32.xlu0 %v625, 21
        %v1506 = vpop.permute.xlu0 %1505
        %1507 = vrot.lane.b32.xlu0 %v626, 21
        %v1508 = vpop.permute.xlu0 %1507
        %1509 = vrot.lane.b32.xlu0 %v627, 21
        %v1510 = vpop.permute.xlu0 %1509
        %1511 = vrot.lane.b32.xlu0 %v628, 21
        %v1512 = vpop.permute.xlu0 %1511
        %1513 = vrot.lane.b32.xlu0 %v629, 21
        %v1514 = vpop.permute.xlu0 %1513
        %1515 = vrot.lane.b32.xlu0 %v630, 21
        %v1516 = vpop.permute.xlu0 %1515
        %1517 = vrot.lane.b32.xlu0 %v631, 21
        %v1518 = vpop.permute.xlu0 %1517
        %1519 = vrot.lane.b32.xlu0 %v632, 21
        %v1520 = vpop.permute.xlu0 %1519
        %1521 = vrot.lane.b32.xlu0 %v633, 21
        %v1522 = vpop.permute.xlu0 %1521
        %1523 = vrot.lane.b32.xlu0 %v634, 21
        %v1524 = vpop.permute.xlu0 %1523
        %1525 = vrot.lane.b32.xlu0 %v635, 21
        %v1526 = vpop.permute.xlu0 %1525
        %1527 = vrot.lane.b32.xlu0 %v636, 21
        %v1528 = vpop.permute.xlu0 %1527
        %1529 = vrot.lane.b32.xlu0 %v637, 21
        %v1530 = vpop.permute.xlu0 %1529
        %1531 = vrot.lane.b32.xlu0 %v638, 21
        %v1532 = vpop.permute.xlu0 %1531
        %1533 = vrot.lane.b32.xlu0 %v639, 21
        %v1534 = vpop.permute.xlu0 %1533
        %1535 = vrot.lane.b32.xlu0 %v640, 21
        %v1536 = vpop.permute.xlu0 %1535
        %1601 = vrot.lane.b32.xlu0 %v641, 24
        %v1602 = vpop.permute.xlu0 %1601
        %1603 = vrot.lane.b32.xlu0 %v642, 24
        %v1604 = vpop.permute.xlu0 %1603
        %1605 = vrot.lane.b32.xlu0 %v643, 24
        %v1606 = vpop.permute.xlu0 %1605
        %1607 = vrot.lane.b32.xlu0 %v644, 24
        %v1608 = vpop.permute.xlu0 %1607
        %1609 = vrot.lane.b32.xlu0 %v645, 24
        %v1610 = vpop.permute.xlu0 %1609
        %1611 = vrot.lane.b32.xlu0 %v646, 24
        %v1612 = vpop.permute.xlu0 %1611
        %1613 = vrot.lane.b32.xlu0 %v647, 24
        %v1614 = vpop.permute.xlu0 %1613
        %1615 = vrot.lane.b32.xlu0 %v648, 24
        %v1616 = vpop.permute.xlu0 %1615
        %1617 = vrot.lane.b32.xlu0 %v649, 24
        %v1618 = vpop.permute.xlu0 %1617
        %1619 = vrot.lane.b32.xlu0 %v650, 24
        %v1620 = vpop.permute.xlu0 %1619
        %1621 = vrot.lane.b32.xlu0 %v651, 24
        %v1622 = vpop.permute.xlu0 %1621
        %1623 = vrot.lane.b32.xlu0 %v652, 24
        %v1624 = vpop.permute.xlu0 %1623
        %1625 = vrot.lane.b32.xlu0 %v653, 24
        %v1626 = vpop.permute.xlu0 %1625
        %1627 = vrot.lane.b32.xlu0 %v654, 24
        %v1628 = vpop.permute.xlu0 %1627
        %1629 = vrot.lane.b32.xlu0 %v655, 24
        %v1630 = vpop.permute.xlu0 %1629
        %1631 = vrot.lane.b32.xlu0 %v656, 24
        %v1632 = vpop.permute.xlu0 %1631
        %1633 = vrot.lane.b32.xlu0 %v657, 24
        %v1634 = vpop.permute.xlu0 %1633
        %1635 = vrot.lane.b32.xlu0 %v658, 24
        %v1636 = vpop.permute.xlu0 %1635
        %1637 = vrot.lane.b32.xlu0 %v659, 24
        %v1638 = vpop.permute.xlu0 %1637
        %1639 = vrot.lane.b32.xlu0 %v660, 24
        %v1640 = vpop.permute.xlu0 %1639
        %1641 = vrot.lane.b32.xlu0 %v661, 24
        %v1642 = vpop.permute.xlu0 %1641
        %1643 = vrot.lane.b32.xlu0 %v662, 24
        %v1644 = vpop.permute.xlu0 %1643
        %1645 = vrot.lane.b32.xlu0 %v663, 24
        %v1646 = vpop.permute.xlu0 %1645
        %1647 = vrot.lane.b32.xlu0 %v664, 24
        %v1648 = vpop.permute.xlu0 %1647
        %1649 = vrot.lane.b32.xlu0 %v665, 24
        %v1650 = vpop.permute.xlu0 %1649
        %1651 = vrot.lane.b32.xlu0 %v666, 24
        %v1652 = vpop.permute.xlu0 %1651
        %1653 = vrot.lane.b32.xlu0 %v667, 24
        %v1654 = vpop.permute.xlu0 %1653
        %1655 = vrot.lane.b32.xlu0 %v668, 24
        %v1656 = vpop.permute.xlu0 %1655
        %1657 = vrot.lane.b32.xlu0 %v669, 24
        %v1658 = vpop.permute.xlu0 %1657
        %1659 = vrot.lane.b32.xlu0 %v670, 24
        %v1660 = vpop.permute.xlu0 %1659
        %1661 = vrot.lane.b32.xlu0 %v671, 24
        %v1662 = vpop.permute.xlu0 %1661
        %1663 = vrot.lane.b32.xlu0 %v672, 24
        %v1664 = vpop.permute.xlu0 %1663
        %v1697 = vsel %vm309, %v384, %v706
        %v1698 = vsel %vm309, %v385, %v708
        %v1699 = vsel %vm309, %v386, %v710
        %v1700 = vsel %vm309, %v387, %v712
        %v1701 = vsel %vm309, %v388, %v714
        %v1702 = vsel %vm309, %v389, %v716
        %v1703 = vsel %vm309, %v390, %v718
        %v1704 = vsel %vm309, %v391, %v720
        %v1705 = vsel %vm309, %v392, %v722
        %v1706 = vsel %vm309, %v393, %v724
        %v1707 = vsel %vm309, %v394, %v726
        %v1708 = vsel %vm309, %v395, %v728
        %v1709 = vsel %vm309, %v396, %v730
        %v1710 = vsel %vm309, %v397, %v732
        %v1711 = vsel %vm309, %v398, %v734
        %v1712 = vsel %vm309, %v399, %v736
        %v1713 = vsel %vm309, %v400, %v738
        %v1714 = vsel %vm309, %v401, %v740
        %v1715 = vsel %vm309, %v402, %v742
        %v1716 = vsel %vm309, %v403, %v744
        %v1717 = vsel %vm309, %v404, %v746
        %v1718 = vsel %vm309, %v405, %v748
        %v1719 = vsel %vm309, %v406, %v750
        %v1720 = vsel %vm309, %v407, %v752
        %v1721 = vsel %vm309, %v408, %v754
        %v1722 = vsel %vm309, %v409, %v756
        %v1723 = vsel %vm309, %v410, %v758
        %v1724 = vsel %vm309, %v411, %v760
        %v1725 = vsel %vm309, %v412, %v762
        %v1726 = vsel %vm309, %v413, %v764
        %v1727 = vsel %vm309, %v414, %v766
        %v1728 = vsel %vm309, %v415, %v768
        %vm1729 = vcmask 48128
        %v1730 = vsel %vm1729, %v1697, %v834
        %v1731 = vsel %vm1729, %v1698, %v836
        %v1732 = vsel %vm1729, %v1699, %v838
        %v1733 = vsel %vm1729, %v1700, %v840
        %v1734 = vsel %vm1729, %v1701, %v842
        %v1735 = vsel %vm1729, %v1702, %v844
        %v1736 = vsel %vm1729, %v1703, %v846
        %v1737 = vsel %vm1729, %v1704, %v848
        %v1738 = vsel %vm1729, %v1705, %v850
        %v1739 = vsel %vm1729, %v1706, %v852
        %v1740 = vsel %vm1729, %v1707, %v854
        %v1741 = vsel %vm1729, %v1708, %v856
        %v1742 = vsel %vm1729, %v1709, %v858
        %v1743 = vsel %vm1729, %v1710, %v860
        %v1744 = vsel %vm1729, %v1711, %v862
        %v1745 = vsel %vm1729, %v1712, %v864
        %v1746 = vsel %vm1729, %v1713, %v866
        %v1747 = vsel %vm1729, %v1714, %v868
        %v1748 = vsel %vm1729, %v1715, %v870
        %v1749 = vsel %vm1729, %v1716, %v872
        %v1750 = vsel %vm1729, %v1717, %v874
        %v1751 = vsel %vm1729, %v1718, %v876
        %v1752 = vsel %vm1729, %v1719, %v878
        %v1753 = vsel %vm1729, %v1720, %v880
        %v1754 = vsel %vm1729, %v1721, %v882
        %v1755 = vsel %vm1729, %v1722, %v884
        %v1756 = vsel %vm1729, %v1723, %v886
        %v1757 = vsel %vm1729, %v1724, %v888
        %v1758 = vsel %vm1729, %v1725, %v890
        %v1759 = vsel %vm1729, %v1726, %v892
        %v1760 = vsel %vm1729, %v1727, %v894
        %v1761 = vsel %vm1729, %v1728, %v896
        %vm1762 = vcmask 72704
        %v1763 = vsel %vm1762, %v1730, %v962
        %v1764 = vsel %vm1762, %v1731, %v964
        %v1765 = vsel %vm1762, %v1732, %v966
        %v1766 = vsel %vm1762, %v1733, %v968
        %v1767 = vsel %vm1762, %v1734, %v970
        %v1768 = vsel %vm1762, %v1735, %v972
        %v1769 = vsel %vm1762, %v1736, %v974
        %v1770 = vsel %vm1762, %v1737, %v976
        %v1771 = vsel %vm1762, %v1738, %v978
        %v1772 = vsel %vm1762, %v1739, %v980
        %v1773 = vsel %vm1762, %v1740, %v982
        %v1774 = vsel %vm1762, %v1741, %v984
        %v1775 = vsel %vm1762, %v1742, %v986
        %v1776 = vsel %vm1762, %v1743, %v988
        %v1777 = vsel %vm1762, %v1744, %v990
        %v1778 = vsel %vm1762, %v1745, %v992
        %v1779 = vsel %vm1762, %v1746, %v994
        %v1780 = vsel %vm1762, %v1747, %v996
        %v1781 = vsel %vm1762, %v1748, %v998
        %v1782 = vsel %vm1762, %v1749, %v1000
        %v1783 = vsel %vm1762, %v1750, %v1002
        %v1784 = vsel %vm1762, %v1751, %v1004
        %v1785 = vsel %vm1762, %v1752, %v1006
        %v1786 = vsel %vm1762, %v1753, %v1008
        %v1787 = vsel %vm1762, %v1754, %v1010
        %v1788 = vsel %vm1762, %v1755, %v1012
        %v1789 = vsel %vm1762, %v1756, %v1014
        %v1790 = vsel %vm1762, %v1757, %v1016
        %v1791 = vsel %vm1762, %v1758, %v1018
        %v1792 = vsel %vm1762, %v1759, %v1020
        %v1793 = vsel %vm1762, %v1760, %v1022
        %v1794 = vsel %vm1762, %v1761, %v1024
        %vm1795 = vcmask 97280
        %v1796 = vsel %vm1795, %v1763, %v1090
        %v1797 = vsel %vm1795, %v1764, %v1092
        %v1798 = vsel %vm1795, %v1765, %v1094
        %v1799 = vsel %vm1795, %v1766, %v1096
        %v1800 = vsel %vm1795, %v1767, %v1098
        %v1801 = vsel %vm1795, %v1768, %v1100
        %v1802 = vsel %vm1795, %v1769, %v1102
        %v1803 = vsel %vm1795, %v1770, %v1104
        %v1804 = vsel %vm1795, %v1771, %v1106
        %v1805 = vsel %vm1795, %v1772, %v1108
        %v1806 = vsel %vm1795, %v1773, %v1110
        %v1807 = vsel %vm1795, %v1774, %v1112
        %v1808 = vsel %vm1795, %v1775, %v1114
        %v1809 = vsel %vm1795, %v1776, %v1116
        %v1810 = vsel %vm1795, %v1777, %v1118
        %v1811 = vsel %vm1795, %v1778, %v1120
        %v1812 = vsel %vm1795, %v1779, %v1122
        %v1813 = vsel %vm1795, %v1780, %v1124
        %v1814 = vsel %vm1795, %v1781, %v1126
        %v1815 = vsel %vm1795, %v1782, %v1128
        %v1816 = vsel %vm1795, %v1783, %v1130
        %v1817 = vsel %vm1795, %v1784, %v1132
        %v1818 = vsel %vm1795, %v1785, %v1134
        %v1819 = vsel %vm1795, %v1786, %v1136
        %v1820 = vsel %vm1795, %v1787, %v1138
        %v1821 = vsel %vm1795, %v1788, %v1140
        %v1822 = vsel %vm1795, %v1789, %v1142
        %v1823 = vsel %vm1795, %v1790, %v1144
        %v1824 = vsel %vm1795, %v1791, %v1146
        %v1825 = vsel %vm1795, %v1792, %v1148
        %v1826 = vsel %vm1795, %v1793, %v1150
        %v1827 = vsel %vm1795, %v1794, %v1152
        %vm1828 = vcmask 121856
        %v1829 = vsel %vm1828, %v1796, %v1218
        %v1830 = vsel %vm1828, %v1797, %v1220
        %v1831 = vsel %vm1828, %v1798, %v1222
        %v1832 = vsel %vm1828, %v1799, %v1224
        %v1833 = vsel %vm1828, %v1800, %v1226
        %v1834 = vsel %vm1828, %v1801, %v1228
        %v1835 = vsel %vm1828, %v1802, %v1230
        %v1836 = vsel %vm1828, %v1803, %v1232
        %v1837 = vsel %vm1828, %v1804, %v1234
        %v1838 = vsel %vm1828, %v1805, %v1236
        %v1839 = vsel %vm1828, %v1806, %v1238
        %v1840 = vsel %vm1828, %v1807, %v1240
        %v1841 = vsel %vm1828, %v1808, %v1242
        %v1842 = vsel %vm1828, %v1809, %v1244
        %v1843 = vsel %vm1828, %v1810, %v1246
        %v1844 = vsel %vm1828, %v1811, %v1248
        %v1845 = vsel %vm1828, %v1812, %v1250
        %v1846 = vsel %vm1828, %v1813, %v1252
        %v1847 = vsel %vm1828, %v1814, %v1254
        %v1848 = vsel %vm1828, %v1815, %v1256
        %v1849 = vsel %vm1828, %v1816, %v1258
        %v1850 = vsel %vm1828, %v1817, %v1260
        %v1851 = vsel %vm1828, %v1818, %v1262
        %v1852 = vsel %vm1828, %v1819, %v1264
        %v1853 = vsel %vm1828, %v1820, %v1266
        %v1854 = vsel %vm1828, %v1821, %v1268
        %v1855 = vsel %vm1828, %v1822, %v1270
        %v1856 = vsel %vm1828, %v1823, %v1272
        %v1857 = vsel %vm1828, %v1824, %v1274
        %v1858 = vsel %vm1828, %v1825, %v1276
        %v1859 = vsel %vm1828, %v1826, %v1278
        %v1860 = vsel %vm1828, %v1827, %v1280
        %vm1861 = vcmask 146432
        %v1862 = vsel %vm1861, %v1829, %v1346
        %v1863 = vsel %vm1861, %v1830, %v1348
        %v1864 = vsel %vm1861, %v1831, %v1350
        %v1865 = vsel %vm1861, %v1832, %v1352
        %v1866 = vsel %vm1861, %v1833, %v1354
        %v1867 = vsel %vm1861, %v1834, %v1356
        %v1868 = vsel %vm1861, %v1835, %v1358
        %v1869 = vsel %vm1861, %v1836, %v1360
        %v1870 = vsel %vm1861, %v1837, %v1362
        %v1871 = vsel %vm1861, %v1838, %v1364
        %v1872 = vsel %vm1861, %v1839, %v1366
        %v1873 = vsel %vm1861, %v1840, %v1368
        %v1874 = vsel %vm1861, %v1841, %v1370
        %v1875 = vsel %vm1861, %v1842, %v1372
        %v1876 = vsel %vm1861, %v1843, %v1374
        %v1877 = vsel %vm1861, %v1844, %v1376
        %v1878 = vsel %vm1861, %v1845, %v1378
        %v1879 = vsel %vm1861, %v1846, %v1380
        %v1880 = vsel %vm1861, %v1847, %v1382
        %v1881 = vsel %vm1861, %v1848, %v1384
        %v1882 = vsel %vm1861, %v1849, %v1386
        %v1883 = vsel %vm1861, %v1850, %v1388
        %v1884 = vsel %vm1861, %v1851, %v1390
        %v1885 = vsel %vm1861, %v1852, %v1392
        %v1886 = vsel %vm1861, %v1853, %v1394
        %v1887 = vsel %vm1861, %v1854, %v1396
        %v1888 = vsel %vm1861, %v1855, %v1398
        %v1889 = vsel %vm1861, %v1856, %v1400
        %v1890 = vsel %vm1861, %v1857, %v1402
        %v1891 = vsel %vm1861, %v1858, %v1404
        %v1892 = vsel %vm1861, %v1859, %v1406
        %v1893 = vsel %vm1861, %v1860, %v1408
        %vm1894 = vcmask 171008
        %v1895 = vsel %vm1894, %v1862, %v1474
        %v1896 = vsel %vm1894, %v1863, %v1476
        %v1897 = vsel %vm1894, %v1864, %v1478
        %v1898 = vsel %vm1894, %v1865, %v1480
        %v1899 = vsel %vm1894, %v1866, %v1482
        %v1900 = vsel %vm1894, %v1867, %v1484
        %v1901 = vsel %vm1894, %v1868, %v1486
        %v1902 = vsel %vm1894, %v1869, %v1488
        %v1903 = vsel %vm1894, %v1870, %v1490
        %v1904 = vsel %vm1894, %v1871, %v1492
        %v1905 = vsel %vm1894, %v1872, %v1494
        %v1906 = vsel %vm1894, %v1873, %v1496
        %v1907 = vsel %vm1894, %v1874, %v1498
        %v1908 = vsel %vm1894, %v1875, %v1500
        %v1909 = vsel %vm1894, %v1876, %v1502
        %v1910 = vsel %vm1894, %v1877, %v1504
        %v1911 = vsel %vm1894, %v1878, %v1506
        %v1912 = vsel %vm1894, %v1879, %v1508
        %v1913 = vsel %vm1894, %v1880, %v1510
        %v1914 = vsel %vm1894, %v1881, %v1512
        %v1915 = vsel %vm1894, %v1882, %v1514
        %v1916 = vsel %vm1894, %v1883, %v1516
        %v1917 = vsel %vm1894, %v1884, %v1518
        %v1918 = vsel %vm1894, %v1885, %v1520
        %v1919 = vsel %vm1894, %v1886, %v1522
        %v1920 = vsel %vm1894, %v1887, %v1524
        %v1921 = vsel %vm1894, %v1888, %v1526
        %v1922 = vsel %vm1894, %v1889, %v1528
        %v1923 = vsel %vm1894, %v1890, %v1530
        %v1924 = vsel %vm1894, %v1891, %v1532
        %v1925 = vsel %vm1894, %v1892, %v1534
        %v1926 = vsel %vm1894, %v1893, %v1536
        %vm1927 = vcmask 195584
        %v1928 = vsel %vm1927, %v1895, %v1602
        %v1929 = vsel %vm1927, %v1896, %v1604
        %v1930 = vsel %vm1927, %v1897, %v1606
        %v1931 = vsel %vm1927, %v1898, %v1608
        %v1932 = vsel %vm1927, %v1899, %v1610
        %v1933 = vsel %vm1927, %v1900, %v1612
        %v1934 = vsel %vm1927, %v1901, %v1614
        %v1935 = vsel %vm1927, %v1902, %v1616
        %v1936 = vsel %vm1927, %v1903, %v1618
        %v1937 = vsel %vm1927, %v1904, %v1620
        %v1938 = vsel %vm1927, %v1905, %v1622
        %v1939 = vsel %vm1927, %v1906, %v1624
        %v1940 = vsel %vm1927, %v1907, %v1626
        %v1941 = vsel %vm1927, %v1908, %v1628
        %v1942 = vsel %vm1927, %v1909, %v1630
        %v1943 = vsel %vm1927, %v1910, %v1632
        %v1944 = vsel %vm1927, %v1911, %v1634
        %v1945 = vsel %vm1927, %v1912, %v1636
        %v1946 = vsel %vm1927, %v1913, %v1638
        %v1947 = vsel %vm1927, %v1914, %v1640
        %v1948 = vsel %vm1927, %v1915, %v1642
        %v1949 = vsel %vm1927, %v1916, %v1644
        %v1950 = vsel %vm1927, %v1917, %v1646
        %v1951 = vsel %vm1927, %v1918, %v1648
        %v1952 = vsel %vm1927, %v1919, %v1650
        %v1953 = vsel %vm1927, %v1920, %v1652
        %v1954 = vsel %vm1927, %v1921, %v1654
        %v1955 = vsel %vm1927, %v1922, %v1656
        %v1956 = vsel %vm1927, %v1923, %v1658
        %v1957 = vsel %vm1927, %v1924, %v1660
        %v1958 = vsel %vm1927, %v1925, %v1662
        %v1959 = vsel %vm1927, %v1926, %v1664
        %v1960 = vld [vmem:[%s1] sm:$0xf]
        %v1961 = vld [vmem:[%s1 + $0x4] sm:$0xf]
        %v1962 = vld [vmem:[%s1 + $0x8] sm:$0xf]
        %v1963 = vld [vmem:[%s1 + $0xc] sm:$0x3]
        %v1964 = vpack.c.bf16 %v1929, %v1928
        %v1965 = vpack.c.bf16 %v1931, %v1930
        %v1966 = vpack.c.bf16 %v1933, %v1932
        %v1967 = vpack.c.bf16 %v1935, %v1934
        %v1968 = vpack.c.bf16 %v1937, %v1936
        %v1969 = vpack.c.bf16 %v1939, %v1938
        %v1970 = vpack.c.bf16 %v1941, %v1940
        %v1971 = vpack.c.bf16 %v1943, %v1942
        %v1972 = vpack.c.bf16 %v1945, %v1944
        %v1973 = vpack.c.bf16 %v1947, %v1946
        %v1974 = vpack.c.bf16 %v1949, %v1948
        %v1975 = vpack.c.bf16 %v1951, %v1950
        %v1976 = vpack.c.bf16 %v1953, %v1952
        %v1977 = vpack.c.bf16 %v1955, %v1954
        %v1978 = vpack.c.bf16 %v1957, %v1956
        %v1979 = vpack.c.bf16 %v1959, %v1958
        %v1980 = vld [vmem:[%s2] sm:$0x7]
        %v1981 = vlaneseq
        %v1982 = vshrl.u32 %v1981, 7
        %v1983 = vsub.s32 0, %v1982
        %v1984 = vrot.slane %v1980, %v1983
        %v1989 = vunpack.c.l.b16 %v1960
        %v1990 = vunpack.c.l.b16 %v1961
        %v1991 = vunpack.c.l.b16 %v1962
        %v1992 = vunpack.c.l.b16 %v1963
        %v1993 = vpack.c.b16 %v1990, %v1989
        %v1994 = vpack.c.b16 %v1992, %v1991
        %vm1996 = vcmask 220160
        %v1998 = vsel %vm1996, %v1964, 0
        %v2001 = vsel %vm1996, %v1965, 0
        %v2004 = vsel %vm1996, %v1966, 0
        %v2007 = vsel %vm1996, %v1967, 0
        %v2010 = vsel %vm1996, %v1968, 0
        %v2013 = vsel %vm1996, %v1969, 0
        %v2016 = vsel %vm1996, %v1970, 0
        %v2019 = vsel %vm1996, %v1971, 0
        %v2022 = vsel %vm1996, %v1972, 0
        %v2025 = vsel %vm1996, %v1973, 0
        %v2028 = vsel %vm1996, %v1974, 0
        %v2031 = vsel %vm1996, %v1975, 0
        %v2034 = vsel %vm1996, %v1976, 0
        %v2037 = vsel %vm1996, %v1977, 0
        %v2040 = vsel %vm1996, %v1978, 0
        %v2043 = vsel %vm1996, %v1979, 0
        %vm2045 = vcmask 1044480
        %vm2046 = vcmask 1045504
        %v2047 = vsel %vm2045, 4294967295, 65535
        %v2048 = vsel %vm2046, %v2047, 0
        %v2050 = vand.u32 %v1994, %v2048
        %2052 = vmatprep.subr.bf16.mxu0 0
        %2053 = vmatpush1.bf16.msra.mxu0 %v1993
        %2054 = vmatprep.subr.bf16.mxu0 0
        %2055 = vmatpush1.bf16.msra.mxu0 %v2050
        %2056 = vmatprep.subr.bf16.mxu0 0
        %2057 = vmatpush1.bf16.msra.mxu0 0
        %2058 = vmatprep.subr.bf16.mxu0 0
        %2059 = vmatpush1.bf16.msra.mxu0 0
        %2060 = vmatprep.subr.bf16.mxu0 0
        %2061 = vmatpush1.bf16.msra.mxu0 0
        %2062 = vmatprep.subr.bf16.mxu0 0
        %2063 = vmatpush1.bf16.msra.mxu0 0
        %2064 = vmatprep.subr.bf16.mxu0 0
        %2065 = vmatpush1.bf16.msra.mxu0 0
        %2066 = vmatprep.subr.bf16.mxu0 0
        %2067 = vmatpush1.bf16.msra.mxu0 0
        %2068 = vmatprep.subr.bf16.mxu0 0
        %2069 = vmatpush1.bf16.msra.mxu0 0
        %2070 = vmatprep.subr.bf16.mxu0 0
        %2071 = vmatpush1.bf16.msra.mxu0 0
        %2072 = vmatprep.subr.bf16.mxu0 0
        %2073 = vmatpush1.bf16.msra.mxu0 0
        %2074 = vmatprep.subr.bf16.mxu0 0
        %2075 = vmatpush1.bf16.msra.mxu0 0
        %2076 = vmatprep.subr.bf16.mxu0 0
        %2077 = vmatpush1.bf16.msra.mxu0 0
        %2078 = vmatprep.subr.bf16.mxu0 0
        %2079 = vmatpush1.bf16.msra.mxu0 0
        %2080 = vmatprep.subr.bf16.mxu0 0
        %2081 = vmatpush1.bf16.msra.mxu0 0
        %2082 = vmatprep.subr.bf16.mxu0 0
        %2083 = vmatpush1.bf16.msra.mxu0 0
        %2084 = vmatprep.mubr.bf16.mxu0 0
        %2085 = vmatmul.mubr.bf16.gmra.mrb[0].mxu0 %v1998
        %v2086 = vpop.f32.mrb[0].mxu0
        %v2087 = vadd.f32 %v1984, %v2086
        %v2088 = vpop.f32.mrb[0].mxu0
        %v2089 = vpop.f32.mrb[0].mxu0
        %v2090 = vadd.f32 %v1984, %v2089
        %v2091 = vpop.f32.mrb[0].mxu0
        %2092 = vmatprep.mubr.bf16.mxu0 0
        %2093 = vmatmul.mubr.bf16.gmra.mrb[0].mxu0 %v2001
        %v2094 = vpop.f32.mrb[0].mxu0
        %v2095 = vadd.f32 %v1984, %v2094
        %v2096 = vpop.f32.mrb[0].mxu0
        %v2097 = vpop.f32.mrb[0].mxu0
        %v2098 = vadd.f32 %v1984, %v2097
        %v2099 = vpop.f32.mrb[0].mxu0
        %2100 = vmatprep.mubr.bf16.mxu0 0
        %2101 = vmatmul.mubr.bf16.gmra.mrb[0].mxu0 %v2004
        %v2102 = vpop.f32.mrb[0].mxu0
        %v2103 = vadd.f32 %v1984, %v2102
        %v2104 = vpop.f32.mrb[0].mxu0
        %v2105 = vpop.f32.mrb[0].mxu0
        %v2106 = vadd.f32 %v1984, %v2105
        %v2107 = vpop.f32.mrb[0].mxu0
        %2108 = vmatprep.mubr.bf16.mxu0 0
        %2109 = vmatmul.mubr.bf16.gmra.mrb[0].mxu0 %v2007
        %v2110 = vpop.f32.mrb[0].mxu0
        %v2111 = vadd.f32 %v1984, %v2110
        %v2112 = vpop.f32.mrb[0].mxu0
        %v2113 = vpop.f32.mrb[0].mxu0
        %v2114 = vadd.f32 %v1984, %v2113
        %v2115 = vpop.f32.mrb[0].mxu0
        %2116 = vmatprep.mubr.bf16.mxu0 0
        %2117 = vmatmul.mubr.bf16.gmra.mrb[0].mxu0 %v2010
        %v2118 = vpop.f32.mrb[0].mxu0
        %v2119 = vadd.f32 %v1984, %v2118
        %v2120 = vpop.f32.mrb[0].mxu0
        %v2121 = vpop.f32.mrb[0].mxu0
        %v2122 = vadd.f32 %v1984, %v2121
        %v2123 = vpop.f32.mrb[0].mxu0
        %2124 = vmatprep.mubr.bf16.mxu0 0
        %2125 = vmatmul.mubr.bf16.gmra.mrb[0].mxu0 %v2013
        %v2126 = vpop.f32.mrb[0].mxu0
        %v2127 = vadd.f32 %v1984, %v2126
        %v2128 = vpop.f32.mrb[0].mxu0
        %v2129 = vpop.f32.mrb[0].mxu0
        %v2130 = vadd.f32 %v1984, %v2129
        %v2131 = vpop.f32.mrb[0].mxu0
        %2132 = vmatprep.mubr.bf16.mxu0 0
        %2133 = vmatmul.mubr.bf16.gmra.mrb[0].mxu0 %v2016
        %v2134 = vpop.f32.mrb[0].mxu0
        %v2135 = vadd.f32 %v1984, %v2134
        %v2136 = vpop.f32.mrb[0].mxu0
        %v2137 = vpop.f32.mrb[0].mxu0
        %v2138 = vadd.f32 %v1984, %v2137
        %v2139 = vpop.f32.mrb[0].mxu0
        %2140 = vmatprep.mubr.bf16.mxu0 0
        %2141 = vmatmul.mubr.bf16.gmra.mrb[0].mxu0 %v2019
        %v2142 = vpop.f32.mrb[0].mxu0
        %v2143 = vadd.f32 %v1984, %v2142
        %v2144 = vpop.f32.mrb[0].mxu0
        %v2145 = vpop.f32.mrb[0].mxu0
        %v2146 = vadd.f32 %v1984, %v2145
        %v2147 = vpop.f32.mrb[0].mxu0
        %2148 = vmatprep.mubr.bf16.mxu0 0
        %2149 = vmatmul.mubr.bf16.gmra.mrb[0].mxu0 %v2022
        %v2150 = vpop.f32.mrb[0].mxu0
        %v2151 = vadd.f32 %v1984, %v2150
        %v2152 = vpop.f32.mrb[0].mxu0
        %v2153 = vpop.f32.mrb[0].mxu0
        %v2154 = vadd.f32 %v1984, %v2153
        %v2155 = vpop.f32.mrb[0].mxu0
        %2156 = vmatprep.mubr.bf16.mxu0 0
        %2157 = vmatmul.mubr.bf16.gmra.mrb[0].mxu0 %v2025
        %v2158 = vpop.f32.mrb[0].mxu0
        %v2159 = vadd.f32 %v1984, %v2158
        %v2160 = vpop.f32.mrb[0].mxu0
        %v2161 = vpop.f32.mrb[0].mxu0
        %v2162 = vadd.f32 %v1984, %v2161
        %v2163 = vpop.f32.mrb[0].mxu0
        %2164 = vmatprep.mubr.bf16.mxu0 0
        %2165 = vmatmul.mubr.bf16.gmra.mrb[0].mxu0 %v2028
        %v2166 = vpop.f32.mrb[0].mxu0
        %v2167 = vadd.f32 %v1984, %v2166
        %v2168 = vpop.f32.mrb[0].mxu0
        %v2169 = vpop.f32.mrb[0].mxu0
        %v2170 = vadd.f32 %v1984, %v2169
        %v2171 = vpop.f32.mrb[0].mxu0
        %2172 = vmatprep.mubr.bf16.mxu0 0
        %2173 = vmatmul.mubr.bf16.gmra.mrb[0].mxu0 %v2031
        %v2174 = vpop.f32.mrb[0].mxu0
        %v2175 = vadd.f32 %v1984, %v2174
        %v2176 = vpop.f32.mrb[0].mxu0
        %v2177 = vpop.f32.mrb[0].mxu0
        %v2178 = vadd.f32 %v1984, %v2177
        %v2179 = vpop.f32.mrb[0].mxu0
        %2180 = vmatprep.mubr.bf16.mxu0 0
        %2181 = vmatmul.mubr.bf16.gmra.mrb[0].mxu0 %v2034
        %v2182 = vpop.f32.mrb[0].mxu0
        %v2183 = vadd.f32 %v1984, %v2182
        %v2184 = vpop.f32.mrb[0].mxu0
        %v2185 = vpop.f32.mrb[0].mxu0
        %v2186 = vadd.f32 %v1984, %v2185
        %v2187 = vpop.f32.mrb[0].mxu0
        %2188 = vmatprep.mubr.bf16.mxu0 0
        %2189 = vmatmul.mubr.bf16.gmra.mrb[0].mxu0 %v2037
        %v2190 = vpop.f32.mrb[0].mxu0
        %v2191 = vadd.f32 %v1984, %v2190
        %v2192 = vpop.f32.mrb[0].mxu0
        %v2193 = vpop.f32.mrb[0].mxu0
        %v2194 = vadd.f32 %v1984, %v2193
        %v2195 = vpop.f32.mrb[0].mxu0
        %2196 = vmatprep.mubr.bf16.mxu0 0
        %2197 = vmatmul.mubr.bf16.gmra.mrb[0].mxu0 %v2040
        %v2198 = vpop.f32.mrb[0].mxu0
        %v2199 = vadd.f32 %v1984, %v2198
        %v2200 = vpop.f32.mrb[0].mxu0
        %v2201 = vpop.f32.mrb[0].mxu0
        %v2202 = vadd.f32 %v1984, %v2201
        %v2203 = vpop.f32.mrb[0].mxu0
        %2204 = vmatprep.mubr.bf16.mxu0 0
        %2205 = vmatmul.mubr.bf16.gmra.mrb[0].mxu0 %v2043
        %v2206 = vpop.f32.mrb[0].mxu0
        %v2207 = vadd.f32 %v1984, %v2206
        %v2208 = vpop.f32.mrb[0].mxu0
        %v2209 = vpop.f32.mrb[0].mxu0
        %v2210 = vadd.f32 %v1984, %v2209
        %v2211 = vpop.f32.mrb[0].mxu0
        %2212 = vdwg.mxu0
        %vm2213 = vcmp.gt.f32.partialorder %v2087, 0.0
        %vm2214 = vcmp.gt.f32.partialorder %v2090, 0.0
        %vm2215 = vcmp.gt.f32.partialorder %v2095, 0.0
        %vm2216 = vcmp.gt.f32.partialorder %v2098, 0.0
        %vm2217 = vcmp.gt.f32.partialorder %v2103, 0.0
        %vm2218 = vcmp.gt.f32.partialorder %v2106, 0.0
        %vm2219 = vcmp.gt.f32.partialorder %v2111, 0.0
        %vm2220 = vcmp.gt.f32.partialorder %v2114, 0.0
        %vm2221 = vcmp.gt.f32.partialorder %v2119, 0.0
        %vm2222 = vcmp.gt.f32.partialorder %v2122, 0.0
        %vm2223 = vcmp.gt.f32.partialorder %v2127, 0.0
        %vm2224 = vcmp.gt.f32.partialorder %v2130, 0.0
        %vm2225 = vcmp.gt.f32.partialorder %v2135, 0.0
        %vm2226 = vcmp.gt.f32.partialorder %v2138, 0.0
        %vm2227 = vcmp.gt.f32.partialorder %v2143, 0.0
        %vm2228 = vcmp.gt.f32.partialorder %v2146, 0.0
        %vm2229 = vcmp.gt.f32.partialorder %v2151, 0.0
        %vm2230 = vcmp.gt.f32.partialorder %v2154, 0.0
        %vm2231 = vcmp.gt.f32.partialorder %v2159, 0.0
        %vm2232 = vcmp.gt.f32.partialorder %v2162, 0.0
        %vm2233 = vcmp.gt.f32.partialorder %v2167, 0.0
        %vm2234 = vcmp.gt.f32.partialorder %v2170, 0.0
        %vm2235 = vcmp.gt.f32.partialorder %v2175, 0.0
        %vm2236 = vcmp.gt.f32.partialorder %v2178, 0.0
        %vm2237 = vcmp.gt.f32.partialorder %v2183, 0.0
        %vm2238 = vcmp.gt.f32.partialorder %v2186, 0.0
        %vm2239 = vcmp.gt.f32.partialorder %v2191, 0.0
        %vm2240 = vcmp.gt.f32.partialorder %v2194, 0.0
        %vm2241 = vcmp.gt.f32.partialorder %v2199, 0.0
        %vm2242 = vcmp.gt.f32.partialorder %v2202, 0.0
        %vm2243 = vcmp.gt.f32.partialorder %v2207, 0.0
        %vm2244 = vcmp.gt.f32.partialorder %v2210, 0.0
        %v2245 = vmul.f32 %v2087, 0.1
        %v2246 = vmul.f32 %v2090, 0.1
        %v2247 = vmul.f32 %v2095, 0.1
        %v2248 = vmul.f32 %v2098, 0.1
        %v2249 = vmul.f32 %v2103, 0.1
        %v2250 = vmul.f32 %v2106, 0.1
        %v2251 = vmul.f32 %v2111, 0.1
        %v2252 = vmul.f32 %v2114, 0.1
        %v2253 = vmul.f32 %v2119, 0.1
        %v2254 = vmul.f32 %v2122, 0.1
        %v2255 = vmul.f32 %v2127, 0.1
        %v2256 = vmul.f32 %v2130, 0.1
        %v2257 = vmul.f32 %v2135, 0.1
        %v2258 = vmul.f32 %v2138, 0.1
        %v2259 = vmul.f32 %v2143, 0.1
        %v2260 = vmul.f32 %v2146, 0.1
        %v2261 = vmul.f32 %v2151, 0.1
        %v2262 = vmul.f32 %v2154, 0.1
        %v2263 = vmul.f32 %v2159, 0.1
        %v2264 = vmul.f32 %v2162, 0.1
        %v2265 = vmul.f32 %v2167, 0.1
        %v2266 = vmul.f32 %v2170, 0.1
        %v2267 = vmul.f32 %v2175, 0.1
        %v2268 = vmul.f32 %v2178, 0.1
        %v2269 = vmul.f32 %v2183, 0.1
        %v2270 = vmul.f32 %v2186, 0.1
        %v2271 = vmul.f32 %v2191, 0.1
        %v2272 = vmul.f32 %v2194, 0.1
        %v2273 = vmul.f32 %v2199, 0.1
        %v2274 = vmul.f32 %v2202, 0.1
        %v2275 = vmul.f32 %v2207, 0.1
        %v2276 = vmul.f32 %v2210, 0.1
        %v2277 = vsel %vm2213, %v2087, %v2245
        %v2278 = vsel %vm2214, %v2090, %v2246
        %v2279 = vsel %vm2215, %v2095, %v2247
        %v2280 = vsel %vm2216, %v2098, %v2248
        %v2281 = vsel %vm2217, %v2103, %v2249
        %v2282 = vsel %vm2218, %v2106, %v2250
        %v2283 = vsel %vm2219, %v2111, %v2251
        %v2284 = vsel %vm2220, %v2114, %v2252
        %v2285 = vsel %vm2221, %v2119, %v2253
        %v2286 = vsel %vm2222, %v2122, %v2254
        %v2287 = vsel %vm2223, %v2127, %v2255
        %v2288 = vsel %vm2224, %v2130, %v2256
        %v2289 = vsel %vm2225, %v2135, %v2257
        %v2290 = vsel %vm2226, %v2138, %v2258
        %v2291 = vsel %vm2227, %v2143, %v2259
        %v2292 = vsel %vm2228, %v2146, %v2260
        %v2293 = vsel %vm2229, %v2151, %v2261
        %v2294 = vsel %vm2230, %v2154, %v2262
        %v2295 = vsel %vm2231, %v2159, %v2263
        %v2296 = vsel %vm2232, %v2162, %v2264
        %v2297 = vsel %vm2233, %v2167, %v2265
        %v2298 = vsel %vm2234, %v2170, %v2266
        %v2299 = vsel %vm2235, %v2175, %v2267
        %v2300 = vsel %vm2236, %v2178, %v2268
        %v2301 = vsel %vm2237, %v2183, %v2269
        %v2302 = vsel %vm2238, %v2186, %v2270
        %v2303 = vsel %vm2239, %v2191, %v2271
        %v2304 = vsel %vm2240, %v2194, %v2272
        %v2305 = vsel %vm2241, %v2199, %v2273
        %v2306 = vsel %vm2242, %v2202, %v2274
        %v2307 = vsel %vm2243, %v2207, %v2275
        %v2308 = vsel %vm2244, %v2210, %v2276
        %v2309 = vlaneseq
        %v2310 = vshrl.u32 %v2309, 7
        %v2311 = vsub.s32 1, %v2310
        %v2312 = vrot.slane %v1980, %v2311
        %v2313 = vmul.f32 %v2277, %v2312
        %v2314 = vmul.f32 %v2278, %v2312
        %v2315 = vmul.f32 %v2279, %v2312
        %v2316 = vmul.f32 %v2280, %v2312
        %v2317 = vmul.f32 %v2281, %v2312
        %v2318 = vmul.f32 %v2282, %v2312
        %v2319 = vmul.f32 %v2283, %v2312
        %v2320 = vmul.f32 %v2284, %v2312
        %v2321 = vmul.f32 %v2285, %v2312
        %v2322 = vmul.f32 %v2286, %v2312
        %v2323 = vmul.f32 %v2287, %v2312
        %v2324 = vmul.f32 %v2288, %v2312
        %v2325 = vmul.f32 %v2289, %v2312
        %v2326 = vmul.f32 %v2290, %v2312
        %v2327 = vmul.f32 %v2291, %v2312
        %v2328 = vmul.f32 %v2292, %v2312
        %v2329 = vmul.f32 %v2293, %v2312
        %v2330 = vmul.f32 %v2294, %v2312
        %v2331 = vmul.f32 %v2295, %v2312
        %v2332 = vmul.f32 %v2296, %v2312
        %v2333 = vmul.f32 %v2297, %v2312
        %v2334 = vmul.f32 %v2298, %v2312
        %v2335 = vmul.f32 %v2299, %v2312
        %v2336 = vmul.f32 %v2300, %v2312
        %v2337 = vmul.f32 %v2301, %v2312
        %v2338 = vmul.f32 %v2302, %v2312
        %v2339 = vmul.f32 %v2303, %v2312
        %v2340 = vmul.f32 %v2304, %v2312
        %v2341 = vmul.f32 %v2305, %v2312
        %v2342 = vmul.f32 %v2306, %v2312
        %v2343 = vmul.f32 %v2307, %v2312
        %v2344 = vmul.f32 %v2308, %v2312
        %v2345 = vlaneseq
        %v2346 = vshrl.u32 %v2345, 7
        %v2347 = vsub.s32 2, %v2346
        %v2348 = vrot.slane %v1980, %v2347
        %v2349 = vadd.f32 %v2313, %v2348
        %v2350 = vadd.f32 %v2314, %v2348
        %v2351 = vadd.f32 %v2315, %v2348
        %v2352 = vadd.f32 %v2316, %v2348
        %v2353 = vadd.f32 %v2317, %v2348
        %v2354 = vadd.f32 %v2318, %v2348
        %v2355 = vadd.f32 %v2319, %v2348
        %v2356 = vadd.f32 %v2320, %v2348
        %v2357 = vadd.f32 %v2321, %v2348
        %v2358 = vadd.f32 %v2322, %v2348
        %v2359 = vadd.f32 %v2323, %v2348
        %v2360 = vadd.f32 %v2324, %v2348
        %v2361 = vadd.f32 %v2325, %v2348
        %v2362 = vadd.f32 %v2326, %v2348
        %v2363 = vadd.f32 %v2327, %v2348
        %v2364 = vadd.f32 %v2328, %v2348
        %v2365 = vadd.f32 %v2329, %v2348
        %v2366 = vadd.f32 %v2330, %v2348
        %v2367 = vadd.f32 %v2331, %v2348
        %v2368 = vadd.f32 %v2332, %v2348
        %v2369 = vadd.f32 %v2333, %v2348
        %v2370 = vadd.f32 %v2334, %v2348
        %v2371 = vadd.f32 %v2335, %v2348
        %v2372 = vadd.f32 %v2336, %v2348
        %v2373 = vadd.f32 %v2337, %v2348
        %v2374 = vadd.f32 %v2338, %v2348
        %v2375 = vadd.f32 %v2339, %v2348
        %v2376 = vadd.f32 %v2340, %v2348
        %v2377 = vadd.f32 %v2341, %v2348
        %v2378 = vadd.f32 %v2342, %v2348
        %v2379 = vadd.f32 %v2343, %v2348
        %v2380 = vadd.f32 %v2344, %v2348
        %vm2381 = vcmask 64512
        %2382 = vst.msk [vmem:[#allocation3] sm:$0xff] %vm2381, 0.0
        %2383 = vst.msk [vmem:[#allocation3 + $0x8] sm:$0xff] %vm2381, 0.0
        %vm2384 = vcmask 58368
        %2385 = vst.msk [vmem:[#allocation3 + $0x10] sm:$0x3] %vm2384, 0.0
        %s2386 = scalar_lea.vmem [#allocation3], 408
        %2387 = vst.msk [vmem:[%s2386] sm:$0xff] %vm2381, 0.0
        %2388 = vst.msk [vmem:[%s2386 + $0x8] sm:$0xff] %vm2381, 0.0
        %2389 = vst.msk [vmem:[%s2386 + $0x10] sm:$0x3] %vm2384, 0.0
        %s2390 = scalar_lea.vmem [#allocation3], 24
        %vm2391 = vcmask 57344
        %2392 = vst.msk [vmem:[%s2390] sm:$0x1] %vm2391, 0.0
        %2393 = vst.msk [vmem:[%s2390 + $0x18] sm:$0x1] %vm2391, 0.0
        %2394 = vst.msk [vmem:[%s2390 + $0x30] sm:$0x1] %vm2391, 0.0
        %2395 = vst.msk [vmem:[%s2390 + $0x48] sm:$0x1] %vm2391, 0.0
        %2396 = vst.msk [vmem:[%s2390 + $0x60] sm:$0x1] %vm2391, 0.0
        %2397 = vst.msk [vmem:[%s2390 + $0x78] sm:$0x1] %vm2391, 0.0
        %2398 = vst.msk [vmem:[%s2390 + $0x90] sm:$0x1] %vm2391, 0.0
        %2399 = vst.msk [vmem:[%s2390 + $0xa8] sm:$0x1] %vm2391, 0.0
        %2400 = vst.msk [vmem:[%s2390 + $0xc0] sm:$0x1] %vm2391, 0.0
        %2401 = vst.msk [vmem:[%s2390 + $0xd8] sm:$0x1] %vm2391, 0.0
        %2402 = vst.msk [vmem:[%s2390 + $0xf0] sm:$0x1] %vm2391, 0.0
        %2403 = vst.msk [vmem:[%s2390 + $0x108] sm:$0x1] %vm2391, 0.0
        %2404 = vst.msk [vmem:[%s2390 + $0x120] sm:$0x1] %vm2391, 0.0
        %2405 = vst.msk [vmem:[%s2390 + $0x138] sm:$0x1] %vm2391, 0.0
        %2406 = vst.msk [vmem:[%s2390 + $0x150] sm:$0x1] %vm2391, 0.0
        %2407 = vst.msk [vmem:[%s2390 + $0x168] sm:$0x1] %vm2391, 0.0
        %2408 = vst.msk [vmem:[%s2390 + $0x11] sm:$0x1] %vm2391, 0.0
        %2409 = vst.msk [vmem:[%s2390 + $0x29] sm:$0x1] %vm2391, 0.0
        %2410 = vst.msk [vmem:[%s2390 + $0x41] sm:$0x1] %vm2391, 0.0
        %2411 = vst.msk [vmem:[%s2390 + $0x59] sm:$0x1] %vm2391, 0.0
        %2412 = vst.msk [vmem:[%s2390 + $0x71] sm:$0x1] %vm2391, 0.0
        %2413 = vst.msk [vmem:[%s2390 + $0x89] sm:$0x1] %vm2391, 0.0
        %2414 = vst.msk [vmem:[%s2390 + $0xa1] sm:$0x1] %vm2391, 0.0
        %2415 = vst.msk [vmem:[%s2390 + $0xb9] sm:$0x1] %vm2391, 0.0
        %2416 = vst.msk [vmem:[%s2390 + $0xd1] sm:$0x1] %vm2391, 0.0
        %2417 = vst.msk [vmem:[%s2390 + $0xe9] sm:$0x1] %vm2391, 0.0
        %2418 = vst.msk [vmem:[%s2390 + $0x101] sm:$0x1] %vm2391, 0.0
        %2419 = vst.msk [vmem:[%s2390 + $0x119] sm:$0x1] %vm2391, 0.0
        %2420 = vst.msk [vmem:[%s2390 + $0x131] sm:$0x1] %vm2391, 0.0
        %2421 = vst.msk [vmem:[%s2390 + $0x149] sm:$0x1] %vm2391, 0.0
        %2422 = vst.msk [vmem:[%s2390 + $0x161] sm:$0x1] %vm2391, 0.0
        %2423 = vst.msk [vmem:[%s2390 + $0x179] sm:$0x1] %vm2391, 0.0
        %2424 = vst.msk [vmem:[%s2390 + $0x1] sm:$0xff] %vm2381, %v2349
        %2425 = vst.msk [vmem:[%s2390 + $0x9] sm:$0xff] %vm2381, %v2350
        %2426 = vst.msk [vmem:[%s2390 + $0x19] sm:$0xff] %vm2381, %v2351
        %2427 = vst.msk [vmem:[%s2390 + $0x21] sm:$0xff] %vm2381, %v2352
        %2428 = vst.msk [vmem:[%s2390 + $0x31] sm:$0xff] %vm2381, %v2353
        %2429 = vst.msk [vmem:[%s2390 + $0x39] sm:$0xff] %vm2381, %v2354
        %2430 = vst.msk [vmem:[%s2390 + $0x49] sm:$0xff] %vm2381, %v2355
        %2431 = vst.msk [vmem:[%s2390 + $0x51] sm:$0xff] %vm2381, %v2356
        %2432 = vst.msk [vmem:[%s2390 + $0x61] sm:$0xff] %vm2381, %v2357
        %2433 = vst.msk [vmem:[%s2390 + $0x69] sm:$0xff] %vm2381, %v2358
        %2434 = vst.msk [vmem:[%s2390 + $0x79] sm:$0xff] %vm2381, %v2359
        %2435 = vst.msk [vmem:[%s2390 + $0x81] sm:$0xff] %vm2381, %v2360
        %2436 = vst.msk [vmem:[%s2390 + $0x91] sm:$0xff] %vm2381, %v2361
        %2437 = vst.msk [vmem:[%s2390 + $0x99] sm:$0xff] %vm2381, %v2362
        %2438 = vst.msk [vmem:[%s2390 + $0xa9] sm:$0xff] %vm2381, %v2363
        %2439 = vst.msk [vmem:[%s2390 + $0xb1] sm:$0xff] %vm2381, %v2364
        %2440 = vst.msk [vmem:[%s2390 + $0xc1] sm:$0xff] %vm2381, %v2365
        %2441 = vst.msk [vmem:[%s2390 + $0xc9] sm:$0xff] %vm2381, %v2366
        %2442 = vst.msk [vmem:[%s2390 + $0xd9] sm:$0xff] %vm2381, %v2367
        %2443 = vst.msk [vmem:[%s2390 + $0xe1] sm:$0xff] %vm2381, %v2368
        %2444 = vst.msk [vmem:[%s2390 + $0xf1] sm:$0xff] %vm2381, %v2369
        %2445 = vst.msk [vmem:[%s2390 + $0xf9] sm:$0xff] %vm2381, %v2370
        %2446 = vst.msk [vmem:[%s2390 + $0x109] sm:$0xff] %vm2381, %v2371
        %2447 = vst.msk [vmem:[%s2390 + $0x111] sm:$0xff] %vm2381, %v2372
        %2448 = vst.msk [vmem:[%s2390 + $0x121] sm:$0xff] %vm2381, %v2373
        %2449 = vst.msk [vmem:[%s2390 + $0x129] sm:$0xff] %vm2381, %v2374
        %2450 = vst.msk [vmem:[%s2390 + $0x139] sm:$0xff] %vm2381, %v2375
        %2451 = vst.msk [vmem:[%s2390 + $0x141] sm:$0xff] %vm2381, %v2376
        %2452 = vst.msk [vmem:[%s2390 + $0x151] sm:$0xff] %vm2381, %v2377
        %2453 = vst.msk [vmem:[%s2390 + $0x159] sm:$0xff] %vm2381, %v2378
        %2454 = vst.msk [vmem:[%s2390 + $0x169] sm:$0xff] %vm2381, %v2379
        %2455 = vst.msk [vmem:[%s2390 + $0x171] sm:$0xff] %vm2381, %v2380
        %v2456 = vld [vmem:[#allocation3] sm:$0xff]
        %v2457 = vld [vmem:[#allocation3 + $0x8] sm:$0xff]
        %v2458 = vld [vmem:[#allocation3 + $0x18] sm:$0xff]
        %v2459 = vld [vmem:[#allocation3 + $0x20] sm:$0xff]
        %v2460 = vld [vmem:[#allocation3 + $0x30] sm:$0xff]
        %v2461 = vld [vmem:[#allocation3 + $0x38] sm:$0xff]
        %v2462 = vld [vmem:[#allocation3 + $0x48] sm:$0xff]
        %v2463 = vld [vmem:[#allocation3 + $0x50] sm:$0xff]
        %v2464 = vld [vmem:[#allocation3 + $0x60] sm:$0xff]
        %v2465 = vld [vmem:[#allocation3 + $0x68] sm:$0xff]
        %v2466 = vld [vmem:[#allocation3 + $0x78] sm:$0xff]
        %v2467 = vld [vmem:[#allocation3 + $0x80] sm:$0xff]
        %v2468 = vld [vmem:[#allocation3 + $0x90] sm:$0xff]
        %v2469 = vld [vmem:[#allocation3 + $0x98] sm:$0xff]
        %v2470 = vld [vmem:[#allocation3 + $0xa8] sm:$0xff]
        %v2471 = vld [vmem:[#allocation3 + $0xb0] sm:$0xff]
        %v2472 = vld [vmem:[#allocation3 + $0xc0] sm:$0xff]
        %v2473 = vld [vmem:[#allocation3 + $0xc8] sm:$0xff]
        %v2474 = vld [vmem:[#allocation3 + $0xd8] sm:$0xff]
        %v2475 = vld [vmem:[#allocation3 + $0xe0] sm:$0xff]
        %v2476 = vld [vmem:[#allocation3 + $0xf0] sm:$0xff]
        %v2477 = vld [vmem:[#allocation3 + $0xf8] sm:$0xff]
        %v2478 = vld [vmem:[#allocation3 + $0x108] sm:$0xff]
        %v2479 = vld [vmem:[#allocation3 + $0x110] sm:$0xff]
        %v2480 = vld [vmem:[#allocation3 + $0x120] sm:$0xff]
        %v2481 = vld [vmem:[#allocation3 + $0x128] sm:$0xff]
        %v2482 = vld [vmem:[#allocation3 + $0x138] sm:$0xff]
        %v2483 = vld [vmem:[#allocation3 + $0x140] sm:$0xff]
        %v2484 = vld [vmem:[#allocation3 + $0x150] sm:$0xff]
        %v2485 = vld [vmem:[#allocation3 + $0x158] sm:$0xff]
        %v2486 = vld [vmem:[#allocation3 + $0x168] sm:$0xff]
        %v2487 = vld [vmem:[#allocation3 + $0x170] sm:$0xff]
        %v2488 = vld [vmem:[#allocation3 + $0x1] sm:$0xff]
        %v2489 = vld [vmem:[#allocation3 + $0x9] sm:$0xff]
        %v2490 = vld [vmem:[#allocation3 + $0x19] sm:$0xff]
        %v2491 = vld [vmem:[#allocation3 + $0x21] sm:$0xff]
        %v2492 = vld [vmem:[#allocation3 + $0x31] sm:$0xff]
        %v2493 = vld [vmem:[#allocation3 + $0x39] sm:$0xff]
        %v2494 = vld [vmem:[#allocation3 + $0x49] sm:$0xff]
        %v2495 = vld [vmem:[#allocation3 + $0x51] sm:$0xff]
        %v2496 = vld [vmem:[#allocation3 + $0x61] sm:$0xff]
        %v2497 = vld [vmem:[#allocation3 + $0x69] sm:$0xff]
        %v2498 = vld [vmem:[#allocation3 + $0x79] sm:$0xff]
        %v2499 = vld [vmem:[#allocation3 + $0x81] sm:$0xff]
        %v2500 = vld [vmem:[#allocation3 + $0x91] sm:$0xff]
        %v2501 = vld [vmem:[#allocation3 + $0x99] sm:$0xff]
        %v2502 = vld [vmem:[#allocation3 + $0xa9] sm:$0xff]
        %v2503 = vld [vmem:[#allocation3 + $0xb1] sm:$0xff]
        %v2504 = vld [vmem:[#allocation3 + $0xc1] sm:$0xff]
        %v2505 = vld [vmem:[#allocation3 + $0xc9] sm:$0xff]
        %v2506 = vld [vmem:[#allocation3 + $0xd9] sm:$0xff]
        %v2507 = vld [vmem:[#allocation3 + $0xe1] sm:$0xff]
        %v2508 = vld [vmem:[#allocation3 + $0xf1] sm:$0xff]
        %v2509 = vld [vmem:[#allocation3 + $0xf9] sm:$0xff]
        %v2510 = vld [vmem:[#allocation3 + $0x109] sm:$0xff]
        %v2511 = vld [vmem:[#allocation3 + $0x111] sm:$0xff]
        %v2512 = vld [vmem:[#allocation3 + $0x121] sm:$0xff]
        %v2513 = vld [vmem:[#allocation3 + $0x129] sm:$0xff]
        %v2514 = vld [vmem:[#allocation3 + $0x139] sm:$0xff]
        %v2515 = vld [vmem:[#allocation3 + $0x141] sm:$0xff]
        %v2516 = vld [vmem:[#allocation3 + $0x151] sm:$0xff]
        %v2517 = vld [vmem:[#allocation3 + $0x159] sm:$0xff]
        %v2518 = vld [vmem:[#allocation3 + $0x169] sm:$0xff]
        %v2519 = vld [vmem:[#allocation3 + $0x171] sm:$0xff]
        %v2520 = vld [vmem:[#allocation3 + $0x2] sm:$0xff]
        %v2521 = vld [vmem:[#allocation3 + $0xa] sm:$0xff]
        %v2522 = vld [vmem:[#allocation3 + $0x1a] sm:$0xff]
        %v2523 = vld [vmem:[#allocation3 + $0x22] sm:$0xff]
        %v2524 = vld [vmem:[#allocation3 + $0x32] sm:$0xff]
        %v2525 = vld [vmem:[#allocation3 + $0x3a] sm:$0xff]
        %v2526 = vld [vmem:[#allocation3 + $0x4a] sm:$0xff]
        %v2527 = vld [vmem:[#allocation3 + $0x52] sm:$0xff]
        %v2528 = vld [vmem:[#allocation3 + $0x62] sm:$0xff]
        %v2529 = vld [vmem:[#allocation3 + $0x6a] sm:$0xff]
        %v2530 = vld [vmem:[#allocation3 + $0x7a] sm:$0xff]
        %v2531 = vld [vmem:[#allocation3 + $0x82] sm:$0xff]
        %v2532 = vld [vmem:[#allocation3 + $0x92] sm:$0xff]
        %v2533 = vld [vmem:[#allocation3 + $0x9a] sm:$0xff]
        %v2534 = vld [vmem:[#allocation3 + $0xaa] sm:$0xff]
        %v2535 = vld [vmem:[#allocation3 + $0xb2] sm:$0xff]
        %v2536 = vld [vmem:[#allocation3 + $0xc2] sm:$0xff]
        %v2537 = vld [vmem:[#allocation3 + $0xca] sm:$0xff]
        %v2538 = vld [vmem:[#allocation3 + $0xda] sm:$0xff]
        %v2539 = vld [vmem:[#allocation3 + $0xe2] sm:$0xff]
        %v2540 = vld [vmem:[#allocation3 + $0xf2] sm:$0xff]
        %v2541 = vld [vmem:[#allocation3 + $0xfa] sm:$0xff]
        %v2542 = vld [vmem:[#allocation3 + $0x10a] sm:$0xff]
        %v2543 = vld [vmem:[#allocation3 + $0x112] sm:$0xff]
        %v2544 = vld [vmem:[#allocation3 + $0x122] sm:$0xff]
        %v2545 = vld [vmem:[#allocation3 + $0x12a] sm:$0xff]
        %v2546 = vld [vmem:[#allocation3 + $0x13a] sm:$0xff]
        %v2547 = vld [vmem:[#allocation3 + $0x142] sm:$0xff]
        %v2548 = vld [vmem:[#allocation3 + $0x152] sm:$0xff]
        %v2549 = vld [vmem:[#allocation3 + $0x15a] sm:$0xff]
        %v2550 = vld [vmem:[#allocation3 + $0x16a] sm:$0xff]
        %v2551 = vld [vmem:[#allocation3 + $0x172] sm:$0xff]
        %v2552 = vld [vmem:[%s2390] sm:$0xff]
        %v2553 = vld [vmem:[%s2390 + $0x8] sm:$0xff]
        %v2554 = vld [vmem:[%s2390 + $0x18] sm:$0xff]
        %v2555 = vld [vmem:[%s2390 + $0x20] sm:$0xff]
        %v2556 = vld [vmem:[%s2390 + $0x30] sm:$0xff]
        %v2557 = vld [vmem:[%s2390 + $0x38] sm:$0xff]
        %v2558 = vld [vmem:[%s2390 + $0x48] sm:$0xff]
        %v2559 = vld [vmem:[%s2390 + $0x50] sm:$0xff]
        %v2560 = vld [vmem:[%s2390 + $0x60] sm:$0xff]
        %v2561 = vld [vmem:[%s2390 + $0x68] sm:$0xff]
        %v2562 = vld [vmem:[%s2390 + $0x78] sm:$0xff]
        %v2563 = vld [vmem:[%s2390 + $0x80] sm:$0xff]
        %v2564 = vld [vmem:[%s2390 + $0x90] sm:$0xff]
        %v2565 = vld [vmem:[%s2390 + $0x98] sm:$0xff]
        %v2566 = vld [vmem:[%s2390 + $0xa8] sm:$0xff]
        %v2567 = vld [vmem:[%s2390 + $0xb0] sm:$0xff]
        %v2568 = vld [vmem:[%s2390 + $0xc0] sm:$0xff]
        %v2569 = vld [vmem:[%s2390 + $0xc8] sm:$0xff]
        %v2570 = vld [vmem:[%s2390 + $0xd8] sm:$0xff]
        %v2571 = vld [vmem:[%s2390 + $0xe0] sm:$0xff]
        %v2572 = vld [vmem:[%s2390 + $0xf0] sm:$0xff]
        %v2573 = vld [vmem:[%s2390 + $0xf8] sm:$0xff]
        %v2574 = vld [vmem:[%s2390 + $0x108] sm:$0xff]
        %v2575 = vld [vmem:[%s2390 + $0x110] sm:$0xff]
        %v2576 = vld [vmem:[%s2390 + $0x120] sm:$0xff]
        %v2577 = vld [vmem:[%s2390 + $0x128] sm:$0xff]
        %v2578 = vld [vmem:[%s2390 + $0x138] sm:$0xff]
        %v2579 = vld [vmem:[%s2390 + $0x140] sm:$0xff]
        %v2580 = vld [vmem:[%s2390 + $0x150] sm:$0xff]
        %v2581 = vld [vmem:[%s2390 + $0x158] sm:$0xff]
        %v2582 = vld [vmem:[%s2390 + $0x168] sm:$0xff]
        %v2583 = vld [vmem:[%s2390 + $0x170] sm:$0xff]
        %v2584 = vld [vmem:[%s2390 + $0x1] sm:$0xff]
        %v2585 = vld [vmem:[%s2390 + $0x9] sm:$0xff]
        %v2586 = vld [vmem:[%s2390 + $0x19] sm:$0xff]
        %v2587 = vld [vmem:[%s2390 + $0x21] sm:$0xff]
        %v2588 = vld [vmem:[%s2390 + $0x31] sm:$0xff]
        %v2589 = vld [vmem:[%s2390 + $0x39] sm:$0xff]
        %v2590 = vld [vmem:[%s2390 + $0x49] sm:$0xff]
        %v2591 = vld [vmem:[%s2390 + $0x51] sm:$0xff]
        %v2592 = vld [vmem:[%s2390 + $0x61] sm:$0xff]
        %v2593 = vld [vmem:[%s2390 + $0x69] sm:$0xff]
        %v2594 = vld [vmem:[%s2390 + $0x79] sm:$0xff]
        %v2595 = vld [vmem:[%s2390 + $0x81] sm:$0xff]
        %v2596 = vld [vmem:[%s2390 + $0x91] sm:$0xff]
        %v2597 = vld [vmem:[%s2390 + $0x99] sm:$0xff]
        %v2598 = vld [vmem:[%s2390 + $0xa9] sm:$0xff]
        %v2599 = vld [vmem:[%s2390 + $0xb1] sm:$0xff]
        %v2600 = vld [vmem:[%s2390 + $0xc1] sm:$0xff]
        %v2601 = vld [vmem:[%s2390 + $0xc9] sm:$0xff]
        %v2602 = vld [vmem:[%s2390 + $0xd9] sm:$0xff]
        %v2603 = vld [vmem:[%s2390 + $0xe1] sm:$0xff]
        %v2604 = vld [vmem:[%s2390 + $0xf1] sm:$0xff]
        %v2605 = vld [vmem:[%s2390 + $0xf9] sm:$0xff]
        %v2606 = vld [vmem:[%s2390 + $0x109] sm:$0xff]
        %v2607 = vld [vmem:[%s2390 + $0x111] sm:$0xff]
        %v2608 = vld [vmem:[%s2390 + $0x121] sm:$0xff]
        %v2609 = vld [vmem:[%s2390 + $0x129] sm:$0xff]
        %v2610 = vld [vmem:[%s2390 + $0x139] sm:$0xff]
        %v2611 = vld [vmem:[%s2390 + $0x141] sm:$0xff]
        %v2612 = vld [vmem:[%s2390 + $0x151] sm:$0xff]
        %v2613 = vld [vmem:[%s2390 + $0x159] sm:$0xff]
        %v2614 = vld [vmem:[%s2390 + $0x169] sm:$0xff]
        %v2615 = vld [vmem:[%s2390 + $0x171] sm:$0xff]
        %v2616 = vld [vmem:[%s2390 + $0x2] sm:$0xff]
        %v2617 = vld [vmem:[%s2390 + $0xa] sm:$0xff]
        %v2618 = vld [vmem:[%s2390 + $0x1a] sm:$0xff]
        %v2619 = vld [vmem:[%s2390 + $0x22] sm:$0xff]
        %v2620 = vld [vmem:[%s2390 + $0x32] sm:$0xff]
        %v2621 = vld [vmem:[%s2390 + $0x3a] sm:$0xff]
        %v2622 = vld [vmem:[%s2390 + $0x4a] sm:$0xff]
        %v2623 = vld [vmem:[%s2390 + $0x52] sm:$0xff]
        %v2624 = vld [vmem:[%s2390 + $0x62] sm:$0xff]
        %v2625 = vld [vmem:[%s2390 + $0x6a] sm:$0xff]
        %v2626 = vld [vmem:[%s2390 + $0x7a] sm:$0xff]
        %v2627 = vld [vmem:[%s2390 + $0x82] sm:$0xff]
        %v2628 = vld [vmem:[%s2390 + $0x92] sm:$0xff]
        %v2629 = vld [vmem:[%s2390 + $0x9a] sm:$0xff]
        %v2630 = vld [vmem:[%s2390 + $0xaa] sm:$0xff]
        %v2631 = vld [vmem:[%s2390 + $0xb2] sm:$0xff]
        %v2632 = vld [vmem:[%s2390 + $0xc2] sm:$0xff]
        %v2633 = vld [vmem:[%s2390 + $0xca] sm:$0xff]
        %v2634 = vld [vmem:[%s2390 + $0xda] sm:$0xff]
        %v2635 = vld [vmem:[%s2390 + $0xe2] sm:$0xff]
        %v2636 = vld [vmem:[%s2390 + $0xf2] sm:$0xff]
        %v2637 = vld [vmem:[%s2390 + $0xfa] sm:$0xff]
        %v2638 = vld [vmem:[%s2390 + $0x10a] sm:$0xff]
        %v2639 = vld [vmem:[%s2390 + $0x112] sm:$0xff]
        %v2640 = vld [vmem:[%s2390 + $0x122] sm:$0xff]
        %v2641 = vld [vmem:[%s2390 + $0x12a] sm:$0xff]
        %v2642 = vld [vmem:[%s2390 + $0x13a] sm:$0xff]
        %v2643 = vld [vmem:[%s2390 + $0x142] sm:$0xff]
        %v2644 = vld [vmem:[%s2390 + $0x152] sm:$0xff]
        %v2645 = vld [vmem:[%s2390 + $0x15a] sm:$0xff]
        %v2646 = vld [vmem:[%s2390 + $0x16a] sm:$0xff]
        %v2647 = vld [vmem:[%s2390 + $0x172] sm:$0xff]
        %s2648 = scalar_lea.vmem [#allocation3], 48
        %v2649 = vld [vmem:[%s2648] sm:$0xff]
        %v2650 = vld [vmem:[%s2648 + $0x8] sm:$0xff]
        %v2651 = vld [vmem:[%s2648 + $0x18] sm:$0xff]
        %v2652 = vld [vmem:[%s2648 + $0x20] sm:$0xff]
        %v2653 = vld [vmem:[%s2648 + $0x30] sm:$0xff]
        %v2654 = vld [vmem:[%s2648 + $0x38] sm:$0xff]
        %v2655 = vld [vmem:[%s2648 + $0x48] sm:$0xff]
        %v2656 = vld [vmem:[%s2648 + $0x50] sm:$0xff]
        %v2657 = vld [vmem:[%s2648 + $0x60] sm:$0xff]
        %v2658 = vld [vmem:[%s2648 + $0x68] sm:$0xff]
        %v2659 = vld [vmem:[%s2648 + $0x78] sm:$0xff]
        %v2660 = vld [vmem:[%s2648 + $0x80] sm:$0xff]
        %v2661 = vld [vmem:[%s2648 + $0x90] sm:$0xff]
        %v2662 = vld [vmem:[%s2648 + $0x98] sm:$0xff]
        %v2663 = vld [vmem:[%s2648 + $0xa8] sm:$0xff]
        %v2664 = vld [vmem:[%s2648 + $0xb0] sm:$0xff]
        %v2665 = vld [vmem:[%s2648 + $0xc0] sm:$0xff]
        %v2666 = vld [vmem:[%s2648 + $0xc8] sm:$0xff]
        %v2667 = vld [vmem:[%s2648 + $0xd8] sm:$0xff]
        %v2668 = vld [vmem:[%s2648 + $0xe0] sm:$0xff]
        %v2669 = vld [vmem:[%s2648 + $0xf0] sm:$0xff]
        %v2670 = vld [vmem:[%s2648 + $0xf8] sm:$0xff]
        %v2671 = vld [vmem:[%s2648 + $0x108] sm:$0xff]
        %v2672 = vld [vmem:[%s2648 + $0x110] sm:$0xff]
        %v2673 = vld [vmem:[%s2648 + $0x120] sm:$0xff]
        %v2674 = vld [vmem:[%s2648 + $0x128] sm:$0xff]
        %v2675 = vld [vmem:[%s2648 + $0x138] sm:$0xff]
        %v2676 = vld [vmem:[%s2648 + $0x140] sm:$0xff]
        %v2677 = vld [vmem:[%s2648 + $0x150] sm:$0xff]
        %v2678 = vld [vmem:[%s2648 + $0x158] sm:$0xff]
        %v2679 = vld [vmem:[%s2648 + $0x168] sm:$0xff]
        %v2680 = vld [vmem:[%s2648 + $0x170] sm:$0xff]
        %v2681 = vld [vmem:[%s2648 + $0x1] sm:$0xff]
        %v2682 = vld [vmem:[%s2648 + $0x9] sm:$0xff]
        %v2683 = vld [vmem:[%s2648 + $0x19] sm:$0xff]
        %v2684 = vld [vmem:[%s2648 + $0x21] sm:$0xff]
        %v2685 = vld [vmem:[%s2648 + $0x31] sm:$0xff]
        %v2686 = vld [vmem:[%s2648 + $0x39] sm:$0xff]
        %v2687 = vld [vmem:[%s2648 + $0x49] sm:$0xff]
        %v2688 = vld [vmem:[%s2648 + $0x51] sm:$0xff]
        %v2689 = vld [vmem:[%s2648 + $0x61] sm:$0xff]
        %v2690 = vld [vmem:[%s2648 + $0x69] sm:$0xff]
        %v2691 = vld [vmem:[%s2648 + $0x79] sm:$0xff]
        %v2692 = vld [vmem:[%s2648 + $0x81] sm:$0xff]
        %v2693 = vld [vmem:[%s2648 + $0x91] sm:$0xff]
        %v2694 = vld [vmem:[%s2648 + $0x99] sm:$0xff]
        %v2695 = vld [vmem:[%s2648 + $0xa9] sm:$0xff]
        %v2696 = vld [vmem:[%s2648 + $0xb1] sm:$0xff]
        %v2697 = vld [vmem:[%s2648 + $0xc1] sm:$0xff]
        %v2698 = vld [vmem:[%s2648 + $0xc9] sm:$0xff]
        %v2699 = vld [vmem:[%s2648 + $0xd9] sm:$0xff]
        %v2700 = vld [vmem:[%s2648 + $0xe1] sm:$0xff]
        %v2701 = vld [vmem:[%s2648 + $0xf1] sm:$0xff]
        %v2702 = vld [vmem:[%s2648 + $0xf9] sm:$0xff]
        %v2703 = vld [vmem:[%s2648 + $0x109] sm:$0xff]
        %v2704 = vld [vmem:[%s2648 + $0x111] sm:$0xff]
        %v2705 = vld [vmem:[%s2648 + $0x121] sm:$0xff]
        %v2706 = vld [vmem:[%s2648 + $0x129] sm:$0xff]
        %v2707 = vld [vmem:[%s2648 + $0x139] sm:$0xff]
        %v2708 = vld [vmem:[%s2648 + $0x141] sm:$0xff]
        %v2709 = vld [vmem:[%s2648 + $0x151] sm:$0xff]
        %v2710 = vld [vmem:[%s2648 + $0x159] sm:$0xff]
        %v2711 = vld [vmem:[%s2648 + $0x169] sm:$0xff]
        %v2712 = vld [vmem:[%s2648 + $0x171] sm:$0xff]
        %v2713 = vld [vmem:[%s2648 + $0x2] sm:$0xff]
        %v2714 = vld [vmem:[%s2648 + $0xa] sm:$0xff]
        %v2715 = vld [vmem:[%s2648 + $0x1a] sm:$0xff]
        %v2716 = vld [vmem:[%s2648 + $0x22] sm:$0xff]
        %v2717 = vld [vmem:[%s2648 + $0x32] sm:$0xff]
        %v2718 = vld [vmem:[%s2648 + $0x3a] sm:$0xff]
        %v2719 = vld [vmem:[%s2648 + $0x4a] sm:$0xff]
        %v2720 = vld [vmem:[%s2648 + $0x52] sm:$0xff]
        %v2721 = vld [vmem:[%s2648 + $0x62] sm:$0xff]
        %v2722 = vld [vmem:[%s2648 + $0x6a] sm:$0xff]
        %v2723 = vld [vmem:[%s2648 + $0x7a] sm:$0xff]
        %v2724 = vld [vmem:[%s2648 + $0x82] sm:$0xff]
        %v2725 = vld [vmem:[%s2648 + $0x92] sm:$0xff]
        %v2726 = vld [vmem:[%s2648 + $0x9a] sm:$0xff]
        %v2727 = vld [vmem:[%s2648 + $0xaa] sm:$0xff]
        %v2728 = vld [vmem:[%s2648 + $0xb2] sm:$0xff]
        %v2729 = vld [vmem:[%s2648 + $0xc2] sm:$0xff]
        %v2730 = vld [vmem:[%s2648 + $0xca] sm:$0xff]
        %v2731 = vld [vmem:[%s2648 + $0xda] sm:$0xff]
        %v2732 = vld [vmem:[%s2648 + $0xe2] sm:$0xff]
        %v2733 = vld [vmem:[%s2648 + $0xf2] sm:$0xff]
        %v2734 = vld [vmem:[%s2648 + $0xfa] sm:$0xff]
        %v2735 = vld [vmem:[%s2648 + $0x10a] sm:$0xff]
        %v2736 = vld [vmem:[%s2648 + $0x112] sm:$0xff]
        %v2737 = vld [vmem:[%s2648 + $0x122] sm:$0xff]
        %v2738 = vld [vmem:[%s2648 + $0x12a] sm:$0xff]
        %v2739 = vld [vmem:[%s2648 + $0x13a] sm:$0xff]
        %v2740 = vld [vmem:[%s2648 + $0x142] sm:$0xff]
        %v2741 = vld [vmem:[%s2648 + $0x152] sm:$0xff]
        %v2742 = vld [vmem:[%s2648 + $0x15a] sm:$0xff]
        %v2743 = vld [vmem:[%s2648 + $0x16a] sm:$0xff]
        %v2744 = vld [vmem:[%s2648 + $0x172] sm:$0xff]
        %2777 = vrot.lane.b32.xlu0 %v2488, 8
        %v2778 = vpop.permute.xlu0 %2777
        %2779 = vrot.lane.b32.xlu0 %v2489, 8
        %v2780 = vpop.permute.xlu0 %2779
        %2781 = vrot.lane.b32.xlu0 %v2490, 8
        %v2782 = vpop.permute.xlu0 %2781
        %2783 = vrot.lane.b32.xlu0 %v2491, 8
        %v2784 = vpop.permute.xlu0 %2783
        %2785 = vrot.lane.b32.xlu0 %v2492, 8
        %v2786 = vpop.permute.xlu0 %2785
        %2787 = vrot.lane.b32.xlu0 %v2493, 8
        %v2788 = vpop.permute.xlu0 %2787
        %2789 = vrot.lane.b32.xlu0 %v2494, 8
        %v2790 = vpop.permute.xlu0 %2789
        %2791 = vrot.lane.b32.xlu0 %v2495, 8
        %v2792 = vpop.permute.xlu0 %2791
        %2793 = vrot.lane.b32.xlu0 %v2496, 8
        %v2794 = vpop.permute.xlu0 %2793
        %2795 = vrot.lane.b32.xlu0 %v2497, 8
        %v2796 = vpop.permute.xlu0 %2795
        %2797 = vrot.lane.b32.xlu0 %v2498, 8
        %v2798 = vpop.permute.xlu0 %2797
        %2799 = vrot.lane.b32.xlu0 %v2499, 8
        %v2800 = vpop.permute.xlu0 %2799
        %2801 = vrot.lane.b32.xlu0 %v2500, 8
        %v2802 = vpop.permute.xlu0 %2801
        %2803 = vrot.lane.b32.xlu0 %v2501, 8
        %v2804 = vpop.permute.xlu0 %2803
        %2805 = vrot.lane.b32.xlu0 %v2502, 8
        %v2806 = vpop.permute.xlu0 %2805
        %2807 = vrot.lane.b32.xlu0 %v2503, 8
        %v2808 = vpop.permute.xlu0 %2807
        %2809 = vrot.lane.b32.xlu0 %v2504, 8
        %v2810 = vpop.permute.xlu0 %2809
        %2811 = vrot.lane.b32.xlu0 %v2505, 8
        %v2812 = vpop.permute.xlu0 %2811
        %2813 = vrot.lane.b32.xlu0 %v2506, 8
        %v2814 = vpop.permute.xlu0 %2813
        %2815 = vrot.lane.b32.xlu0 %v2507, 8
        %v2816 = vpop.permute.xlu0 %2815
        %2817 = vrot.lane.b32.xlu0 %v2508, 8
        %v2818 = vpop.permute.xlu0 %2817
        %2819 = vrot.lane.b32.xlu0 %v2509, 8
        %v2820 = vpop.permute.xlu0 %2819
        %2821 = vrot.lane.b32.xlu0 %v2510, 8
        %v2822 = vpop.permute.xlu0 %2821
        %2823 = vrot.lane.b32.xlu0 %v2511, 8
        %v2824 = vpop.permute.xlu0 %2823
        %2825 = vrot.lane.b32.xlu0 %v2512, 8
        %v2826 = vpop.permute.xlu0 %2825
        %2827 = vrot.lane.b32.xlu0 %v2513, 8
        %v2828 = vpop.permute.xlu0 %2827
        %2829 = vrot.lane.b32.xlu0 %v2514, 8
        %v2830 = vpop.permute.xlu0 %2829
        %2831 = vrot.lane.b32.xlu0 %v2515, 8
        %v2832 = vpop.permute.xlu0 %2831
        %2833 = vrot.lane.b32.xlu0 %v2516, 8
        %v2834 = vpop.permute.xlu0 %2833
        %2835 = vrot.lane.b32.xlu0 %v2517, 8
        %v2836 = vpop.permute.xlu0 %2835
        %2837 = vrot.lane.b32.xlu0 %v2518, 8
        %v2838 = vpop.permute.xlu0 %2837
        %2839 = vrot.lane.b32.xlu0 %v2519, 8
        %v2840 = vpop.permute.xlu0 %2839
        %2905 = vrot.lane.b32.xlu0 %v2520, 16
        %v2906 = vpop.permute.xlu0 %2905
        %2907 = vrot.lane.b32.xlu0 %v2521, 16
        %v2908 = vpop.permute.xlu0 %2907
        %2909 = vrot.lane.b32.xlu0 %v2522, 16
        %v2910 = vpop.permute.xlu0 %2909
        %2911 = vrot.lane.b32.xlu0 %v2523, 16
        %v2912 = vpop.permute.xlu0 %2911
        %2913 = vrot.lane.b32.xlu0 %v2524, 16
        %v2914 = vpop.permute.xlu0 %2913
        %2915 = vrot.lane.b32.xlu0 %v2525, 16
        %v2916 = vpop.permute.xlu0 %2915
        %2917 = vrot.lane.b32.xlu0 %v2526, 16
        %v2918 = vpop.permute.xlu0 %2917
        %2919 = vrot.lane.b32.xlu0 %v2527, 16
        %v2920 = vpop.permute.xlu0 %2919
        %2921 = vrot.lane.b32.xlu0 %v2528, 16
        %v2922 = vpop.permute.xlu0 %2921
        %2923 = vrot.lane.b32.xlu0 %v2529, 16
        %v2924 = vpop.permute.xlu0 %2923
        %2925 = vrot.lane.b32.xlu0 %v2530, 16
        %v2926 = vpop.permute.xlu0 %2925
        %2927 = vrot.lane.b32.xlu0 %v2531, 16
        %v2928 = vpop.permute.xlu0 %2927
        %2929 = vrot.lane.b32.xlu0 %v2532, 16
        %v2930 = vpop.permute.xlu0 %2929
        %2931 = vrot.lane.b32.xlu0 %v2533, 16
        %v2932 = vpop.permute.xlu0 %2931
        %2933 = vrot.lane.b32.xlu0 %v2534, 16
        %v2934 = vpop.permute.xlu0 %2933
        %2935 = vrot.lane.b32.xlu0 %v2535, 16
        %v2936 = vpop.permute.xlu0 %2935
        %2937 = vrot.lane.b32.xlu0 %v2536, 16
        %v2938 = vpop.permute.xlu0 %2937
        %2939 = vrot.lane.b32.xlu0 %v2537, 16
        %v2940 = vpop.permute.xlu0 %2939
        %2941 = vrot.lane.b32.xlu0 %v2538, 16
        %v2942 = vpop.permute.xlu0 %2941
        %2943 = vrot.lane.b32.xlu0 %v2539, 16
        %v2944 = vpop.permute.xlu0 %2943
        %2945 = vrot.lane.b32.xlu0 %v2540, 16
        %v2946 = vpop.permute.xlu0 %2945
        %2947 = vrot.lane.b32.xlu0 %v2541, 16
        %v2948 = vpop.permute.xlu0 %2947
        %2949 = vrot.lane.b32.xlu0 %v2542, 16
        %v2950 = vpop.permute.xlu0 %2949
        %2951 = vrot.lane.b32.xlu0 %v2543, 16
        %v2952 = vpop.permute.xlu0 %2951
        %2953 = vrot.lane.b32.xlu0 %v2544, 16
        %v2954 = vpop.permute.xlu0 %2953
        %2955 = vrot.lane.b32.xlu0 %v2545, 16
        %v2956 = vpop.permute.xlu0 %2955
        %2957 = vrot.lane.b32.xlu0 %v2546, 16
        %v2958 = vpop.permute.xlu0 %2957
        %2959 = vrot.lane.b32.xlu0 %v2547, 16
        %v2960 = vpop.permute.xlu0 %2959
        %2961 = vrot.lane.b32.xlu0 %v2548, 16
        %v2962 = vpop.permute.xlu0 %2961
        %2963 = vrot.lane.b32.xlu0 %v2549, 16
        %v2964 = vpop.permute.xlu0 %2963
        %2965 = vrot.lane.b32.xlu0 %v2550, 16
        %v2966 = vpop.permute.xlu0 %2965
        %2967 = vrot.lane.b32.xlu0 %v2551, 16
        %v2968 = vpop.permute.xlu0 %2967
        %3033 = vrot.lane.b32.xlu0 %v2552, 24
        %v3034 = vpop.permute.xlu0 %3033
        %3035 = vrot.lane.b32.xlu0 %v2553, 24
        %v3036 = vpop.permute.xlu0 %3035
        %3037 = vrot.lane.b32.xlu0 %v2554, 24
        %v3038 = vpop.permute.xlu0 %3037
        %3039 = vrot.lane.b32.xlu0 %v2555, 24
        %v3040 = vpop.permute.xlu0 %3039
        %3041 = vrot.lane.b32.xlu0 %v2556, 24
        %v3042 = vpop.permute.xlu0 %3041
        %3043 = vrot.lane.b32.xlu0 %v2557, 24
        %v3044 = vpop.permute.xlu0 %3043
        %3045 = vrot.lane.b32.xlu0 %v2558, 24
        %v3046 = vpop.permute.xlu0 %3045
        %3047 = vrot.lane.b32.xlu0 %v2559, 24
        %v3048 = vpop.permute.xlu0 %3047
        %3049 = vrot.lane.b32.xlu0 %v2560, 24
        %v3050 = vpop.permute.xlu0 %3049
        %3051 = vrot.lane.b32.xlu0 %v2561, 24
        %v3052 = vpop.permute.xlu0 %3051
        %3053 = vrot.lane.b32.xlu0 %v2562, 24
        %v3054 = vpop.permute.xlu0 %3053
        %3055 = vrot.lane.b32.xlu0 %v2563, 24
        %v3056 = vpop.permute.xlu0 %3055
        %3057 = vrot.lane.b32.xlu0 %v2564, 24
        %v3058 = vpop.permute.xlu0 %3057
        %3059 = vrot.lane.b32.xlu0 %v2565, 24
        %v3060 = vpop.permute.xlu0 %3059
        %3061 = vrot.lane.b32.xlu0 %v2566, 24
        %v3062 = vpop.permute.xlu0 %3061
        %3063 = vrot.lane.b32.xlu0 %v2567, 24
        %v3064 = vpop.permute.xlu0 %3063
        %3065 = vrot.lane.b32.xlu0 %v2568, 24
        %v3066 = vpop.permute.xlu0 %3065
        %3067 = vrot.lane.b32.xlu0 %v2569, 24
        %v3068 = vpop.permute.xlu0 %3067
        %3069 = vrot.lane.b32.xlu0 %v2570, 24
        %v3070 = vpop.permute.xlu0 %3069
        %3071 = vrot.lane.b32.xlu0 %v2571, 24
        %v3072 = vpop.permute.xlu0 %3071
        %3073 = vrot.lane.b32.xlu0 %v2572, 24
        %v3074 = vpop.permute.xlu0 %3073
        %3075 = vrot.lane.b32.xlu0 %v2573, 24
        %v3076 = vpop.permute.xlu0 %3075
        %3077 = vrot.lane.b32.xlu0 %v2574, 24
        %v3078 = vpop.permute.xlu0 %3077
        %3079 = vrot.lane.b32.xlu0 %v2575, 24
        %v3080 = vpop.permute.xlu0 %3079
        %3081 = vrot.lane.b32.xlu0 %v2576, 24
        %v3082 = vpop.permute.xlu0 %3081
        %3083 = vrot.lane.b32.xlu0 %v2577, 24
        %v3084 = vpop.permute.xlu0 %3083
        %3085 = vrot.lane.b32.xlu0 %v2578, 24
        %v3086 = vpop.permute.xlu0 %3085
        %3087 = vrot.lane.b32.xlu0 %v2579, 24
        %v3088 = vpop.permute.xlu0 %3087
        %3089 = vrot.lane.b32.xlu0 %v2580, 24
        %v3090 = vpop.permute.xlu0 %3089
        %3091 = vrot.lane.b32.xlu0 %v2581, 24
        %v3092 = vpop.permute.xlu0 %3091
        %3093 = vrot.lane.b32.xlu0 %v2582, 24
        %v3094 = vpop.permute.xlu0 %3093
        %3095 = vrot.lane.b32.xlu0 %v2583, 24
        %v3096 = vpop.permute.xlu0 %3095
        %3161 = vrot.lane.b32.xlu0 %v2584, 32
        %v3162 = vpop.permute.xlu0 %3161
        %3163 = vrot.lane.b32.xlu0 %v2585, 32
        %v3164 = vpop.permute.xlu0 %3163
        %3165 = vrot.lane.b32.xlu0 %v2586, 32
        %v3166 = vpop.permute.xlu0 %3165
        %3167 = vrot.lane.b32.xlu0 %v2587, 32
        %v3168 = vpop.permute.xlu0 %3167
        %3169 = vrot.lane.b32.xlu0 %v2588, 32
        %v3170 = vpop.permute.xlu0 %3169
        %3171 = vrot.lane.b32.xlu0 %v2589, 32
        %v3172 = vpop.permute.xlu0 %3171
        %3173 = vrot.lane.b32.xlu0 %v2590, 32
        %v3174 = vpop.permute.xlu0 %3173
        %3175 = vrot.lane.b32.xlu0 %v2591, 32
        %v3176 = vpop.permute.xlu0 %3175
        %3177 = vrot.lane.b32.xlu0 %v2592, 32
        %v3178 = vpop.permute.xlu0 %3177
        %3179 = vrot.lane.b32.xlu0 %v2593, 32
        %v3180 = vpop.permute.xlu0 %3179
        %3181 = vrot.lane.b32.xlu0 %v2594, 32
        %v3182 = vpop.permute.xlu0 %3181
        %3183 = vrot.lane.b32.xlu0 %v2595, 32
        %v3184 = vpop.permute.xlu0 %3183
        %3185 = vrot.lane.b32.xlu0 %v2596, 32
        %v3186 = vpop.permute.xlu0 %3185
        %3187 = vrot.lane.b32.xlu0 %v2597, 32
        %v3188 = vpop.permute.xlu0 %3187
        %3189 = vrot.lane.b32.xlu0 %v2598, 32
        %v3190 = vpop.permute.xlu0 %3189
        %3191 = vrot.lane.b32.xlu0 %v2599, 32
        %v3192 = vpop.permute.xlu0 %3191
        %3193 = vrot.lane.b32.xlu0 %v2600, 32
        %v3194 = vpop.permute.xlu0 %3193
        %3195 = vrot.lane.b32.xlu0 %v2601, 32
        %v3196 = vpop.permute.xlu0 %3195
        %3197 = vrot.lane.b32.xlu0 %v2602, 32
        %v3198 = vpop.permute.xlu0 %3197
        %3199 = vrot.lane.b32.xlu0 %v2603, 32
        %v3200 = vpop.permute.xlu0 %3199
        %3201 = vrot.lane.b32.xlu0 %v2604, 32
        %v3202 = vpop.permute.xlu0 %3201
        %3203 = vrot.lane.b32.xlu0 %v2605, 32
        %v3204 = vpop.permute.xlu0 %3203
        %3205 = vrot.lane.b32.xlu0 %v2606, 32
        %v3206 = vpop.permute.xlu0 %3205
        %3207 = vrot.lane.b32.xlu0 %v2607, 32
        %v3208 = vpop.permute.xlu0 %3207
        %3209 = vrot.lane.b32.xlu0 %v2608, 32
        %v3210 = vpop.permute.xlu0 %3209
        %3211 = vrot.lane.b32.xlu0 %v2609, 32
        %v3212 = vpop.permute.xlu0 %3211
        %3213 = vrot.lane.b32.xlu0 %v2610, 32
        %v3214 = vpop.permute.xlu0 %3213
        %3215 = vrot.lane.b32.xlu0 %v2611, 32
        %v3216 = vpop.permute.xlu0 %3215
        %3217 = vrot.lane.b32.xlu0 %v2612, 32
        %v3218 = vpop.permute.xlu0 %3217
        %3219 = vrot.lane.b32.xlu0 %v2613, 32
        %v3220 = vpop.permute.xlu0 %3219
        %3221 = vrot.lane.b32.xlu0 %v2614, 32
        %v3222 = vpop.permute.xlu0 %3221
        %3223 = vrot.lane.b32.xlu0 %v2615, 32
        %v3224 = vpop.permute.xlu0 %3223
        %3289 = vrot.lane.b32.xlu0 %v2616, 40
        %v3290 = vpop.permute.xlu0 %3289
        %3291 = vrot.lane.b32.xlu0 %v2617, 40
        %v3292 = vpop.permute.xlu0 %3291
        %3293 = vrot.lane.b32.xlu0 %v2618, 40
        %v3294 = vpop.permute.xlu0 %3293
        %3295 = vrot.lane.b32.xlu0 %v2619, 40
        %v3296 = vpop.permute.xlu0 %3295
        %3297 = vrot.lane.b32.xlu0 %v2620, 40
        %v3298 = vpop.permute.xlu0 %3297
        %3299 = vrot.lane.b32.xlu0 %v2621, 40
        %v3300 = vpop.permute.xlu0 %3299
        %3301 = vrot.lane.b32.xlu0 %v2622, 40
        %v3302 = vpop.permute.xlu0 %3301
        %3303 = vrot.lane.b32.xlu0 %v2623, 40
        %v3304 = vpop.permute.xlu0 %3303
        %3305 = vrot.lane.b32.xlu0 %v2624, 40
        %v3306 = vpop.permute.xlu0 %3305
        %3307 = vrot.lane.b32.xlu0 %v2625, 40
        %v3308 = vpop.permute.xlu0 %3307
        %3309 = vrot.lane.b32.xlu0 %v2626, 40
        %v3310 = vpop.permute.xlu0 %3309
        %3311 = vrot.lane.b32.xlu0 %v2627, 40
        %v3312 = vpop.permute.xlu0 %3311
        %3313 = vrot.lane.b32.xlu0 %v2628, 40
        %v3314 = vpop.permute.xlu0 %3313
        %3315 = vrot.lane.b32.xlu0 %v2629, 40
        %v3316 = vpop.permute.xlu0 %3315
        %3317 = vrot.lane.b32.xlu0 %v2630, 40
        %v3318 = vpop.permute.xlu0 %3317
        %3319 = vrot.lane.b32.xlu0 %v2631, 40
        %v3320 = vpop.permute.xlu0 %3319
        %3321 = vrot.lane.b32.xlu0 %v2632, 40
        %v3322 = vpop.permute.xlu0 %3321
        %3323 = vrot.lane.b32.xlu0 %v2633, 40
        %v3324 = vpop.permute.xlu0 %3323
        %3325 = vrot.lane.b32.xlu0 %v2634, 40
        %v3326 = vpop.permute.xlu0 %3325
        %3327 = vrot.lane.b32.xlu0 %v2635, 40
        %v3328 = vpop.permute.xlu0 %3327
        %3329 = vrot.lane.b32.xlu0 %v2636, 40
        %v3330 = vpop.permute.xlu0 %3329
        %3331 = vrot.lane.b32.xlu0 %v2637, 40
        %v3332 = vpop.permute.xlu0 %3331
        %3333 = vrot.lane.b32.xlu0 %v2638, 40
        %v3334 = vpop.permute.xlu0 %3333
        %3335 = vrot.lane.b32.xlu0 %v2639, 40
        %v3336 = vpop.permute.xlu0 %3335
        %3337 = vrot.lane.b32.xlu0 %v2640, 40
        %v3338 = vpop.permute.xlu0 %3337
        %3339 = vrot.lane.b32.xlu0 %v2641, 40
        %v3340 = vpop.permute.xlu0 %3339
        %3341 = vrot.lane.b32.xlu0 %v2642, 40
        %v3342 = vpop.permute.xlu0 %3341
        %3343 = vrot.lane.b32.xlu0 %v2643, 40
        %v3344 = vpop.permute.xlu0 %3343
        %3345 = vrot.lane.b32.xlu0 %v2644, 40
        %v3346 = vpop.permute.xlu0 %3345
        %3347 = vrot.lane.b32.xlu0 %v2645, 40
        %v3348 = vpop.permute.xlu0 %3347
        %3349 = vrot.lane.b32.xlu0 %v2646, 40
        %v3350 = vpop.permute.xlu0 %3349
        %3351 = vrot.lane.b32.xlu0 %v2647, 40
        %v3352 = vpop.permute.xlu0 %3351
        %3417 = vrot.lane.b32.xlu0 %v2649, 48
        %v3418 = vpop.permute.xlu0 %3417
        %3419 = vrot.lane.b32.xlu0 %v2650, 48
        %v3420 = vpop.permute.xlu0 %3419
        %3421 = vrot.lane.b32.xlu0 %v2651, 48
        %v3422 = vpop.permute.xlu0 %3421
        %3423 = vrot.lane.b32.xlu0 %v2652, 48
        %v3424 = vpop.permute.xlu0 %3423
        %3425 = vrot.lane.b32.xlu0 %v2653, 48
        %v3426 = vpop.permute.xlu0 %3425
        %3427 = vrot.lane.b32.xlu0 %v2654, 48
        %v3428 = vpop.permute.xlu0 %3427
        %3429 = vrot.lane.b32.xlu0 %v2655, 48
        %v3430 = vpop.permute.xlu0 %3429
        %3431 = vrot.lane.b32.xlu0 %v2656, 48
        %v3432 = vpop.permute.xlu0 %3431
        %3433 = vrot.lane.b32.xlu0 %v2657, 48
        %v3434 = vpop.permute.xlu0 %3433
        %3435 = vrot.lane.b32.xlu0 %v2658, 48
        %v3436 = vpop.permute.xlu0 %3435
        %3437 = vrot.lane.b32.xlu0 %v2659, 48
        %v3438 = vpop.permute.xlu0 %3437
        %3439 = vrot.lane.b32.xlu0 %v2660, 48
        %v3440 = vpop.permute.xlu0 %3439
        %3441 = vrot.lane.b32.xlu0 %v2661, 48
        %v3442 = vpop.permute.xlu0 %3441
        %3443 = vrot.lane.b32.xlu0 %v2662, 48
        %v3444 = vpop.permute.xlu0 %3443
        %3445 = vrot.lane.b32.xlu0 %v2663, 48
        %v3446 = vpop.permute.xlu0 %3445
        %3447 = vrot.lane.b32.xlu0 %v2664, 48
        %v3448 = vpop.permute.xlu0 %3447
        %3449 = vrot.lane.b32.xlu0 %v2665, 48
        %v3450 = vpop.permute.xlu0 %3449
        %3451 = vrot.lane.b32.xlu0 %v2666, 48
        %v3452 = vpop.permute.xlu0 %3451
        %3453 = vrot.lane.b32.xlu0 %v2667, 48
        %v3454 = vpop.permute.xlu0 %3453
        %3455 = vrot.lane.b32.xlu0 %v2668, 48
        %v3456 = vpop.permute.xlu0 %3455
        %3457 = vrot.lane.b32.xlu0 %v2669, 48
        %v3458 = vpop.permute.xlu0 %3457
        %3459 = vrot.lane.b32.xlu0 %v2670, 48
        %v3460 = vpop.permute.xlu0 %3459
        %3461 = vrot.lane.b32.xlu0 %v2671, 48
        %v3462 = vpop.permute.xlu0 %3461
        %3463 = vrot.lane.b32.xlu0 %v2672, 48
        %v3464 = vpop.permute.xlu0 %3463
        %3465 = vrot.lane.b32.xlu0 %v2673, 48
        %v3466 = vpop.permute.xlu0 %3465
        %3467 = vrot.lane.b32.xlu0 %v2674, 48
        %v3468 = vpop.permute.xlu0 %3467
        %3469 = vrot.lane.b32.xlu0 %v2675, 48
        %v3470 = vpop.permute.xlu0 %3469
        %3471 = vrot.lane.b32.xlu0 %v2676, 48
        %v3472 = vpop.permute.xlu0 %3471
        %3473 = vrot.lane.b32.xlu0 %v2677, 48
        %v3474 = vpop.permute.xlu0 %3473
        %3475 = vrot.lane.b32.xlu0 %v2678, 48
        %v3476 = vpop.permute.xlu0 %3475
        %3477 = vrot.lane.b32.xlu0 %v2679, 48
        %v3478 = vpop.permute.xlu0 %3477
        %3479 = vrot.lane.b32.xlu0 %v2680, 48
        %v3480 = vpop.permute.xlu0 %3479
        %3545 = vrot.lane.b32.xlu0 %v2681, 56
        %v3546 = vpop.permute.xlu0 %3545
        %3547 = vrot.lane.b32.xlu0 %v2682, 56
        %v3548 = vpop.permute.xlu0 %3547
        %3549 = vrot.lane.b32.xlu0 %v2683, 56
        %v3550 = vpop.permute.xlu0 %3549
        %3551 = vrot.lane.b32.xlu0 %v2684, 56
        %v3552 = vpop.permute.xlu0 %3551
        %3553 = vrot.lane.b32.xlu0 %v2685, 56
        %v3554 = vpop.permute.xlu0 %3553
        %3555 = vrot.lane.b32.xlu0 %v2686, 56
        %v3556 = vpop.permute.xlu0 %3555
        %3557 = vrot.lane.b32.xlu0 %v2687, 56
        %v3558 = vpop.permute.xlu0 %3557
        %3559 = vrot.lane.b32.xlu0 %v2688, 56
        %v3560 = vpop.permute.xlu0 %3559
        %3561 = vrot.lane.b32.xlu0 %v2689, 56
        %v3562 = vpop.permute.xlu0 %3561
        %3563 = vrot.lane.b32.xlu0 %v2690, 56
        %v3564 = vpop.permute.xlu0 %3563
        %3565 = vrot.lane.b32.xlu0 %v2691, 56
        %v3566 = vpop.permute.xlu0 %3565
        %3567 = vrot.lane.b32.xlu0 %v2692, 56
        %v3568 = vpop.permute.xlu0 %3567
        %3569 = vrot.lane.b32.xlu0 %v2693, 56
        %v3570 = vpop.permute.xlu0 %3569
        %3571 = vrot.lane.b32.xlu0 %v2694, 56
        %v3572 = vpop.permute.xlu0 %3571
        %3573 = vrot.lane.b32.xlu0 %v2695, 56
        %v3574 = vpop.permute.xlu0 %3573
        %3575 = vrot.lane.b32.xlu0 %v2696, 56
        %v3576 = vpop.permute.xlu0 %3575
        %3577 = vrot.lane.b32.xlu0 %v2697, 56
        %v3578 = vpop.permute.xlu0 %3577
        %3579 = vrot.lane.b32.xlu0 %v2698, 56
        %v3580 = vpop.permute.xlu0 %3579
        %3581 = vrot.lane.b32.xlu0 %v2699, 56
        %v3582 = vpop.permute.xlu0 %3581
        %3583 = vrot.lane.b32.xlu0 %v2700, 56
        %v3584 = vpop.permute.xlu0 %3583
        %3585 = vrot.lane.b32.xlu0 %v2701, 56
        %v3586 = vpop.permute.xlu0 %3585
        %3587 = vrot.lane.b32.xlu0 %v2702, 56
        %v3588 = vpop.permute.xlu0 %3587
        %3589 = vrot.lane.b32.xlu0 %v2703, 56
        %v3590 = vpop.permute.xlu0 %3589
        %3591 = vrot.lane.b32.xlu0 %v2704, 56
        %v3592 = vpop.permute.xlu0 %3591
        %3593 = vrot.lane.b32.xlu0 %v2705, 56
        %v3594 = vpop.permute.xlu0 %3593
        %3595 = vrot.lane.b32.xlu0 %v2706, 56
        %v3596 = vpop.permute.xlu0 %3595
        %3597 = vrot.lane.b32.xlu0 %v2707, 56
        %v3598 = vpop.permute.xlu0 %3597
        %3599 = vrot.lane.b32.xlu0 %v2708, 56
        %v3600 = vpop.permute.xlu0 %3599
        %3601 = vrot.lane.b32.xlu0 %v2709, 56
        %v3602 = vpop.permute.xlu0 %3601
        %3603 = vrot.lane.b32.xlu0 %v2710, 56
        %v3604 = vpop.permute.xlu0 %3603
        %3605 = vrot.lane.b32.xlu0 %v2711, 56
        %v3606 = vpop.permute.xlu0 %3605
        %3607 = vrot.lane.b32.xlu0 %v2712, 56
        %v3608 = vpop.permute.xlu0 %3607
        %3673 = vrot.lane.b32.xlu0 %v2713, 64
        %v3674 = vpop.permute.xlu0 %3673
        %3675 = vrot.lane.b32.xlu0 %v2714, 64
        %v3676 = vpop.permute.xlu0 %3675
        %3677 = vrot.lane.b32.xlu0 %v2715, 64
        %v3678 = vpop.permute.xlu0 %3677
        %3679 = vrot.lane.b32.xlu0 %v2716, 64
        %v3680 = vpop.permute.xlu0 %3679
        %3681 = vrot.lane.b32.xlu0 %v2717, 64
        %v3682 = vpop.permute.xlu0 %3681
        %3683 = vrot.lane.b32.xlu0 %v2718, 64
        %v3684 = vpop.permute.xlu0 %3683
        %3685 = vrot.lane.b32.xlu0 %v2719, 64
        %v3686 = vpop.permute.xlu0 %3685
        %3687 = vrot.lane.b32.xlu0 %v2720, 64
        %v3688 = vpop.permute.xlu0 %3687
        %3689 = vrot.lane.b32.xlu0 %v2721, 64
        %v3690 = vpop.permute.xlu0 %3689
        %3691 = vrot.lane.b32.xlu0 %v2722, 64
        %v3692 = vpop.permute.xlu0 %3691
        %3693 = vrot.lane.b32.xlu0 %v2723, 64
        %v3694 = vpop.permute.xlu0 %3693
        %3695 = vrot.lane.b32.xlu0 %v2724, 64
        %v3696 = vpop.permute.xlu0 %3695
        %3697 = vrot.lane.b32.xlu0 %v2725, 64
        %v3698 = vpop.permute.xlu0 %3697
        %3699 = vrot.lane.b32.xlu0 %v2726, 64
        %v3700 = vpop.permute.xlu0 %3699
        %3701 = vrot.lane.b32.xlu0 %v2727, 64
        %v3702 = vpop.permute.xlu0 %3701
        %3703 = vrot.lane.b32.xlu0 %v2728, 64
        %v3704 = vpop.permute.xlu0 %3703
        %3705 = vrot.lane.b32.xlu0 %v2729, 64
        %v3706 = vpop.permute.xlu0 %3705
        %3707 = vrot.lane.b32.xlu0 %v2730, 64
        %v3708 = vpop.permute.xlu0 %3707
        %3709 = vrot.lane.b32.xlu0 %v2731, 64
        %v3710 = vpop.permute.xlu0 %3709
        %3711 = vrot.lane.b32.xlu0 %v2732, 64
        %v3712 = vpop.permute.xlu0 %3711
        %3713 = vrot.lane.b32.xlu0 %v2733, 64
        %v3714 = vpop.permute.xlu0 %3713
        %3715 = vrot.lane.b32.xlu0 %v2734, 64
        %v3716 = vpop.permute.xlu0 %3715
        %3717 = vrot.lane.b32.xlu0 %v2735, 64
        %v3718 = vpop.permute.xlu0 %3717
        %3719 = vrot.lane.b32.xlu0 %v2736, 64
        %v3720 = vpop.permute.xlu0 %3719
        %3721 = vrot.lane.b32.xlu0 %v2737, 64
        %v3722 = vpop.permute.xlu0 %3721
        %3723 = vrot.lane.b32.xlu0 %v2738, 64
        %v3724 = vpop.permute.xlu0 %3723
        %3725 = vrot.lane.b32.xlu0 %v2739, 64
        %v3726 = vpop.permute.xlu0 %3725
        %3727 = vrot.lane.b32.xlu0 %v2740, 64
        %v3728 = vpop.permute.xlu0 %3727
        %3729 = vrot.lane.b32.xlu0 %v2741, 64
        %v3730 = vpop.permute.xlu0 %3729
        %3731 = vrot.lane.b32.xlu0 %v2742, 64
        %v3732 = vpop.permute.xlu0 %3731
        %3733 = vrot.lane.b32.xlu0 %v2743, 64
        %v3734 = vpop.permute.xlu0 %3733
        %3735 = vrot.lane.b32.xlu0 %v2744, 64
        %v3736 = vpop.permute.xlu0 %3735
        %v3769 = vsel %vm2381, %v2456, %v2778
        %v3770 = vsel %vm2381, %v2457, %v2780
        %v3771 = vsel %vm2381, %v2458, %v2782
        %v3772 = vsel %vm2381, %v2459, %v2784
        %v3773 = vsel %vm2381, %v2460, %v2786
        %v3774 = vsel %vm2381, %v2461, %v2788
        %v3775 = vsel %vm2381, %v2462, %v2790
        %v3776 = vsel %vm2381, %v2463, %v2792
        %v3777 = vsel %vm2381, %v2464, %v2794
        %v3778 = vsel %vm2381, %v2465, %v2796
        %v3779 = vsel %vm2381, %v2466, %v2798
        %v3780 = vsel %vm2381, %v2467, %v2800
        %v3781 = vsel %vm2381, %v2468, %v2802
        %v3782 = vsel %vm2381, %v2469, %v2804
        %v3783 = vsel %vm2381, %v2470, %v2806
        %v3784 = vsel %vm2381, %v2471, %v2808
        %v3785 = vsel %vm2381, %v2472, %v2810
        %v3786 = vsel %vm2381, %v2473, %v2812
        %v3787 = vsel %vm2381, %v2474, %v2814
        %v3788 = vsel %vm2381, %v2475, %v2816
        %v3789 = vsel %vm2381, %v2476, %v2818
        %v3790 = vsel %vm2381, %v2477, %v2820
        %v3791 = vsel %vm2381, %v2478, %v2822
        %v3792 = vsel %vm2381, %v2479, %v2824
        %v3793 = vsel %vm2381, %v2480, %v2826
        %v3794 = vsel %vm2381, %v2481, %v2828
        %v3795 = vsel %vm2381, %v2482, %v2830
        %v3796 = vsel %vm2381, %v2483, %v2832
        %v3797 = vsel %vm2381, %v2484, %v2834
        %v3798 = vsel %vm2381, %v2485, %v2836
        %v3799 = vsel %vm2381, %v2486, %v2838
        %v3800 = vsel %vm2381, %v2487, %v2840
        %vm3801 = vcmask 130048
        %v3802 = vsel %vm3801, %v3769, %v2906
        %v3803 = vsel %vm3801, %v3770, %v2908
        %v3804 = vsel %vm3801, %v3771, %v2910
        %v3805 = vsel %vm3801, %v3772, %v2912
        %v3806 = vsel %vm3801, %v3773, %v2914
        %v3807 = vsel %vm3801, %v3774, %v2916
        %v3808 = vsel %vm3801, %v3775, %v2918
        %v3809 = vsel %vm3801, %v3776, %v2920
        %v3810 = vsel %vm3801, %v3777, %v2922
        %v3811 = vsel %vm3801, %v3778, %v2924
        %v3812 = vsel %vm3801, %v3779, %v2926
        %v3813 = vsel %vm3801, %v3780, %v2928
        %v3814 = vsel %vm3801, %v3781, %v2930
        %v3815 = vsel %vm3801, %v3782, %v2932
        %v3816 = vsel %vm3801, %v3783, %v2934
        %v3817 = vsel %vm3801, %v3784, %v2936
        %v3818 = vsel %vm3801, %v3785, %v2938
        %v3819 = vsel %vm3801, %v3786, %v2940
        %v3820 = vsel %vm3801, %v3787, %v2942
        %v3821 = vsel %vm3801, %v3788, %v2944
        %v3822 = vsel %vm3801, %v3789, %v2946
        %v3823 = vsel %vm3801, %v3790, %v2948
        %v3824 = vsel %vm3801, %v3791, %v2950
        %v3825 = vsel %vm3801, %v3792, %v2952
        %v3826 = vsel %vm3801, %v3793, %v2954
        %v3827 = vsel %vm3801, %v3794, %v2956
        %v3828 = vsel %vm3801, %v3795, %v2958
        %v3829 = vsel %vm3801, %v3796, %v2960
        %v3830 = vsel %vm3801, %v3797, %v2962
        %v3831 = vsel %vm3801, %v3798, %v2964
        %v3832 = vsel %vm3801, %v3799, %v2966
        %v3833 = vsel %vm3801, %v3800, %v2968
        %v3834 = vsel %vm1927, %v3802, %v3034
        %v3835 = vsel %vm1927, %v3803, %v3036
        %v3836 = vsel %vm1927, %v3804, %v3038
        %v3837 = vsel %vm1927, %v3805, %v3040
        %v3838 = vsel %vm1927, %v3806, %v3042
        %v3839 = vsel %vm1927, %v3807, %v3044
        %v3840 = vsel %vm1927, %v3808, %v3046
        %v3841 = vsel %vm1927, %v3809, %v3048
        %v3842 = vsel %vm1927, %v3810, %v3050
        %v3843 = vsel %vm1927, %v3811, %v3052
        %v3844 = vsel %vm1927, %v3812, %v3054
        %v3845 = vsel %vm1927, %v3813, %v3056
        %v3846 = vsel %vm1927, %v3814, %v3058
        %v3847 = vsel %vm1927, %v3815, %v3060
        %v3848 = vsel %vm1927, %v3816, %v3062
        %v3849 = vsel %vm1927, %v3817, %v3064
        %v3850 = vsel %vm1927, %v3818, %v3066
        %v3851 = vsel %vm1927, %v3819, %v3068
        %v3852 = vsel %vm1927, %v3820, %v3070
        %v3853 = vsel %vm1927, %v3821, %v3072
        %v3854 = vsel %vm1927, %v3822, %v3074
        %v3855 = vsel %vm1927, %v3823, %v3076
        %v3856 = vsel %vm1927, %v3824, %v3078
        %v3857 = vsel %vm1927, %v3825, %v3080
        %v3858 = vsel %vm1927, %v3826, %v3082
        %v3859 = vsel %vm1927, %v3827, %v3084
        %v3860 = vsel %vm1927, %v3828, %v3086
        %v3861 = vsel %vm1927, %v3829, %v3088
        %v3862 = vsel %vm1927, %v3830, %v3090
        %v3863 = vsel %vm1927, %v3831, %v3092
        %v3864 = vsel %vm1927, %v3832, %v3094
        %v3865 = vsel %vm1927, %v3833, %v3096
        %vm3866 = vcmask 261120
        %v3867 = vsel %vm3866, %v3834, %v3162
        %v3868 = vsel %vm3866, %v3835, %v3164
        %v3869 = vsel %vm3866, %v3836, %v3166
        %v3870 = vsel %vm3866, %v3837, %v3168
        %v3871 = vsel %vm3866, %v3838, %v3170
        %v3872 = vsel %vm3866, %v3839, %v3172
        %v3873 = vsel %vm3866, %v3840, %v3174
        %v3874 = vsel %vm3866, %v3841, %v3176
        %v3875 = vsel %vm3866, %v3842, %v3178
        %v3876 = vsel %vm3866, %v3843, %v3180
        %v3877 = vsel %vm3866, %v3844, %v3182
        %v3878 = vsel %vm3866, %v3845, %v3184
        %v3879 = vsel %vm3866, %v3846, %v3186
        %v3880 = vsel %vm3866, %v3847, %v3188
        %v3881 = vsel %vm3866, %v3848, %v3190
        %v3882 = vsel %vm3866, %v3849, %v3192
        %v3883 = vsel %vm3866, %v3850, %v3194
        %v3884 = vsel %vm3866, %v3851, %v3196
        %v3885 = vsel %vm3866, %v3852, %v3198
        %v3886 = vsel %vm3866, %v3853, %v3200
        %v3887 = vsel %vm3866, %v3854, %v3202
        %v3888 = vsel %vm3866, %v3855, %v3204
        %v3889 = vsel %vm3866, %v3856, %v3206
        %v3890 = vsel %vm3866, %v3857, %v3208
        %v3891 = vsel %vm3866, %v3858, %v3210
        %v3892 = vsel %vm3866, %v3859, %v3212
        %v3893 = vsel %vm3866, %v3860, %v3214
        %v3894 = vsel %vm3866, %v3861, %v3216
        %v3895 = vsel %vm3866, %v3862, %v3218
        %v3896 = vsel %vm3866, %v3863, %v3220
        %v3897 = vsel %vm3866, %v3864, %v3222
        %v3898 = vsel %vm3866, %v3865, %v3224
        %vm3899 = vcmask 326656
        %v3900 = vsel %vm3899, %v3867, %v3290
        %v3901 = vsel %vm3899, %v3868, %v3292
        %v3902 = vsel %vm3899, %v3869, %v3294
        %v3903 = vsel %vm3899, %v3870, %v3296
        %v3904 = vsel %vm3899, %v3871, %v3298
        %v3905 = vsel %vm3899, %v3872, %v3300
        %v3906 = vsel %vm3899, %v3873, %v3302
        %v3907 = vsel %vm3899, %v3874, %v3304
        %v3908 = vsel %vm3899, %v3875, %v3306
        %v3909 = vsel %vm3899, %v3876, %v3308
        %v3910 = vsel %vm3899, %v3877, %v3310
        %v3911 = vsel %vm3899, %v3878, %v3312
        %v3912 = vsel %vm3899, %v3879, %v3314
        %v3913 = vsel %vm3899, %v3880, %v3316
        %v3914 = vsel %vm3899, %v3881, %v3318
        %v3915 = vsel %vm3899, %v3882, %v3320
        %v3916 = vsel %vm3899, %v3883, %v3322
        %v3917 = vsel %vm3899, %v3884, %v3324
        %v3918 = vsel %vm3899, %v3885, %v3326
        %v3919 = vsel %vm3899, %v3886, %v3328
        %v3920 = vsel %vm3899, %v3887, %v3330
        %v3921 = vsel %vm3899, %v3888, %v3332
        %v3922 = vsel %vm3899, %v3889, %v3334
        %v3923 = vsel %vm3899, %v3890, %v3336
        %v3924 = vsel %vm3899, %v3891, %v3338
        %v3925 = vsel %vm3899, %v3892, %v3340
        %v3926 = vsel %vm3899, %v3893, %v3342
        %v3927 = vsel %vm3899, %v3894, %v3344
        %v3928 = vsel %vm3899, %v3895, %v3346
        %v3929 = vsel %vm3899, %v3896, %v3348
        %v3930 = vsel %vm3899, %v3897, %v3350
        %v3931 = vsel %vm3899, %v3898, %v3352
        %vm3932 = vcmask 392192
        %v3933 = vsel %vm3932, %v3900, %v3418
        %v3934 = vsel %vm3932, %v3901, %v3420
        %v3935 = vsel %vm3932, %v3902, %v3422
        %v3936 = vsel %vm3932, %v3903, %v3424
        %v3937 = vsel %vm3932, %v3904, %v3426
        %v3938 = vsel %vm3932, %v3905, %v3428
        %v3939 = vsel %vm3932, %v3906, %v3430
        %v3940 = vsel %vm3932, %v3907, %v3432
        %v3941 = vsel %vm3932, %v3908, %v3434
        %v3942 = vsel %vm3932, %v3909, %v3436
        %v3943 = vsel %vm3932, %v3910, %v3438
        %v3944 = vsel %vm3932, %v3911, %v3440
        %v3945 = vsel %vm3932, %v3912, %v3442
        %v3946 = vsel %vm3932, %v3913, %v3444
        %v3947 = vsel %vm3932, %v3914, %v3446
        %v3948 = vsel %vm3932, %v3915, %v3448
        %v3949 = vsel %vm3932, %v3916, %v3450
        %v3950 = vsel %vm3932, %v3917, %v3452
        %v3951 = vsel %vm3932, %v3918, %v3454
        %v3952 = vsel %vm3932, %v3919, %v3456
        %v3953 = vsel %vm3932, %v3920, %v3458
        %v3954 = vsel %vm3932, %v3921, %v3460
        %v3955 = vsel %vm3932, %v3922, %v3462
        %v3956 = vsel %vm3932, %v3923, %v3464
        %v3957 = vsel %vm3932, %v3924, %v3466
        %v3958 = vsel %vm3932, %v3925, %v3468
        %v3959 = vsel %vm3932, %v3926, %v3470
        %v3960 = vsel %vm3932, %v3927, %v3472
        %v3961 = vsel %vm3932, %v3928, %v3474
        %v3962 = vsel %vm3932, %v3929, %v3476
        %v3963 = vsel %vm3932, %v3930, %v3478
        %v3964 = vsel %vm3932, %v3931, %v3480
        %vm3965 = vcmask 457728
        %v3966 = vsel %vm3965, %v3933, %v3546
        %v3967 = vsel %vm3965, %v3934, %v3548
        %v3968 = vsel %vm3965, %v3935, %v3550
        %v3969 = vsel %vm3965, %v3936, %v3552
        %v3970 = vsel %vm3965, %v3937, %v3554
        %v3971 = vsel %vm3965, %v3938, %v3556
        %v3972 = vsel %vm3965, %v3939, %v3558
        %v3973 = vsel %vm3965, %v3940, %v3560
        %v3974 = vsel %vm3965, %v3941, %v3562
        %v3975 = vsel %vm3965, %v3942, %v3564
        %v3976 = vsel %vm3965, %v3943, %v3566
        %v3977 = vsel %vm3965, %v3944, %v3568
        %v3978 = vsel %vm3965, %v3945, %v3570
        %v3979 = vsel %vm3965, %v3946, %v3572
        %v3980 = vsel %vm3965, %v3947, %v3574
        %v3981 = vsel %vm3965, %v3948, %v3576
        %v3982 = vsel %vm3965, %v3949, %v3578
        %v3983 = vsel %vm3965, %v3950, %v3580
        %v3984 = vsel %vm3965, %v3951, %v3582
        %v3985 = vsel %vm3965, %v3952, %v3584
        %v3986 = vsel %vm3965, %v3953, %v3586
        %v3987 = vsel %vm3965, %v3954, %v3588
        %v3988 = vsel %vm3965, %v3955, %v3590
        %v3989 = vsel %vm3965, %v3956, %v3592
        %v3990 = vsel %vm3965, %v3957, %v3594
        %v3991 = vsel %vm3965, %v3958, %v3596
        %v3992 = vsel %vm3965, %v3959, %v3598
        %v3993 = vsel %vm3965, %v3960, %v3600
        %v3994 = vsel %vm3965, %v3961, %v3602
        %v3995 = vsel %vm3965, %v3962, %v3604
        %v3996 = vsel %vm3965, %v3963, %v3606
        %v3997 = vsel %vm3965, %v3964, %v3608
        %vm3998 = vcmask 523264
        %v3999 = vsel %vm3998, %v3966, %v3674
        %v4000 = vsel %vm3998, %v3967, %v3676
        %v4001 = vsel %vm3998, %v3968, %v3678
        %v4002 = vsel %vm3998, %v3969, %v3680
        %v4003 = vsel %vm3998, %v3970, %v3682
        %v4004 = vsel %vm3998, %v3971, %v3684
        %v4005 = vsel %vm3998, %v3972, %v3686
        %v4006 = vsel %vm3998, %v3973, %v3688
        %v4007 = vsel %vm3998, %v3974, %v3690
        %v4008 = vsel %vm3998, %v3975, %v3692
        %v4009 = vsel %vm3998, %v3976, %v3694
        %v4010 = vsel %vm3998, %v3977, %v3696
        %v4011 = vsel %vm3998, %v3978, %v3698
        %v4012 = vsel %vm3998, %v3979, %v3700
        %v4013 = vsel %vm3998, %v3980, %v3702
        %v4014 = vsel %vm3998, %v3981, %v3704
        %v4015 = vsel %vm3998, %v3982, %v3706
        %v4016 = vsel %vm3998, %v3983, %v3708
        %v4017 = vsel %vm3998, %v3984, %v3710
        %v4018 = vsel %vm3998, %v3985, %v3712
        %v4019 = vsel %vm3998, %v3986, %v3714
        %v4020 = vsel %vm3998, %v3987, %v3716
        %v4021 = vsel %vm3998, %v3988, %v3718
        %v4022 = vsel %vm3998, %v3989, %v3720
        %v4023 = vsel %vm3998, %v3990, %v3722
        %v4024 = vsel %vm3998, %v3991, %v3724
        %v4025 = vsel %vm3998, %v3992, %v3726
        %v4026 = vsel %vm3998, %v3993, %v3728
        %v4027 = vsel %vm3998, %v3994, %v3730
        %v4028 = vsel %vm3998, %v3995, %v3732
        %v4029 = vsel %vm3998, %v3996, %v3734
        %v4030 = vsel %vm3998, %v3997, %v3736
        %v4031 = vld [vmem:[%s1 + $0x10] sm:$0xf]
        %v4032 = vld [vmem:[%s1 + $0x14] sm:$0xf]
        %v4033 = vld [vmem:[%s1 + $0x18] sm:$0xf]
        %v4034 = vld [vmem:[%s1 + $0x1c] sm:$0xf]
        %v4035 = vld [vmem:[%s1 + $0x20] sm:$0xf]
        %v4036 = vld [vmem:[%s1 + $0x24] sm:$0xf]
        %v4037 = vld [vmem:[%s1 + $0x28] sm:$0xf]
        %v4038 = vld [vmem:[%s1 + $0x2c] sm:$0xf]
        %v4039 = vld [vmem:[%s1 + $0x30] sm:$0xf]
        %v4040 = vpack.c.bf16 %v4000, %v3999
        %v4041 = vpack.c.bf16 %v4002, %v4001
        %v4042 = vpack.c.bf16 %v4004, %v4003
        %v4043 = vpack.c.bf16 %v4006, %v4005
        %v4044 = vpack.c.bf16 %v4008, %v4007
        %v4045 = vpack.c.bf16 %v4010, %v4009
        %v4046 = vpack.c.bf16 %v4012, %v4011
        %v4047 = vpack.c.bf16 %v4014, %v4013
        %v4048 = vpack.c.bf16 %v4016, %v4015
        %v4049 = vpack.c.bf16 %v4018, %v4017
        %v4050 = vpack.c.bf16 %v4020, %v4019
        %v4051 = vpack.c.bf16 %v4022, %v4021
        %v4052 = vpack.c.bf16 %v4024, %v4023
        %v4053 = vpack.c.bf16 %v4026, %v4025
        %v4054 = vpack.c.bf16 %v4028, %v4027
        %v4055 = vpack.c.bf16 %v4030, %v4029
        %s4056 = scalar_lea.vmem %s2, 4
        %v4057 = vld [vmem:[%s4056] sm:$0x7]
        %v4058 = vlaneseq
        %v4059 = vshrl.u32 %v4058, 7
        %v4060 = vsub.s32 0, %v4059
        %v4061 = vrot.slane %v4057, %v4060
        %v4071 = vunpack.c.l.b16 %v4031
        %v4072 = vunpack.c.l.b16 %v4032
        %v4073 = vunpack.c.l.b16 %v4033
        %v4074 = vunpack.c.l.b16 %v4034
        %v4075 = vunpack.c.l.b16 %v4035
        %v4076 = vunpack.c.l.b16 %v4036
        %v4077 = vunpack.c.l.b16 %v4037
        %v4078 = vunpack.c.l.b16 %v4038
        %v4079 = vunpack.c.l.b16 %v4039
        %v4080 = vpack.c.b16 %v4072, %v4071
        %v4081 = vpack.c.b16 %v4074, %v4073
        %v4082 = vpack.c.b16 %v4076, %v4075
        %v4083 = vpack.c.b16 %v4078, %v4077
        %v4084 = vpack.c.b16 %v4079, %v4079
        %vm4089 = vcmask 588800
        %v4091 = vsel %vm4089, %v4040, 0
        %v4094 = vsel %vm4089, %v4041, 0
        %v4097 = vsel %vm4089, %v4042, 0
        %v4100 = vsel %vm4089, %v4043, 0
        %v4103 = vsel %vm4089, %v4044, 0
        %v4106 = vsel %vm4089, %v4045, 0
        %v4109 = vsel %vm4089, %v4046, 0
        %v4112 = vsel %vm4089, %v4047, 0
        %v4115 = vsel %vm4089, %v4048, 0
        %v4118 = vsel %vm4089, %v4049, 0
        %v4121 = vsel %vm4089, %v4050, 0
        %v4124 = vsel %vm4089, %v4051, 0
        %v4127 = vsel %vm4089, %v4052, 0
        %v4130 = vsel %vm4089, %v4053, 0
        %v4133 = vsel %vm4089, %v4054, 0
        %v4136 = vsel %vm4089, %v4055, 0
        %vm4138 = vcmask 1043456
        %v4140 = vsel %vm4138, %v4084, 0
        %4142 = vmatprep.subr.bf16.mxu0 0
        %4143 = vmatpush1.bf16.msra.mxu0 %v4080
        %4144 = vmatprep.subr.bf16.mxu0 0
        %4145 = vmatpush1.bf16.msra.mxu0 %v4081
        %4146 = vmatprep.subr.bf16.mxu0 0
        %4147 = vmatpush1.bf16.msra.mxu0 %v4082
        %4148 = vmatprep.subr.bf16.mxu0 0
        %4149 = vmatpush1.bf16.msra.mxu0 %v4083
        %4150 = vmatprep.subr.bf16.mxu0 0
        %4151 = vmatpush1.bf16.msra.mxu0 %v4140
        %4152 = vmatprep.subr.bf16.mxu0 0
        %4153 = vmatpush1.bf16.msra.mxu0 0
        %4154 = vmatprep.subr.bf16.mxu0 0
        %4155 = vmatpush1.bf16.msra.mxu0 0
        %4156 = vmatprep.subr.bf16.mxu0 0
        %4157 = vmatpush1.bf16.msra.mxu0 0
        %4158 = vmatprep.subr.bf16.mxu0 0
        %4159 = vmatpush1.bf16.msra.mxu0 0
        %4160 = vmatprep.subr.bf16.mxu0 0
        %4161 = vmatpush1.bf16.msra.mxu0 0
        %4162 = vmatprep.subr.bf16.mxu0 0
        %4163 = vmatpush1.bf16.msra.mxu0 0
        %4164 = vmatprep.subr.bf16.mxu0 0
        %4165 = vmatpush1.bf16.msra.mxu0 0
        %4166 = vmatprep.subr.bf16.mxu0 0
        %4167 = vmatpush1.bf16.msra.mxu0 0
        %4168 = vmatprep.subr.bf16.mxu0 0
        %4169 = vmatpush1.bf16.msra.mxu0 0
        %4170 = vmatprep.subr.bf16.mxu0 0
        %4171 = vmatpush1.bf16.msra.mxu0 0
        %4172 = vmatprep.subr.bf16.mxu0 0
        %4173 = vmatpush1.bf16.msra.mxu0 0
        %4174 = vmatprep.mubr.bf16.mxu0 0
        %4175 = vmatmul.mubr.bf16.gmra.mrb[0].mxu0 %v4091
        %v4176 = vpop.f32.mrb[0].mxu0
        %v4177 = vadd.f32 %v4061, %v4176
        %v4178 = vpop.f32.mrb[0].mxu0
        %v4179 = vpop.f32.mrb[0].mxu0
        %v4180 = vadd.f32 %v4061, %v4179
        %v4181 = vpop.f32.mrb[0].mxu0
        %4182 = vmatprep.mubr.bf16.mxu0 0
        %4183 = vmatmul.mubr.bf16.gmra.mrb[0].mxu0 %v4094
        %v4184 = vpop.f32.mrb[0].mxu0
        %v4185 = vadd.f32 %v4061, %v4184
        %v4186 = vpop.f32.mrb[0].mxu0
        %v4187 = vpop.f32.mrb[0].mxu0
        %v4188 = vadd.f32 %v4061, %v4187
        %v4189 = vpop.f32.mrb[0].mxu0
        %4190 = vmatprep.mubr.bf16.mxu0 0
        %4191 = vmatmul.mubr.bf16.gmra.mrb[0].mxu0 %v4097
        %v4192 = vpop.f32.mrb[0].mxu0
        %v4193 = vadd.f32 %v4061, %v4192
        %v4194 = vpop.f32.mrb[0].mxu0
        %v4195 = vpop.f32.mrb[0].mxu0
        %v4196 = vadd.f32 %v4061, %v4195
        %v4197 = vpop.f32.mrb[0].mxu0
        %4198 = vmatprep.mubr.bf16.mxu0 0
        %4199 = vmatmul.mubr.bf16.gmra.mrb[0].mxu0 %v4100
        %v4200 = vpop.f32.mrb[0].mxu0
        %v4201 = vadd.f32 %v4061, %v4200
        %v4202 = vpop.f32.mrb[0].mxu0
        %v4203 = vpop.f32.mrb[0].mxu0
        %v4204 = vadd.f32 %v4061, %v4203
        %v4205 = vpop.f32.mrb[0].mxu0
        %4206 = vmatprep.mubr.bf16.mxu0 0
        %4207 = vmatmul.mubr.bf16.gmra.mrb[0].mxu0 %v4103
        %v4208 = vpop.f32.mrb[0].mxu0
        %v4209 = vadd.f32 %v4061, %v4208
        %v4210 = vpop.f32.mrb[0].mxu0
        %v4211 = vpop.f32.mrb[0].mxu0
        %v4212 = vadd.f32 %v4061, %v4211
        %v4213 = vpop.f32.mrb[0].mxu0
        %4214 = vmatprep.mubr.bf16.mxu0 0
        %4215 = vmatmul.mubr.bf16.gmra.mrb[0].mxu0 %v4106
        %v4216 = vpop.f32.mrb[0].mxu0
        %v4217 = vadd.f32 %v4061, %v4216
        %v4218 = vpop.f32.mrb[0].mxu0
        %v4219 = vpop.f32.mrb[0].mxu0
        %v4220 = vadd.f32 %v4061, %v4219
        %v4221 = vpop.f32.mrb[0].mxu0
        %4222 = vmatprep.mubr.bf16.mxu0 0
        %4223 = vmatmul.mubr.bf16.gmra.mrb[0].mxu0 %v4109
        %v4224 = vpop.f32.mrb[0].mxu0
        %v4225 = vadd.f32 %v4061, %v4224
        %v4226 = vpop.f32.mrb[0].mxu0
        %v4227 = vpop.f32.mrb[0].mxu0
        %v4228 = vadd.f32 %v4061, %v4227
        %v4229 = vpop.f32.mrb[0].mxu0
        %4230 = vmatprep.mubr.bf16.mxu0 0
        %4231 = vmatmul.mubr.bf16.gmra.mrb[0].mxu0 %v4112
        %v4232 = vpop.f32.mrb[0].mxu0
        %v4233 = vadd.f32 %v4061, %v4232
        %v4234 = vpop.f32.mrb[0].mxu0
        %v4235 = vpop.f32.mrb[0].mxu0
        %v4236 = vadd.f32 %v4061, %v4235
        %v4237 = vpop.f32.mrb[0].mxu0
        %4238 = vmatprep.mubr.bf16.mxu0 0
        %4239 = vmatmul.mubr.bf16.gmra.mrb[0].mxu0 %v4115
        %v4240 = vpop.f32.mrb[0].mxu0
        %v4241 = vadd.f32 %v4061, %v4240
        %v4242 = vpop.f32.mrb[0].mxu0
        %v4243 = vpop.f32.mrb[0].mxu0
        %v4244 = vadd.f32 %v4061, %v4243
        %v4245 = vpop.f32.mrb[0].mxu0
        %4246 = vmatprep.mubr.bf16.mxu0 0
        %4247 = vmatmul.mubr.bf16.gmra.mrb[0].mxu0 %v4118
        %v4248 = vpop.f32.mrb[0].mxu0
        %v4249 = vadd.f32 %v4061, %v4248
        %v4250 = vpop.f32.mrb[0].mxu0
        %v4251 = vpop.f32.mrb[0].mxu0
        %v4252 = vadd.f32 %v4061, %v4251
        %v4253 = vpop.f32.mrb[0].mxu0
        %4254 = vmatprep.mubr.bf16.mxu0 0
        %4255 = vmatmul.mubr.bf16.gmra.mrb[0].mxu0 %v4121
        %v4256 = vpop.f32.mrb[0].mxu0
        %v4257 = vadd.f32 %v4061, %v4256
        %v4258 = vpop.f32.mrb[0].mxu0
        %v4259 = vpop.f32.mrb[0].mxu0
        %v4260 = vadd.f32 %v4061, %v4259
        %v4261 = vpop.f32.mrb[0].mxu0
        %4262 = vmatprep.mubr.bf16.mxu0 0
        %4263 = vmatmul.mubr.bf16.gmra.mrb[0].mxu0 %v4124
        %v4264 = vpop.f32.mrb[0].mxu0
        %v4265 = vadd.f32 %v4061, %v4264
        %v4266 = vpop.f32.mrb[0].mxu0
        %v4267 = vpop.f32.mrb[0].mxu0
        %v4268 = vadd.f32 %v4061, %v4267
        %v4269 = vpop.f32.mrb[0].mxu0
        %4270 = vmatprep.mubr.bf16.mxu0 0
        %4271 = vmatmul.mubr.bf16.gmra.mrb[0].mxu0 %v4127
        %v4272 = vpop.f32.mrb[0].mxu0
        %v4273 = vadd.f32 %v4061, %v4272
        %v4274 = vpop.f32.mrb[0].mxu0
        %v4275 = vpop.f32.mrb[0].mxu0
        %v4276 = vadd.f32 %v4061, %v4275
        %v4277 = vpop.f32.mrb[0].mxu0
        %4278 = vmatprep.mubr.bf16.mxu0 0
        %4279 = vmatmul.mubr.bf16.gmra.mrb[0].mxu0 %v4130
        %v4280 = vpop.f32.mrb[0].mxu0
        %v4281 = vadd.f32 %v4061, %v4280
        %v4282 = vpop.f32.mrb[0].mxu0
        %v4283 = vpop.f32.mrb[0].mxu0
        %v4284 = vadd.f32 %v4061, %v4283
        %v4285 = vpop.f32.mrb[0].mxu0
        %4286 = vmatprep.mubr.bf16.mxu0 0
        %4287 = vmatmul.mubr.bf16.gmra.mrb[0].mxu0 %v4133
        %v4288 = vpop.f32.mrb[0].mxu0
        %v4289 = vadd.f32 %v4061, %v4288
        %v4290 = vpop.f32.mrb[0].mxu0
        %v4291 = vpop.f32.mrb[0].mxu0
        %v4292 = vadd.f32 %v4061, %v4291
        %v4293 = vpop.f32.mrb[0].mxu0
        %4294 = vmatprep.mubr.bf16.mxu0 0
        %4295 = vmatmul.mubr.bf16.gmra.mrb[0].mxu0 %v4136
        %v4296 = vpop.f32.mrb[0].mxu0
        %v4297 = vadd.f32 %v4061, %v4296
        %v4298 = vpop.f32.mrb[0].mxu0
        %v4299 = vpop.f32.mrb[0].mxu0
        %v4300 = vadd.f32 %v4061, %v4299
        %v4301 = vpop.f32.mrb[0].mxu0
        %4302 = vdwg.mxu0
        %vm4303 = vcmp.gt.f32.partialorder %v4177, 0.0
        %vm4304 = vcmp.gt.f32.partialorder %v4180, 0.0
        %vm4305 = vcmp.gt.f32.partialorder %v4185, 0.0
        %vm4306 = vcmp.gt.f32.partialorder %v4188, 0.0
        %vm4307 = vcmp.gt.f32.partialorder %v4193, 0.0
        %vm4308 = vcmp.gt.f32.partialorder %v4196, 0.0
        %vm4309 = vcmp.gt.f32.partialorder %v4201, 0.0
        %vm4310 = vcmp.gt.f32.partialorder %v4204, 0.0
        %vm4311 = vcmp.gt.f32.partialorder %v4209, 0.0
        %vm4312 = vcmp.gt.f32.partialorder %v4212, 0.0
        %vm4313 = vcmp.gt.f32.partialorder %v4217, 0.0
        %vm4314 = vcmp.gt.f32.partialorder %v4220, 0.0
        %vm4315 = vcmp.gt.f32.partialorder %v4225, 0.0
        %vm4316 = vcmp.gt.f32.partialorder %v4228, 0.0
        %vm4317 = vcmp.gt.f32.partialorder %v4233, 0.0
        %vm4318 = vcmp.gt.f32.partialorder %v4236, 0.0
        %vm4319 = vcmp.gt.f32.partialorder %v4241, 0.0
        %vm4320 = vcmp.gt.f32.partialorder %v4244, 0.0
        %vm4321 = vcmp.gt.f32.partialorder %v4249, 0.0
        %vm4322 = vcmp.gt.f32.partialorder %v4252, 0.0
        %vm4323 = vcmp.gt.f32.partialorder %v4257, 0.0
        %vm4324 = vcmp.gt.f32.partialorder %v4260, 0.0
        %vm4325 = vcmp.gt.f32.partialorder %v4265, 0.0
        %vm4326 = vcmp.gt.f32.partialorder %v4268, 0.0
        %vm4327 = vcmp.gt.f32.partialorder %v4273, 0.0
        %vm4328 = vcmp.gt.f32.partialorder %v4276, 0.0
        %vm4329 = vcmp.gt.f32.partialorder %v4281, 0.0
        %vm4330 = vcmp.gt.f32.partialorder %v4284, 0.0
        %vm4331 = vcmp.gt.f32.partialorder %v4289, 0.0
        %vm4332 = vcmp.gt.f32.partialorder %v4292, 0.0
        %vm4333 = vcmp.gt.f32.partialorder %v4297, 0.0
        %vm4334 = vcmp.gt.f32.partialorder %v4300, 0.0
        %v4335 = vmul.f32 %v4177, 0.1
        %v4336 = vmul.f32 %v4180, 0.1
        %v4337 = vmul.f32 %v4185, 0.1
        %v4338 = vmul.f32 %v4188, 0.1
        %v4339 = vmul.f32 %v4193, 0.1
        %v4340 = vmul.f32 %v4196, 0.1
        %v4341 = vmul.f32 %v4201, 0.1
        %v4342 = vmul.f32 %v4204, 0.1
        %v4343 = vmul.f32 %v4209, 0.1
        %v4344 = vmul.f32 %v4212, 0.1
        %v4345 = vmul.f32 %v4217, 0.1
        %v4346 = vmul.f32 %v4220, 0.1
        %v4347 = vmul.f32 %v4225, 0.1
        %v4348 = vmul.f32 %v4228, 0.1
        %v4349 = vmul.f32 %v4233, 0.1
        %v4350 = vmul.f32 %v4236, 0.1
        %v4351 = vmul.f32 %v4241, 0.1
        %v4352 = vmul.f32 %v4244, 0.1
        %v4353 = vmul.f32 %v4249, 0.1
        %v4354 = vmul.f32 %v4252, 0.1
        %v4355 = vmul.f32 %v4257, 0.1
        %v4356 = vmul.f32 %v4260, 0.1
        %v4357 = vmul.f32 %v4265, 0.1
        %v4358 = vmul.f32 %v4268, 0.1
        %v4359 = vmul.f32 %v4273, 0.1
        %v4360 = vmul.f32 %v4276, 0.1
        %v4361 = vmul.f32 %v4281, 0.1
        %v4362 = vmul.f32 %v4284, 0.1
        %v4363 = vmul.f32 %v4289, 0.1
        %v4364 = vmul.f32 %v4292, 0.1
        %v4365 = vmul.f32 %v4297, 0.1
        %v4366 = vmul.f32 %v4300, 0.1
        %v4367 = vsel %vm4303, %v4177, %v4335
        %v4368 = vsel %vm4304, %v4180, %v4336
        %v4369 = vsel %vm4305, %v4185, %v4337
        %v4370 = vsel %vm4306, %v4188, %v4338
        %v4371 = vsel %vm4307, %v4193, %v4339
        %v4372 = vsel %vm4308, %v4196, %v4340
        %v4373 = vsel %vm4309, %v4201, %v4341
        %v4374 = vsel %vm4310, %v4204, %v4342
        %v4375 = vsel %vm4311, %v4209, %v4343
        %v4376 = vsel %vm4312, %v4212, %v4344
        %v4377 = vsel %vm4313, %v4217, %v4345
        %v4378 = vsel %vm4314, %v4220, %v4346
        %v4379 = vsel %vm4315, %v4225, %v4347
        %v4380 = vsel %vm4316, %v4228, %v4348
        %v4381 = vsel %vm4317, %v4233, %v4349
        %v4382 = vsel %vm4318, %v4236, %v4350
        %v4383 = vsel %vm4319, %v4241, %v4351
        %v4384 = vsel %vm4320, %v4244, %v4352
        %v4385 = vsel %vm4321, %v4249, %v4353
        %v4386 = vsel %vm4322, %v4252, %v4354
        %v4387 = vsel %vm4323, %v4257, %v4355
        %v4388 = vsel %vm4324, %v4260, %v4356
        %v4389 = vsel %vm4325, %v4265, %v4357
        %v4390 = vsel %vm4326, %v4268, %v4358
        %v4391 = vsel %vm4327, %v4273, %v4359
        %v4392 = vsel %vm4328, %v4276, %v4360
        %v4393 = vsel %vm4329, %v4281, %v4361
        %v4394 = vsel %vm4330, %v4284, %v4362
        %v4395 = vsel %vm4331, %v4289, %v4363
        %v4396 = vsel %vm4332, %v4292, %v4364
        %v4397 = vsel %vm4333, %v4297, %v4365
        %v4398 = vsel %vm4334, %v4300, %v4366
        %v4399 = vlaneseq
        %v4400 = vshrl.u32 %v4399, 7
        %v4401 = vsub.s32 1, %v4400
        %v4402 = vrot.slane %v4057, %v4401
        %v4403 = vmul.f32 %v4367, %v4402
        %v4404 = vmul.f32 %v4368, %v4402
        %v4405 = vmul.f32 %v4369, %v4402
        %v4406 = vmul.f32 %v4370, %v4402
        %v4407 = vmul.f32 %v4371, %v4402
        %v4408 = vmul.f32 %v4372, %v4402
        %v4409 = vmul.f32 %v4373, %v4402
        %v4410 = vmul.f32 %v4374, %v4402
        %v4411 = vmul.f32 %v4375, %v4402
        %v4412 = vmul.f32 %v4376, %v4402
        %v4413 = vmul.f32 %v4377, %v4402
        %v4414 = vmul.f32 %v4378, %v4402
        %v4415 = vmul.f32 %v4379, %v4402
        %v4416 = vmul.f32 %v4380, %v4402
        %v4417 = vmul.f32 %v4381, %v4402
        %v4418 = vmul.f32 %v4382, %v4402
        %v4419 = vmul.f32 %v4383, %v4402
        %v4420 = vmul.f32 %v4384, %v4402
        %v4421 = vmul.f32 %v4385, %v4402
        %v4422 = vmul.f32 %v4386, %v4402
        %v4423 = vmul.f32 %v4387, %v4402
        %v4424 = vmul.f32 %v4388, %v4402
        %v4425 = vmul.f32 %v4389, %v4402
        %v4426 = vmul.f32 %v4390, %v4402
        %v4427 = vmul.f32 %v4391, %v4402
        %v4428 = vmul.f32 %v4392, %v4402
        %v4429 = vmul.f32 %v4393, %v4402
        %v4430 = vmul.f32 %v4394, %v4402
        %v4431 = vmul.f32 %v4395, %v4402
        %v4432 = vmul.f32 %v4396, %v4402
        %v4433 = vmul.f32 %v4397, %v4402
        %v4434 = vmul.f32 %v4398, %v4402
        %v4435 = vlaneseq
        %v4436 = vshrl.u32 %v4435, 7
        %v4437 = vsub.s32 2, %v4436
        %v4438 = vrot.slane %v4057, %v4437
        %v4439 = vadd.f32 %v4403, %v4438
        %v4440 = vadd.f32 %v4404, %v4438
        %v4441 = vadd.f32 %v4405, %v4438
        %v4442 = vadd.f32 %v4406, %v4438
        %v4443 = vadd.f32 %v4407, %v4438
        %v4444 = vadd.f32 %v4408, %v4438
        %v4445 = vadd.f32 %v4409, %v4438
        %v4446 = vadd.f32 %v4410, %v4438
        %v4447 = vadd.f32 %v4411, %v4438
        %v4448 = vadd.f32 %v4412, %v4438
        %v4449 = vadd.f32 %v4413, %v4438
        %v4450 = vadd.f32 %v4414, %v4438
        %v4451 = vadd.f32 %v4415, %v4438
        %v4452 = vadd.f32 %v4416, %v4438
        %v4453 = vadd.f32 %v4417, %v4438
        %v4454 = vadd.f32 %v4418, %v4438
        %v4455 = vadd.f32 %v4419, %v4438
        %v4456 = vadd.f32 %v4420, %v4438
        %v4457 = vadd.f32 %v4421, %v4438
        %v4458 = vadd.f32 %v4422, %v4438
        %v4459 = vadd.f32 %v4423, %v4438
        %v4460 = vadd.f32 %v4424, %v4438
        %v4461 = vadd.f32 %v4425, %v4438
        %v4462 = vadd.f32 %v4426, %v4438
        %v4463 = vadd.f32 %v4427, %v4438
        %v4464 = vadd.f32 %v4428, %v4438
        %v4465 = vadd.f32 %v4429, %v4438
        %v4466 = vadd.f32 %v4430, %v4438
        %v4467 = vadd.f32 %v4431, %v4438
        %v4468 = vadd.f32 %v4432, %v4438
        %v4469 = vadd.f32 %v4433, %v4438
        %v4470 = vadd.f32 %v4434, %v4438
        %v4471 = vsel %vm2381, %v4439, -inf
        %v4472 = vsel %vm2381, %v4441, -inf
        %v4473 = vmax.f32 %v4471, %v4472
        %v4474 = vsel %vm2381, %v4440, -inf
        %v4475 = vsel %vm2381, %v4442, -inf
        %v4476 = vmax.f32 %v4474, %v4475
        %v4477 = vsel %vm2381, %v4443, -inf
        %v4478 = vsel %vm2381, %v4445, -inf
        %v4479 = vmax.f32 %v4477, %v4478
        %v4480 = vsel %vm2381, %v4444, -inf
        %v4481 = vsel %vm2381, %v4446, -inf
        %v4482 = vmax.f32 %v4480, %v4481
        %v4483 = vsel %vm2381, %v4447, -inf
        %v4484 = vsel %vm2381, %v4449, -inf
        %v4485 = vmax.f32 %v4483, %v4484
        %v4486 = vsel %vm2381, %v4448, -inf
        %v4487 = vsel %vm2381, %v4450, -inf
        %v4488 = vmax.f32 %v4486, %v4487
        %v4489 = vsel %vm2381, %v4451, -inf
        %v4490 = vsel %vm2381, %v4453, -inf
        %v4491 = vmax.f32 %v4489, %v4490
        %v4492 = vsel %vm2381, %v4452, -inf
        %v4493 = vsel %vm2381, %v4454, -inf
        %v4494 = vmax.f32 %v4492, %v4493
        %v4495 = vsel %vm2381, %v4455, -inf
        %v4496 = vsel %vm2381, %v4457, -inf
        %v4497 = vmax.f32 %v4495, %v4496
        %v4498 = vsel %vm2381, %v4456, -inf
        %v4499 = vsel %vm2381, %v4458, -inf
        %v4500 = vmax.f32 %v4498, %v4499
        %v4501 = vsel %vm2381, %v4459, -inf
        %v4502 = vsel %vm2381, %v4461, -inf
        %v4503 = vmax.f32 %v4501, %v4502
        %v4504 = vsel %vm2381, %v4460, -inf
        %v4505 = vsel %vm2381, %v4462, -inf
        %v4506 = vmax.f32 %v4504, %v4505
        %v4507 = vsel %vm2381, %v4463, -inf
        %v4508 = vsel %vm2381, %v4465, -inf
        %v4509 = vmax.f32 %v4507, %v4508
        %v4510 = vsel %vm2381, %v4464, -inf
        %v4511 = vsel %vm2381, %v4466, -inf
        %v4512 = vmax.f32 %v4510, %v4511
        %v4513 = vsel %vm2381, %v4467, -inf
        %v4514 = vsel %vm2381, %v4469, -inf
        %v4515 = vmax.f32 %v4513, %v4514
        %v4516 = vsel %vm2381, %v4468, -inf
        %v4517 = vsel %vm2381, %v4470, -inf
        %v4518 = vmax.f32 %v4516, %v4517
        %v4535 = vcombine.high %v4473, %v4473
        %v4537 = vunpack.c.l.s4 1983009808
        %v4538 = vunpack.c.0.s8 %v4537
        %v4539 = vlaneseq
        %v4540 = vshrl.u32 %v4539, 7
        %v4541 = vsub.s32 %v4538, %v4540
        %v4542 = vrot.slane %v4473, %v4541
        %v4544 = vunpack.c.l.s4 1983009808
        %v4545 = vunpack.c.0.s8 %v4544
        %v4546 = vlaneseq
        %v4547 = vshrl.u32 %v4546, 7
        %v4548 = vsub.s32 %v4545, %v4547
        %v4549 = vrot.slane %v4535, %v4548
        %v4550 = vcombine.high %v4542, %v4542
        %v4551 = vcombine.high %v4549, %v4549
        %v4552 = vcombine.high %v4476, %v4476
        %v4554 = vunpack.c.l.s4 1983009808
        %v4555 = vunpack.c.0.s8 %v4554
        %v4556 = vlaneseq
        %v4557 = vshrl.u32 %v4556, 7
        %v4558 = vsub.s32 %v4555, %v4557
        %v4559 = vrot.slane %v4476, %v4558
        %v4561 = vunpack.c.l.s4 1983009808
        %v4562 = vunpack.c.0.s8 %v4561
        %v4563 = vlaneseq
        %v4564 = vshrl.u32 %v4563, 7
        %v4565 = vsub.s32 %v4562, %v4564
        %v4566 = vrot.slane %v4552, %v4565
        %v4567 = vcombine.high %v4559, %v4559
        %v4568 = vcombine.high %v4566, %v4566
        %v4569 = vcombine.high %v4479, %v4479
        %v4571 = vunpack.c.l.s4 1983009808
        %v4572 = vunpack.c.0.s8 %v4571
        %v4573 = vlaneseq
        %v4574 = vshrl.u32 %v4573, 7
        %v4575 = vsub.s32 %v4572, %v4574
        %v4576 = vrot.slane %v4479, %v4575
        %v4578 = vunpack.c.l.s4 1983009808
        %v4579 = vunpack.c.0.s8 %v4578
        %v4580 = vlaneseq
        %v4581 = vshrl.u32 %v4580, 7
        %v4582 = vsub.s32 %v4579, %v4581
        %v4583 = vrot.slane %v4569, %v4582
        %v4584 = vcombine.high %v4576, %v4576
        %v4585 = vcombine.high %v4583, %v4583
        %v4586 = vcombine.high %v4482, %v4482
        %v4588 = vunpack.c.l.s4 1983009808
        %v4589 = vunpack.c.0.s8 %v4588
        %v4590 = vlaneseq
        %v4591 = vshrl.u32 %v4590, 7
        %v4592 = vsub.s32 %v4589, %v4591
        %v4593 = vrot.slane %v4482, %v4592
        %v4595 = vunpack.c.l.s4 1983009808
        %v4596 = vunpack.c.0.s8 %v4595
        %v4597 = vlaneseq
        %v4598 = vshrl.u32 %v4597, 7
        %v4599 = vsub.s32 %v4596, %v4598
        %v4600 = vrot.slane %v4586, %v4599
        %v4601 = vcombine.high %v4593, %v4593
        %v4602 = vcombine.high %v4600, %v4600
        %v4603 = vcombine.high %v4485, %v4485
        %v4605 = vunpack.c.l.s4 1983009808
        %v4606 = vunpack.c.0.s8 %v4605
        %v4607 = vlaneseq
        %v4608 = vshrl.u32 %v4607, 7
        %v4609 = vsub.s32 %v4606, %v4608
        %v4610 = vrot.slane %v4485, %v4609
        %v4612 = vunpack.c.l.s4 1983009808
        %v4613 = vunpack.c.0.s8 %v4612
        %v4614 = vlaneseq
        %v4615 = vshrl.u32 %v4614, 7
        %v4616 = vsub.s32 %v4613, %v4615
        %v4617 = vrot.slane %v4603, %v4616
        %v4618 = vcombine.high %v4610, %v4610
        %v4619 = vcombine.high %v4617, %v4617
        %v4620 = vcombine.high %v4488, %v4488
        %v4622 = vunpack.c.l.s4 1983009808
        %v4623 = vunpack.c.0.s8 %v4622
        %v4624 = vlaneseq
        %v4625 = vshrl.u32 %v4624, 7
        %v4626 = vsub.s32 %v4623, %v4625
        %v4627 = vrot.slane %v4488, %v4626
        %v4629 = vunpack.c.l.s4 1983009808
        %v4630 = vunpack.c.0.s8 %v4629
        %v4631 = vlaneseq
        %v4632 = vshrl.u32 %v4631, 7
        %v4633 = vsub.s32 %v4630, %v4632
        %v4634 = vrot.slane %v4620, %v4633
        %v4635 = vcombine.high %v4627, %v4627
        %v4636 = vcombine.high %v4634, %v4634
        %v4637 = vcombine.high %v4491, %v4491
        %v4639 = vunpack.c.l.s4 1983009808
        %v4640 = vunpack.c.0.s8 %v4639
        %v4641 = vlaneseq
        %v4642 = vshrl.u32 %v4641, 7
        %v4643 = vsub.s32 %v4640, %v4642
        %v4644 = vrot.slane %v4491, %v4643
        %v4646 = vunpack.c.l.s4 1983009808
        %v4647 = vunpack.c.0.s8 %v4646
        %v4648 = vlaneseq
        %v4649 = vshrl.u32 %v4648, 7
        %v4650 = vsub.s32 %v4647, %v4649
        %v4651 = vrot.slane %v4637, %v4650
        %v4652 = vcombine.high %v4644, %v4644
        %v4653 = vcombine.high %v4651, %v4651
        %v4654 = vcombine.high %v4494, %v4494
        %v4656 = vunpack.c.l.s4 1983009808
        %v4657 = vunpack.c.0.s8 %v4656
        %v4658 = vlaneseq
        %v4659 = vshrl.u32 %v4658, 7
        %v4660 = vsub.s32 %v4657, %v4659
        %v4661 = vrot.slane %v4494, %v4660
        %v4663 = vunpack.c.l.s4 1983009808
        %v4664 = vunpack.c.0.s8 %v4663
        %v4665 = vlaneseq
        %v4666 = vshrl.u32 %v4665, 7
        %v4667 = vsub.s32 %v4664, %v4666
        %v4668 = vrot.slane %v4654, %v4667
        %v4669 = vcombine.high %v4661, %v4661
        %v4670 = vcombine.high %v4668, %v4668
        %v4671 = vcombine.high %v4497, %v4497
        %v4673 = vunpack.c.l.s4 1983009808
        %v4674 = vunpack.c.0.s8 %v4673
        %v4675 = vlaneseq
        %v4676 = vshrl.u32 %v4675, 7
        %v4677 = vsub.s32 %v4674, %v4676
        %v4678 = vrot.slane %v4497, %v4677
        %v4680 = vunpack.c.l.s4 1983009808
        %v4681 = vunpack.c.0.s8 %v4680
        %v4682 = vlaneseq
        %v4683 = vshrl.u32 %v4682, 7
        %v4684 = vsub.s32 %v4681, %v4683
        %v4685 = vrot.slane %v4671, %v4684
        %v4686 = vcombine.high %v4678, %v4678
        %v4687 = vcombine.high %v4685, %v4685
        %v4688 = vcombine.high %v4500, %v4500
        %v4690 = vunpack.c.l.s4 1983009808
        %v4691 = vunpack.c.0.s8 %v4690
        %v4692 = vlaneseq
        %v4693 = vshrl.u32 %v4692, 7
        %v4694 = vsub.s32 %v4691, %v4693
        %v4695 = vrot.slane %v4500, %v4694
        %v4697 = vunpack.c.l.s4 1983009808
        %v4698 = vunpack.c.0.s8 %v4697
        %v4699 = vlaneseq
        %v4700 = vshrl.u32 %v4699, 7
        %v4701 = vsub.s32 %v4698, %v4700
        %v4702 = vrot.slane %v4688, %v4701
        %v4703 = vcombine.high %v4695, %v4695
        %v4704 = vcombine.high %v4702, %v4702
        %v4705 = vcombine.high %v4503, %v4503
        %v4707 = vunpack.c.l.s4 1983009808
        %v4708 = vunpack.c.0.s8 %v4707
        %v4709 = vlaneseq
        %v4710 = vshrl.u32 %v4709, 7
        %v4711 = vsub.s32 %v4708, %v4710
        %v4712 = vrot.slane %v4503, %v4711
        %v4714 = vunpack.c.l.s4 1983009808
        %v4715 = vunpack.c.0.s8 %v4714
        %v4716 = vlaneseq
        %v4717 = vshrl.u32 %v4716, 7
        %v4718 = vsub.s32 %v4715, %v4717
        %v4719 = vrot.slane %v4705, %v4718
        %v4720 = vcombine.high %v4712, %v4712
        %v4721 = vcombine.high %v4719, %v4719
        %v4722 = vcombine.high %v4506, %v4506
        %v4724 = vunpack.c.l.s4 1983009808
        %v4725 = vunpack.c.0.s8 %v4724
        %v4726 = vlaneseq
        %v4727 = vshrl.u32 %v4726, 7
        %v4728 = vsub.s32 %v4725, %v4727
        %v4729 = vrot.slane %v4506, %v4728
        %v4731 = vunpack.c.l.s4 1983009808
        %v4732 = vunpack.c.0.s8 %v4731
        %v4733 = vlaneseq
        %v4734 = vshrl.u32 %v4733, 7
        %v4735 = vsub.s32 %v4732, %v4734
        %v4736 = vrot.slane %v4722, %v4735
        %v4737 = vcombine.high %v4729, %v4729
        %v4738 = vcombine.high %v4736, %v4736
        %v4739 = vcombine.high %v4509, %v4509
        %v4741 = vunpack.c.l.s4 1983009808
        %v4742 = vunpack.c.0.s8 %v4741
        %v4743 = vlaneseq
        %v4744 = vshrl.u32 %v4743, 7
        %v4745 = vsub.s32 %v4742, %v4744
        %v4746 = vrot.slane %v4509, %v4745
        %v4748 = vunpack.c.l.s4 1983009808
        %v4749 = vunpack.c.0.s8 %v4748
        %v4750 = vlaneseq
        %v4751 = vshrl.u32 %v4750, 7
        %v4752 = vsub.s32 %v4749, %v4751
        %v4753 = vrot.slane %v4739, %v4752
        %v4754 = vcombine.high %v4746, %v4746
        %v4755 = vcombine.high %v4753, %v4753
        %v4756 = vcombine.high %v4512, %v4512
        %v4758 = vunpack.c.l.s4 1983009808
        %v4759 = vunpack.c.0.s8 %v4758
        %v4760 = vlaneseq
        %v4761 = vshrl.u32 %v4760, 7
        %v4762 = vsub.s32 %v4759, %v4761
        %v4763 = vrot.slane %v4512, %v4762
        %v4765 = vunpack.c.l.s4 1983009808
        %v4766 = vunpack.c.0.s8 %v4765
        %v4767 = vlaneseq
        %v4768 = vshrl.u32 %v4767, 7
        %v4769 = vsub.s32 %v4766, %v4768
        %v4770 = vrot.slane %v4756, %v4769
        %v4771 = vcombine.high %v4763, %v4763
        %v4772 = vcombine.high %v4770, %v4770
        %v4773 = vcombine.high %v4515, %v4515
        %v4775 = vunpack.c.l.s4 1983009808
        %v4776 = vunpack.c.0.s8 %v4775
        %v4777 = vlaneseq
        %v4778 = vshrl.u32 %v4777, 7
        %v4779 = vsub.s32 %v4776, %v4778
        %v4780 = vrot.slane %v4515, %v4779
        %v4782 = vunpack.c.l.s4 1983009808
        %v4783 = vunpack.c.0.s8 %v4782
        %v4784 = vlaneseq
        %v4785 = vshrl.u32 %v4784, 7
        %v4786 = vsub.s32 %v4783, %v4785
        %v4787 = vrot.slane %v4773, %v4786
        %v4788 = vcombine.high %v4780, %v4780
        %v4789 = vcombine.high %v4787, %v4787
        %v4790 = vcombine.high %v4518, %v4518
        %v4792 = vunpack.c.l.s4 1983009808
        %v4793 = vunpack.c.0.s8 %v4792
        %v4794 = vlaneseq
        %v4795 = vshrl.u32 %v4794, 7
        %v4796 = vsub.s32 %v4793, %v4795
        %v4797 = vrot.slane %v4518, %v4796
        %v4799 = vunpack.c.l.s4 1983009808
        %v4800 = vunpack.c.0.s8 %v4799
        %v4801 = vlaneseq
        %v4802 = vshrl.u32 %v4801, 7
        %v4803 = vsub.s32 %v4800, %v4802
        %v4804 = vrot.slane %v4790, %v4803
        %v4805 = vcombine.high %v4797, %v4797
        %v4806 = vcombine.high %v4804, %v4804
        %v4871 = vsel %vm2384, %v4542, -inf
        %v4872 = vrot.slane %v4871, 4
        %v4873 = vmax.f32 %v4871, %v4872
        %v4874 = vrot.slane %v4873, 2
        %v4875 = vmax.f32 %v4873, %v4874
        %v4876 = vrot.slane %v4875, 1
        %v4877 = vmax.f32 %v4875, %v4876
        %v4878 = vsel %vm2384, %v4550, -inf
        %v4879 = vrot.slane %v4878, 4
        %v4880 = vmax.f32 %v4878, %v4879
        %v4881 = vrot.slane %v4880, 2
        %v4882 = vmax.f32 %v4880, %v4881
        %v4883 = vrot.slane %v4882, 1
        %v4884 = vmax.f32 %v4882, %v4883
        %v4885 = vsel %vm2384, %v4549, -inf
        %v4886 = vrot.slane %v4885, 4
        %v4887 = vmax.f32 %v4885, %v4886
        %v4888 = vrot.slane %v4887, 2
        %v4889 = vmax.f32 %v4887, %v4888
        %v4890 = vrot.slane %v4889, 1
        %v4891 = vmax.f32 %v4889, %v4890
        %v4892 = vsel %vm2384, %v4551, -inf
        %v4893 = vrot.slane %v4892, 4
        %v4894 = vmax.f32 %v4892, %v4893
        %v4895 = vrot.slane %v4894, 2
        %v4896 = vmax.f32 %v4894, %v4895
        %v4897 = vrot.slane %v4896, 1
        %v4898 = vmax.f32 %v4896, %v4897
        %v4899 = vsel %vm2384, %v4559, -inf
        %v4900 = vrot.slane %v4899, 4
        %v4901 = vmax.f32 %v4899, %v4900
        %v4902 = vrot.slane %v4901, 2
        %v4903 = vmax.f32 %v4901, %v4902
        %v4904 = vrot.slane %v4903, 1
        %v4905 = vmax.f32 %v4903, %v4904
        %v4906 = vsel %vm2384, %v4567, -inf
        %v4907 = vrot.slane %v4906, 4
        %v4908 = vmax.f32 %v4906, %v4907
        %v4909 = vrot.slane %v4908, 2
        %v4910 = vmax.f32 %v4908, %v4909
        %v4911 = vrot.slane %v4910, 1
        %v4912 = vmax.f32 %v4910, %v4911
        %v4913 = vsel %vm2384, %v4566, -inf
        %v4914 = vrot.slane %v4913, 4
        %v4915 = vmax.f32 %v4913, %v4914
        %v4916 = vrot.slane %v4915, 2
        %v4917 = vmax.f32 %v4915, %v4916
        %v4918 = vrot.slane %v4917, 1
        %v4919 = vmax.f32 %v4917, %v4918
        %v4920 = vsel %vm2384, %v4568, -inf
        %v4921 = vrot.slane %v4920, 4
        %v4922 = vmax.f32 %v4920, %v4921
        %v4923 = vrot.slane %v4922, 2
        %v4924 = vmax.f32 %v4922, %v4923
        %v4925 = vrot.slane %v4924, 1
        %v4926 = vmax.f32 %v4924, %v4925
        %v4927 = vsel %vm2384, %v4576, -inf
        %v4928 = vrot.slane %v4927, 4
        %v4929 = vmax.f32 %v4927, %v4928
        %v4930 = vrot.slane %v4929, 2
        %v4931 = vmax.f32 %v4929, %v4930
        %v4932 = vrot.slane %v4931, 1
        %v4933 = vmax.f32 %v4931, %v4932
        %v4934 = vsel %vm2384, %v4584, -inf
        %v4935 = vrot.slane %v4934, 4
        %v4936 = vmax.f32 %v4934, %v4935
        %v4937 = vrot.slane %v4936, 2
        %v4938 = vmax.f32 %v4936, %v4937
        %v4939 = vrot.slane %v4938, 1
        %v4940 = vmax.f32 %v4938, %v4939
        %v4941 = vsel %vm2384, %v4583, -inf
        %v4942 = vrot.slane %v4941, 4
        %v4943 = vmax.f32 %v4941, %v4942
        %v4944 = vrot.slane %v4943, 2
        %v4945 = vmax.f32 %v4943, %v4944
        %v4946 = vrot.slane %v4945, 1
        %v4947 = vmax.f32 %v4945, %v4946
        %v4948 = vsel %vm2384, %v4585, -inf
        %v4949 = vrot.slane %v4948, 4
        %v4950 = vmax.f32 %v4948, %v4949
        %v4951 = vrot.slane %v4950, 2
        %v4952 = vmax.f32 %v4950, %v4951
        %v4953 = vrot.slane %v4952, 1
        %v4954 = vmax.f32 %v4952, %v4953
        %v4955 = vsel %vm2384, %v4593, -inf
        %v4956 = vrot.slane %v4955, 4
        %v4957 = vmax.f32 %v4955, %v4956
        %v4958 = vrot.slane %v4957, 2
        %v4959 = vmax.f32 %v4957, %v4958
        %v4960 = vrot.slane %v4959, 1
        %v4961 = vmax.f32 %v4959, %v4960
        %v4962 = vsel %vm2384, %v4601, -inf
        %v4963 = vrot.slane %v4962, 4
        %v4964 = vmax.f32 %v4962, %v4963
        %v4965 = vrot.slane %v4964, 2
        %v4966 = vmax.f32 %v4964, %v4965
        %v4967 = vrot.slane %v4966, 1
        %v4968 = vmax.f32 %v4966, %v4967
        %v4969 = vsel %vm2384, %v4600, -inf
        %v4970 = vrot.slane %v4969, 4
        %v4971 = vmax.f32 %v4969, %v4970
        %v4972 = vrot.slane %v4971, 2
        %v4973 = vmax.f32 %v4971, %v4972
        %v4974 = vrot.slane %v4973, 1
        %v4975 = vmax.f32 %v4973, %v4974
        %v4976 = vsel %vm2384, %v4602, -inf
        %v4977 = vrot.slane %v4976, 4
        %v4978 = vmax.f32 %v4976, %v4977
        %v4979 = vrot.slane %v4978, 2
        %v4980 = vmax.f32 %v4978, %v4979
        %v4981 = vrot.slane %v4980, 1
        %v4982 = vmax.f32 %v4980, %v4981
        %v4983 = vsel %vm2384, %v4610, -inf
        %v4984 = vrot.slane %v4983, 4
        %v4985 = vmax.f32 %v4983, %v4984
        %v4986 = vrot.slane %v4985, 2
        %v4987 = vmax.f32 %v4985, %v4986
        %v4988 = vrot.slane %v4987, 1
        %v4989 = vmax.f32 %v4987, %v4988
        %v4990 = vsel %vm2384, %v4618, -inf
        %v4991 = vrot.slane %v4990, 4
        %v4992 = vmax.f32 %v4990, %v4991
        %v4993 = vrot.slane %v4992, 2
        %v4994 = vmax.f32 %v4992, %v4993
        %v4995 = vrot.slane %v4994, 1
        %v4996 = vmax.f32 %v4994, %v4995
        %v4997 = vsel %vm2384, %v4617, -inf
        %v4998 = vrot.slane %v4997, 4
        %v4999 = vmax.f32 %v4997, %v4998
        %v5000 = vrot.slane %v4999, 2
        %v5001 = vmax.f32 %v4999, %v5000
        %v5002 = vrot.slane %v5001, 1
        %v5003 = vmax.f32 %v5001, %v5002
        %v5004 = vsel %vm2384, %v4619, -inf
        %v5005 = vrot.slane %v5004, 4
        %v5006 = vmax.f32 %v5004, %v5005
        %v5007 = vrot.slane %v5006, 2
        %v5008 = vmax.f32 %v5006, %v5007
        %v5009 = vrot.slane %v5008, 1
        %v5010 = vmax.f32 %v5008, %v5009
        %v5011 = vsel %vm2384, %v4627, -inf
        %v5012 = vrot.slane %v5011, 4
        %v5013 = vmax.f32 %v5011, %v5012
        %v5014 = vrot.slane %v5013, 2
        %v5015 = vmax.f32 %v5013, %v5014
        %v5016 = vrot.slane %v5015, 1
        %v5017 = vmax.f32 %v5015, %v5016
        %v5018 = vsel %vm2384, %v4635, -inf
        %v5019 = vrot.slane %v5018, 4
        %v5020 = vmax.f32 %v5018, %v5019
        %v5021 = vrot.slane %v5020, 2
        %v5022 = vmax.f32 %v5020, %v5021
        %v5023 = vrot.slane %v5022, 1
        %v5024 = vmax.f32 %v5022, %v5023
        %v5025 = vsel %vm2384, %v4634, -inf
        %v5026 = vrot.slane %v5025, 4
        %v5027 = vmax.f32 %v5025, %v5026
        %v5028 = vrot.slane %v5027, 2
        %v5029 = vmax.f32 %v5027, %v5028
        %v5030 = vrot.slane %v5029, 1
        %v5031 = vmax.f32 %v5029, %v5030
        %v5032 = vsel %vm2384, %v4636, -inf
        %v5033 = vrot.slane %v5032, 4
        %v5034 = vmax.f32 %v5032, %v5033
        %v5035 = vrot.slane %v5034, 2
        %v5036 = vmax.f32 %v5034, %v5035
        %v5037 = vrot.slane %v5036, 1
        %v5038 = vmax.f32 %v5036, %v5037
        %v5039 = vsel %vm2384, %v4644, -inf
        %v5040 = vrot.slane %v5039, 4
        %v5041 = vmax.f32 %v5039, %v5040
        %v5042 = vrot.slane %v5041, 2
        %v5043 = vmax.f32 %v5041, %v5042
        %v5044 = vrot.slane %v5043, 1
        %v5045 = vmax.f32 %v5043, %v5044
        %v5046 = vsel %vm2384, %v4652, -inf
        %v5047 = vrot.slane %v5046, 4
        %v5048 = vmax.f32 %v5046, %v5047
        %v5049 = vrot.slane %v5048, 2
        %v5050 = vmax.f32 %v5048, %v5049
        %v5051 = vrot.slane %v5050, 1
        %v5052 = vmax.f32 %v5050, %v5051
        %v5053 = vsel %vm2384, %v4651, -inf
        %v5054 = vrot.slane %v5053, 4
        %v5055 = vmax.f32 %v5053, %v5054
        %v5056 = vrot.slane %v5055, 2
        %v5057 = vmax.f32 %v5055, %v5056
        %v5058 = vrot.slane %v5057, 1
        %v5059 = vmax.f32 %v5057, %v5058
        %v5060 = vsel %vm2384, %v4653, -inf
        %v5061 = vrot.slane %v5060, 4
        %v5062 = vmax.f32 %v5060, %v5061
        %v5063 = vrot.slane %v5062, 2
        %v5064 = vmax.f32 %v5062, %v5063
        %v5065 = vrot.slane %v5064, 1
        %v5066 = vmax.f32 %v5064, %v5065
        %v5067 = vsel %vm2384, %v4661, -inf
        %v5068 = vrot.slane %v5067, 4
        %v5069 = vmax.f32 %v5067, %v5068
        %v5070 = vrot.slane %v5069, 2
        %v5071 = vmax.f32 %v5069, %v5070
        %v5072 = vrot.slane %v5071, 1
        %v5073 = vmax.f32 %v5071, %v5072
        %v5074 = vsel %vm2384, %v4669, -inf
        %v5075 = vrot.slane %v5074, 4
        %v5076 = vmax.f32 %v5074, %v5075
        %v5077 = vrot.slane %v5076, 2
        %v5078 = vmax.f32 %v5076, %v5077
        %v5079 = vrot.slane %v5078, 1
        %v5080 = vmax.f32 %v5078, %v5079
        %v5081 = vsel %vm2384, %v4668, -inf
        %v5082 = vrot.slane %v5081, 4
        %v5083 = vmax.f32 %v5081, %v5082
        %v5084 = vrot.slane %v5083, 2
        %v5085 = vmax.f32 %v5083, %v5084
        %v5086 = vrot.slane %v5085, 1
        %v5087 = vmax.f32 %v5085, %v5086
        %v5088 = vsel %vm2384, %v4670, -inf
        %v5089 = vrot.slane %v5088, 4
        %v5090 = vmax.f32 %v5088, %v5089
        %v5091 = vrot.slane %v5090, 2
        %v5092 = vmax.f32 %v5090, %v5091
        %v5093 = vrot.slane %v5092, 1
        %v5094 = vmax.f32 %v5092, %v5093
        %v5095 = vsel %vm2384, %v4678, -inf
        %v5096 = vrot.slane %v5095, 4
        %v5097 = vmax.f32 %v5095, %v5096
        %v5098 = vrot.slane %v5097, 2
        %v5099 = vmax.f32 %v5097, %v5098
        %v5100 = vrot.slane %v5099, 1
        %v5101 = vmax.f32 %v5099, %v5100
        %v5102 = vsel %vm2384, %v4686, -inf
        %v5103 = vrot.slane %v5102, 4
        %v5104 = vmax.f32 %v5102, %v5103
        %v5105 = vrot.slane %v5104, 2
        %v5106 = vmax.f32 %v5104, %v5105
        %v5107 = vrot.slane %v5106, 1
        %v5108 = vmax.f32 %v5106, %v5107
        %v5109 = vsel %vm2384, %v4685, -inf
        %v5110 = vrot.slane %v5109, 4
        %v5111 = vmax.f32 %v5109, %v5110
        %v5112 = vrot.slane %v5111, 2
        %v5113 = vmax.f32 %v5111, %v5112
        %v5114 = vrot.slane %v5113, 1
        %v5115 = vmax.f32 %v5113, %v5114
        %v5116 = vsel %vm2384, %v4687, -inf
        %v5117 = vrot.slane %v5116, 4
        %v5118 = vmax.f32 %v5116, %v5117
        %v5119 = vrot.slane %v5118, 2
        %v5120 = vmax.f32 %v5118, %v5119
        %v5121 = vrot.slane %v5120, 1
        %v5122 = vmax.f32 %v5120, %v5121
        %v5123 = vsel %vm2384, %v4695, -inf
        %v5124 = vrot.slane %v5123, 4
        %v5125 = vmax.f32 %v5123, %v5124
        %v5126 = vrot.slane %v5125, 2
        %v5127 = vmax.f32 %v5125, %v5126
        %v5128 = vrot.slane %v5127, 1
        %v5129 = vmax.f32 %v5127, %v5128
        %v5130 = vsel %vm2384, %v4703, -inf
        %v5131 = vrot.slane %v5130, 4
        %v5132 = vmax.f32 %v5130, %v5131
        %v5133 = vrot.slane %v5132, 2
        %v5134 = vmax.f32 %v5132, %v5133
        %v5135 = vrot.slane %v5134, 1
        %v5136 = vmax.f32 %v5134, %v5135
        %v5137 = vsel %vm2384, %v4702, -inf
        %v5138 = vrot.slane %v5137, 4
        %v5139 = vmax.f32 %v5137, %v5138
        %v5140 = vrot.slane %v5139, 2
        %v5141 = vmax.f32 %v5139, %v5140
        %v5142 = vrot.slane %v5141, 1
        %v5143 = vmax.f32 %v5141, %v5142
        %v5144 = vsel %vm2384, %v4704, -inf
        %v5145 = vrot.slane %v5144, 4
        %v5146 = vmax.f32 %v5144, %v5145
        %v5147 = vrot.slane %v5146, 2
        %v5148 = vmax.f32 %v5146, %v5147
        %v5149 = vrot.slane %v5148, 1
        %v5150 = vmax.f32 %v5148, %v5149
        %v5151 = vsel %vm2384, %v4712, -inf
        %v5152 = vrot.slane %v5151, 4
        %v5153 = vmax.f32 %v5151, %v5152
        %v5154 = vrot.slane %v5153, 2
        %v5155 = vmax.f32 %v5153, %v5154
        %v5156 = vrot.slane %v5155, 1
        %v5157 = vmax.f32 %v5155, %v5156
        %v5158 = vsel %vm2384, %v4720, -inf
        %v5159 = vrot.slane %v5158, 4
        %v5160 = vmax.f32 %v5158, %v5159
        %v5161 = vrot.slane %v5160, 2
        %v5162 = vmax.f32 %v5160, %v5161
        %v5163 = vrot.slane %v5162, 1
        %v5164 = vmax.f32 %v5162, %v5163
        %v5165 = vsel %vm2384, %v4719, -inf
        %v5166 = vrot.slane %v5165, 4
        %v5167 = vmax.f32 %v5165, %v5166
        %v5168 = vrot.slane %v5167, 2
        %v5169 = vmax.f32 %v5167, %v5168
        %v5170 = vrot.slane %v5169, 1
        %v5171 = vmax.f32 %v5169, %v5170
        %v5172 = vsel %vm2384, %v4721, -inf
        %v5173 = vrot.slane %v5172, 4
        %v5174 = vmax.f32 %v5172, %v5173
        %v5175 = vrot.slane %v5174, 2
        %v5176 = vmax.f32 %v5174, %v5175
        %v5177 = vrot.slane %v5176, 1
        %v5178 = vmax.f32 %v5176, %v5177
        %v5179 = vsel %vm2384, %v4729, -inf
        %v5180 = vrot.slane %v5179, 4
        %v5181 = vmax.f32 %v5179, %v5180
        %v5182 = vrot.slane %v5181, 2
        %v5183 = vmax.f32 %v5181, %v5182
        %v5184 = vrot.slane %v5183, 1
        %v5185 = vmax.f32 %v5183, %v5184
        %v5186 = vsel %vm2384, %v4737, -inf
        %v5187 = vrot.slane %v5186, 4
        %v5188 = vmax.f32 %v5186, %v5187
        %v5189 = vrot.slane %v5188, 2
        %v5190 = vmax.f32 %v5188, %v5189
        %v5191 = vrot.slane %v5190, 1
        %v5192 = vmax.f32 %v5190, %v5191
        %v5193 = vsel %vm2384, %v4736, -inf
        %v5194 = vrot.slane %v5193, 4
        %v5195 = vmax.f32 %v5193, %v5194
        %v5196 = vrot.slane %v5195, 2
        %v5197 = vmax.f32 %v5195, %v5196
        %v5198 = vrot.slane %v5197, 1
        %v5199 = vmax.f32 %v5197, %v5198
        %v5200 = vsel %vm2384, %v4738, -inf
        %v5201 = vrot.slane %v5200, 4
        %v5202 = vmax.f32 %v5200, %v5201
        %v5203 = vrot.slane %v5202, 2
        %v5204 = vmax.f32 %v5202, %v5203
        %v5205 = vrot.slane %v5204, 1
        %v5206 = vmax.f32 %v5204, %v5205
        %v5207 = vsel %vm2384, %v4746, -inf
        %v5208 = vrot.slane %v5207, 4
        %v5209 = vmax.f32 %v5207, %v5208
        %v5210 = vrot.slane %v5209, 2
        %v5211 = vmax.f32 %v5209, %v5210
        %v5212 = vrot.slane %v5211, 1
        %v5213 = vmax.f32 %v5211, %v5212
        %v5214 = vsel %vm2384, %v4754, -inf
        %v5215 = vrot.slane %v5214, 4
        %v5216 = vmax.f32 %v5214, %v5215
        %v5217 = vrot.slane %v5216, 2
        %v5218 = vmax.f32 %v5216, %v5217
        %v5219 = vrot.slane %v5218, 1
        %v5220 = vmax.f32 %v5218, %v5219
        %v5221 = vsel %vm2384, %v4753, -inf
        %v5222 = vrot.slane %v5221, 4
        %v5223 = vmax.f32 %v5221, %v5222
        %v5224 = vrot.slane %v5223, 2
        %v5225 = vmax.f32 %v5223, %v5224
        %v5226 = vrot.slane %v5225, 1
        %v5227 = vmax.f32 %v5225, %v5226
        %v5228 = vsel %vm2384, %v4755, -inf
        %v5229 = vrot.slane %v5228, 4
        %v5230 = vmax.f32 %v5228, %v5229
        %v5231 = vrot.slane %v5230, 2
        %v5232 = vmax.f32 %v5230, %v5231
        %v5233 = vrot.slane %v5232, 1
        %v5234 = vmax.f32 %v5232, %v5233
        %v5235 = vsel %vm2384, %v4763, -inf
        %v5236 = vrot.slane %v5235, 4
        %v5237 = vmax.f32 %v5235, %v5236
        %v5238 = vrot.slane %v5237, 2
        %v5239 = vmax.f32 %v5237, %v5238
        %v5240 = vrot.slane %v5239, 1
        %v5241 = vmax.f32 %v5239, %v5240
        %v5242 = vsel %vm2384, %v4771, -inf
        %v5243 = vrot.slane %v5242, 4
        %v5244 = vmax.f32 %v5242, %v5243
        %v5245 = vrot.slane %v5244, 2
        %v5246 = vmax.f32 %v5244, %v5245
        %v5247 = vrot.slane %v5246, 1
        %v5248 = vmax.f32 %v5246, %v5247
        %v5249 = vsel %vm2384, %v4770, -inf
        %v5250 = vrot.slane %v5249, 4
        %v5251 = vmax.f32 %v5249, %v5250
        %v5252 = vrot.slane %v5251, 2
        %v5253 = vmax.f32 %v5251, %v5252
        %v5254 = vrot.slane %v5253, 1
        %v5255 = vmax.f32 %v5253, %v5254
        %v5256 = vsel %vm2384, %v4772, -inf
        %v5257 = vrot.slane %v5256, 4
        %v5258 = vmax.f32 %v5256, %v5257
        %v5259 = vrot.slane %v5258, 2
        %v5260 = vmax.f32 %v5258, %v5259
        %v5261 = vrot.slane %v5260, 1
        %v5262 = vmax.f32 %v5260, %v5261
        %v5263 = vsel %vm2384, %v4780, -inf
        %v5264 = vrot.slane %v5263, 4
        %v5265 = vmax.f32 %v5263, %v5264
        %v5266 = vrot.slane %v5265, 2
        %v5267 = vmax.f32 %v5265, %v5266
        %v5268 = vrot.slane %v5267, 1
        %v5269 = vmax.f32 %v5267, %v5268
        %v5270 = vsel %vm2384, %v4788, -inf
        %v5271 = vrot.slane %v5270, 4
        %v5272 = vmax.f32 %v5270, %v5271
        %v5273 = vrot.slane %v5272, 2
        %v5274 = vmax.f32 %v5272, %v5273
        %v5275 = vrot.slane %v5274, 1
        %v5276 = vmax.f32 %v5274, %v5275
        %v5277 = vsel %vm2384, %v4787, -inf
        %v5278 = vrot.slane %v5277, 4
        %v5279 = vmax.f32 %v5277, %v5278
        %v5280 = vrot.slane %v5279, 2
        %v5281 = vmax.f32 %v5279, %v5280
        %v5282 = vrot.slane %v5281, 1
        %v5283 = vmax.f32 %v5281, %v5282
        %v5284 = vsel %vm2384, %v4789, -inf
        %v5285 = vrot.slane %v5284, 4
        %v5286 = vmax.f32 %v5284, %v5285
        %v5287 = vrot.slane %v5286, 2
        %v5288 = vmax.f32 %v5286, %v5287
        %v5289 = vrot.slane %v5288, 1
        %v5290 = vmax.f32 %v5288, %v5289
        %v5291 = vsel %vm2384, %v4797, -inf
        %v5292 = vrot.slane %v5291, 4
        %v5293 = vmax.f32 %v5291, %v5292
        %v5294 = vrot.slane %v5293, 2
        %v5295 = vmax.f32 %v5293, %v5294
        %v5296 = vrot.slane %v5295, 1
        %v5297 = vmax.f32 %v5295, %v5296
        %v5298 = vsel %vm2384, %v4805, -inf
        %v5299 = vrot.slane %v5298, 4
        %v5300 = vmax.f32 %v5298, %v5299
        %v5301 = vrot.slane %v5300, 2
        %v5302 = vmax.f32 %v5300, %v5301
        %v5303 = vrot.slane %v5302, 1
        %v5304 = vmax.f32 %v5302, %v5303
        %v5305 = vsel %vm2384, %v4804, -inf
        %v5306 = vrot.slane %v5305, 4
        %v5307 = vmax.f32 %v5305, %v5306
        %v5308 = vrot.slane %v5307, 2
        %v5309 = vmax.f32 %v5307, %v5308
        %v5310 = vrot.slane %v5309, 1
        %v5311 = vmax.f32 %v5309, %v5310
        %v5312 = vsel %vm2384, %v4806, -inf
        %v5313 = vrot.slane %v5312, 4
        %v5314 = vmax.f32 %v5312, %v5313
        %v5315 = vrot.slane %v5314, 2
        %v5316 = vmax.f32 %v5314, %v5315
        %v5317 = vrot.slane %v5316, 1
        %v5318 = vmax.f32 %v5316, %v5317
        %5319 = vst.msk [vmem:[#allocation4] sm:$0xff] %vm2381, 0.0
        %5320 = vst.msk [vmem:[#allocation4 + $0x8] sm:$0x3] %vm2384, 0.0
        %s5321 = scalar_lea.vmem [#allocation4], 144
        %5322 = vst.msk [vmem:[%s5321] sm:$0xff] %vm2381, 0.0
        %5323 = vst.msk [vmem:[%s5321 + $0x8] sm:$0x3] %vm2384, 0.0
        %s5324 = scalar_lea.vmem [#allocation4], 16
        %5325 = vst.msk [vmem:[%s5324] sm:$0x1] %vm2391, 0.0
        %5326 = vst.msk [vmem:[%s5324 + $0x10] sm:$0x1] %vm2391, 0.0
        %5327 = vst.msk [vmem:[%s5324 + $0x20] sm:$0x1] %vm2391, 0.0
        %5328 = vst.msk [vmem:[%s5324 + $0x30] sm:$0x1] %vm2391, 0.0
        %5329 = vst.msk [vmem:[%s5324 + $0x40] sm:$0x1] %vm2391, 0.0
        %5330 = vst.msk [vmem:[%s5324 + $0x50] sm:$0x1] %vm2391, 0.0
        %5331 = vst.msk [vmem:[%s5324 + $0x60] sm:$0x1] %vm2391, 0.0
        %5332 = vst.msk [vmem:[%s5324 + $0x70] sm:$0x1] %vm2391, 0.0
        %5333 = vst.msk [vmem:[%s5324 + $0x9] sm:$0x1] %vm2391, 0.0
        %5334 = vst.msk [vmem:[%s5324 + $0x19] sm:$0x1] %vm2391, 0.0
        %5335 = vst.msk [vmem:[%s5324 + $0x29] sm:$0x1] %vm2391, 0.0
        %5336 = vst.msk [vmem:[%s5324 + $0x39] sm:$0x1] %vm2391, 0.0
        %5337 = vst.msk [vmem:[%s5324 + $0x49] sm:$0x1] %vm2391, 0.0
        %5338 = vst.msk [vmem:[%s5324 + $0x59] sm:$0x1] %vm2391, 0.0
        %5339 = vst.msk [vmem:[%s5324 + $0x69] sm:$0x1] %vm2391, 0.0
        %5340 = vst.msk [vmem:[%s5324 + $0x79] sm:$0x1] %vm2391, 0.0
        %vm5405 = vcmask 1041409
        %v5406 = vsel %vm5405, %v4884, %v4877
        %vm5407 = vcmask 1042434
        %v5408 = vsel %vm5407, %v4891, %v5406
        %vm5409 = vcmask 1043459
        %v5410 = vsel %vm5409, %v4898, %v5408
        %vm5411 = vcmask 1044484
        %v5412 = vsel %vm5411, %v4905, %v5410
        %vm5413 = vcmask 1045509
        %v5414 = vsel %vm5413, %v4912, %v5412
        %vm5415 = vcmask 1046534
        %v5416 = vsel %vm5415, %v4919, %v5414
        %vm5417 = vcmask 1047559
        %v5418 = vsel %vm5417, %v4926, %v5416
        %v5419 = vsel %vm5405, %v4940, %v4933
        %v5420 = vsel %vm5407, %v4947, %v5419
        %v5421 = vsel %vm5409, %v4954, %v5420
        %v5422 = vsel %vm5411, %v4961, %v5421
        %v5423 = vsel %vm5413, %v4968, %v5422
        %v5424 = vsel %vm5415, %v4975, %v5423
        %v5425 = vsel %vm5417, %v4982, %v5424
        %v5426 = vsel %vm5405, %v4996, %v4989
        %v5427 = vsel %vm5407, %v5003, %v5426
        %v5428 = vsel %vm5409, %v5010, %v5427
        %v5429 = vsel %vm5411, %v5017, %v5428
        %v5430 = vsel %vm5413, %v5024, %v5429
        %v5431 = vsel %vm5415, %v5031, %v5430
        %v5432 = vsel %vm5417, %v5038, %v5431
        %v5433 = vsel %vm5405, %v5052, %v5045
        %v5434 = vsel %vm5407, %v5059, %v5433
        %v5435 = vsel %vm5409, %v5066, %v5434
        %v5436 = vsel %vm5411, %v5073, %v5435
        %v5437 = vsel %vm5413, %v5080, %v5436
        %v5438 = vsel %vm5415, %v5087, %v5437
        %v5439 = vsel %vm5417, %v5094, %v5438
        %v5440 = vsel %vm5405, %v5108, %v5101
        %v5441 = vsel %vm5407, %v5115, %v5440
        %v5442 = vsel %vm5409, %v5122, %v5441
        %v5443 = vsel %vm5411, %v5129, %v5442
        %v5444 = vsel %vm5413, %v5136, %v5443
        %v5445 = vsel %vm5415, %v5143, %v5444
        %v5446 = vsel %vm5417, %v5150, %v5445
        %v5447 = vsel %vm5405, %v5164, %v5157
        %v5448 = vsel %vm5407, %v5171, %v5447
        %v5449 = vsel %vm5409, %v5178, %v5448
        %v5450 = vsel %vm5411, %v5185, %v5449
        %v5451 = vsel %vm5413, %v5192, %v5450
        %v5452 = vsel %vm5415, %v5199, %v5451
        %v5453 = vsel %vm5417, %v5206, %v5452
        %v5454 = vsel %vm5405, %v5220, %v5213
        %v5455 = vsel %vm5407, %v5227, %v5454
        %v5456 = vsel %vm5409, %v5234, %v5455
        %v5457 = vsel %vm5411, %v5241, %v5456
        %v5458 = vsel %vm5413, %v5248, %v5457
        %v5459 = vsel %vm5415, %v5255, %v5458
        %v5460 = vsel %vm5417, %v5262, %v5459
        %v5461 = vsel %vm5405, %v5276, %v5269
        %v5462 = vsel %vm5407, %v5283, %v5461
        %v5463 = vsel %vm5409, %v5290, %v5462
        %v5464 = vsel %vm5411, %v5297, %v5463
        %v5465 = vsel %vm5413, %v5304, %v5464
        %v5466 = vsel %vm5415, %v5311, %v5465
        %v5467 = vsel %vm5417, %v5318, %v5466
        %5476 = vst.msk [vmem:[%s5324 + $0x1] sm:$0xff] %vm2381, %v5418
        %5477 = vst.msk [vmem:[%s5324 + $0x11] sm:$0xff] %vm2381, %v5425
        %5478 = vst.msk [vmem:[%s5324 + $0x21] sm:$0xff] %vm2381, %v5432
        %5479 = vst.msk [vmem:[%s5324 + $0x31] sm:$0xff] %vm2381, %v5439
        %5480 = vst.msk [vmem:[%s5324 + $0x41] sm:$0xff] %vm2381, %v5446
        %5481 = vst.msk [vmem:[%s5324 + $0x51] sm:$0xff] %vm2381, %v5453
        %5482 = vst.msk [vmem:[%s5324 + $0x61] sm:$0xff] %vm2381, %v5460
        %5483 = vst.msk [vmem:[%s5324 + $0x71] sm:$0xff] %vm2381, %v5467
        %v5484 = vld [vmem:[#allocation4] sm:$0xff]
        %v5485 = vld [vmem:[#allocation4 + $0x10] sm:$0xff]
        %v5486 = vld [vmem:[#allocation4 + $0x20] sm:$0xff]
        %v5487 = vld [vmem:[#allocation4 + $0x30] sm:$0xff]
        %v5488 = vld [vmem:[#allocation4 + $0x40] sm:$0xff]
        %v5489 = vld [vmem:[#allocation4 + $0x50] sm:$0xff]
        %v5490 = vld [vmem:[#allocation4 + $0x60] sm:$0xff]
        %v5491 = vld [vmem:[#allocation4 + $0x70] sm:$0xff]
        %v5492 = vld [vmem:[#allocation4 + $0x1] sm:$0xff]
        %v5493 = vld [vmem:[#allocation4 + $0x11] sm:$0xff]
        %v5494 = vld [vmem:[#allocation4 + $0x21] sm:$0xff]
        %v5495 = vld [vmem:[#allocation4 + $0x31] sm:$0xff]
        %v5496 = vld [vmem:[#allocation4 + $0x41] sm:$0xff]
        %v5497 = vld [vmem:[#allocation4 + $0x51] sm:$0xff]
        %v5498 = vld [vmem:[#allocation4 + $0x61] sm:$0xff]
        %v5499 = vld [vmem:[#allocation4 + $0x71] sm:$0xff]
        %v5500 = vld [vmem:[#allocation4 + $0x2] sm:$0xff]
        %v5501 = vld [vmem:[#allocation4 + $0x12] sm:$0xff]
        %v5502 = vld [vmem:[#allocation4 + $0x22] sm:$0xff]
        %v5503 = vld [vmem:[#allocation4 + $0x32] sm:$0xff]
        %v5504 = vld [vmem:[#allocation4 + $0x42] sm:$0xff]
        %v5505 = vld [vmem:[#allocation4 + $0x52] sm:$0xff]
        %v5506 = vld [vmem:[#allocation4 + $0x62] sm:$0xff]
        %v5507 = vld [vmem:[#allocation4 + $0x72] sm:$0xff]
        %v5508 = vld [vmem:[%s5324] sm:$0xff]
        %v5509 = vld [vmem:[%s5324 + $0x10] sm:$0xff]
        %v5510 = vld [vmem:[%s5324 + $0x20] sm:$0xff]
        %v5511 = vld [vmem:[%s5324 + $0x30] sm:$0xff]
        %v5512 = vld [vmem:[%s5324 + $0x40] sm:$0xff]
        %v5513 = vld [vmem:[%s5324 + $0x50] sm:$0xff]
        %v5514 = vld [vmem:[%s5324 + $0x60] sm:$0xff]
        %v5515 = vld [vmem:[%s5324 + $0x70] sm:$0xff]
        %v5516 = vld [vmem:[%s5324 + $0x1] sm:$0xff]
        %v5517 = vld [vmem:[%s5324 + $0x11] sm:$0xff]
        %v5518 = vld [vmem:[%s5324 + $0x21] sm:$0xff]
        %v5519 = vld [vmem:[%s5324 + $0x31] sm:$0xff]
        %v5520 = vld [vmem:[%s5324 + $0x41] sm:$0xff]
        %v5521 = vld [vmem:[%s5324 + $0x51] sm:$0xff]
        %v5522 = vld [vmem:[%s5324 + $0x61] sm:$0xff]
        %v5523 = vld [vmem:[%s5324 + $0x71] sm:$0xff]
        %v5524 = vld [vmem:[%s5324 + $0x2] sm:$0xff]
        %v5525 = vld [vmem:[%s5324 + $0x12] sm:$0xff]
        %v5526 = vld [vmem:[%s5324 + $0x22] sm:$0xff]
        %v5527 = vld [vmem:[%s5324 + $0x32] sm:$0xff]
        %v5528 = vld [vmem:[%s5324 + $0x42] sm:$0xff]
        %v5529 = vld [vmem:[%s5324 + $0x52] sm:$0xff]
        %v5530 = vld [vmem:[%s5324 + $0x62] sm:$0xff]
        %v5531 = vld [vmem:[%s5324 + $0x72] sm:$0xff]
        %s5532 = scalar_lea.vmem [#allocation4], 32
        %v5533 = vld [vmem:[%s5532] sm:$0xff]
        %v5534 = vld [vmem:[%s5532 + $0x10] sm:$0xff]
        %v5535 = vld [vmem:[%s5532 + $0x20] sm:$0xff]
        %v5536 = vld [vmem:[%s5532 + $0x30] sm:$0xff]
        %v5537 = vld [vmem:[%s5532 + $0x40] sm:$0xff]
        %v5538 = vld [vmem:[%s5532 + $0x50] sm:$0xff]
        %v5539 = vld [vmem:[%s5532 + $0x60] sm:$0xff]
        %v5540 = vld [vmem:[%s5532 + $0x70] sm:$0xff]
        %v5541 = vld [vmem:[%s5532 + $0x1] sm:$0xff]
        %v5542 = vld [vmem:[%s5532 + $0x11] sm:$0xff]
        %v5543 = vld [vmem:[%s5532 + $0x21] sm:$0xff]
        %v5544 = vld [vmem:[%s5532 + $0x31] sm:$0xff]
        %v5545 = vld [vmem:[%s5532 + $0x41] sm:$0xff]
        %v5546 = vld [vmem:[%s5532 + $0x51] sm:$0xff]
        %v5547 = vld [vmem:[%s5532 + $0x61] sm:$0xff]
        %v5548 = vld [vmem:[%s5532 + $0x71] sm:$0xff]
        %v5549 = vld [vmem:[%s5532 + $0x2] sm:$0xff]
        %v5550 = vld [vmem:[%s5532 + $0x12] sm:$0xff]
        %v5551 = vld [vmem:[%s5532 + $0x22] sm:$0xff]
        %v5552 = vld [vmem:[%s5532 + $0x32] sm:$0xff]
        %v5553 = vld [vmem:[%s5532 + $0x42] sm:$0xff]
        %v5554 = vld [vmem:[%s5532 + $0x52] sm:$0xff]
        %v5555 = vld [vmem:[%s5532 + $0x62] sm:$0xff]
        %v5556 = vld [vmem:[%s5532 + $0x72] sm:$0xff]
        %5565 = vrot.lane.b32.xlu0 %v5492, 8
        %v5566 = vpop.permute.xlu0 %5565
        %5567 = vrot.lane.b32.xlu0 %v5493, 8
        %v5568 = vpop.permute.xlu0 %5567
        %5569 = vrot.lane.b32.xlu0 %v5494, 8
        %v5570 = vpop.permute.xlu0 %5569
        %5571 = vrot.lane.b32.xlu0 %v5495, 8
        %v5572 = vpop.permute.xlu0 %5571
        %5573 = vrot.lane.b32.xlu0 %v5496, 8
        %v5574 = vpop.permute.xlu0 %5573
        %5575 = vrot.lane.b32.xlu0 %v5497, 8
        %v5576 = vpop.permute.xlu0 %5575
        %5577 = vrot.lane.b32.xlu0 %v5498, 8
        %v5578 = vpop.permute.xlu0 %5577
        %5579 = vrot.lane.b32.xlu0 %v5499, 8
        %v5580 = vpop.permute.xlu0 %5579
        %5597 = vrot.lane.b32.xlu0 %v5500, 16
        %v5598 = vpop.permute.xlu0 %5597
        %5599 = vrot.lane.b32.xlu0 %v5501, 16
        %v5600 = vpop.permute.xlu0 %5599
        %5601 = vrot.lane.b32.xlu0 %v5502, 16
        %v5602 = vpop.permute.xlu0 %5601
        %5603 = vrot.lane.b32.xlu0 %v5503, 16
        %v5604 = vpop.permute.xlu0 %5603
        %5605 = vrot.lane.b32.xlu0 %v5504, 16
        %v5606 = vpop.permute.xlu0 %5605
        %5607 = vrot.lane.b32.xlu0 %v5505, 16
        %v5608 = vpop.permute.xlu0 %5607
        %5609 = vrot.lane.b32.xlu0 %v5506, 16
        %v5610 = vpop.permute.xlu0 %5609
        %5611 = vrot.lane.b32.xlu0 %v5507, 16
        %v5612 = vpop.permute.xlu0 %5611
        %5629 = vrot.lane.b32.xlu0 %v5508, 24
        %v5630 = vpop.permute.xlu0 %5629
        %5631 = vrot.lane.b32.xlu0 %v5509, 24
        %v5632 = vpop.permute.xlu0 %5631
        %5633 = vrot.lane.b32.xlu0 %v5510, 24
        %v5634 = vpop.permute.xlu0 %5633
        %5635 = vrot.lane.b32.xlu0 %v5511, 24
        %v5636 = vpop.permute.xlu0 %5635
        %5637 = vrot.lane.b32.xlu0 %v5512, 24
        %v5638 = vpop.permute.xlu0 %5637
        %5639 = vrot.lane.b32.xlu0 %v5513, 24
        %v5640 = vpop.permute.xlu0 %5639
        %5641 = vrot.lane.b32.xlu0 %v5514, 24
        %v5642 = vpop.permute.xlu0 %5641
        %5643 = vrot.lane.b32.xlu0 %v5515, 24
        %v5644 = vpop.permute.xlu0 %5643
        %5661 = vrot.lane.b32.xlu0 %v5516, 32
        %v5662 = vpop.permute.xlu0 %5661
        %5663 = vrot.lane.b32.xlu0 %v5517, 32
        %v5664 = vpop.permute.xlu0 %5663
        %5665 = vrot.lane.b32.xlu0 %v5518, 32
        %v5666 = vpop.permute.xlu0 %5665
        %5667 = vrot.lane.b32.xlu0 %v5519, 32
        %v5668 = vpop.permute.xlu0 %5667
        %5669 = vrot.lane.b32.xlu0 %v5520, 32
        %v5670 = vpop.permute.xlu0 %5669
        %5671 = vrot.lane.b32.xlu0 %v5521, 32
        %v5672 = vpop.permute.xlu0 %5671
        %5673 = vrot.lane.b32.xlu0 %v5522, 32
        %v5674 = vpop.permute.xlu0 %5673
        %5675 = vrot.lane.b32.xlu0 %v5523, 32
        %v5676 = vpop.permute.xlu0 %5675
        %5693 = vrot.lane.b32.xlu0 %v5524, 40
        %v5694 = vpop.permute.xlu0 %5693
        %5695 = vrot.lane.b32.xlu0 %v5525, 40
        %v5696 = vpop.permute.xlu0 %5695
        %5697 = vrot.lane.b32.xlu0 %v5526, 40
        %v5698 = vpop.permute.xlu0 %5697
        %5699 = vrot.lane.b32.xlu0 %v5527, 40
        %v5700 = vpop.permute.xlu0 %5699
        %5701 = vrot.lane.b32.xlu0 %v5528, 40
        %v5702 = vpop.permute.xlu0 %5701
        %5703 = vrot.lane.b32.xlu0 %v5529, 40
        %v5704 = vpop.permute.xlu0 %5703
        %5705 = vrot.lane.b32.xlu0 %v5530, 40
        %v5706 = vpop.permute.xlu0 %5705
        %5707 = vrot.lane.b32.xlu0 %v5531, 40
        %v5708 = vpop.permute.xlu0 %5707
        %5725 = vrot.lane.b32.xlu0 %v5533, 48
        %v5726 = vpop.permute.xlu0 %5725
        %5727 = vrot.lane.b32.xlu0 %v5534, 48
        %v5728 = vpop.permute.xlu0 %5727
        %5729 = vrot.lane.b32.xlu0 %v5535, 48
        %v5730 = vpop.permute.xlu0 %5729
        %5731 = vrot.lane.b32.xlu0 %v5536, 48
        %v5732 = vpop.permute.xlu0 %5731
        %5733 = vrot.lane.b32.xlu0 %v5537, 48
        %v5734 = vpop.permute.xlu0 %5733
        %5735 = vrot.lane.b32.xlu0 %v5538, 48
        %v5736 = vpop.permute.xlu0 %5735
        %5737 = vrot.lane.b32.xlu0 %v5539, 48
        %v5738 = vpop.permute.xlu0 %5737
        %5739 = vrot.lane.b32.xlu0 %v5540, 48
        %v5740 = vpop.permute.xlu0 %5739
        %5757 = vrot.lane.b32.xlu0 %v5541, 56
        %v5758 = vpop.permute.xlu0 %5757
        %5759 = vrot.lane.b32.xlu0 %v5542, 56
        %v5760 = vpop.permute.xlu0 %5759
        %5761 = vrot.lane.b32.xlu0 %v5543, 56
        %v5762 = vpop.permute.xlu0 %5761
        %5763 = vrot.lane.b32.xlu0 %v5544, 56
        %v5764 = vpop.permute.xlu0 %5763
        %5765 = vrot.lane.b32.xlu0 %v5545, 56
        %v5766 = vpop.permute.xlu0 %5765
        %5767 = vrot.lane.b32.xlu0 %v5546, 56
        %v5768 = vpop.permute.xlu0 %5767
        %5769 = vrot.lane.b32.xlu0 %v5547, 56
        %v5770 = vpop.permute.xlu0 %5769
        %5771 = vrot.lane.b32.xlu0 %v5548, 56
        %v5772 = vpop.permute.xlu0 %5771
        %5789 = vrot.lane.b32.xlu0 %v5549, 64
        %v5790 = vpop.permute.xlu0 %5789
        %5791 = vrot.lane.b32.xlu0 %v5550, 64
        %v5792 = vpop.permute.xlu0 %5791
        %5793 = vrot.lane.b32.xlu0 %v5551, 64
        %v5794 = vpop.permute.xlu0 %5793
        %5795 = vrot.lane.b32.xlu0 %v5552, 64
        %v5796 = vpop.permute.xlu0 %5795
        %5797 = vrot.lane.b32.xlu0 %v5553, 64
        %v5798 = vpop.permute.xlu0 %5797
        %5799 = vrot.lane.b32.xlu0 %v5554, 64
        %v5800 = vpop.permute.xlu0 %5799
        %5801 = vrot.lane.b32.xlu0 %v5555, 64
        %v5802 = vpop.permute.xlu0 %5801
        %5803 = vrot.lane.b32.xlu0 %v5556, 64
        %v5804 = vpop.permute.xlu0 %5803
        %v5813 = vsel %vm2381, %v5484, %v5566
        %v5814 = vsel %vm2381, %v5485, %v5568
        %v5815 = vsel %vm2381, %v5486, %v5570
        %v5816 = vsel %vm2381, %v5487, %v5572
        %v5817 = vsel %vm2381, %v5488, %v5574
        %v5818 = vsel %vm2381, %v5489, %v5576
        %v5819 = vsel %vm2381, %v5490, %v5578
        %v5820 = vsel %vm2381, %v5491, %v5580
        %v5821 = vsel %vm3801, %v5813, %v5598
        %v5822 = vsel %vm3801, %v5814, %v5600
        %v5823 = vsel %vm3801, %v5815, %v5602
        %v5824 = vsel %vm3801, %v5816, %v5604
        %v5825 = vsel %vm3801, %v5817, %v5606
        %v5826 = vsel %vm3801, %v5818, %v5608
        %v5827 = vsel %vm3801, %v5819, %v5610
        %v5828 = vsel %vm3801, %v5820, %v5612
        %v5829 = vsel %vm1927, %v5821, %v5630
        %v5830 = vsel %vm1927, %v5822, %v5632
        %v5831 = vsel %vm1927, %v5823, %v5634
        %v5832 = vsel %vm1927, %v5824, %v5636
        %v5833 = vsel %vm1927, %v5825, %v5638
        %v5834 = vsel %vm1927, %v5826, %v5640
        %v5835 = vsel %vm1927, %v5827, %v5642
        %v5836 = vsel %vm1927, %v5828, %v5644
        %v5837 = vsel %vm3866, %v5829, %v5662
        %v5838 = vsel %vm3866, %v5830, %v5664
        %v5839 = vsel %vm3866, %v5831, %v5666
        %v5840 = vsel %vm3866, %v5832, %v5668
        %v5841 = vsel %vm3866, %v5833, %v5670
        %v5842 = vsel %vm3866, %v5834, %v5672
        %v5843 = vsel %vm3866, %v5835, %v5674
        %v5844 = vsel %vm3866, %v5836, %v5676
        %v5845 = vsel %vm3899, %v5837, %v5694
        %v5846 = vsel %vm3899, %v5838, %v5696
        %v5847 = vsel %vm3899, %v5839, %v5698
        %v5848 = vsel %vm3899, %v5840, %v5700
        %v5849 = vsel %vm3899, %v5841, %v5702
        %v5850 = vsel %vm3899, %v5842, %v5704
        %v5851 = vsel %vm3899, %v5843, %v5706
        %v5852 = vsel %vm3899, %v5844, %v5708
        %v5853 = vsel %vm3932, %v5845, %v5726
        %v5854 = vsel %vm3932, %v5846, %v5728
        %v5855 = vsel %vm3932, %v5847, %v5730
        %v5856 = vsel %vm3932, %v5848, %v5732
        %v5857 = vsel %vm3932, %v5849, %v5734
        %v5858 = vsel %vm3932, %v5850, %v5736
        %v5859 = vsel %vm3932, %v5851, %v5738
        %v5860 = vsel %vm3932, %v5852, %v5740
        %v5861 = vsel %vm3965, %v5853, %v5758
        %v5862 = vsel %vm3965, %v5854, %v5760
        %v5863 = vsel %vm3965, %v5855, %v5762
        %v5864 = vsel %vm3965, %v5856, %v5764
        %v5865 = vsel %vm3965, %v5857, %v5766
        %v5866 = vsel %vm3965, %v5858, %v5768
        %v5867 = vsel %vm3965, %v5859, %v5770
        %v5868 = vsel %vm3965, %v5860, %v5772
        %v5869 = vsel %vm3998, %v5861, %v5790
        %v5870 = vsel %vm3998, %v5862, %v5792
        %v5871 = vsel %vm3998, %v5863, %v5794
        %v5872 = vsel %vm3998, %v5864, %v5796
        %v5873 = vsel %vm3998, %v5865, %v5798
        %v5874 = vsel %vm3998, %v5866, %v5800
        %v5875 = vsel %vm3998, %v5867, %v5802
        %v5876 = vsel %vm3998, %v5868, %v5804
        %v5877 = vld [vmem:[%s1 + $0x38] sm:$0xf]
        %v5878 = vld [vmem:[%s1 + $0x3c] sm:$0xf]
        %v5879 = vld [vmem:[%s1 + $0x40] sm:$0xf]
        %v5880 = vld [vmem:[%s1 + $0x44] sm:$0xf]
        %v5881 = vld [vmem:[%s1 + $0x48] sm:$0xf]
        %v5882 = vld [vmem:[%s1 + $0x4c] sm:$0xf]
        %v5883 = vld [vmem:[%s1 + $0x50] sm:$0xf]
        %v5884 = vld [vmem:[%s1 + $0x54] sm:$0xf]
        %v5885 = vld [vmem:[%s1 + $0x58] sm:$0xf]
        %v5886 = vpack.c.bf16 %v5870, %v5869
        %v5887 = vpack.c.bf16 %v5872, %v5871
        %v5888 = vpack.c.bf16 %v5874, %v5873
        %v5889 = vpack.c.bf16 %v5876, %v5875
        %s5890 = scalar_lea.vmem %s2, 8
        %v5891 = vld [vmem:[%s5890] sm:$0x7]
        %v5892 = vlaneseq
        %v5893 = vshrl.u32 %v5892, 7
        %v5894 = vsub.s32 0, %v5893
        %v5895 = vrot.slane %v5891, %v5894
        %v5905 = vunpack.c.l.b16 %v5877
        %v5906 = vunpack.c.l.b16 %v5878
        %v5907 = vunpack.c.l.b16 %v5879
        %v5908 = vunpack.c.l.b16 %v5880
        %v5909 = vunpack.c.l.b16 %v5881
        %v5910 = vunpack.c.l.b16 %v5882
        %v5911 = vunpack.c.l.b16 %v5883
        %v5912 = vunpack.c.l.b16 %v5884
        %v5913 = vunpack.c.l.b16 %v5885
        %v5914 = vpack.c.b16 %v5906, %v5905
        %v5915 = vpack.c.b16 %v5908, %v5907
        %v5916 = vpack.c.b16 %v5910, %v5909
        %v5917 = vpack.c.b16 %v5912, %v5911
        %v5918 = vpack.c.b16 %v5913, %v5913
        %v5924 = vsel %vm4089, %v5886, 0
        %v5927 = vsel %vm4089, %v5887, 0
        %v5930 = vsel %vm4089, %v5888, 0
        %v5933 = vsel %vm4089, %v5889, 0
        %v5936 = vsel %vm4138, %v5918, 0
        %5938 = vmatprep.subr.bf16.mxu0 0
        %5939 = vmatpush1.bf16.msra.mxu0 %v5914
        %5940 = vmatprep.subr.bf16.mxu0 0
        %5941 = vmatpush1.bf16.msra.mxu0 %v5915
        %5942 = vmatprep.subr.bf16.mxu0 0
        %5943 = vmatpush1.bf16.msra.mxu0 %v5916
        %5944 = vmatprep.subr.bf16.mxu0 0
        %5945 = vmatpush1.bf16.msra.mxu0 %v5917
        %5946 = vmatprep.subr.bf16.mxu0 0
        %5947 = vmatpush1.bf16.msra.mxu0 %v5936
        %5948 = vmatprep.subr.bf16.mxu0 0
        %5949 = vmatpush1.bf16.msra.mxu0 0
        %5950 = vmatprep.subr.bf16.mxu0 0
        %5951 = vmatpush1.bf16.msra.mxu0 0
        %5952 = vmatprep.subr.bf16.mxu0 0
        %5953 = vmatpush1.bf16.msra.mxu0 0
        %5954 = vmatprep.subr.bf16.mxu0 0
        %5955 = vmatpush1.bf16.msra.mxu0 0
        %5956 = vmatprep.subr.bf16.mxu0 0
        %5957 = vmatpush1.bf16.msra.mxu0 0
        %5958 = vmatprep.subr.bf16.mxu0 0
        %5959 = vmatpush1.bf16.msra.mxu0 0
        %5960 = vmatprep.subr.bf16.mxu0 0
        %5961 = vmatpush1.bf16.msra.mxu0 0
        %5962 = vmatprep.subr.bf16.mxu0 0
        %5963 = vmatpush1.bf16.msra.mxu0 0
        %5964 = vmatprep.subr.bf16.mxu0 0
        %5965 = vmatpush1.bf16.msra.mxu0 0
        %5966 = vmatprep.subr.bf16.mxu0 0
        %5967 = vmatpush1.bf16.msra.mxu0 0
        %5968 = vmatprep.subr.bf16.mxu0 0
        %5969 = vmatpush1.bf16.msra.mxu0 0
        %5970 = vmatprep.mubr.bf16.mxu0 0
        %5971 = vmatmul.mubr.bf16.gmra.mrb[0].mxu0 %v5924
        %v5972 = vpop.f32.mrb[0].mxu0
        %v5973 = vadd.f32 %v5895, %v5972
        %v5974 = vpop.f32.mrb[0].mxu0
        %v5975 = vpop.f32.mrb[0].mxu0
        %v5976 = vadd.f32 %v5895, %v5975
        %v5977 = vpop.f32.mrb[0].mxu0
        %5978 = vmatprep.mubr.bf16.mxu0 0
        %5979 = vmatmul.mubr.bf16.gmra.mrb[0].mxu0 %v5927
        %v5980 = vpop.f32.mrb[0].mxu0
        %v5981 = vadd.f32 %v5895, %v5980
        %v5982 = vpop.f32.mrb[0].mxu0
        %v5983 = vpop.f32.mrb[0].mxu0
        %v5984 = vadd.f32 %v5895, %v5983
        %v5985 = vpop.f32.mrb[0].mxu0
        %5986 = vmatprep.mubr.bf16.mxu0 0
        %5987 = vmatmul.mubr.bf16.gmra.mrb[0].mxu0 %v5930
        %v5988 = vpop.f32.mrb[0].mxu0
        %v5989 = vadd.f32 %v5895, %v5988
        %v5990 = vpop.f32.mrb[0].mxu0
        %v5991 = vpop.f32.mrb[0].mxu0
        %v5992 = vadd.f32 %v5895, %v5991
        %v5993 = vpop.f32.mrb[0].mxu0
        %5994 = vmatprep.mubr.bf16.mxu0 0
        %5995 = vmatmul.mubr.bf16.gmra.mrb[0].mxu0 %v5933
        %v5996 = vpop.f32.mrb[0].mxu0
        %v5997 = vadd.f32 %v5895, %v5996
        %v5998 = vpop.f32.mrb[0].mxu0
        %v5999 = vpop.f32.mrb[0].mxu0
        %v6000 = vadd.f32 %v5895, %v5999
        %v6001 = vpop.f32.mrb[0].mxu0
        %6002 = vdwg.mxu0
        %vm6003 = vcmp.gt.f32.partialorder %v5973, 0.0
        %vm6004 = vcmp.gt.f32.partialorder %v5976, 0.0
        %vm6005 = vcmp.gt.f32.partialorder %v5981, 0.0
        %vm6006 = vcmp.gt.f32.partialorder %v5984, 0.0
        %vm6007 = vcmp.gt.f32.partialorder %v5989, 0.0
        %vm6008 = vcmp.gt.f32.partialorder %v5992, 0.0
        %vm6009 = vcmp.gt.f32.partialorder %v5997, 0.0
        %vm6010 = vcmp.gt.f32.partialorder %v6000, 0.0
        %v6011 = vmul.f32 %v5973, 0.1
        %v6012 = vmul.f32 %v5976, 0.1
        %v6013 = vmul.f32 %v5981, 0.1
        %v6014 = vmul.f32 %v5984, 0.1
        %v6015 = vmul.f32 %v5989, 0.1
        %v6016 = vmul.f32 %v5992, 0.1
        %v6017 = vmul.f32 %v5997, 0.1
        %v6018 = vmul.f32 %v6000, 0.1
        %v6019 = vsel %vm6003, %v5973, %v6011
        %v6020 = vsel %vm6004, %v5976, %v6012
        %v6021 = vsel %vm6005, %v5981, %v6013
        %v6022 = vsel %vm6006, %v5984, %v6014
        %v6023 = vsel %vm6007, %v5989, %v6015
        %v6024 = vsel %vm6008, %v5992, %v6016
        %v6025 = vsel %vm6009, %v5997, %v6017
        %v6026 = vsel %vm6010, %v6000, %v6018
        %v6027 = vlaneseq
        %v6028 = vshrl.u32 %v6027, 7
        %v6029 = vsub.s32 1, %v6028
        %v6030 = vrot.slane %v5891, %v6029
        %v6031 = vmul.f32 %v6019, %v6030
        %v6032 = vmul.f32 %v6020, %v6030
        %v6033 = vmul.f32 %v6021, %v6030
        %v6034 = vmul.f32 %v6022, %v6030
        %v6035 = vmul.f32 %v6023, %v6030
        %v6036 = vmul.f32 %v6024, %v6030
        %v6037 = vmul.f32 %v6025, %v6030
        %v6038 = vmul.f32 %v6026, %v6030
        %v6039 = vlaneseq
        %v6040 = vshrl.u32 %v6039, 7
        %v6041 = vsub.s32 2, %v6040
        %v6042 = vrot.slane %v5891, %v6041
        %v6043 = vadd.f32 %v6031, %v6042
        %v6044 = vadd.f32 %v6032, %v6042
        %v6045 = vadd.f32 %v6033, %v6042
        %v6046 = vadd.f32 %v6034, %v6042
        %v6047 = vadd.f32 %v6035, %v6042
        %v6048 = vadd.f32 %v6036, %v6042
        %v6049 = vadd.f32 %v6037, %v6042
        %v6050 = vadd.f32 %v6038, %v6042
        %6051 = vst.msk [vmem:[#allocation5] sm:$0xff] %vm3801, 0.0
        %vm6052 = vcmask 123904
        %6053 = vst.msk [vmem:[#allocation5 + $0x8] sm:$0x3] %vm6052, 0.0
        %s6054 = scalar_lea.vmem [#allocation5], 144
        %6055 = vst.msk [vmem:[%s6054] sm:$0xff] %vm3801, 0.0
        %6056 = vst.msk [vmem:[%s6054 + $0x8] sm:$0x3] %vm6052, 0.0
        %s6057 = scalar_lea.vmem [#allocation5], 16
        %vm6058 = vcmask 122880
        %6059 = vst.msk [vmem:[%s6057] sm:$0x1] %vm6058, 0.0
        %6060 = vst.msk [vmem:[%s6057 + $0x10] sm:$0x1] %vm6058, 0.0
        %6061 = vst.msk [vmem:[%s6057 + $0x20] sm:$0x1] %vm6058, 0.0
        %6062 = vst.msk [vmem:[%s6057 + $0x30] sm:$0x1] %vm6058, 0.0
        %6063 = vst.msk [vmem:[%s6057 + $0x40] sm:$0x1] %vm6058, 0.0
        %6064 = vst.msk [vmem:[%s6057 + $0x50] sm:$0x1] %vm6058, 0.0
        %6065 = vst.msk [vmem:[%s6057 + $0x60] sm:$0x1] %vm6058, 0.0
        %6066 = vst.msk [vmem:[%s6057 + $0x70] sm:$0x1] %vm6058, 0.0
        %6067 = vst.msk [vmem:[%s6057 + $0x9] sm:$0x1] %vm6058, 0.0
        %6068 = vst.msk [vmem:[%s6057 + $0x19] sm:$0x1] %vm6058, 0.0
        %6069 = vst.msk [vmem:[%s6057 + $0x29] sm:$0x1] %vm6058, 0.0
        %6070 = vst.msk [vmem:[%s6057 + $0x39] sm:$0x1] %vm6058, 0.0
        %6071 = vst.msk [vmem:[%s6057 + $0x49] sm:$0x1] %vm6058, 0.0
        %6072 = vst.msk [vmem:[%s6057 + $0x59] sm:$0x1] %vm6058, 0.0
        %6073 = vst.msk [vmem:[%s6057 + $0x69] sm:$0x1] %vm6058, 0.0
        %6074 = vst.msk [vmem:[%s6057 + $0x79] sm:$0x1] %vm6058, 0.0
        %6075 = vst.msk [vmem:[%s6057 + $0x1] sm:$0xff] %vm3801, %v6043
        %6076 = vst.msk [vmem:[%s6057 + $0x11] sm:$0xff] %vm3801, %v6044
        %6077 = vst.msk [vmem:[%s6057 + $0x21] sm:$0xff] %vm3801, %v6045
        %6078 = vst.msk [vmem:[%s6057 + $0x31] sm:$0xff] %vm3801, %v6046
        %6079 = vst.msk [vmem:[%s6057 + $0x41] sm:$0xff] %vm3801, %v6047
        %6080 = vst.msk [vmem:[%s6057 + $0x51] sm:$0xff] %vm3801, %v6048
        %6081 = vst.msk [vmem:[%s6057 + $0x61] sm:$0xff] %vm3801, %v6049
        %6082 = vst.msk [vmem:[%s6057 + $0x71] sm:$0xff] %vm3801, %v6050
        %v6083 = vld [vmem:[#allocation5] sm:$0xff]
        %v6084 = vld [vmem:[#allocation5 + $0x10] sm:$0xff]
        %v6085 = vld [vmem:[#allocation5 + $0x20] sm:$0xff]
        %v6086 = vld [vmem:[#allocation5 + $0x30] sm:$0xff]
        %v6087 = vld [vmem:[#allocation5 + $0x40] sm:$0xff]
        %v6088 = vld [vmem:[#allocation5 + $0x50] sm:$0xff]
        %v6089 = vld [vmem:[#allocation5 + $0x60] sm:$0xff]
        %v6090 = vld [vmem:[#allocation5 + $0x70] sm:$0xff]
        %v6091 = vld [vmem:[#allocation5 + $0x1] sm:$0xff]
        %v6092 = vld [vmem:[#allocation5 + $0x11] sm:$0xff]
        %v6093 = vld [vmem:[#allocation5 + $0x21] sm:$0xff]
        %v6094 = vld [vmem:[#allocation5 + $0x31] sm:$0xff]
        %v6095 = vld [vmem:[#allocation5 + $0x41] sm:$0xff]
        %v6096 = vld [vmem:[#allocation5 + $0x51] sm:$0xff]
        %v6097 = vld [vmem:[#allocation5 + $0x61] sm:$0xff]
        %v6098 = vld [vmem:[#allocation5 + $0x71] sm:$0xff]
        %v6099 = vld [vmem:[#allocation5 + $0x2] sm:$0xff]
        %v6100 = vld [vmem:[#allocation5 + $0x12] sm:$0xff]
        %v6101 = vld [vmem:[#allocation5 + $0x22] sm:$0xff]
        %v6102 = vld [vmem:[#allocation5 + $0x32] sm:$0xff]
        %v6103 = vld [vmem:[#allocation5 + $0x42] sm:$0xff]
        %v6104 = vld [vmem:[#allocation5 + $0x52] sm:$0xff]
        %v6105 = vld [vmem:[#allocation5 + $0x62] sm:$0xff]
        %v6106 = vld [vmem:[#allocation5 + $0x72] sm:$0xff]
        %v6107 = vld [vmem:[%s6057] sm:$0xff]
        %v6108 = vld [vmem:[%s6057 + $0x10] sm:$0xff]
        %v6109 = vld [vmem:[%s6057 + $0x20] sm:$0xff]
        %v6110 = vld [vmem:[%s6057 + $0x30] sm:$0xff]
        %v6111 = vld [vmem:[%s6057 + $0x40] sm:$0xff]
        %v6112 = vld [vmem:[%s6057 + $0x50] sm:$0xff]
        %v6113 = vld [vmem:[%s6057 + $0x60] sm:$0xff]
        %v6114 = vld [vmem:[%s6057 + $0x70] sm:$0xff]
        %v6115 = vld [vmem:[%s6057 + $0x1] sm:$0xff]
        %v6116 = vld [vmem:[%s6057 + $0x11] sm:$0xff]
        %v6117 = vld [vmem:[%s6057 + $0x21] sm:$0xff]
        %v6118 = vld [vmem:[%s6057 + $0x31] sm:$0xff]
        %v6119 = vld [vmem:[%s6057 + $0x41] sm:$0xff]
        %v6120 = vld [vmem:[%s6057 + $0x51] sm:$0xff]
        %v6121 = vld [vmem:[%s6057 + $0x61] sm:$0xff]
        %v6122 = vld [vmem:[%s6057 + $0x71] sm:$0xff]
        %v6123 = vld [vmem:[%s6057 + $0x2] sm:$0xff]
        %v6124 = vld [vmem:[%s6057 + $0x12] sm:$0xff]
        %v6125 = vld [vmem:[%s6057 + $0x22] sm:$0xff]
        %v6126 = vld [vmem:[%s6057 + $0x32] sm:$0xff]
        %v6127 = vld [vmem:[%s6057 + $0x42] sm:$0xff]
        %v6128 = vld [vmem:[%s6057 + $0x52] sm:$0xff]
        %v6129 = vld [vmem:[%s6057 + $0x62] sm:$0xff]
        %v6130 = vld [vmem:[%s6057 + $0x72] sm:$0xff]
        %s6131 = scalar_lea.vmem [#allocation5], 32
        %v6132 = vld [vmem:[%s6131] sm:$0xff]
        %v6133 = vld [vmem:[%s6131 + $0x10] sm:$0xff]
        %v6134 = vld [vmem:[%s6131 + $0x20] sm:$0xff]
        %v6135 = vld [vmem:[%s6131 + $0x30] sm:$0xff]
        %v6136 = vld [vmem:[%s6131 + $0x40] sm:$0xff]
        %v6137 = vld [vmem:[%s6131 + $0x50] sm:$0xff]
        %v6138 = vld [vmem:[%s6131 + $0x60] sm:$0xff]
        %v6139 = vld [vmem:[%s6131 + $0x70] sm:$0xff]
        %v6140 = vld [vmem:[%s6131 + $0x1] sm:$0xff]
        %v6141 = vld [vmem:[%s6131 + $0x11] sm:$0xff]
        %v6142 = vld [vmem:[%s6131 + $0x21] sm:$0xff]
        %v6143 = vld [vmem:[%s6131 + $0x31] sm:$0xff]
        %v6144 = vld [vmem:[%s6131 + $0x41] sm:$0xff]
        %v6145 = vld [vmem:[%s6131 + $0x51] sm:$0xff]
        %v6146 = vld [vmem:[%s6131 + $0x61] sm:$0xff]
        %v6147 = vld [vmem:[%s6131 + $0x71] sm:$0xff]
        %v6148 = vld [vmem:[%s6131 + $0x2] sm:$0xff]
        %v6149 = vld [vmem:[%s6131 + $0x12] sm:$0xff]
        %v6150 = vld [vmem:[%s6131 + $0x22] sm:$0xff]
        %v6151 = vld [vmem:[%s6131 + $0x32] sm:$0xff]
        %v6152 = vld [vmem:[%s6131 + $0x42] sm:$0xff]
        %v6153 = vld [vmem:[%s6131 + $0x52] sm:$0xff]
        %v6154 = vld [vmem:[%s6131 + $0x62] sm:$0xff]
        %v6155 = vld [vmem:[%s6131 + $0x72] sm:$0xff]
        %6164 = vrot.lane.b32.xlu0 %v6091, 16
        %v6165 = vpop.permute.xlu0 %6164
        %6166 = vrot.lane.b32.xlu0 %v6092, 16
        %v6167 = vpop.permute.xlu0 %6166
        %6168 = vrot.lane.b32.xlu0 %v6093, 16
        %v6169 = vpop.permute.xlu0 %6168
        %6170 = vrot.lane.b32.xlu0 %v6094, 16
        %v6171 = vpop.permute.xlu0 %6170
        %6172 = vrot.lane.b32.xlu0 %v6095, 16
        %v6173 = vpop.permute.xlu0 %6172
        %6174 = vrot.lane.b32.xlu0 %v6096, 16
        %v6175 = vpop.permute.xlu0 %6174
        %6176 = vrot.lane.b32.xlu0 %v6097, 16
        %v6177 = vpop.permute.xlu0 %6176
        %6178 = vrot.lane.b32.xlu0 %v6098, 16
        %v6179 = vpop.permute.xlu0 %6178
        %6196 = vrot.lane.b32.xlu0 %v6099, 32
        %v6197 = vpop.permute.xlu0 %6196
        %6198 = vrot.lane.b32.xlu0 %v6100, 32
        %v6199 = vpop.permute.xlu0 %6198
        %6200 = vrot.lane.b32.xlu0 %v6101, 32
        %v6201 = vpop.permute.xlu0 %6200
        %6202 = vrot.lane.b32.xlu0 %v6102, 32
        %v6203 = vpop.permute.xlu0 %6202
        %6204 = vrot.lane.b32.xlu0 %v6103, 32
        %v6205 = vpop.permute.xlu0 %6204
        %6206 = vrot.lane.b32.xlu0 %v6104, 32
        %v6207 = vpop.permute.xlu0 %6206
        %6208 = vrot.lane.b32.xlu0 %v6105, 32
        %v6209 = vpop.permute.xlu0 %6208
        %6210 = vrot.lane.b32.xlu0 %v6106, 32
        %v6211 = vpop.permute.xlu0 %6210
        %6228 = vrot.lane.b32.xlu0 %v6107, 48
        %v6229 = vpop.permute.xlu0 %6228
        %6230 = vrot.lane.b32.xlu0 %v6108, 48
        %v6231 = vpop.permute.xlu0 %6230
        %6232 = vrot.lane.b32.xlu0 %v6109, 48
        %v6233 = vpop.permute.xlu0 %6232
        %6234 = vrot.lane.b32.xlu0 %v6110, 48
        %v6235 = vpop.permute.xlu0 %6234
        %6236 = vrot.lane.b32.xlu0 %v6111, 48
        %v6237 = vpop.permute.xlu0 %6236
        %6238 = vrot.lane.b32.xlu0 %v6112, 48
        %v6239 = vpop.permute.xlu0 %6238
        %6240 = vrot.lane.b32.xlu0 %v6113, 48
        %v6241 = vpop.permute.xlu0 %6240
        %6242 = vrot.lane.b32.xlu0 %v6114, 48
        %v6243 = vpop.permute.xlu0 %6242
        %6260 = vrot.lane.b32.xlu0 %v6115, 64
        %v6261 = vpop.permute.xlu0 %6260
        %6262 = vrot.lane.b32.xlu0 %v6116, 64
        %v6263 = vpop.permute.xlu0 %6262
        %6264 = vrot.lane.b32.xlu0 %v6117, 64
        %v6265 = vpop.permute.xlu0 %6264
        %6266 = vrot.lane.b32.xlu0 %v6118, 64
        %v6267 = vpop.permute.xlu0 %6266
        %6268 = vrot.lane.b32.xlu0 %v6119, 64
        %v6269 = vpop.permute.xlu0 %6268
        %6270 = vrot.lane.b32.xlu0 %v6120, 64
        %v6271 = vpop.permute.xlu0 %6270
        %6272 = vrot.lane.b32.xlu0 %v6121, 64
        %v6273 = vpop.permute.xlu0 %6272
        %6274 = vrot.lane.b32.xlu0 %v6122, 64
        %v6275 = vpop.permute.xlu0 %6274
        %6292 = vrot.lane.b32.xlu0 %v6123, 80
        %v6293 = vpop.permute.xlu0 %6292
        %6294 = vrot.lane.b32.xlu0 %v6124, 80
        %v6295 = vpop.permute.xlu0 %6294
        %6296 = vrot.lane.b32.xlu0 %v6125, 80
        %v6297 = vpop.permute.xlu0 %6296
        %6298 = vrot.lane.b32.xlu0 %v6126, 80
        %v6299 = vpop.permute.xlu0 %6298
        %6300 = vrot.lane.b32.xlu0 %v6127, 80
        %v6301 = vpop.permute.xlu0 %6300
        %6302 = vrot.lane.b32.xlu0 %v6128, 80
        %v6303 = vpop.permute.xlu0 %6302
        %6304 = vrot.lane.b32.xlu0 %v6129, 80
        %v6305 = vpop.permute.xlu0 %6304
        %6306 = vrot.lane.b32.xlu0 %v6130, 80
        %v6307 = vpop.permute.xlu0 %6306
        %6324 = vrot.lane.b32.xlu0 %v6132, 96
        %v6325 = vpop.permute.xlu0 %6324
        %6326 = vrot.lane.b32.xlu0 %v6133, 96
        %v6327 = vpop.permute.xlu0 %6326
        %6328 = vrot.lane.b32.xlu0 %v6134, 96
        %v6329 = vpop.permute.xlu0 %6328
        %6330 = vrot.lane.b32.xlu0 %v6135, 96
        %v6331 = vpop.permute.xlu0 %6330
        %6332 = vrot.lane.b32.xlu0 %v6136, 96
        %v6333 = vpop.permute.xlu0 %6332
        %6334 = vrot.lane.b32.xlu0 %v6137, 96
        %v6335 = vpop.permute.xlu0 %6334
        %6336 = vrot.lane.b32.xlu0 %v6138, 96
        %v6337 = vpop.permute.xlu0 %6336
        %6338 = vrot.lane.b32.xlu0 %v6139, 96
        %v6339 = vpop.permute.xlu0 %6338
        %6356 = vrot.lane.b32.xlu0 %v6140, 112
        %v6357 = vpop.permute.xlu0 %6356
        %6358 = vrot.lane.b32.xlu0 %v6141, 112
        %v6359 = vpop.permute.xlu0 %6358
        %6360 = vrot.lane.b32.xlu0 %v6142, 112
        %v6361 = vpop.permute.xlu0 %6360
        %6362 = vrot.lane.b32.xlu0 %v6143, 112
        %v6363 = vpop.permute.xlu0 %6362
        %6364 = vrot.lane.b32.xlu0 %v6144, 112
        %v6365 = vpop.permute.xlu0 %6364
        %6366 = vrot.lane.b32.xlu0 %v6145, 112
        %v6367 = vpop.permute.xlu0 %6366
        %6368 = vrot.lane.b32.xlu0 %v6146, 112
        %v6369 = vpop.permute.xlu0 %6368
        %6370 = vrot.lane.b32.xlu0 %v6147, 112
        %v6371 = vpop.permute.xlu0 %6370
        %v6380 = vsel %vm3801, %v6083, %v6165
        %v6381 = vsel %vm3801, %v6084, %v6167
        %v6382 = vsel %vm3801, %v6085, %v6169
        %v6383 = vsel %vm3801, %v6086, %v6171
        %v6384 = vsel %vm3801, %v6087, %v6173
        %v6385 = vsel %vm3801, %v6088, %v6175
        %v6386 = vsel %vm3801, %v6089, %v6177
        %v6387 = vsel %vm3801, %v6090, %v6179
        %v6388 = vsel %vm3866, %v6380, %v6197
        %v6389 = vsel %vm3866, %v6381, %v6199
        %v6390 = vsel %vm3866, %v6382, %v6201
        %v6391 = vsel %vm3866, %v6383, %v6203
        %v6392 = vsel %vm3866, %v6384, %v6205
        %v6393 = vsel %vm3866, %v6385, %v6207
        %v6394 = vsel %vm3866, %v6386, %v6209
        %v6395 = vsel %vm3866, %v6387, %v6211
        %v6396 = vsel %vm3932, %v6388, %v6229
        %v6397 = vsel %vm3932, %v6389, %v6231
        %v6398 = vsel %vm3932, %v6390, %v6233
        %v6399 = vsel %vm3932, %v6391, %v6235
        %v6400 = vsel %vm3932, %v6392, %v6237
        %v6401 = vsel %vm3932, %v6393, %v6239
        %v6402 = vsel %vm3932, %v6394, %v6241
        %v6403 = vsel %vm3932, %v6395, %v6243
        %v6404 = vsel %vm3998, %v6396, %v6261
        %v6405 = vsel %vm3998, %v6397, %v6263
        %v6406 = vsel %vm3998, %v6398, %v6265
        %v6407 = vsel %vm3998, %v6399, %v6267
        %v6408 = vsel %vm3998, %v6400, %v6269
        %v6409 = vsel %vm3998, %v6401, %v6271
        %v6410 = vsel %vm3998, %v6402, %v6273
        %v6411 = vsel %vm3998, %v6403, %v6275
        %vm6412 = vcmask 654336
        %v6413 = vsel %vm6412, %v6404, %v6293
        %v6414 = vsel %vm6412, %v6405, %v6295
        %v6415 = vsel %vm6412, %v6406, %v6297
        %v6416 = vsel %vm6412, %v6407, %v6299
        %v6417 = vsel %vm6412, %v6408, %v6301
        %v6418 = vsel %vm6412, %v6409, %v6303
        %v6419 = vsel %vm6412, %v6410, %v6305
        %v6420 = vsel %vm6412, %v6411, %v6307
        %vm6421 = vcmask 785408
        %v6422 = vsel %vm6421, %v6413, %v6325
        %v6423 = vsel %vm6421, %v6414, %v6327
        %v6424 = vsel %vm6421, %v6415, %v6329
        %v6425 = vsel %vm6421, %v6416, %v6331
        %v6426 = vsel %vm6421, %v6417, %v6333
        %v6427 = vsel %vm6421, %v6418, %v6335
        %v6428 = vsel %vm6421, %v6419, %v6337
        %v6429 = vsel %vm6421, %v6420, %v6339
        %vm6430 = vcmask 916480
        %v6431 = vsel %vm6430, %v6422, %v6357
        %v6432 = vsel %vm6430, %v6423, %v6359
        %v6433 = vsel %vm6430, %v6424, %v6361
        %v6434 = vsel %vm6430, %v6425, %v6363
        %v6435 = vsel %vm6430, %v6426, %v6365
        %v6436 = vsel %vm6430, %v6427, %v6367
        %v6437 = vsel %vm6430, %v6428, %v6369
        %v6438 = vsel %vm6430, %v6429, %v6371
        %v6439 = vld [vmem:[%s1 + $0x60] sm:$0xf]
        %v6440 = vld [vmem:[%s1 + $0x64] sm:$0xf]
        %v6441 = vld [vmem:[%s1 + $0x68] sm:$0xf]
        %v6442 = vld [vmem:[%s1 + $0x6c] sm:$0xf]
        %v6443 = vld [vmem:[%s1 + $0x70] sm:$0xf]
        %v6444 = vld [vmem:[%s1 + $0x74] sm:$0xf]
        %v6445 = vld [vmem:[%s1 + $0x78] sm:$0xf]
        %v6446 = vld [vmem:[%s1 + $0x7c] sm:$0xf]
        %v6447 = vld [vmem:[%s1 + $0x80] sm:$0xf]
        %v6448 = vld [vmem:[%s1 + $0x84] sm:$0xf]
        %v6449 = vld [vmem:[%s1 + $0x88] sm:$0xf]
        %v6450 = vld [vmem:[%s1 + $0x8c] sm:$0xf]
        %v6451 = vld [vmem:[%s1 + $0x90] sm:$0xf]
        %v6452 = vld [vmem:[%s1 + $0x94] sm:$0xf]
        %v6453 = vld [vmem:[%s1 + $0x98] sm:$0xf]
        %v6454 = vld [vmem:[%s1 + $0x9c] sm:$0xf]
        %v6455 = vld [vmem:[%s1 + $0xa0] sm:$0xf]
        %v6456 = vld [vmem:[%s1 + $0xa4] sm:$0xf]
        %v6457 = vpack.c.bf16 %v6432, %v6431
        %v6458 = vpack.c.bf16 %v6149, %v6148
        %v6459 = vpack.c.bf16 %v6434, %v6433
        %v6460 = vpack.c.bf16 %v6151, %v6150
        %v6461 = vpack.c.bf16 %v6436, %v6435
        %v6462 = vpack.c.bf16 %v6153, %v6152
        %v6463 = vpack.c.bf16 %v6438, %v6437
        %v6464 = vpack.c.bf16 %v6155, %v6154
        %s6465 = scalar_lea.vmem %s2, 12
        %v6466 = vld [vmem:[%s6465] sm:$0x7]
        %v6467 = vlaneseq
        %v6468 = vshrl.u32 %v6467, 7
        %v6469 = vsub.s32 0, %v6468
        %v6470 = vrot.slane %v6466, %v6469
        %v6489 = vunpack.c.l.b16 %v6439
        %v6490 = vunpack.c.l.b16 %v6440
        %v6491 = vunpack.c.l.b16 %v6441
        %v6492 = vunpack.c.l.b16 %v6442
        %v6493 = vunpack.c.l.b16 %v6443
        %v6494 = vunpack.c.l.b16 %v6444
        %v6495 = vunpack.c.l.b16 %v6445
        %v6496 = vunpack.c.l.b16 %v6446
        %v6497 = vunpack.c.l.b16 %v6447
        %v6498 = vunpack.c.l.b16 %v6448
        %v6499 = vunpack.c.l.b16 %v6449
        %v6500 = vunpack.c.l.b16 %v6450
        %v6501 = vunpack.c.l.b16 %v6451
        %v6502 = vunpack.c.l.b16 %v6452
        %v6503 = vunpack.c.l.b16 %v6453
        %v6504 = vunpack.c.l.b16 %v6454
        %v6505 = vunpack.c.l.b16 %v6455
        %v6506 = vunpack.c.l.b16 %v6456
        %v6507 = vpack.c.b16 %v6490, %v6489
        %v6508 = vpack.c.b16 %v6492, %v6491
        %v6509 = vpack.c.b16 %v6494, %v6493
        %v6510 = vpack.c.b16 %v6496, %v6495
        %v6511 = vpack.c.b16 %v6498, %v6497
        %v6512 = vpack.c.b16 %v6500, %v6499
        %v6513 = vpack.c.b16 %v6502, %v6501
        %v6514 = vpack.c.b16 %v6504, %v6503
        %v6515 = vpack.c.b16 %v6506, %v6505
        %v6526 = vsel %vm3801, %v6458, 0
        %v6529 = vsel %vm3801, %v6460, 0
        %v6532 = vsel %vm3801, %v6462, 0
        %v6535 = vsel %vm3801, %v6464, 0
        %6537 = vmatprep.subr.bf16.mxu0 0
        %6538 = vmatpush1.bf16.msra.mxu0 %v6507
        %6539 = vmatprep.subr.bf16.mxu0 0
        %6540 = vmatpush1.bf16.msra.mxu0 %v6508
        %6541 = vmatprep.subr.bf16.mxu0 0
        %6542 = vmatpush1.bf16.msra.mxu0 %v6509
        %6543 = vmatprep.subr.bf16.mxu0 0
        %6544 = vmatpush1.bf16.msra.mxu0 %v6510
        %6545 = vmatprep.subr.bf16.mxu0 0
        %6546 = vmatpush1.bf16.msra.mxu0 %v6511
        %6547 = vmatprep.subr.bf16.mxu0 0
        %6548 = vmatpush1.bf16.msra.mxu0 %v6512
        %6549 = vmatprep.subr.bf16.mxu0 0
        %6550 = vmatpush1.bf16.msra.mxu0 %v6513
        %6551 = vmatprep.subr.bf16.mxu0 0
        %6552 = vmatpush1.bf16.msra.mxu0 %v6514
        %6553 = vmatprep.subr.bf16.mxu0 0
        %6554 = vmatpush1.bf16.msra.mxu0 %v6515
        %6555 = vmatprep.subr.bf16.mxu0 0
        %6556 = vmatpush1.bf16.msra.mxu0 0
        %6557 = vmatprep.subr.bf16.mxu0 0
        %6558 = vmatpush1.bf16.msra.mxu0 0
        %6559 = vmatprep.subr.bf16.mxu0 0
        %6560 = vmatpush1.bf16.msra.mxu0 0
        %6561 = vmatprep.subr.bf16.mxu0 0
        %6562 = vmatpush1.bf16.msra.mxu0 0
        %6563 = vmatprep.subr.bf16.mxu0 0
        %6564 = vmatpush1.bf16.msra.mxu0 0
        %6565 = vmatprep.subr.bf16.mxu0 0
        %6566 = vmatpush1.bf16.msra.mxu0 0
        %6567 = vmatprep.subr.bf16.mxu0 0
        %6568 = vmatpush1.bf16.msra.mxu0 0
        %6569 = vmatprep.mubr.bf16.mxu0 %v6526
        %6570 = vmatmul.mubr.bf16.gmra.mrb[0].mxu0 %v6457
        %v6571 = vpop.f32.mrb[0].mxu0
        %v6572 = vadd.f32 %v6470, %v6571
        %v6573 = vpop.f32.mrb[0].mxu0
        %v6574 = vpop.f32.mrb[0].mxu0
        %v6575 = vadd.f32 %v6470, %v6574
        %v6576 = vpop.f32.mrb[0].mxu0
        %6577 = vmatprep.mubr.bf16.mxu0 %v6529
        %6578 = vmatmul.mubr.bf16.gmra.mrb[0].mxu0 %v6459
        %v6579 = vpop.f32.mrb[0].mxu0
        %v6580 = vadd.f32 %v6470, %v6579
        %v6581 = vpop.f32.mrb[0].mxu0
        %v6582 = vpop.f32.mrb[0].mxu0
        %v6583 = vadd.f32 %v6470, %v6582
        %v6584 = vpop.f32.mrb[0].mxu0
        %6585 = vmatprep.mubr.bf16.mxu0 %v6532
        %6586 = vmatmul.mubr.bf16.gmra.mrb[0].mxu0 %v6461
        %v6587 = vpop.f32.mrb[0].mxu0
        %v6588 = vadd.f32 %v6470, %v6587
        %v6589 = vpop.f32.mrb[0].mxu0
        %v6590 = vpop.f32.mrb[0].mxu0
        %v6591 = vadd.f32 %v6470, %v6590
        %v6592 = vpop.f32.mrb[0].mxu0
        %6593 = vmatprep.mubr.bf16.mxu0 %v6535
        %6594 = vmatmul.mubr.bf16.gmra.mrb[0].mxu0 %v6463
        %v6595 = vpop.f32.mrb[0].mxu0
        %v6596 = vadd.f32 %v6470, %v6595
        %v6597 = vpop.f32.mrb[0].mxu0
        %v6598 = vpop.f32.mrb[0].mxu0
        %v6599 = vadd.f32 %v6470, %v6598
        %v6600 = vpop.f32.mrb[0].mxu0
        %6601 = vdwg.mxu0
        %vm6602 = vcmp.gt.f32.partialorder %v6572, 0.0
        %vm6603 = vcmp.gt.f32.partialorder %v6575, 0.0
        %vm6604 = vcmp.gt.f32.partialorder %v6580, 0.0
        %vm6605 = vcmp.gt.f32.partialorder %v6583, 0.0
        %vm6606 = vcmp.gt.f32.partialorder %v6588, 0.0
        %vm6607 = vcmp.gt.f32.partialorder %v6591, 0.0
        %vm6608 = vcmp.gt.f32.partialorder %v6596, 0.0
        %vm6609 = vcmp.gt.f32.partialorder %v6599, 0.0
        %v6610 = vmul.f32 %v6572, 0.1
        %v6611 = vmul.f32 %v6575, 0.1
        %v6612 = vmul.f32 %v6580, 0.1
        %v6613 = vmul.f32 %v6583, 0.1
        %v6614 = vmul.f32 %v6588, 0.1
        %v6615 = vmul.f32 %v6591, 0.1
        %v6616 = vmul.f32 %v6596, 0.1
        %v6617 = vmul.f32 %v6599, 0.1
        %v6618 = vsel %vm6602, %v6572, %v6610
        %v6619 = vsel %vm6603, %v6575, %v6611
        %v6620 = vsel %vm6604, %v6580, %v6612
        %v6621 = vsel %vm6605, %v6583, %v6613
        %v6622 = vsel %vm6606, %v6588, %v6614
        %v6623 = vsel %vm6607, %v6591, %v6615
        %v6624 = vsel %vm6608, %v6596, %v6616
        %v6625 = vsel %vm6609, %v6599, %v6617
        %v6626 = vlaneseq
        %v6627 = vshrl.u32 %v6626, 7
        %v6628 = vsub.s32 1, %v6627
        %v6629 = vrot.slane %v6466, %v6628
        %v6630 = vmul.f32 %v6618, %v6629
        %v6631 = vmul.f32 %v6619, %v6629
        %v6632 = vmul.f32 %v6620, %v6629
        %v6633 = vmul.f32 %v6621, %v6629
        %v6634 = vmul.f32 %v6622, %v6629
        %v6635 = vmul.f32 %v6623, %v6629
        %v6636 = vmul.f32 %v6624, %v6629
        %v6637 = vmul.f32 %v6625, %v6629
        %v6638 = vlaneseq
        %v6639 = vshrl.u32 %v6638, 7
        %v6640 = vsub.s32 2, %v6639
        %v6641 = vrot.slane %v6466, %v6640
        %v6642 = vadd.f32 %v6630, %v6641
        %v6643 = vadd.f32 %v6631, %v6641
        %v6644 = vadd.f32 %v6632, %v6641
        %v6645 = vadd.f32 %v6633, %v6641
        %v6646 = vadd.f32 %v6634, %v6641
        %v6647 = vadd.f32 %v6635, %v6641
        %v6648 = vadd.f32 %v6636, %v6641
        %v6649 = vadd.f32 %v6637, %v6641
        %v6650 = vsel %vm3801, %v6642, -inf
        %v6651 = vsel %vm3801, %v6643, -inf
        %v6652 = vmax.f32 %v6650, %v6651
        %v6653 = vsel %vm3801, %v6644, -inf
        %v6654 = vsel %vm3801, %v6645, -inf
        %v6655 = vmax.f32 %v6653, %v6654
        %v6656 = vsel %vm3801, %v6646, -inf
        %v6657 = vsel %vm3801, %v6647, -inf
        %v6658 = vmax.f32 %v6656, %v6657
        %v6659 = vsel %vm3801, %v6648, -inf
        %v6660 = vsel %vm3801, %v6649, -inf
        %v6661 = vmax.f32 %v6659, %v6660
        %v6666 = vcombine.high %v6652, %v6652
        %v6668 = vunpack.c.l.s4 1983009808
        %v6669 = vunpack.c.0.s8 %v6668
        %v6670 = vlaneseq
        %v6671 = vshrl.u32 %v6670, 7
        %v6672 = vsub.s32 %v6669, %v6671
        %v6673 = vrot.slane %v6652, %v6672
        %v6675 = vunpack.c.l.s4 1983009808
        %v6676 = vunpack.c.0.s8 %v6675
        %v6677 = vlaneseq
        %v6678 = vshrl.u32 %v6677, 7
        %v6679 = vsub.s32 %v6676, %v6678
        %v6680 = vrot.slane %v6666, %v6679
        %v6681 = vcombine.high %v6673, %v6673
        %v6682 = vcombine.high %v6680, %v6680
        %v6683 = vcombine.high %v6655, %v6655
        %v6685 = vunpack.c.l.s4 1983009808
        %v6686 = vunpack.c.0.s8 %v6685
        %v6687 = vlaneseq
        %v6688 = vshrl.u32 %v6687, 7
        %v6689 = vsub.s32 %v6686, %v6688
        %v6690 = vrot.slane %v6655, %v6689
        %v6692 = vunpack.c.l.s4 1983009808
        %v6693 = vunpack.c.0.s8 %v6692
        %v6694 = vlaneseq
        %v6695 = vshrl.u32 %v6694, 7
        %v6696 = vsub.s32 %v6693, %v6695
        %v6697 = vrot.slane %v6683, %v6696
        %v6698 = vcombine.high %v6690, %v6690
        %v6699 = vcombine.high %v6697, %v6697
        %v6700 = vcombine.high %v6658, %v6658
        %v6702 = vunpack.c.l.s4 1983009808
        %v6703 = vunpack.c.0.s8 %v6702
        %v6704 = vlaneseq
        %v6705 = vshrl.u32 %v6704, 7
        %v6706 = vsub.s32 %v6703, %v6705
        %v6707 = vrot.slane %v6658, %v6706
        %v6709 = vunpack.c.l.s4 1983009808
        %v6710 = vunpack.c.0.s8 %v6709
        %v6711 = vlaneseq
        %v6712 = vshrl.u32 %v6711, 7
        %v6713 = vsub.s32 %v6710, %v6712
        %v6714 = vrot.slane %v6700, %v6713
        %v6715 = vcombine.high %v6707, %v6707
        %v6716 = vcombine.high %v6714, %v6714
        %v6717 = vcombine.high %v6661, %v6661
        %v6719 = vunpack.c.l.s4 1983009808
        %v6720 = vunpack.c.0.s8 %v6719
        %v6721 = vlaneseq
        %v6722 = vshrl.u32 %v6721, 7
        %v6723 = vsub.s32 %v6720, %v6722
        %v6724 = vrot.slane %v6661, %v6723
        %v6726 = vunpack.c.l.s4 1983009808
        %v6727 = vunpack.c.0.s8 %v6726
        %v6728 = vlaneseq
        %v6729 = vshrl.u32 %v6728, 7
        %v6730 = vsub.s32 %v6727, %v6729
        %v6731 = vrot.slane %v6717, %v6730
        %v6732 = vcombine.high %v6724, %v6724
        %v6733 = vcombine.high %v6731, %v6731
        %v6750 = vsel %vm6052, %v6673, -inf
        %v6751 = vrot.slane %v6750, 4
        %v6752 = vmax.f32 %v6750, %v6751
        %v6753 = vrot.slane %v6752, 2
        %v6754 = vmax.f32 %v6752, %v6753
        %v6755 = vrot.slane %v6754, 1
        %v6756 = vmax.f32 %v6754, %v6755
        %v6757 = vsel %vm6052, %v6681, -inf
        %v6758 = vrot.slane %v6757, 4
        %v6759 = vmax.f32 %v6757, %v6758
        %v6760 = vrot.slane %v6759, 2
        %v6761 = vmax.f32 %v6759, %v6760
        %v6762 = vrot.slane %v6761, 1
        %v6763 = vmax.f32 %v6761, %v6762
        %v6764 = vsel %vm6052, %v6680, -inf
        %v6765 = vrot.slane %v6764, 4
        %v6766 = vmax.f32 %v6764, %v6765
        %v6767 = vrot.slane %v6766, 2
        %v6768 = vmax.f32 %v6766, %v6767
        %v6769 = vrot.slane %v6768, 1
        %v6770 = vmax.f32 %v6768, %v6769
        %v6771 = vsel %vm6052, %v6682, -inf
        %v6772 = vrot.slane %v6771, 4
        %v6773 = vmax.f32 %v6771, %v6772
        %v6774 = vrot.slane %v6773, 2
        %v6775 = vmax.f32 %v6773, %v6774
        %v6776 = vrot.slane %v6775, 1
        %v6777 = vmax.f32 %v6775, %v6776
        %v6778 = vsel %vm6052, %v6690, -inf
        %v6779 = vrot.slane %v6778, 4
        %v6780 = vmax.f32 %v6778, %v6779
        %v6781 = vrot.slane %v6780, 2
        %v6782 = vmax.f32 %v6780, %v6781
        %v6783 = vrot.slane %v6782, 1
        %v6784 = vmax.f32 %v6782, %v6783
        %v6785 = vsel %vm6052, %v6698, -inf
        %v6786 = vrot.slane %v6785, 4
        %v6787 = vmax.f32 %v6785, %v6786
        %v6788 = vrot.slane %v6787, 2
        %v6789 = vmax.f32 %v6787, %v6788
        %v6790 = vrot.slane %v6789, 1
        %v6791 = vmax.f32 %v6789, %v6790
        %v6792 = vsel %vm6052, %v6697, -inf
        %v6793 = vrot.slane %v6792, 4
        %v6794 = vmax.f32 %v6792, %v6793
        %v6795 = vrot.slane %v6794, 2
        %v6796 = vmax.f32 %v6794, %v6795
        %v6797 = vrot.slane %v6796, 1
        %v6798 = vmax.f32 %v6796, %v6797
        %v6799 = vsel %vm6052, %v6699, -inf
        %v6800 = vrot.slane %v6799, 4
        %v6801 = vmax.f32 %v6799, %v6800
        %v6802 = vrot.slane %v6801, 2
        %v6803 = vmax.f32 %v6801, %v6802
        %v6804 = vrot.slane %v6803, 1
        %v6805 = vmax.f32 %v6803, %v6804
        %v6806 = vsel %vm6052, %v6707, -inf
        %v6807 = vrot.slane %v6806, 4
        %v6808 = vmax.f32 %v6806, %v6807
        %v6809 = vrot.slane %v6808, 2
        %v6810 = vmax.f32 %v6808, %v6809
        %v6811 = vrot.slane %v6810, 1
        %v6812 = vmax.f32 %v6810, %v6811
        %v6813 = vsel %vm6052, %v6715, -inf
        %v6814 = vrot.slane %v6813, 4
        %v6815 = vmax.f32 %v6813, %v6814
        %v6816 = vrot.slane %v6815, 2
        %v6817 = vmax.f32 %v6815, %v6816
        %v6818 = vrot.slane %v6817, 1
        %v6819 = vmax.f32 %v6817, %v6818
        %v6820 = vsel %vm6052, %v6714, -inf
        %v6821 = vrot.slane %v6820, 4
        %v6822 = vmax.f32 %v6820, %v6821
        %v6823 = vrot.slane %v6822, 2
        %v6824 = vmax.f32 %v6822, %v6823
        %v6825 = vrot.slane %v6824, 1
        %v6826 = vmax.f32 %v6824, %v6825
        %v6827 = vsel %vm6052, %v6716, -inf
        %v6828 = vrot.slane %v6827, 4
        %v6829 = vmax.f32 %v6827, %v6828
        %v6830 = vrot.slane %v6829, 2
        %v6831 = vmax.f32 %v6829, %v6830
        %v6832 = vrot.slane %v6831, 1
        %v6833 = vmax.f32 %v6831, %v6832
        %v6834 = vsel %vm6052, %v6724, -inf
        %v6835 = vrot.slane %v6834, 4
        %v6836 = vmax.f32 %v6834, %v6835
        %v6837 = vrot.slane %v6836, 2
        %v6838 = vmax.f32 %v6836, %v6837
        %v6839 = vrot.slane %v6838, 1
        %v6840 = vmax.f32 %v6838, %v6839
        %v6841 = vsel %vm6052, %v6732, -inf
        %v6842 = vrot.slane %v6841, 4
        %v6843 = vmax.f32 %v6841, %v6842
        %v6844 = vrot.slane %v6843, 2
        %v6845 = vmax.f32 %v6843, %v6844
        %v6846 = vrot.slane %v6845, 1
        %v6847 = vmax.f32 %v6845, %v6846
        %v6848 = vsel %vm6052, %v6731, -inf
        %v6849 = vrot.slane %v6848, 4
        %v6850 = vmax.f32 %v6848, %v6849
        %v6851 = vrot.slane %v6850, 2
        %v6852 = vmax.f32 %v6850, %v6851
        %v6853 = vrot.slane %v6852, 1
        %v6854 = vmax.f32 %v6852, %v6853
        %v6855 = vsel %vm6052, %v6733, -inf
        %v6856 = vrot.slane %v6855, 4
        %v6857 = vmax.f32 %v6855, %v6856
        %v6858 = vrot.slane %v6857, 2
        %v6859 = vmax.f32 %v6857, %v6858
        %v6860 = vrot.slane %v6859, 1
        %v6861 = vmax.f32 %v6859, %v6860
        %vm6862 = vcmask 128000
        %6863 = vst.msk [vmem:[#allocation6] sm:$0x3f] %vm6862, 0.0
        %s6864 = scalar_lea.vmem [#allocation6], 40
        %6865 = vst.msk [vmem:[%s6864] sm:$0x3f] %vm6862, 0.0
        %s6866 = scalar_lea.vmem [#allocation6], 8
        %6867 = vst.msk [vmem:[%s6866] sm:$0x1] %vm6058, 0.0
        %6868 = vst.msk [vmem:[%s6866 + $0x8] sm:$0x1] %vm6058, 0.0
        %6869 = vst.msk [vmem:[%s6866 + $0x10] sm:$0x1] %vm6058, 0.0
        %6870 = vst.msk [vmem:[%s6866 + $0x18] sm:$0x1] %vm6058, 0.0
        %6871 = vst.msk [vmem:[%s6866 + $0x5] sm:$0x1] %vm6058, 0.0
        %6872 = vst.msk [vmem:[%s6866 + $0xd] sm:$0x1] %vm6058, 0.0
        %6873 = vst.msk [vmem:[%s6866 + $0x15] sm:$0x1] %vm6058, 0.0
        %6874 = vst.msk [vmem:[%s6866 + $0x1d] sm:$0x1] %vm6058, 0.0
        %v6891 = vsel %vm5405, %v6763, %v6756
        %v6892 = vsel %vm5407, %v6770, %v6891
        %v6893 = vsel %vm5409, %v6777, %v6892
        %v6894 = vsel %vm5405, %v6791, %v6784
        %v6895 = vsel %vm5407, %v6798, %v6894
        %v6896 = vsel %vm5409, %v6805, %v6895
        %v6897 = vsel %vm5405, %v6819, %v6812
        %v6898 = vsel %vm5407, %v6826, %v6897
        %v6899 = vsel %vm5409, %v6833, %v6898
        %v6900 = vsel %vm5405, %v6847, %v6840
        %v6901 = vsel %vm5407, %v6854, %v6900
        %v6902 = vsel %vm5409, %v6861, %v6901
        %vm6907 = vcmask 125952
        %6908 = vst.msk [vmem:[%s6866 + $0x1] sm:$0xf] %vm6907, %v6893
        %6909 = vst.msk [vmem:[%s6866 + $0x9] sm:$0xf] %vm6907, %v6896
        %6910 = vst.msk [vmem:[%s6866 + $0x11] sm:$0xf] %vm6907, %v6899
        %6911 = vst.msk [vmem:[%s6866 + $0x19] sm:$0xf] %vm6907, %v6902
        %v6912 = vld [vmem:[#allocation6] sm:$0xf]
        %v6913 = vld [vmem:[#allocation6 + $0x8] sm:$0xf]
        %v6914 = vld [vmem:[#allocation6 + $0x10] sm:$0xf]
        %v6915 = vld [vmem:[#allocation6 + $0x18] sm:$0xf]
        %v6916 = vld [vmem:[#allocation6 + $0x1] sm:$0xf]
        %v6917 = vld [vmem:[#allocation6 + $0x9] sm:$0xf]
        %v6918 = vld [vmem:[#allocation6 + $0x11] sm:$0xf]
        %v6919 = vld [vmem:[#allocation6 + $0x19] sm:$0xf]
        %v6920 = vld [vmem:[#allocation6 + $0x2] sm:$0xf]
        %v6921 = vld [vmem:[#allocation6 + $0xa] sm:$0xf]
        %v6922 = vld [vmem:[#allocation6 + $0x12] sm:$0xf]
        %v6923 = vld [vmem:[#allocation6 + $0x1a] sm:$0xf]
        %v6924 = vld [vmem:[%s6866] sm:$0xf]
        %v6925 = vld [vmem:[%s6866 + $0x8] sm:$0xf]
        %v6926 = vld [vmem:[%s6866 + $0x10] sm:$0xf]
        %v6927 = vld [vmem:[%s6866 + $0x18] sm:$0xf]
        %v6928 = vld [vmem:[%s6866 + $0x1] sm:$0xf]
        %v6929 = vld [vmem:[%s6866 + $0x9] sm:$0xf]
        %v6930 = vld [vmem:[%s6866 + $0x11] sm:$0xf]
        %v6931 = vld [vmem:[%s6866 + $0x19] sm:$0xf]
        %v6932 = vld [vmem:[%s6866 + $0x2] sm:$0xf]
        %v6933 = vld [vmem:[%s6866 + $0xa] sm:$0xf]
        %v6934 = vld [vmem:[%s6866 + $0x12] sm:$0xf]
        %v6935 = vld [vmem:[%s6866 + $0x1a] sm:$0xf]
        %s6936 = scalar_lea.vmem [#allocation6], 16
        %v6937 = vld [vmem:[%s6936] sm:$0xf]
        %v6938 = vld [vmem:[%s6936 + $0x8] sm:$0xf]
        %v6939 = vld [vmem:[%s6936 + $0x10] sm:$0xf]
        %v6940 = vld [vmem:[%s6936 + $0x18] sm:$0xf]
        %v6941 = vld [vmem:[%s6936 + $0x1] sm:$0xf]
        %v6942 = vld [vmem:[%s6936 + $0x9] sm:$0xf]
        %v6943 = vld [vmem:[%s6936 + $0x11] sm:$0xf]
        %v6944 = vld [vmem:[%s6936 + $0x19] sm:$0xf]
        %v6945 = vld [vmem:[%s6936 + $0x2] sm:$0xf]
        %v6946 = vld [vmem:[%s6936 + $0xa] sm:$0xf]
        %v6947 = vld [vmem:[%s6936 + $0x12] sm:$0xf]
        %v6948 = vld [vmem:[%s6936 + $0x1a] sm:$0xf]
        %6953 = vrot.lane.b32.xlu0 %v6916, 16
        %v6954 = vpop.permute.xlu0 %6953
        %6955 = vrot.lane.b32.xlu0 %v6917, 16
        %v6956 = vpop.permute.xlu0 %6955
        %6957 = vrot.lane.b32.xlu0 %v6918, 16
        %v6958 = vpop.permute.xlu0 %6957
        %6959 = vrot.lane.b32.xlu0 %v6919, 16
        %v6960 = vpop.permute.xlu0 %6959
        %6969 = vrot.lane.b32.xlu0 %v6920, 32
        %v6970 = vpop.permute.xlu0 %6969
        %6971 = vrot.lane.b32.xlu0 %v6921, 32
        %v6972 = vpop.permute.xlu0 %6971
        %6973 = vrot.lane.b32.xlu0 %v6922, 32
        %v6974 = vpop.permute.xlu0 %6973
        %6975 = vrot.lane.b32.xlu0 %v6923, 32
        %v6976 = vpop.permute.xlu0 %6975
        %6985 = vrot.lane.b32.xlu0 %v6924, 48
        %v6986 = vpop.permute.xlu0 %6985
        %6987 = vrot.lane.b32.xlu0 %v6925, 48
        %v6988 = vpop.permute.xlu0 %6987
        %6989 = vrot.lane.b32.xlu0 %v6926, 48
        %v6990 = vpop.permute.xlu0 %6989
        %6991 = vrot.lane.b32.xlu0 %v6927, 48
        %v6992 = vpop.permute.xlu0 %6991
        %7001 = vrot.lane.b32.xlu0 %v6928, 64
        %v7002 = vpop.permute.xlu0 %7001
        %7003 = vrot.lane.b32.xlu0 %v6929, 64
        %v7004 = vpop.permute.xlu0 %7003
        %7005 = vrot.lane.b32.xlu0 %v6930, 64
        %v7006 = vpop.permute.xlu0 %7005
        %7007 = vrot.lane.b32.xlu0 %v6931, 64
        %v7008 = vpop.permute.xlu0 %7007
        %7017 = vrot.lane.b32.xlu0 %v6932, 80
        %v7018 = vpop.permute.xlu0 %7017
        %7019 = vrot.lane.b32.xlu0 %v6933, 80
        %v7020 = vpop.permute.xlu0 %7019
        %7021 = vrot.lane.b32.xlu0 %v6934, 80
        %v7022 = vpop.permute.xlu0 %7021
        %7023 = vrot.lane.b32.xlu0 %v6935, 80
        %v7024 = vpop.permute.xlu0 %7023
        %7033 = vrot.lane.b32.xlu0 %v6937, 96
        %v7034 = vpop.permute.xlu0 %7033
        %7035 = vrot.lane.b32.xlu0 %v6938, 96
        %v7036 = vpop.permute.xlu0 %7035
        %7037 = vrot.lane.b32.xlu0 %v6939, 96
        %v7038 = vpop.permute.xlu0 %7037
        %7039 = vrot.lane.b32.xlu0 %v6940, 96
        %v7040 = vpop.permute.xlu0 %7039
        %7049 = vrot.lane.b32.xlu0 %v6941, 112
        %v7050 = vpop.permute.xlu0 %7049
        %7051 = vrot.lane.b32.xlu0 %v6942, 112
        %v7052 = vpop.permute.xlu0 %7051
        %7053 = vrot.lane.b32.xlu0 %v6943, 112
        %v7054 = vpop.permute.xlu0 %7053
        %7055 = vrot.lane.b32.xlu0 %v6944, 112
        %v7056 = vpop.permute.xlu0 %7055
        %v7061 = vsel %vm3801, %v6912, %v6954
        %v7062 = vsel %vm3801, %v6913, %v6956
        %v7063 = vsel %vm3801, %v6914, %v6958
        %v7064 = vsel %vm3801, %v6915, %v6960
        %v7065 = vsel %vm3866, %v7061, %v6970
        %v7066 = vsel %vm3866, %v7062, %v6972
        %v7067 = vsel %vm3866, %v7063, %v6974
        %v7068 = vsel %vm3866, %v7064, %v6976
        %v7069 = vsel %vm3932, %v7065, %v6986
        %v7070 = vsel %vm3932, %v7066, %v6988
        %v7071 = vsel %vm3932, %v7067, %v6990
        %v7072 = vsel %vm3932, %v7068, %v6992
        %v7073 = vsel %vm3998, %v7069, %v7002
        %v7074 = vsel %vm3998, %v7070, %v7004
        %v7075 = vsel %vm3998, %v7071, %v7006
        %v7076 = vsel %vm3998, %v7072, %v7008
        %v7077 = vsel %vm6412, %v7073, %v7018
        %v7078 = vsel %vm6412, %v7074, %v7020
        %v7079 = vsel %vm6412, %v7075, %v7022
        %v7080 = vsel %vm6412, %v7076, %v7024
        %v7081 = vsel %vm6421, %v7077, %v7034
        %v7082 = vsel %vm6421, %v7078, %v7036
        %v7083 = vsel %vm6421, %v7079, %v7038
        %v7084 = vsel %vm6421, %v7080, %v7040
        %v7085 = vsel %vm6430, %v7081, %v7050
        %v7086 = vsel %vm6430, %v7082, %v7052
        %v7087 = vsel %vm6430, %v7083, %v7054
        %v7088 = vsel %vm6430, %v7084, %v7056
        %v7097 = vcombine.low %v7085, %v6945
        %v7098 = vcombine.low %v7086, %v6946
        %v7099 = vcombine.low %v7087, %v6947
        %v7100 = vcombine.low %v7088, %v6948
        %v7101 = vld [vmem:[%s1 + $0xa8] sm:$0xf]
        %v7102 = vld [vmem:[%s1 + $0xac] sm:$0xf]
        %v7103 = vld [vmem:[%s1 + $0xb0] sm:$0xf]
        %v7104 = vld [vmem:[%s1 + $0xb4] sm:$0xf]
        %v7105 = vld [vmem:[%s1 + $0xb8] sm:$0xf]
        %v7106 = vld [vmem:[%s1 + $0xbc] sm:$0xf]
        %v7107 = vld [vmem:[%s1 + $0xc0] sm:$0xf]
        %v7108 = vld [vmem:[%s1 + $0xc4] sm:$0xf]
        %v7109 = vld [vmem:[%s1 + $0xc8] sm:$0xf]
        %v7110 = vld [vmem:[%s1 + $0xcc] sm:$0xf]
        %v7111 = vld [vmem:[%s1 + $0xd0] sm:$0xf]
        %v7112 = vld [vmem:[%s1 + $0xd4] sm:$0xf]
        %v7113 = vld [vmem:[%s1 + $0xd8] sm:$0xf]
        %v7114 = vld [vmem:[%s1 + $0xdc] sm:$0xf]
        %v7115 = vld [vmem:[%s1 + $0xe0] sm:$0xf]
        %v7116 = vld [vmem:[%s1 + $0xe4] sm:$0xf]
        %v7117 = vld [vmem:[%s1 + $0xe8] sm:$0xf]
        %v7118 = vld [vmem:[%s1 + $0xec] sm:$0xf]
        %v7119 = vcombine.low %v7097, %v7098
        %v7120 = vcombine.high %v7097, %v7098
        %v7121 = vcombine.low %v7099, %v7100
        %v7122 = vcombine.high %v7099, %v7100
        %v7127 = vpack.c.bf16 %v7121, %v7119
        %v7128 = vpack.c.bf16 %v7122, %v7120
        %s7129 = scalar_lea.vmem %s2, 16
        %v7130 = vld [vmem:[%s7129] sm:$0x7]
        %v7131 = vlaneseq
        %v7132 = vshrl.u32 %v7131, 7
        %v7133 = vsub.s32 0, %v7132
        %v7134 = vrot.slane %v7130, %v7133
        %v7153 = vunpack.c.l.b16 %v7101
        %v7154 = vunpack.c.l.b16 %v7102
        %v7155 = vunpack.c.l.b16 %v7103
        %v7156 = vunpack.c.l.b16 %v7104
        %v7157 = vunpack.c.l.b16 %v7105
        %v7158 = vunpack.c.l.b16 %v7106
        %v7159 = vunpack.c.l.b16 %v7107
        %v7160 = vunpack.c.l.b16 %v7108
        %v7161 = vunpack.c.l.b16 %v7109
        %v7162 = vunpack.c.l.b16 %v7110
        %v7163 = vunpack.c.l.b16 %v7111
        %v7164 = vunpack.c.l.b16 %v7112
        %v7165 = vunpack.c.l.b16 %v7113
        %v7166 = vunpack.c.l.b16 %v7114
        %v7167 = vunpack.c.l.b16 %v7115
        %v7168 = vunpack.c.l.b16 %v7116
        %v7169 = vunpack.c.l.b16 %v7117
        %v7170 = vunpack.c.l.b16 %v7118
        %v7171 = vpack.c.b16 %v7154, %v7153
        %v7172 = vpack.c.b16 %v7156, %v7155
        %v7173 = vpack.c.b16 %v7158, %v7157
        %v7174 = vpack.c.b16 %v7160, %v7159
        %v7175 = vpack.c.b16 %v7162, %v7161
        %v7176 = vpack.c.b16 %v7164, %v7163
        %v7177 = vpack.c.b16 %v7166, %v7165
        %v7178 = vpack.c.b16 %v7168, %v7167
        %v7179 = vpack.c.b16 %v7170, %v7169
        %v7190 = vsel %vm3801, %v7128, 0
        %7192 = vmatprep.subr.bf16.mxu0 0
        %7193 = vmatpush1.bf16.msra.mxu0 %v7171
        %7194 = vmatprep.subr.bf16.mxu0 0
        %7195 = vmatpush1.bf16.msra.mxu0 %v7172
        %7196 = vmatprep.subr.bf16.mxu0 0
        %7197 = vmatpush1.bf16.msra.mxu0 %v7173
        %7198 = vmatprep.subr.bf16.mxu0 0
        %7199 = vmatpush1.bf16.msra.mxu0 %v7174
        %7200 = vmatprep.subr.bf16.mxu0 0
        %7201 = vmatpush1.bf16.msra.mxu0 %v7175
        %7202 = vmatprep.subr.bf16.mxu0 0
        %7203 = vmatpush1.bf16.msra.mxu0 %v7176
        %7204 = vmatprep.subr.bf16.mxu0 0
        %7205 = vmatpush1.bf16.msra.mxu0 %v7177
        %7206 = vmatprep.subr.bf16.mxu0 0
        %7207 = vmatpush1.bf16.msra.mxu0 %v7178
        %7208 = vmatprep.subr.bf16.mxu0 0
        %7209 = vmatpush1.bf16.msra.mxu0 %v7179
        %7210 = vmatprep.subr.bf16.mxu0 0
        %7211 = vmatpush1.bf16.msra.mxu0 0
        %7212 = vmatprep.subr.bf16.mxu0 0
        %7213 = vmatpush1.bf16.msra.mxu0 0
        %7214 = vmatprep.subr.bf16.mxu0 0
        %7215 = vmatpush1.bf16.msra.mxu0 0
        %7216 = vmatprep.subr.bf16.mxu0 0
        %7217 = vmatpush1.bf16.msra.mxu0 0
        %7218 = vmatprep.subr.bf16.mxu0 0
        %7219 = vmatpush1.bf16.msra.mxu0 0
        %7220 = vmatprep.subr.bf16.mxu0 0
        %7221 = vmatpush1.bf16.msra.mxu0 0
        %7222 = vmatprep.subr.bf16.mxu0 0
        %7223 = vmatpush1.bf16.msra.mxu0 0
        %7224 = vmatprep.mubr.bf16.mxu0 %v7190
        %7225 = vmatmul.mubr.bf16.gmra.mrb[0].mxu0 %v7127
        %v7226 = vpop.f32.mrb[0].mxu0
        %v7227 = vadd.f32 %v7134, %v7226
        %v7228 = vpop.f32.mrb[0].mxu0
        %v7229 = vpop.f32.mrb[0].mxu0
        %v7230 = vadd.f32 %v7134, %v7229
        %v7231 = vpop.f32.mrb[0].mxu0
        %7232 = vdwg.mxu0
        %vm7233 = vcmp.gt.f32.partialorder %v7227, 0.0
        %vm7234 = vcmp.gt.f32.partialorder %v7230, 0.0
        %v7235 = vmul.f32 %v7227, 0.1
        %v7236 = vmul.f32 %v7230, 0.1
        %v7237 = vsel %vm7233, %v7227, %v7235
        %v7238 = vsel %vm7234, %v7230, %v7236
        %v7239 = vlaneseq
        %v7240 = vshrl.u32 %v7239, 7
        %v7241 = vsub.s32 1, %v7240
        %v7242 = vrot.slane %v7130, %v7241
        %v7243 = vmul.f32 %v7237, %v7242
        %v7244 = vmul.f32 %v7238, %v7242
        %v7245 = vlaneseq
        %v7246 = vshrl.u32 %v7245, 7
        %v7247 = vsub.s32 2, %v7246
        %v7248 = vrot.slane %v7130, %v7247
        %v7249 = vadd.f32 %v7243, %v7248
        %v7250 = vadd.f32 %v7244, %v7248
        %v7253 = vcombine.high %v7249, %v7249
        %v7254 = vcombine.high %v7250, %v7250
        %vm7257 = vcmask 259072
        %7258 = vst.msk [vmem:[#allocation7] sm:$0x3f] %vm7257, 0.0
        %s7259 = scalar_lea.vmem [#allocation7], 40
        %7260 = vst.msk [vmem:[%s7259] sm:$0x3f] %vm7257, 0.0
        %s7261 = scalar_lea.vmem [#allocation7], 8
        %vm7262 = vcmask 253952
        %7263 = vst.msk [vmem:[%s7261] sm:$0x1] %vm7262, 0.0
        %7264 = vst.msk [vmem:[%s7261 + $0x8] sm:$0x1] %vm7262, 0.0
        %7265 = vst.msk [vmem:[%s7261 + $0x10] sm:$0x1] %vm7262, 0.0
        %7266 = vst.msk [vmem:[%s7261 + $0x18] sm:$0x1] %vm7262, 0.0
        %7267 = vst.msk [vmem:[%s7261 + $0x5] sm:$0x1] %vm7262, 0.0
        %7268 = vst.msk [vmem:[%s7261 + $0xd] sm:$0x1] %vm7262, 0.0
        %7269 = vst.msk [vmem:[%s7261 + $0x15] sm:$0x1] %vm7262, 0.0
        %7270 = vst.msk [vmem:[%s7261 + $0x1d] sm:$0x1] %vm7262, 0.0
        %vm7271 = vcmask 257024
        %7272 = vst.msk [vmem:[%s7261 + $0x1] sm:$0xf] %vm7271, %v7249
        %7273 = vst.msk [vmem:[%s7261 + $0x9] sm:$0xf] %vm7271, %v7253
        %7274 = vst.msk [vmem:[%s7261 + $0x11] sm:$0xf] %vm7271, %v7250
        %7275 = vst.msk [vmem:[%s7261 + $0x19] sm:$0xf] %vm7271, %v7254
        %v7276 = vld [vmem:[#allocation7] sm:$0xf]
        %v7277 = vld [vmem:[#allocation7 + $0x8] sm:$0xf]
        %v7278 = vld [vmem:[#allocation7 + $0x10] sm:$0xf]
        %v7279 = vld [vmem:[#allocation7 + $0x18] sm:$0xf]
        %v7280 = vld [vmem:[#allocation7 + $0x1] sm:$0xf]
        %v7281 = vld [vmem:[#allocation7 + $0x9] sm:$0xf]
        %v7282 = vld [vmem:[#allocation7 + $0x11] sm:$0xf]
        %v7283 = vld [vmem:[#allocation7 + $0x19] sm:$0xf]
        %v7284 = vld [vmem:[#allocation7 + $0x2] sm:$0xf]
        %v7285 = vld [vmem:[#allocation7 + $0xa] sm:$0xf]
        %v7286 = vld [vmem:[#allocation7 + $0x12] sm:$0xf]
        %v7287 = vld [vmem:[#allocation7 + $0x1a] sm:$0xf]
        %v7288 = vld [vmem:[%s7261] sm:$0xf]
        %v7289 = vld [vmem:[%s7261 + $0x8] sm:$0xf]
        %v7290 = vld [vmem:[%s7261 + $0x10] sm:$0xf]
        %v7291 = vld [vmem:[%s7261 + $0x18] sm:$0xf]
        %v7292 = vld [vmem:[%s7261 + $0x1] sm:$0xf]
        %v7293 = vld [vmem:[%s7261 + $0x9] sm:$0xf]
        %v7294 = vld [vmem:[%s7261 + $0x11] sm:$0xf]
        %v7295 = vld [vmem:[%s7261 + $0x19] sm:$0xf]
        %v7296 = vld [vmem:[%s7261 + $0x2] sm:$0xf]
        %v7297 = vld [vmem:[%s7261 + $0xa] sm:$0xf]
        %v7298 = vld [vmem:[%s7261 + $0x12] sm:$0xf]
        %v7299 = vld [vmem:[%s7261 + $0x1a] sm:$0xf]
        %s7300 = scalar_lea.vmem [#allocation7], 16
        %v7301 = vld [vmem:[%s7300] sm:$0xf]
        %v7302 = vld [vmem:[%s7300 + $0x8] sm:$0xf]
        %v7303 = vld [vmem:[%s7300 + $0x10] sm:$0xf]
        %v7304 = vld [vmem:[%s7300 + $0x18] sm:$0xf]
        %v7305 = vld [vmem:[%s7300 + $0x1] sm:$0xf]
        %v7306 = vld [vmem:[%s7300 + $0x9] sm:$0xf]
        %v7307 = vld [vmem:[%s7300 + $0x11] sm:$0xf]
        %v7308 = vld [vmem:[%s7300 + $0x19] sm:$0xf]
        %v7309 = vld [vmem:[%s7300 + $0x2] sm:$0xf]
        %v7310 = vld [vmem:[%s7300 + $0xa] sm:$0xf]
        %v7311 = vld [vmem:[%s7300 + $0x12] sm:$0xf]
        %v7312 = vld [vmem:[%s7300 + $0x1a] sm:$0xf]
        %7317 = vrot.lane.b32.xlu0 %v7280, 32
        %v7318 = vpop.permute.xlu0 %7317
        %7319 = vrot.lane.b32.xlu0 %v7281, 32
        %v7320 = vpop.permute.xlu0 %7319
        %7321 = vrot.lane.b32.xlu0 %v7282, 32
        %v7322 = vpop.permute.xlu0 %7321
        %7323 = vrot.lane.b32.xlu0 %v7283, 32
        %v7324 = vpop.permute.xlu0 %7323
        %7333 = vrot.lane.b32.xlu0 %v7284, 64
        %v7334 = vpop.permute.xlu0 %7333
        %7335 = vrot.lane.b32.xlu0 %v7285, 64
        %v7336 = vpop.permute.xlu0 %7335
        %7337 = vrot.lane.b32.xlu0 %v7286, 64
        %v7338 = vpop.permute.xlu0 %7337
        %7339 = vrot.lane.b32.xlu0 %v7287, 64
        %v7340 = vpop.permute.xlu0 %7339
        %7349 = vrot.lane.b32.xlu0 %v7288, 96
        %v7350 = vpop.permute.xlu0 %7349
        %7351 = vrot.lane.b32.xlu0 %v7289, 96
        %v7352 = vpop.permute.xlu0 %7351
        %7353 = vrot.lane.b32.xlu0 %v7290, 96
        %v7354 = vpop.permute.xlu0 %7353
        %7355 = vrot.lane.b32.xlu0 %v7291, 96
        %v7356 = vpop.permute.xlu0 %7355
        %7365 = vrot.lane.b32.xlu0 %v7296, 32
        %v7366 = vpop.permute.xlu0 %7365
        %7367 = vrot.lane.b32.xlu0 %v7297, 32
        %v7368 = vpop.permute.xlu0 %7367
        %7369 = vrot.lane.b32.xlu0 %v7298, 32
        %v7370 = vpop.permute.xlu0 %7369
        %7371 = vrot.lane.b32.xlu0 %v7299, 32
        %v7372 = vpop.permute.xlu0 %7371
        %7381 = vrot.lane.b32.xlu0 %v7301, 64
        %v7382 = vpop.permute.xlu0 %7381
        %7383 = vrot.lane.b32.xlu0 %v7302, 64
        %v7384 = vpop.permute.xlu0 %7383
        %7385 = vrot.lane.b32.xlu0 %v7303, 64
        %v7386 = vpop.permute.xlu0 %7385
        %7387 = vrot.lane.b32.xlu0 %v7304, 64
        %v7388 = vpop.permute.xlu0 %7387
        %7397 = vrot.lane.b32.xlu0 %v7305, 96
        %v7398 = vpop.permute.xlu0 %7397
        %7399 = vrot.lane.b32.xlu0 %v7306, 96
        %v7400 = vpop.permute.xlu0 %7399
        %7401 = vrot.lane.b32.xlu0 %v7307, 96
        %v7402 = vpop.permute.xlu0 %7401
        %7403 = vrot.lane.b32.xlu0 %v7308, 96
        %v7404 = vpop.permute.xlu0 %7403
        %v7409 = vsel %vm3866, %v7276, %v7318
        %v7410 = vsel %vm3866, %v7277, %v7320
        %v7411 = vsel %vm3866, %v7278, %v7322
        %v7412 = vsel %vm3866, %v7279, %v7324
        %v7413 = vsel %vm3998, %v7409, %v7334
        %v7414 = vsel %vm3998, %v7410, %v7336
        %v7415 = vsel %vm3998, %v7411, %v7338
        %v7416 = vsel %vm3998, %v7412, %v7340
        %v7417 = vsel %vm6421, %v7413, %v7350
        %v7418 = vsel %vm6421, %v7414, %v7352
        %v7419 = vsel %vm6421, %v7415, %v7354
        %v7420 = vsel %vm6421, %v7416, %v7356
        %v7421 = vsel %vm3866, %v7292, %v7366
        %v7422 = vsel %vm3866, %v7293, %v7368
        %v7423 = vsel %vm3866, %v7294, %v7370
        %v7424 = vsel %vm3866, %v7295, %v7372
        %v7425 = vsel %vm3998, %v7421, %v7382
        %v7426 = vsel %vm3998, %v7422, %v7384
        %v7427 = vsel %vm3998, %v7423, %v7386
        %v7428 = vsel %vm3998, %v7424, %v7388
        %v7429 = vsel %vm6421, %v7425, %v7398
        %v7430 = vsel %vm6421, %v7426, %v7400
        %v7431 = vsel %vm6421, %v7427, %v7402
        %v7432 = vsel %vm6421, %v7428, %v7404
        %v7445 = vcombine.low %v7417, %v7429
        %v7446 = vcombine.low %v7418, %v7430
        %v7447 = vcombine.low %v7419, %v7431
        %v7448 = vcombine.low %v7420, %v7432
        %v7449 = vld [vmem:[%s1 + $0xf0] sm:$0xf]
        %v7450 = vld [vmem:[%s1 + $0xf4] sm:$0xf]
        %v7451 = vld [vmem:[%s1 + $0xf8] sm:$0xf]
        %v7452 = vld [vmem:[%s1 + $0xfc] sm:$0xf]
        %v7453 = vld [vmem:[%s1 + $0x100] sm:$0xf]
        %v7454 = vld [vmem:[%s1 + $0x104] sm:$0xf]
        %v7455 = vld [vmem:[%s1 + $0x108] sm:$0xf]
        %v7456 = vld [vmem:[%s1 + $0x10c] sm:$0xf]
        %v7457 = vld [vmem:[%s1 + $0x110] sm:$0xf]
        %v7458 = vld [vmem:[%s1 + $0x114] sm:$0xf]
        %v7459 = vld [vmem:[%s1 + $0x118] sm:$0xf]
        %v7460 = vld [vmem:[%s1 + $0x11c] sm:$0xf]
        %v7461 = vld [vmem:[%s1 + $0x120] sm:$0xf]
        %v7462 = vld [vmem:[%s1 + $0x124] sm:$0xf]
        %v7463 = vld [vmem:[%s1 + $0x128] sm:$0xf]
        %v7464 = vld [vmem:[%s1 + $0x12c] sm:$0xf]
        %v7465 = vld [vmem:[%s1 + $0x130] sm:$0xf]
        %v7466 = vld [vmem:[%s1 + $0x134] sm:$0xf]
        %v7467 = vld [vmem:[%s1 + $0x138] sm:$0xf]
        %v7468 = vld [vmem:[%s1 + $0x13c] sm:$0xf]
        %v7469 = vld [vmem:[%s1 + $0x140] sm:$0xf]
        %v7470 = vld [vmem:[%s1 + $0x144] sm:$0xf]
        %v7471 = vld [vmem:[%s1 + $0x148] sm:$0xf]
        %v7472 = vld [vmem:[%s1 + $0x14c] sm:$0xf]
        %v7473 = vld [vmem:[%s1 + $0x150] sm:$0xf]
        %v7474 = vld [vmem:[%s1 + $0x154] sm:$0xf]
        %v7475 = vld [vmem:[%s1 + $0x158] sm:$0xf]
        %v7476 = vld [vmem:[%s1 + $0x15c] sm:$0xf]
        %v7477 = vld [vmem:[%s1 + $0x160] sm:$0xf]
        %v7478 = vld [vmem:[%s1 + $0x164] sm:$0xf]
        %v7479 = vld [vmem:[%s1 + $0x168] sm:$0xf]
        %v7480 = vld [vmem:[%s1 + $0x16c] sm:$0xf]
        %v7481 = vld [vmem:[%s1 + $0x170] sm:$0xf]
        %v7482 = vld [vmem:[%s1 + $0x174] sm:$0xf]
        %v7483 = vld [vmem:[%s1 + $0x178] sm:$0xf]
        %v7484 = vld [vmem:[%s1 + $0x17c] sm:$0xf]
        %v7485 = vcombine.low %v7445, %v7446
        %v7486 = vcombine.high %v7445, %v7446
        %v7487 = vcombine.low %v7309, %v7310
        %v7488 = vcombine.low %v7447, %v7448
        %v7489 = vcombine.high %v7447, %v7448
        %v7490 = vcombine.low %v7311, %v7312
        %v7497 = vpack.c.bf16 %v7488, %v7485
        %v7498 = vpack.c.bf16 %v7489, %v7486
        %v7499 = vpack.c.bf16 %v7490, %v7487
        %s7500 = scalar_lea.vmem %s2, 20
        %v7501 = vld [vmem:[%s7500] sm:$0x7]
        %v7502 = vlaneseq
        %v7503 = vshrl.u32 %v7502, 7
        %v7504 = vsub.s32 0, %v7503
        %v7505 = vrot.slane %v7501, %v7504
        %v7542 = vunpack.c.l.b16 %v7449
        %v7543 = vunpack.c.l.b16 %v7450
        %v7544 = vunpack.c.l.b16 %v7451
        %v7545 = vunpack.c.l.b16 %v7452
        %v7546 = vunpack.c.l.b16 %v7453
        %v7547 = vunpack.c.l.b16 %v7454
        %v7548 = vunpack.c.l.b16 %v7455
        %v7549 = vunpack.c.l.b16 %v7456
        %v7550 = vunpack.c.l.b16 %v7457
        %v7551 = vunpack.c.l.b16 %v7458
        %v7552 = vunpack.c.l.b16 %v7459
        %v7553 = vunpack.c.l.b16 %v7460
        %v7554 = vunpack.c.l.b16 %v7461
        %v7555 = vunpack.c.l.b16 %v7462
        %v7556 = vunpack.c.l.b16 %v7463
        %v7557 = vunpack.c.l.b16 %v7464
        %v7558 = vunpack.c.l.b16 %v7465
        %v7559 = vunpack.c.l.b16 %v7466
        %v7560 = vunpack.c.l.b16 %v7467
        %v7561 = vunpack.c.l.b16 %v7468
        %v7562 = vunpack.c.l.b16 %v7469
        %v7563 = vunpack.c.l.b16 %v7470
        %v7564 = vunpack.c.l.b16 %v7471
        %v7565 = vunpack.c.l.b16 %v7472
        %v7566 = vunpack.c.l.b16 %v7473
        %v7567 = vunpack.c.l.b16 %v7474
        %v7568 = vunpack.c.l.b16 %v7475
        %v7569 = vunpack.c.l.b16 %v7476
        %v7570 = vunpack.c.l.b16 %v7477
        %v7571 = vunpack.c.l.b16 %v7478
        %v7572 = vunpack.c.l.b16 %v7479
        %v7573 = vunpack.c.l.b16 %v7480
        %v7574 = vunpack.c.l.b16 %v7481
        %v7575 = vunpack.c.l.b16 %v7482
        %v7576 = vunpack.c.l.b16 %v7483
        %v7577 = vunpack.c.l.b16 %v7484
        %v7578 = vpack.c.b16 %v7543, %v7542
        %v7579 = vpack.c.b16 %v7545, %v7544
        %v7580 = vpack.c.b16 %v7547, %v7546
        %v7581 = vpack.c.b16 %v7549, %v7548
        %v7582 = vpack.c.b16 %v7551, %v7550
        %v7583 = vpack.c.b16 %v7553, %v7552
        %v7584 = vpack.c.b16 %v7555, %v7554
        %v7585 = vpack.c.b16 %v7557, %v7556
        %v7586 = vpack.c.b16 %v7559, %v7558
        %v7587 = vpack.c.b16 %v7561, %v7560
        %v7588 = vpack.c.b16 %v7563, %v7562
        %v7589 = vpack.c.b16 %v7565, %v7564
        %v7590 = vpack.c.b16 %v7567, %v7566
        %v7591 = vpack.c.b16 %v7569, %v7568
        %v7592 = vpack.c.b16 %v7571, %v7570
        %v7593 = vpack.c.b16 %v7573, %v7572
        %v7594 = vpack.c.b16 %v7575, %v7574
        %v7595 = vpack.c.b16 %v7577, %v7576
        %v7615 = vsel %vm3866, %v7499, 0
        %7617 = vmatprep.subr.bf16.mxu0 0
        %7618 = vmatpush1.bf16.msra.mxu0 %v7578
        %7619 = vmatprep.subr.bf16.mxu0 0
        %7620 = vmatpush1.bf16.msra.mxu0 %v7579
        %7621 = vmatprep.subr.bf16.mxu0 0
        %7622 = vmatpush1.bf16.msra.mxu0 %v7580
        %7623 = vmatprep.subr.bf16.mxu0 0
        %7624 = vmatpush1.bf16.msra.mxu0 %v7581
        %7625 = vmatprep.subr.bf16.mxu0 0
        %7626 = vmatpush1.bf16.msra.mxu0 %v7582
        %7627 = vmatprep.subr.bf16.mxu0 0
        %7628 = vmatpush1.bf16.msra.mxu0 %v7583
        %7629 = vmatprep.subr.bf16.mxu0 0
        %7630 = vmatpush1.bf16.msra.mxu0 %v7584
        %7631 = vmatprep.subr.bf16.mxu0 0
        %7632 = vmatpush1.bf16.msra.mxu0 %v7585
        %7633 = vmatprep.subr.bf16.mxu0 0
        %7634 = vmatpush1.bf16.msra.mxu0 %v7586
        %7635 = vmatprep.subr.bf16.mxu0 0
        %7636 = vmatpush1.bf16.msra.mxu0 %v7587
        %7637 = vmatprep.subr.bf16.mxu0 0
        %7638 = vmatpush1.bf16.msra.mxu0 %v7588
        %7639 = vmatprep.subr.bf16.mxu0 0
        %7640 = vmatpush1.bf16.msra.mxu0 %v7589
        %7641 = vmatprep.subr.bf16.mxu0 0
        %7642 = vmatpush1.bf16.msra.mxu0 %v7590
        %7643 = vmatprep.subr.bf16.mxu0 0
        %7644 = vmatpush1.bf16.msra.mxu0 %v7591
        %7645 = vmatprep.subr.bf16.mxu0 0
        %7646 = vmatpush1.bf16.msra.mxu0 %v7592
        %7647 = vmatprep.subr.bf16.mxu0 0
        %7648 = vmatpush1.bf16.msra.mxu0 %v7593
        %7649 = vmatprep.mubr.bf16.mxu0 %v7498
        %7650 = vmatmul.mubr.bf16.gmra.mrb[0].mxu0 %v7497
        %v7651 = vpop.f32.mrb[0].mxu0
        %v7652 = vadd.f32 %v7505, %v7651
        %v7653 = vpop.f32.mrb[0].mxu0
        %v7654 = vpop.f32.mrb[0].mxu0
        %v7655 = vadd.f32 %v7505, %v7654
        %v7656 = vpop.f32.mrb[0].mxu0
        %7657 = vdwg.mxu0
        %7658 = vmatprep.subr.bf16.mxu0 0
        %7659 = vmatpush1.bf16.msra.mxu0 %v7594
        %7660 = vmatprep.subr.bf16.mxu0 0
        %7661 = vmatpush1.bf16.msra.mxu0 %v7595
        %7662 = vmatprep.subr.bf16.mxu0 0
        %7663 = vmatpush1.bf16.msra.mxu0 0
        %7664 = vmatprep.subr.bf16.mxu0 0
        %7665 = vmatpush1.bf16.msra.mxu0 0
        %7666 = vmatprep.subr.bf16.mxu0 0
        %7667 = vmatpush1.bf16.msra.mxu0 0
        %7668 = vmatprep.subr.bf16.mxu0 0
        %7669 = vmatpush1.bf16.msra.mxu0 0
        %7670 = vmatprep.subr.bf16.mxu0 0
        %7671 = vmatpush1.bf16.msra.mxu0 0
        %7672 = vmatprep.subr.bf16.mxu0 0
        %7673 = vmatpush1.bf16.msra.mxu0 0
        %7674 = vmatprep.subr.bf16.mxu0 0
        %7675 = vmatpush1.bf16.msra.mxu0 0
        %7676 = vmatprep.subr.bf16.mxu0 0
        %7677 = vmatpush1.bf16.msra.mxu0 0
        %7678 = vmatprep.subr.bf16.mxu0 0
        %7679 = vmatpush1.bf16.msra.mxu0 0
        %7680 = vmatprep.subr.bf16.mxu0 0
        %7681 = vmatpush1.bf16.msra.mxu0 0
        %7682 = vmatprep.subr.bf16.mxu0 0
        %7683 = vmatpush1.bf16.msra.mxu0 0
        %7684 = vmatprep.subr.bf16.mxu0 0
        %7685 = vmatpush1.bf16.msra.mxu0 0
        %7686 = vmatprep.subr.bf16.mxu0 0
        %7687 = vmatpush1.bf16.msra.mxu0 0
        %7688 = vmatprep.subr.bf16.mxu0 0
        %7689 = vmatpush1.bf16.msra.mxu0 0
        %7690 = vmatprep.mubr.bf16.mxu0 0
        %7691 = vmatmul.mubr.bf16.gmra.mrb[0].mxu0 %v7615
        %v7692 = vpop.f32.mrb[0].mxu0
        %v7693 = vadd.f32 %v7652, %v7692
        %v7694 = vpop.f32.mrb[0].mxu0
        %v7695 = vpop.f32.mrb[0].mxu0
        %v7696 = vadd.f32 %v7655, %v7695
        %v7697 = vpop.f32.mrb[0].mxu0
        %7698 = vdwg.mxu0
        %vm7699 = vcmp.gt.f32.partialorder %v7693, 0.0
        %vm7700 = vcmp.gt.f32.partialorder %v7696, 0.0
        %v7701 = vmul.f32 %v7693, 0.1
        %v7702 = vmul.f32 %v7696, 0.1
        %v7703 = vsel %vm7699, %v7693, %v7701
        %v7704 = vsel %vm7700, %v7696, %v7702
        %v7705 = vlaneseq
        %v7706 = vshrl.u32 %v7705, 7
        %v7707 = vsub.s32 1, %v7706
        %v7708 = vrot.slane %v7501, %v7707
        %v7709 = vmul.f32 %v7703, %v7708
        %v7710 = vmul.f32 %v7704, %v7708
        %v7711 = vlaneseq
        %v7712 = vshrl.u32 %v7711, 7
        %v7713 = vsub.s32 2, %v7712
        %v7714 = vrot.slane %v7501, %v7713
        %v7715 = vadd.f32 %v7709, %v7714
        %v7716 = vadd.f32 %v7710, %v7714
        %v7719 = vcombine.high %v7715, %v7715
        %v7720 = vcombine.high %v7716, %v7716
        %v7723 = vsel %vm7271, %v7715, -inf
        %v7724 = vsel %vm7271, %v7719, -inf
        %v7725 = vmax.f32 %v7723, %v7724
        %v7726 = vsel %vm7271, %v7716, -inf
        %v7727 = vsel %vm7271, %v7720, -inf
        %v7728 = vmax.f32 %v7726, %v7727
        %v7732 = vunpack.c.l.s4 1983009808
        %v7733 = vunpack.c.0.s8 %v7732
        %v7734 = vlaneseq
        %v7735 = vshrl.u32 %v7734, 7
        %v7736 = vsub.s32 %v7733, %v7735
        %v7737 = vrot.slane %v7725, %v7736
        %v7738 = vcombine.high %v7737, %v7737
        %v7740 = vunpack.c.l.s4 1983009808
        %v7741 = vunpack.c.0.s8 %v7740
        %v7742 = vlaneseq
        %v7743 = vshrl.u32 %v7742, 7
        %v7744 = vsub.s32 %v7741, %v7743
        %v7745 = vrot.slane %v7728, %v7744
        %v7746 = vcombine.high %v7745, %v7745
        %vm7751 = vcmask 254976
        %v7752 = vsel %vm7751, %v7737, -inf
        %v7753 = vrot.slane %v7752, 4
        %v7754 = vmax.f32 %v7752, %v7753
        %v7755 = vrot.slane %v7754, 2
        %v7756 = vmax.f32 %v7754, %v7755
        %v7757 = vrot.slane %v7756, 1
        %v7758 = vmax.f32 %v7756, %v7757
        %v7759 = vsel %vm7751, %v7738, -inf
        %v7760 = vrot.slane %v7759, 4
        %v7761 = vmax.f32 %v7759, %v7760
        %v7762 = vrot.slane %v7761, 2
        %v7763 = vmax.f32 %v7761, %v7762
        %v7764 = vrot.slane %v7763, 1
        %v7765 = vmax.f32 %v7763, %v7764
        %v7766 = vsel %vm7751, %v7745, -inf
        %v7767 = vrot.slane %v7766, 4
        %v7768 = vmax.f32 %v7766, %v7767
        %v7769 = vrot.slane %v7768, 2
        %v7770 = vmax.f32 %v7768, %v7769
        %v7771 = vrot.slane %v7770, 1
        %v7772 = vmax.f32 %v7770, %v7771
        %v7773 = vsel %vm7751, %v7746, -inf
        %v7774 = vrot.slane %v7773, 4
        %v7775 = vmax.f32 %v7773, %v7774
        %v7776 = vrot.slane %v7775, 2
        %v7777 = vmax.f32 %v7775, %v7776
        %v7778 = vrot.slane %v7777, 1
        %v7779 = vmax.f32 %v7777, %v7778
        %7780 = vst.msk [vmem:[#allocation8] sm:$0xf] %vm7271, 0.0
        %s7781 = scalar_lea.vmem [#allocation8], 12
        %7782 = vst.msk [vmem:[%s7781] sm:$0xf] %vm7271, 0.0
        %s7783 = scalar_lea.vmem [#allocation8], 4
        %7784 = vst.msk [vmem:[%s7783] sm:$0x1] %vm7262, 0.0
        %7785 = vst.msk [vmem:[%s7783 + $0x4] sm:$0x1] %vm7262, 0.0
        %7786 = vst.msk [vmem:[%s7783 + $0x3] sm:$0x1] %vm7262, 0.0
        %7787 = vst.msk [vmem:[%s7783 + $0x7] sm:$0x1] %vm7262, 0.0
        %v7792 = vsel %vm5405, %v7765, %v7758
        %v7793 = vsel %vm5405, %v7779, %v7772
        %7796 = vst.msk [vmem:[%s7783 + $0x1] sm:$0x3] %vm7751, %v7792
        %7797 = vst.msk [vmem:[%s7783 + $0x5] sm:$0x3] %vm7751, %v7793
        %v7798 = vld [vmem:[#allocation8] sm:$0x3]
        %v7799 = vld [vmem:[#allocation8 + $0x4] sm:$0x3]
        %v7800 = vld [vmem:[#allocation8 + $0x1] sm:$0x3]
        %v7801 = vld [vmem:[#allocation8 + $0x5] sm:$0x3]
        %v7802 = vld [vmem:[#allocation8 + $0x2] sm:$0x3]
        %v7803 = vld [vmem:[#allocation8 + $0x6] sm:$0x3]
        %v7804 = vld [vmem:[%s7783] sm:$0x3]
        %v7805 = vld [vmem:[%s7783 + $0x4] sm:$0x3]
        %v7806 = vld [vmem:[%s7783 + $0x1] sm:$0x3]
        %v7807 = vld [vmem:[%s7783 + $0x5] sm:$0x3]
        %v7808 = vld [vmem:[%s7783 + $0x2] sm:$0x3]
        %v7809 = vld [vmem:[%s7783 + $0x6] sm:$0x3]
        %s7810 = scalar_lea.vmem [#allocation8], 8
        %v7811 = vld [vmem:[%s7810] sm:$0x3]
        %v7812 = vld [vmem:[%s7810 + $0x4] sm:$0x3]
        %v7813 = vld [vmem:[%s7810 + $0x1] sm:$0x3]
        %v7814 = vld [vmem:[%s7810 + $0x5] sm:$0x3]
        %v7815 = vld [vmem:[%s7810 + $0x2] sm:$0x3]
        %v7816 = vld [vmem:[%s7810 + $0x6] sm:$0x3]
        %7819 = vrot.lane.b32.xlu0 %v7800, 32
        %v7820 = vpop.permute.xlu0 %7819
        %7821 = vrot.lane.b32.xlu0 %v7801, 32
        %v7822 = vpop.permute.xlu0 %7821
        %7827 = vrot.lane.b32.xlu0 %v7802, 64
        %v7828 = vpop.permute.xlu0 %7827
        %7829 = vrot.lane.b32.xlu0 %v7803, 64
        %v7830 = vpop.permute.xlu0 %7829
        %7835 = vrot.lane.b32.xlu0 %v7804, 96
        %v7836 = vpop.permute.xlu0 %7835
        %7837 = vrot.lane.b32.xlu0 %v7805, 96
        %v7838 = vpop.permute.xlu0 %7837
        %7843 = vrot.lane.b32.xlu0 %v7808, 32
        %v7844 = vpop.permute.xlu0 %7843
        %7845 = vrot.lane.b32.xlu0 %v7809, 32
        %v7846 = vpop.permute.xlu0 %7845
        %7851 = vrot.lane.b32.xlu0 %v7811, 64
        %v7852 = vpop.permute.xlu0 %7851
        %7853 = vrot.lane.b32.xlu0 %v7812, 64
        %v7854 = vpop.permute.xlu0 %7853
        %7859 = vrot.lane.b32.xlu0 %v7813, 96
        %v7860 = vpop.permute.xlu0 %7859
        %7861 = vrot.lane.b32.xlu0 %v7814, 96
        %v7862 = vpop.permute.xlu0 %7861
        %v7865 = vsel %vm3866, %v7798, %v7820
        %v7866 = vsel %vm3866, %v7799, %v7822
        %v7867 = vsel %vm3998, %v7865, %v7828
        %v7868 = vsel %vm3998, %v7866, %v7830
        %v7869 = vsel %vm6421, %v7867, %v7836
        %v7870 = vsel %vm6421, %v7868, %v7838
        %v7871 = vsel %vm3866, %v7806, %v7844
        %v7872 = vsel %vm3866, %v7807, %v7846
        %v7873 = vsel %vm3998, %v7871, %v7852
        %v7874 = vsel %vm3998, %v7872, %v7854
        %v7875 = vsel %vm6421, %v7873, %v7860
        %v7876 = vsel %vm6421, %v7874, %v7862
        %v7883 = vcombine.low %v7869, %v7875
        %v7885 = vunpack.c.l.s4 1983009808
        %v7886 = vunpack.c.0.s8 %v7885
        %v7887 = vlaneseq
        %v7888 = vshrl.u32 %v7887, 7
        %v7889 = vsub.s32 %v7886, %v7888
        %v7890 = vrot.slane %v7883, %v7889
        %v7892 = vunpack.c.l.s4 1983009808
        %v7893 = vunpack.c.0.s8 %v7892
        %v7894 = vlaneseq
        %v7895 = vshrl.u32 %v7894, 7
        %v7896 = vsub.s32 %v7893, %v7895
        %v7897 = vrot.slane %v7815, %v7896
        %v7898 = vcombine.low %v7890, %v7897
        %v7899 = vcombine.low %v7870, %v7876
        %v7901 = vunpack.c.l.s4 1983009808
        %v7902 = vunpack.c.0.s8 %v7901
        %v7903 = vlaneseq
        %v7904 = vshrl.u32 %v7903, 7
        %v7905 = vsub.s32 %v7902, %v7904
        %v7906 = vrot.slane %v7899, %v7905
        %v7908 = vunpack.c.l.s4 1983009808
        %v7909 = vunpack.c.0.s8 %v7908
        %v7910 = vlaneseq
        %v7911 = vshrl.u32 %v7910, 7
        %v7912 = vsub.s32 %v7909, %v7911
        %v7913 = vrot.slane %v7816, %v7912
        %v7914 = vcombine.low %v7906, %v7913
        %v7915 = vld [vmem:[%s1 + $0x180] sm:$0xf]
        %v7916 = vld [vmem:[%s1 + $0x184] sm:$0xf]
        %v7917 = vld [vmem:[%s1 + $0x188] sm:$0xf]
        %v7918 = vld [vmem:[%s1 + $0x18c] sm:$0xf]
        %v7919 = vld [vmem:[%s1 + $0x190] sm:$0xf]
        %v7920 = vld [vmem:[%s1 + $0x194] sm:$0xf]
        %v7921 = vld [vmem:[%s1 + $0x198] sm:$0xf]
        %v7922 = vld [vmem:[%s1 + $0x19c] sm:$0xf]
        %v7923 = vld [vmem:[%s1 + $0x1a0] sm:$0xf]
        %v7924 = vld [vmem:[%s1 + $0x1a4] sm:$0xf]
        %v7925 = vld [vmem:[%s1 + $0x1a8] sm:$0xf]
        %v7926 = vld [vmem:[%s1 + $0x1ac] sm:$0xf]
        %v7927 = vld [vmem:[%s1 + $0x1b0] sm:$0xf]
        %v7928 = vld [vmem:[%s1 + $0x1b4] sm:$0xf]
        %v7929 = vld [vmem:[%s1 + $0x1b8] sm:$0xf]
        %v7930 = vld [vmem:[%s1 + $0x1bc] sm:$0xf]
        %v7931 = vld [vmem:[%s1 + $0x1c0] sm:$0xf]
        %v7932 = vld [vmem:[%s1 + $0x1c4] sm:$0xf]
        %v7933 = vld [vmem:[%s1 + $0x1c8] sm:$0xf]
        %v7934 = vld [vmem:[%s1 + $0x1cc] sm:$0xf]
        %v7935 = vld [vmem:[%s1 + $0x1d0] sm:$0xf]
        %v7936 = vld [vmem:[%s1 + $0x1d4] sm:$0xf]
        %v7937 = vld [vmem:[%s1 + $0x1d8] sm:$0xf]
        %v7938 = vld [vmem:[%s1 + $0x1dc] sm:$0xf]
        %v7939 = vld [vmem:[%s1 + $0x1e0] sm:$0xf]
        %v7940 = vld [vmem:[%s1 + $0x1e4] sm:$0xf]
        %v7941 = vld [vmem:[%s1 + $0x1e8] sm:$0xf]
        %v7942 = vld [vmem:[%s1 + $0x1ec] sm:$0xf]
        %v7943 = vld [vmem:[%s1 + $0x1f0] sm:$0xf]
        %v7944 = vld [vmem:[%s1 + $0x1f4] sm:$0xf]
        %v7945 = vld [vmem:[%s1 + $0x1f8] sm:$0xf]
        %v7946 = vld [vmem:[%s1 + $0x1fc] sm:$0xf]
        %v7947 = vld [vmem:[%s1 + $0x200] sm:$0xf]
        %v7948 = vld [vmem:[%s1 + $0x204] sm:$0xf]
        %v7949 = vld [vmem:[%s1 + $0x208] sm:$0xf]
        %v7950 = vld [vmem:[%s1 + $0x20c] sm:$0xf]
        %v7951 = vcombine.low %v7898, %v7914
        %v7952 = vcombine.high %v7898, %v7914
        %v7954 = vunpack.c.l.s4 1983009808
        %v7955 = vunpack.c.0.s8 %v7954
        %v7956 = vlaneseq
        %v7957 = vshrl.u32 %v7956, 7
        %v7958 = vsub.s32 %v7955, %v7957
        %v7959 = vrot.slane %v7951, %v7958
        %v7961 = vunpack.c.l.s4 1983009808
        %v7962 = vunpack.c.0.s8 %v7961
        %v7963 = vlaneseq
        %v7964 = vshrl.u32 %v7963, 7
        %v7965 = vsub.s32 %v7962, %v7964
        %v7966 = vrot.slane %v7952, %v7965
        %v7967 = vcombine.high %v7959, %v7959
        %v7971 = vpack.c.bf16 %v7959, %v7959
        %v7972 = vpack.c.bf16 %v7967, %v7967
        %v7973 = vpack.c.bf16 %v7966, %v7966
        %s7974 = scalar_lea.vmem %s2, 24
        %v7975 = vld [vmem:[%s7974] sm:$0x7]
        %v7976 = vlaneseq
        %v7977 = vshrl.u32 %v7976, 7
        %v7978 = vsub.s32 0, %v7977
        %v7979 = vrot.slane %v7975, %v7978
        %v8016 = vunpack.c.l.b16 %v7915
        %v8017 = vunpack.c.l.b16 %v7916
        %v8018 = vunpack.c.l.b16 %v7917
        %v8019 = vunpack.c.l.b16 %v7918
        %v8020 = vunpack.c.l.b16 %v7919
        %v8021 = vunpack.c.l.b16 %v7920
        %v8022 = vunpack.c.l.b16 %v7921
        %v8023 = vunpack.c.l.b16 %v7922
        %v8024 = vunpack.c.l.b16 %v7923
        %v8025 = vunpack.c.l.b16 %v7924
        %v8026 = vunpack.c.l.b16 %v7925
        %v8027 = vunpack.c.l.b16 %v7926
        %v8028 = vunpack.c.l.b16 %v7927
        %v8029 = vunpack.c.l.b16 %v7928
        %v8030 = vunpack.c.l.b16 %v7929
        %v8031 = vunpack.c.l.b16 %v7930
        %v8032 = vunpack.c.l.b16 %v7931
        %v8033 = vunpack.c.l.b16 %v7932
        %v8034 = vunpack.c.l.b16 %v7933
        %v8035 = vunpack.c.l.b16 %v7934
        %v8036 = vunpack.c.l.b16 %v7935
        %v8037 = vunpack.c.l.b16 %v7936
        %v8038 = vunpack.c.l.b16 %v7937
        %v8039 = vunpack.c.l.b16 %v7938
        %v8040 = vunpack.c.l.b16 %v7939
        %v8041 = vunpack.c.l.b16 %v7940
        %v8042 = vunpack.c.l.b16 %v7941
        %v8043 = vunpack.c.l.b16 %v7942
        %v8044 = vunpack.c.l.b16 %v7943
        %v8045 = vunpack.c.l.b16 %v7944
        %v8046 = vunpack.c.l.b16 %v7945
        %v8047 = vunpack.c.l.b16 %v7946
        %v8048 = vunpack.c.l.b16 %v7947
        %v8049 = vunpack.c.l.b16 %v7948
        %v8050 = vunpack.c.l.b16 %v7949
        %v8051 = vunpack.c.l.b16 %v7950
        %v8052 = vpack.c.b16 %v8017, %v8016
        %v8053 = vpack.c.b16 %v8019, %v8018
        %v8054 = vpack.c.b16 %v8021, %v8020
        %v8055 = vpack.c.b16 %v8023, %v8022
        %v8056 = vpack.c.b16 %v8025, %v8024
        %v8057 = vpack.c.b16 %v8027, %v8026
        %v8058 = vpack.c.b16 %v8029, %v8028
        %v8059 = vpack.c.b16 %v8031, %v8030
        %v8060 = vpack.c.b16 %v8033, %v8032
        %v8061 = vpack.c.b16 %v8035, %v8034
        %v8062 = vpack.c.b16 %v8037, %v8036
        %v8063 = vpack.c.b16 %v8039, %v8038
        %v8064 = vpack.c.b16 %v8041, %v8040
        %v8065 = vpack.c.b16 %v8043, %v8042
        %v8066 = vpack.c.b16 %v8045, %v8044
        %v8067 = vpack.c.b16 %v8047, %v8046
        %v8068 = vpack.c.b16 %v8049, %v8048
        %v8069 = vpack.c.b16 %v8051, %v8050
        %v8089 = vsel %vm3866, %v7973, 0
        %8091 = vmatprep.subr.bf16.mxu0 0
        %8092 = vmatpush1.bf16.msra.mxu0 %v8052
        %8093 = vmatprep.subr.bf16.mxu0 0
        %8094 = vmatpush1.bf16.msra.mxu0 %v8053
        %8095 = vmatprep.subr.bf16.mxu0 0
        %8096 = vmatpush1.bf16.msra.mxu0 %v8054
        %8097 = vmatprep.subr.bf16.mxu0 0
        %8098 = vmatpush1.bf16.msra.mxu0 %v8055
        %8099 = vmatprep.subr.bf16.mxu0 0
        %8100 = vmatpush1.bf16.msra.mxu0 %v8056
        %8101 = vmatprep.subr.bf16.mxu0 0
        %8102 = vmatpush1.bf16.msra.mxu0 %v8057
        %8103 = vmatprep.subr.bf16.mxu0 0
        %8104 = vmatpush1.bf16.msra.mxu0 %v8058
        %8105 = vmatprep.subr.bf16.mxu0 0
        %8106 = vmatpush1.bf16.msra.mxu0 %v8059
        %8107 = vmatprep.subr.bf16.mxu0 0
        %8108 = vmatpush1.bf16.msra.mxu0 %v8060
        %8109 = vmatprep.subr.bf16.mxu0 0
        %8110 = vmatpush1.bf16.msra.mxu0 %v8061
        %8111 = vmatprep.subr.bf16.mxu0 0
        %8112 = vmatpush1.bf16.msra.mxu0 %v8062
        %8113 = vmatprep.subr.bf16.mxu0 0
        %8114 = vmatpush1.bf16.msra.mxu0 %v8063
        %8115 = vmatprep.subr.bf16.mxu0 0
        %8116 = vmatpush1.bf16.msra.mxu0 %v8064
        %8117 = vmatprep.subr.bf16.mxu0 0
        %8118 = vmatpush1.bf16.msra.mxu0 %v8065
        %8119 = vmatprep.subr.bf16.mxu0 0
        %8120 = vmatpush1.bf16.msra.mxu0 %v8066
        %8121 = vmatprep.subr.bf16.mxu0 0
        %8122 = vmatpush1.bf16.msra.mxu0 %v8067
        %8123 = vmatprep.mubr.bf16.mxu0 %v7972
        %8124 = vmatmul.mubr.bf16.gmra.mrb[0].mxu0 %v7971
        %v8125 = vpop.f32.mrb[0].mxu0
        %v8126 = vadd.f32 %v7979, %v8125
        %v8127 = vpop.f32.mrb[0].mxu0
        %v8128 = vpop.f32.mrb[0].mxu0
        %v8129 = vpop.f32.mrb[0].mxu0
        %8130 = vdwg.mxu0
        %8131 = vmatprep.subr.bf16.mxu0 0
        %8132 = vmatpush1.bf16.msra.mxu0 %v8068
        %8133 = vmatprep.subr.bf16.mxu0 0
        %8134 = vmatpush1.bf16.msra.mxu0 %v8069
        %8135 = vmatprep.subr.bf16.mxu0 0
        %8136 = vmatpush1.bf16.msra.mxu0 0
        %8137 = vmatprep.subr.bf16.mxu0 0
        %8138 = vmatpush1.bf16.msra.mxu0 0
        %8139 = vmatprep.subr.bf16.mxu0 0
        %8140 = vmatpush1.bf16.msra.mxu0 0
        %8141 = vmatprep.subr.bf16.mxu0 0
        %8142 = vmatpush1.bf16.msra.mxu0 0
        %8143 = vmatprep.subr.bf16.mxu0 0
        %8144 = vmatpush1.bf16.msra.mxu0 0
        %8145 = vmatprep.subr.bf16.mxu0 0
        %8146 = vmatpush1.bf16.msra.mxu0 0
        %8147 = vmatprep.subr.bf16.mxu0 0
        %8148 = vmatpush1.bf16.msra.mxu0 0
        %8149 = vmatprep.subr.bf16.mxu0 0
        %8150 = vmatpush1.bf16.msra.mxu0 0
        %8151 = vmatprep.subr.bf16.mxu0 0
        %8152 = vmatpush1.bf16.msra.mxu0 0
        %8153 = vmatprep.subr.bf16.mxu0 0
        %8154 = vmatpush1.bf16.msra.mxu0 0
        %8155 = vmatprep.subr.bf16.mxu0 0
        %8156 = vmatpush1.bf16.msra.mxu0 0
        %8157 = vmatprep.subr.bf16.mxu0 0
        %8158 = vmatpush1.bf16.msra.mxu0 0
        %8159 = vmatprep.subr.bf16.mxu0 0
        %8160 = vmatpush1.bf16.msra.mxu0 0
        %8161 = vmatprep.subr.bf16.mxu0 0
        %8162 = vmatpush1.bf16.msra.mxu0 0
        %8163 = vmatprep.mubr.bf16.mxu0 0
        %8164 = vmatmul.mubr.bf16.gmra.mrb[0].mxu0 %v8089
        %v8165 = vpop.f32.mrb[0].mxu0
        %v8166 = vadd.f32 %v8126, %v8165
        %v8167 = vpop.f32.mrb[0].mxu0
        %v8168 = vpop.f32.mrb[0].mxu0
        %v8169 = vpop.f32.mrb[0].mxu0
        %8170 = vdwg.mxu0
        %vm8171 = vcmp.gt.f32.partialorder %v8166, 0.0
        %v8172 = vmul.f32 %v8166, 0.1
        %v8173 = vsel %vm8171, %v8166, %v8172
        %v8174 = vlaneseq
        %v8175 = vshrl.u32 %v8174, 7
        %v8176 = vsub.s32 1, %v8175
        %v8177 = vrot.slane %v7975, %v8176
        %v8178 = vmul.f32 %v8173, %v8177
        %v8179 = vlaneseq
        %v8180 = vshrl.u32 %v8179, 7
        %v8181 = vsub.s32 2, %v8180
        %v8182 = vrot.slane %v7975, %v8181
        %v8183 = vadd.f32 %v8178, %v8182
        %v8186 = vunpack.c.l.s4 1983009808
        %v8187 = vunpack.c.0.s8 %v8186
        %v8188 = vlaneseq
        %v8189 = vshrl.u32 %v8188, 7
        %v8190 = vsub.s32 %v8187, %v8189
        %v8191 = vrot.slane %v8183, %v8190
        %v8192 = vcombine.high %v8191, %v8191
        %vm8195 = vcmask 519168
        %8196 = vst.msk [vmem:[#allocation9] sm:$0xf] %vm8195, 0.0
        %s8197 = scalar_lea.vmem [#allocation9], 12
        %8198 = vst.msk [vmem:[%s8197] sm:$0xf] %vm8195, 0.0
        %s8199 = scalar_lea.vmem [#allocation9], 4
        %vm8200 = vcmask 516096
        %8201 = vst.msk [vmem:[%s8199] sm:$0x1] %vm8200, 0.0
        %8202 = vst.msk [vmem:[%s8199 + $0x4] sm:$0x1] %vm8200, 0.0
        %8203 = vst.msk [vmem:[%s8199 + $0x3] sm:$0x1] %vm8200, 0.0
        %8204 = vst.msk [vmem:[%s8199 + $0x7] sm:$0x1] %vm8200, 0.0
        %vm8205 = vcmask 517120
        %8206 = vst.msk [vmem:[%s8199 + $0x1] sm:$0x3] %vm8205, %v8191
        %8207 = vst.msk [vmem:[%s8199 + $0x5] sm:$0x3] %vm8205, %v8192
        %v8208 = vld [vmem:[#allocation9] sm:$0x3]
        %v8209 = vld [vmem:[#allocation9 + $0x4] sm:$0x3]
        %v8210 = vld [vmem:[#allocation9 + $0x1] sm:$0x3]
        %v8211 = vld [vmem:[#allocation9 + $0x5] sm:$0x3]
        %v8212 = vld [vmem:[#allocation9 + $0x2] sm:$0x3]
        %v8213 = vld [vmem:[#allocation9 + $0x6] sm:$0x3]
        %v8214 = vld [vmem:[%s8199] sm:$0x3]
        %v8215 = vld [vmem:[%s8199 + $0x4] sm:$0x3]
        %v8216 = vld [vmem:[%s8199 + $0x1] sm:$0x3]
        %v8217 = vld [vmem:[%s8199 + $0x5] sm:$0x3]
        %v8218 = vld [vmem:[%s8199 + $0x2] sm:$0x3]
        %v8219 = vld [vmem:[%s8199 + $0x6] sm:$0x3]
        %s8220 = scalar_lea.vmem [#allocation9], 8
        %v8221 = vld [vmem:[%s8220] sm:$0x3]
        %v8222 = vld [vmem:[%s8220 + $0x4] sm:$0x3]
        %v8223 = vld [vmem:[%s8220 + $0x1] sm:$0x3]
        %v8224 = vld [vmem:[%s8220 + $0x5] sm:$0x3]
        %v8225 = vld [vmem:[%s8220 + $0x2] sm:$0x3]
        %v8226 = vld [vmem:[%s8220 + $0x6] sm:$0x3]
        %8229 = vrot.lane.b32.xlu0 %v8210, 64
        %v8230 = vpop.permute.xlu0 %8229
        %8231 = vrot.lane.b32.xlu0 %v8211, 64
        %v8232 = vpop.permute.xlu0 %8231
        %8237 = vrot.lane.b32.xlu0 %v8214, 64
        %v8238 = vpop.permute.xlu0 %8237
        %8239 = vrot.lane.b32.xlu0 %v8215, 64
        %v8240 = vpop.permute.xlu0 %8239
        %8245 = vrot.lane.b32.xlu0 %v8218, 64
        %v8246 = vpop.permute.xlu0 %8245
        %8247 = vrot.lane.b32.xlu0 %v8219, 64
        %v8248 = vpop.permute.xlu0 %8247
        %8253 = vrot.lane.b32.xlu0 %v8223, 64
        %v8254 = vpop.permute.xlu0 %8253
        %8255 = vrot.lane.b32.xlu0 %v8224, 64
        %v8256 = vpop.permute.xlu0 %8255
        %v8259 = vsel %vm3998, %v8208, %v8230
        %v8260 = vsel %vm3998, %v8209, %v8232
        %v8261 = vsel %vm3998, %v8212, %v8238
        %v8262 = vsel %vm3998, %v8213, %v8240
        %v8263 = vsel %vm3998, %v8216, %v8246
        %v8264 = vsel %vm3998, %v8217, %v8248
        %v8265 = vsel %vm3998, %v8221, %v8254
        %v8266 = vsel %vm3998, %v8222, %v8256
        %v8277 = vcombine.low %v8259, %v8261
        %v8278 = vcombine.low %v8263, %v8265
        %v8280 = vunpack.c.l.s4 1983009808
        %v8281 = vunpack.c.0.s8 %v8280
        %v8282 = vlaneseq
        %v8283 = vshrl.u32 %v8282, 7
        %v8284 = vsub.s32 %v8281, %v8283
        %v8285 = vrot.slane %v8277, %v8284
        %v8287 = vunpack.c.l.s4 1983009808
        %v8288 = vunpack.c.0.s8 %v8287
        %v8289 = vlaneseq
        %v8290 = vshrl.u32 %v8289, 7
        %v8291 = vsub.s32 %v8288, %v8290
        %v8292 = vrot.slane %v8278, %v8291
        %v8293 = vcombine.low %v8285, %v8292
        %v8295 = vunpack.c.l.s4 1983009808
        %v8296 = vunpack.c.0.s8 %v8295
        %v8297 = vlaneseq
        %v8298 = vshrl.u32 %v8297, 7
        %v8299 = vsub.s32 %v8296, %v8298
        %v8300 = vrot.slane %v8225, %v8299
        %v8301 = vcombine.low %v8260, %v8262
        %v8302 = vcombine.low %v8264, %v8266
        %v8304 = vunpack.c.l.s4 1983009808
        %v8305 = vunpack.c.0.s8 %v8304
        %v8306 = vlaneseq
        %v8307 = vshrl.u32 %v8306, 7
        %v8308 = vsub.s32 %v8305, %v8307
        %v8309 = vrot.slane %v8301, %v8308
        %v8311 = vunpack.c.l.s4 1983009808
        %v8312 = vunpack.c.0.s8 %v8311
        %v8313 = vlaneseq
        %v8314 = vshrl.u32 %v8313, 7
        %v8315 = vsub.s32 %v8312, %v8314
        %v8316 = vrot.slane %v8302, %v8315
        %v8317 = vcombine.low %v8309, %v8316
        %v8319 = vunpack.c.l.s4 1983009808
        %v8320 = vunpack.c.0.s8 %v8319
        %v8321 = vlaneseq
        %v8322 = vshrl.u32 %v8321, 7
        %v8323 = vsub.s32 %v8320, %v8322
        %v8324 = vrot.slane %v8226, %v8323
        %v8325 = vld [vmem:[%s1 + $0x210] sm:$0xf]
        %v8326 = vld [vmem:[%s1 + $0x214] sm:$0xf]
        %v8327 = vld [vmem:[%s1 + $0x218] sm:$0xf]
        %v8328 = vld [vmem:[%s1 + $0x21c] sm:$0xf]
        %v8329 = vld [vmem:[%s1 + $0x220] sm:$0xf]
        %v8330 = vld [vmem:[%s1 + $0x224] sm:$0xf]
        %v8331 = vld [vmem:[%s1 + $0x228] sm:$0xf]
        %v8332 = vld [vmem:[%s1 + $0x22c] sm:$0xf]
        %v8333 = vld [vmem:[%s1 + $0x230] sm:$0xf]
        %v8334 = vld [vmem:[%s1 + $0x234] sm:$0xf]
        %v8335 = vld [vmem:[%s1 + $0x238] sm:$0xf]
        %v8336 = vld [vmem:[%s1 + $0x23c] sm:$0xf]
        %v8337 = vld [vmem:[%s1 + $0x240] sm:$0xf]
        %v8338 = vld [vmem:[%s1 + $0x244] sm:$0xf]
        %v8339 = vld [vmem:[%s1 + $0x248] sm:$0xf]
        %v8340 = vld [vmem:[%s1 + $0x24c] sm:$0xf]
        %v8341 = vld [vmem:[%s1 + $0x250] sm:$0xf]
        %v8342 = vld [vmem:[%s1 + $0x254] sm:$0xf]
        %v8343 = vld [vmem:[%s1 + $0x258] sm:$0xf]
        %v8344 = vld [vmem:[%s1 + $0x25c] sm:$0xf]
        %v8345 = vld [vmem:[%s1 + $0x260] sm:$0xf]
        %v8346 = vld [vmem:[%s1 + $0x264] sm:$0xf]
        %v8347 = vld [vmem:[%s1 + $0x268] sm:$0xf]
        %v8348 = vld [vmem:[%s1 + $0x26c] sm:$0xf]
        %v8349 = vld [vmem:[%s1 + $0x270] sm:$0xf]
        %v8350 = vld [vmem:[%s1 + $0x274] sm:$0xf]
        %v8351 = vld [vmem:[%s1 + $0x278] sm:$0xf]
        %v8352 = vld [vmem:[%s1 + $0x27c] sm:$0xf]
        %v8353 = vld [vmem:[%s1 + $0x280] sm:$0xf]
        %v8354 = vld [vmem:[%s1 + $0x284] sm:$0xf]
        %v8355 = vld [vmem:[%s1 + $0x288] sm:$0xf]
        %v8356 = vld [vmem:[%s1 + $0x28c] sm:$0xf]
        %v8357 = vld [vmem:[%s1 + $0x290] sm:$0xf]
        %v8358 = vld [vmem:[%s1 + $0x294] sm:$0xf]
        %v8359 = vld [vmem:[%s1 + $0x298] sm:$0xf]
        %v8360 = vld [vmem:[%s1 + $0x29c] sm:$0xf]
        %v8361 = vld [vmem:[%s1 + $0x2a0] sm:$0xf]
        %v8362 = vld [vmem:[%s1 + $0x2a4] sm:$0xf]
        %v8363 = vld [vmem:[%s1 + $0x2a8] sm:$0xf]
        %v8364 = vld [vmem:[%s1 + $0x2ac] sm:$0xf]
        %v8365 = vld [vmem:[%s1 + $0x2b0] sm:$0xf]
        %v8366 = vld [vmem:[%s1 + $0x2b4] sm:$0xf]
        %v8367 = vld [vmem:[%s1 + $0x2b8] sm:$0xf]
        %v8368 = vld [vmem:[%s1 + $0x2bc] sm:$0xf]
        %v8369 = vld [vmem:[%s1 + $0x2c0] sm:$0xf]
        %v8370 = vld [vmem:[%s1 + $0x2c4] sm:$0xf]
        %v8371 = vld [vmem:[%s1 + $0x2c8] sm:$0xf]
        %v8372 = vld [vmem:[%s1 + $0x2cc] sm:$0xf]
        %v8373 = vld [vmem:[%s1 + $0x2d0] sm:$0xf]
        %v8374 = vld [vmem:[%s1 + $0x2d4] sm:$0xf]
        %v8375 = vld [vmem:[%s1 + $0x2d8] sm:$0xf]
        %v8376 = vld [vmem:[%s1 + $0x2dc] sm:$0xf]
        %v8377 = vld [vmem:[%s1 + $0x2e0] sm:$0xf]
        %v8378 = vld [vmem:[%s1 + $0x2e4] sm:$0xf]
        %v8379 = vld [vmem:[%s1 + $0x2e8] sm:$0xf]
        %v8380 = vld [vmem:[%s1 + $0x2ec] sm:$0xf]
        %v8381 = vld [vmem:[%s1 + $0x2f0] sm:$0xf]
        %v8382 = vld [vmem:[%s1 + $0x2f4] sm:$0xf]
        %v8383 = vld [vmem:[%s1 + $0x2f8] sm:$0xf]
        %v8384 = vld [vmem:[%s1 + $0x2fc] sm:$0xf]
        %v8385 = vld [vmem:[%s1 + $0x300] sm:$0xf]
        %v8386 = vld [vmem:[%s1 + $0x304] sm:$0xf]
        %v8387 = vld [vmem:[%s1 + $0x308] sm:$0xf]
        %v8388 = vld [vmem:[%s1 + $0x30c] sm:$0xf]
        %v8389 = vld [vmem:[%s1 + $0x310] sm:$0xf]
        %v8390 = vld [vmem:[%s1 + $0x314] sm:$0xf]
        %v8391 = vld [vmem:[%s1 + $0x318] sm:$0xf]
        %v8392 = vld [vmem:[%s1 + $0x31c] sm:$0xf]
        %v8393 = vld [vmem:[%s1 + $0x320] sm:$0xf]
        %v8394 = vld [vmem:[%s1 + $0x324] sm:$0xf]
        %v8395 = vld [vmem:[%s1 + $0x328] sm:$0xf]
        %v8396 = vld [vmem:[%s1 + $0x32c] sm:$0xf]
        %v8397 = vcombine.low %v8293, %v8317
        %v8398 = vcombine.high %v8293, %v8317
        %v8400 = vunpack.c.l.s4 1983009808
        %v8401 = vunpack.c.0.s8 %v8400
        %v8402 = vlaneseq
        %v8403 = vshrl.u32 %v8402, 7
        %v8404 = vsub.s32 %v8401, %v8403
        %v8405 = vrot.slane %v8397, %v8404
        %v8407 = vunpack.c.l.s4 1983009808
        %v8408 = vunpack.c.0.s8 %v8407
        %v8409 = vlaneseq
        %v8410 = vshrl.u32 %v8409, 7
        %v8411 = vsub.s32 %v8408, %v8410
        %v8412 = vrot.slane %v8398, %v8411
        %v8413 = vcombine.high %v8405, %v8405
        %v8414 = vcombine.high %v8412, %v8412
        %v8415 = vcombine.low %v8300, %v8324
        %v8417 = vunpack.c.l.s4 1983009808
        %v8418 = vunpack.c.0.s8 %v8417
        %v8419 = vlaneseq
        %v8420 = vshrl.u32 %v8419, 7
        %v8421 = vsub.s32 %v8418, %v8420
        %v8422 = vrot.slane %v8415, %v8421
        %v8428 = vpack.c.bf16 %v8405, %v8405
        %v8429 = vpack.c.bf16 %v8413, %v8413
        %v8430 = vpack.c.bf16 %v8412, %v8412
        %v8431 = vpack.c.bf16 %v8414, %v8414
        %v8432 = vpack.c.bf16 %v8422, %v8422
        %s8433 = scalar_lea.vmem %s2, 28
        %v8434 = vld [vmem:[%s8433] sm:$0x7]
        %v8435 = vlaneseq
        %v8436 = vshrl.u32 %v8435, 7
        %v8437 = vsub.s32 0, %v8436
        %v8438 = vrot.slane %v8434, %v8437
        %v8511 = vunpack.c.l.b16 %v8325
        %v8512 = vunpack.c.l.b16 %v8326
        %v8513 = vunpack.c.l.b16 %v8327
        %v8514 = vunpack.c.l.b16 %v8328
        %v8515 = vunpack.c.l.b16 %v8329
        %v8516 = vunpack.c.l.b16 %v8330
        %v8517 = vunpack.c.l.b16 %v8331
        %v8518 = vunpack.c.l.b16 %v8332
        %v8519 = vunpack.c.l.b16 %v8333
        %v8520 = vunpack.c.l.b16 %v8334
        %v8521 = vunpack.c.l.b16 %v8335
        %v8522 = vunpack.c.l.b16 %v8336
        %v8523 = vunpack.c.l.b16 %v8337
        %v8524 = vunpack.c.l.b16 %v8338
        %v8525 = vunpack.c.l.b16 %v8339
        %v8526 = vunpack.c.l.b16 %v8340
        %v8527 = vunpack.c.l.b16 %v8341
        %v8528 = vunpack.c.l.b16 %v8342
        %v8529 = vunpack.c.l.b16 %v8343
        %v8530 = vunpack.c.l.b16 %v8344
        %v8531 = vunpack.c.l.b16 %v8345
        %v8532 = vunpack.c.l.b16 %v8346
        %v8533 = vunpack.c.l.b16 %v8347
        %v8534 = vunpack.c.l.b16 %v8348
        %v8535 = vunpack.c.l.b16 %v8349
        %v8536 = vunpack.c.l.b16 %v8350
        %v8537 = vunpack.c.l.b16 %v8351
        %v8538 = vunpack.c.l.b16 %v8352
        %v8539 = vunpack.c.l.b16 %v8353
        %v8540 = vunpack.c.l.b16 %v8354
        %v8541 = vunpack.c.l.b16 %v8355
        %v8542 = vunpack.c.l.b16 %v8356
        %v8543 = vunpack.c.l.b16 %v8357
        %v8544 = vunpack.c.l.b16 %v8358
        %v8545 = vunpack.c.l.b16 %v8359
        %v8546 = vunpack.c.l.b16 %v8360
        %v8547 = vunpack.c.l.b16 %v8361
        %v8548 = vunpack.c.l.b16 %v8362
        %v8549 = vunpack.c.l.b16 %v8363
        %v8550 = vunpack.c.l.b16 %v8364
        %v8551 = vunpack.c.l.b16 %v8365
        %v8552 = vunpack.c.l.b16 %v8366
        %v8553 = vunpack.c.l.b16 %v8367
        %v8554 = vunpack.c.l.b16 %v8368
        %v8555 = vunpack.c.l.b16 %v8369
        %v8556 = vunpack.c.l.b16 %v8370
        %v8557 = vunpack.c.l.b16 %v8371
        %v8558 = vunpack.c.l.b16 %v8372
        %v8559 = vunpack.c.l.b16 %v8373
        %v8560 = vunpack.c.l.b16 %v8374
        %v8561 = vunpack.c.l.b16 %v8375
        %v8562 = vunpack.c.l.b16 %v8376
        %v8563 = vunpack.c.l.b16 %v8377
        %v8564 = vunpack.c.l.b16 %v8378
        %v8565 = vunpack.c.l.b16 %v8379
        %v8566 = vunpack.c.l.b16 %v8380
        %v8567 = vunpack.c.l.b16 %v8381
        %v8568 = vunpack.c.l.b16 %v8382
        %v8569 = vunpack.c.l.b16 %v8383
        %v8570 = vunpack.c.l.b16 %v8384
        %v8571 = vunpack.c.l.b16 %v8385
        %v8572 = vunpack.c.l.b16 %v8386
        %v8573 = vunpack.c.l.b16 %v8387
        %v8574 = vunpack.c.l.b16 %v8388
        %v8575 = vunpack.c.l.b16 %v8389
        %v8576 = vunpack.c.l.b16 %v8390
        %v8577 = vunpack.c.l.b16 %v8391
        %v8578 = vunpack.c.l.b16 %v8392
        %v8579 = vunpack.c.l.b16 %v8393
        %v8580 = vunpack.c.l.b16 %v8394
        %v8581 = vunpack.c.l.b16 %v8395
        %v8582 = vunpack.c.l.b16 %v8396
        %v8583 = vpack.c.b16 %v8512, %v8511
        %v8584 = vpack.c.b16 %v8514, %v8513
        %v8585 = vpack.c.b16 %v8516, %v8515
        %v8586 = vpack.c.b16 %v8518, %v8517
        %v8587 = vpack.c.b16 %v8520, %v8519
        %v8588 = vpack.c.b16 %v8522, %v8521
        %v8589 = vpack.c.b16 %v8524, %v8523
        %v8590 = vpack.c.b16 %v8526, %v8525
        %v8591 = vpack.c.b16 %v8528, %v8527
        %v8592 = vpack.c.b16 %v8530, %v8529
        %v8593 = vpack.c.b16 %v8532, %v8531
        %v8594 = vpack.c.b16 %v8534, %v8533
        %v8595 = vpack.c.b16 %v8536, %v8535
        %v8596 = vpack.c.b16 %v8538, %v8537
        %v8597 = vpack.c.b16 %v8540, %v8539
        %v8598 = vpack.c.b16 %v8542, %v8541
        %v8599 = vpack.c.b16 %v8544, %v8543
        %v8600 = vpack.c.b16 %v8546, %v8545
        %v8601 = vpack.c.b16 %v8548, %v8547
        %v8602 = vpack.c.b16 %v8550, %v8549
        %v8603 = vpack.c.b16 %v8552, %v8551
        %v8604 = vpack.c.b16 %v8554, %v8553
        %v8605 = vpack.c.b16 %v8556, %v8555
        %v8606 = vpack.c.b16 %v8558, %v8557
        %v8607 = vpack.c.b16 %v8560, %v8559
        %v8608 = vpack.c.b16 %v8562, %v8561
        %v8609 = vpack.c.b16 %v8564, %v8563
        %v8610 = vpack.c.b16 %v8566, %v8565
        %v8611 = vpack.c.b16 %v8568, %v8567
        %v8612 = vpack.c.b16 %v8570, %v8569
        %v8613 = vpack.c.b16 %v8572, %v8571
        %v8614 = vpack.c.b16 %v8574, %v8573
        %v8615 = vpack.c.b16 %v8576, %v8575
        %v8616 = vpack.c.b16 %v8578, %v8577
        %v8617 = vpack.c.b16 %v8580, %v8579
        %v8618 = vpack.c.b16 %v8582, %v8581
        %v8656 = vsel %vm3998, %v8432, 0
        %8658 = vmatprep.subr.bf16.mxu0 0
        %8659 = vmatpush1.bf16.msra.mxu0 %v8583
        %8660 = vmatprep.subr.bf16.mxu0 0
        %8661 = vmatpush1.bf16.msra.mxu0 %v8584
        %8662 = vmatprep.subr.bf16.mxu0 0
        %8663 = vmatpush1.bf16.msra.mxu0 %v8585
        %8664 = vmatprep.subr.bf16.mxu0 0
        %8665 = vmatpush1.bf16.msra.mxu0 %v8586
        %8666 = vmatprep.subr.bf16.mxu0 0
        %8667 = vmatpush1.bf16.msra.mxu0 %v8587
        %8668 = vmatprep.subr.bf16.mxu0 0
        %8669 = vmatpush1.bf16.msra.mxu0 %v8588
        %8670 = vmatprep.subr.bf16.mxu0 0
        %8671 = vmatpush1.bf16.msra.mxu0 %v8589
        %8672 = vmatprep.subr.bf16.mxu0 0
        %8673 = vmatpush1.bf16.msra.mxu0 %v8590
        %8674 = vmatprep.subr.bf16.mxu0 0
        %8675 = vmatpush1.bf16.msra.mxu0 %v8591
        %8676 = vmatprep.subr.bf16.mxu0 0
        %8677 = vmatpush1.bf16.msra.mxu0 %v8592
        %8678 = vmatprep.subr.bf16.mxu0 0
        %8679 = vmatpush1.bf16.msra.mxu0 %v8593
        %8680 = vmatprep.subr.bf16.mxu0 0
        %8681 = vmatpush1.bf16.msra.mxu0 %v8594
        %8682 = vmatprep.subr.bf16.mxu0 0
        %8683 = vmatpush1.bf16.msra.mxu0 %v8595
        %8684 = vmatprep.subr.bf16.mxu0 0
        %8685 = vmatpush1.bf16.msra.mxu0 %v8596
        %8686 = vmatprep.subr.bf16.mxu0 0
        %8687 = vmatpush1.bf16.msra.mxu0 %v8597
        %8688 = vmatprep.subr.bf16.mxu0 0
        %8689 = vmatpush1.bf16.msra.mxu0 %v8598
        %8690 = vmatprep.mubr.bf16.mxu0 %v8429
        %8691 = vmatmul.mubr.bf16.gmra.mrb[0].mxu0 %v8428
        %v8692 = vpop.f32.mrb[0].mxu0
        %v8693 = vadd.f32 %v8438, %v8692
        %v8694 = vpop.f32.mrb[0].mxu0
        %v8695 = vpop.f32.mrb[0].mxu0
        %v8696 = vpop.f32.mrb[0].mxu0
        %8697 = vdwg.mxu0
        %8698 = vmatprep.subr.bf16.mxu0 0
        %8699 = vmatpush1.bf16.msra.mxu0 %v8599
        %8700 = vmatprep.subr.bf16.mxu0 0
        %8701 = vmatpush1.bf16.msra.mxu0 %v8600
        %8702 = vmatprep.subr.bf16.mxu0 0
        %8703 = vmatpush1.bf16.msra.mxu0 %v8601
        %8704 = vmatprep.subr.bf16.mxu0 0
        %8705 = vmatpush1.bf16.msra.mxu0 %v8602
        %8706 = vmatprep.subr.bf16.mxu0 0
        %8707 = vmatpush1.bf16.msra.mxu0 %v8603
        %8708 = vmatprep.subr.bf16.mxu0 0
        %8709 = vmatpush1.bf16.msra.mxu0 %v8604
        %8710 = vmatprep.subr.bf16.mxu0 0
        %8711 = vmatpush1.bf16.msra.mxu0 %v8605
        %8712 = vmatprep.subr.bf16.mxu0 0
        %8713 = vmatpush1.bf16.msra.mxu0 %v8606
        %8714 = vmatprep.subr.bf16.mxu0 0
        %8715 = vmatpush1.bf16.msra.mxu0 %v8607
        %8716 = vmatprep.subr.bf16.mxu0 0
        %8717 = vmatpush1.bf16.msra.mxu0 %v8608
        %8718 = vmatprep.subr.bf16.mxu0 0
        %8719 = vmatpush1.bf16.msra.mxu0 %v8609
        %8720 = vmatprep.subr.bf16.mxu0 0
        %8721 = vmatpush1.bf16.msra.mxu0 %v8610
        %8722 = vmatprep.subr.bf16.mxu0 0
        %8723 = vmatpush1.bf16.msra.mxu0 %v8611
        %8724 = vmatprep.subr.bf16.mxu0 0
        %8725 = vmatpush1.bf16.msra.mxu0 %v8612
        %8726 = vmatprep.subr.bf16.mxu0 0
        %8727 = vmatpush1.bf16.msra.mxu0 %v8613
        %8728 = vmatprep.subr.bf16.mxu0 0
        %8729 = vmatpush1.bf16.msra.mxu0 %v8614
        %8730 = vmatprep.mubr.bf16.mxu0 %v8431
        %8731 = vmatmul.mubr.bf16.gmra.mrb[0].mxu0 %v8430
        %v8732 = vpop.f32.mrb[0].mxu0
        %v8733 = vadd.f32 %v8693, %v8732
        %v8734 = vpop.f32.mrb[0].mxu0
        %v8735 = vpop.f32.mrb[0].mxu0
        %v8736 = vpop.f32.mrb[0].mxu0
        %8737 = vdwg.mxu0
        %8738 = vmatprep.subr.bf16.mxu0 0
        %8739 = vmatpush1.bf16.msra.mxu0 %v8615
        %8740 = vmatprep.subr.bf16.mxu0 0
        %8741 = vmatpush1.bf16.msra.mxu0 %v8616
        %8742 = vmatprep.subr.bf16.mxu0 0
        %8743 = vmatpush1.bf16.msra.mxu0 %v8617
        %8744 = vmatprep.subr.bf16.mxu0 0
        %8745 = vmatpush1.bf16.msra.mxu0 %v8618
        %8746 = vmatprep.subr.bf16.mxu0 0
        %8747 = vmatpush1.bf16.msra.mxu0 0
        %8748 = vmatprep.subr.bf16.mxu0 0
        %8749 = vmatpush1.bf16.msra.mxu0 0
        %8750 = vmatprep.subr.bf16.mxu0 0
        %8751 = vmatpush1.bf16.msra.mxu0 0
        %8752 = vmatprep.subr.bf16.mxu0 0
        %8753 = vmatpush1.bf16.msra.mxu0 0
        %8754 = vmatprep.subr.bf16.mxu0 0
        %8755 = vmatpush1.bf16.msra.mxu0 0
        %8756 = vmatprep.subr.bf16.mxu0 0
        %8757 = vmatpush1.bf16.msra.mxu0 0
        %8758 = vmatprep.subr.bf16.mxu0 0
        %8759 = vmatpush1.bf16.msra.mxu0 0
        %8760 = vmatprep.subr.bf16.mxu0 0
        %8761 = vmatpush1.bf16.msra.mxu0 0
        %8762 = vmatprep.subr.bf16.mxu0 0
        %8763 = vmatpush1.bf16.msra.mxu0 0
        %8764 = vmatprep.subr.bf16.mxu0 0
        %8765 = vmatpush1.bf16.msra.mxu0 0
        %8766 = vmatprep.subr.bf16.mxu0 0
        %8767 = vmatpush1.bf16.msra.mxu0 0
        %8768 = vmatprep.subr.bf16.mxu0 0
        %8769 = vmatpush1.bf16.msra.mxu0 0
        %8770 = vmatprep.mubr.bf16.mxu0 0
        %8771 = vmatmul.mubr.bf16.gmra.mrb[0].mxu0 %v8656
        %v8772 = vpop.f32.mrb[0].mxu0
        %v8773 = vadd.f32 %v8733, %v8772
        %v8774 = vpop.f32.mrb[0].mxu0
        %v8775 = vpop.f32.mrb[0].mxu0
        %v8776 = vpop.f32.mrb[0].mxu0
        %8777 = vdwg.mxu0
        %vm8778 = vcmp.gt.f32.partialorder %v8773, 0.0
        %v8779 = vmul.f32 %v8773, 0.1
        %v8780 = vsel %vm8778, %v8773, %v8779
        %v8781 = vlaneseq
        %v8782 = vshrl.u32 %v8781, 7
        %v8783 = vsub.s32 1, %v8782
        %v8784 = vrot.slane %v8434, %v8783
        %v8785 = vmul.f32 %v8780, %v8784
        %v8786 = vlaneseq
        %v8787 = vshrl.u32 %v8786, 7
        %v8788 = vsub.s32 2, %v8787
        %v8789 = vrot.slane %v8434, %v8788
        %v8790 = vadd.f32 %v8785, %v8789
        %v8793 = vunpack.c.l.s4 1983009808
        %v8794 = vunpack.c.0.s8 %v8793
        %v8795 = vlaneseq
        %v8796 = vshrl.u32 %v8795, 7
        %v8797 = vsub.s32 %v8794, %v8796
        %v8798 = vrot.slane %v8790, %v8797
        %v8799 = vcombine.high %v8798, %v8798
        %v8802 = vsel %vm8205, %v8798, -inf
        %v8803 = vsel %vm8205, %v8799, -inf
        %v8804 = vmax.f32 %v8802, %v8803
        %v8805 = vsel %vm8205, %v8804, -inf
        %v8806 = vrot.slane %v8805, 4
        %v8807 = vmax.f32 %v8805, %v8806
        %v8808 = vrot.slane %v8807, 2
        %v8809 = vmax.f32 %v8807, %v8808
        %v8810 = vrot.slane %v8809, 1
        %v8811 = vmax.f32 %v8809, %v8810
        %v8812 = vadd.f32 %v8811, 0.0
        %v8813 = vpack.c.bf16 %v8812, %v8812
        %v8814 = vld [vmem:[%s3] sm:$0xff]
        %v8815 = vld [vmem:[%s3 + $0x8] sm:$0xff]
        %v8816 = vld [vmem:[%s3 + $0x10] sm:$0xff]
        %v8817 = vld [vmem:[%s3 + $0x18] sm:$0xff]
        %v8818 = vld [vmem:[%s3 + $0x20] sm:$0xff]
        %v8819 = vld [vmem:[%s3 + $0x28] sm:$0xff]
        %v8820 = vld [vmem:[%s3 + $0x30] sm:$0xff]
        %v8821 = vld [vmem:[%s3 + $0x38] sm:$0xff]
        %v8822 = vld [vmem:[%s3 + $0x40] sm:$0xff]
        %v8823 = vld [vmem:[%s3 + $0x48] sm:$0xff]
        %v8824 = vld [vmem:[%s3 + $0x50] sm:$0xff]
        %v8825 = vld [vmem:[%s3 + $0x58] sm:$0xff]
        %v8826 = vld [vmem:[%s3 + $0x60] sm:$0xff]
        %v8827 = vld [vmem:[%s3 + $0x68] sm:$0xff]
        %v8828 = vld [vmem:[%s3 + $0x70] sm:$0xff]
        %v8829 = vld [vmem:[%s3 + $0x78] sm:$0xff]
        %v8830 = vld [vmem:[%s4] ss:$4 sm:$0xf]
        %v8847 = vunpack.c.l.b16 %v8814
        %v8848 = vunpack.c.h.b16 %v8814
        %v8849 = vunpack.c.l.b16 %v8815
        %v8850 = vunpack.c.h.b16 %v8815
        %v8851 = vunpack.c.l.b16 %v8816
        %v8852 = vunpack.c.h.b16 %v8816
        %v8853 = vunpack.c.l.b16 %v8817
        %v8854 = vunpack.c.h.b16 %v8817
        %v8855 = vunpack.c.l.b16 %v8818
        %v8856 = vunpack.c.h.b16 %v8818
        %v8857 = vunpack.c.l.b16 %v8819
        %v8858 = vunpack.c.h.b16 %v8819
        %v8859 = vunpack.c.l.b16 %v8820
        %v8860 = vunpack.c.h.b16 %v8820
        %v8861 = vunpack.c.l.b16 %v8821
        %v8862 = vunpack.c.h.b16 %v8821
        %v8863 = vunpack.c.l.b16 %v8822
        %v8864 = vunpack.c.h.b16 %v8822
        %v8865 = vunpack.c.l.b16 %v8823
        %v8866 = vunpack.c.h.b16 %v8823
        %v8867 = vunpack.c.l.b16 %v8824
        %v8868 = vunpack.c.h.b16 %v8824
        %v8869 = vunpack.c.l.b16 %v8825
        %v8870 = vunpack.c.h.b16 %v8825
        %v8871 = vunpack.c.l.b16 %v8826
        %v8872 = vunpack.c.h.b16 %v8826
        %v8873 = vunpack.c.l.b16 %v8827
        %v8874 = vunpack.c.h.b16 %v8827
        %v8875 = vunpack.c.l.b16 %v8828
        %v8876 = vunpack.c.h.b16 %v8828
        %v8877 = vunpack.c.l.b16 %v8829
        %v8878 = vunpack.c.h.b16 %v8829
        %v8879 = vpack.c.b16 %v8851, %v8847
        %v8880 = vpack.c.b16 %v8852, %v8848
        %v8881 = vpack.c.b16 %v8853, %v8849
        %v8882 = vpack.c.b16 %v8854, %v8850
        %v8883 = vpack.c.b16 %v8859, %v8855
        %v8884 = vpack.c.b16 %v8860, %v8856
        %v8885 = vpack.c.b16 %v8861, %v8857
        %v8886 = vpack.c.b16 %v8862, %v8858
        %v8887 = vpack.c.b16 %v8867, %v8863
        %v8888 = vpack.c.b16 %v8868, %v8864
        %v8889 = vpack.c.b16 %v8869, %v8865
        %v8890 = vpack.c.b16 %v8870, %v8866
        %v8891 = vpack.c.b16 %v8875, %v8871
        %v8892 = vpack.c.b16 %v8876, %v8872
        %v8893 = vpack.c.b16 %v8877, %v8873
        %v8894 = vpack.c.b16 %v8878, %v8874
        %v8912 = vlaneseq
        %v8913 = vshrl.u32 %v8912, 7
        %v8914 = vsub.s32 0, %v8913
        %v8915 = vrot.slane %v8830, %v8914
        %v8916 = vlaneseq
        %v8917 = vshrl.u32 %v8916, 7
        %v8918 = vsub.s32 1, %v8917
        %v8919 = vrot.slane %v8830, %v8918
        %v8920 = vlaneseq
        %v8921 = vshrl.u32 %v8920, 7
        %v8922 = vsub.s32 2, %v8921
        %v8923 = vrot.slane %v8830, %v8922
        %v8924 = vlaneseq
        %v8925 = vshrl.u32 %v8924, 7
        %v8926 = vsub.s32 3, %v8925
        %v8927 = vrot.slane %v8830, %v8926
        %v8933 = vsel %vm3998, %v8813, 0
        %8935 = vmatprep.subr.bf16.mxu0 %v8880
        %8936 = vmatpush1.bf16.msra.mxu0 %v8879
        %8937 = vmatprep.subr.bf16.mxu0 %v8884
        %8938 = vmatpush1.bf16.msra.mxu0 %v8883
        %8939 = vmatprep.subr.bf16.mxu0 %v8888
        %8940 = vmatpush1.bf16.msra.mxu0 %v8887
        %8941 = vmatprep.subr.bf16.mxu0 %v8892
        %8942 = vmatpush1.bf16.msra.mxu0 %v8891
        %8943 = vmatprep.subr.bf16.mxu0 0
        %8944 = vmatpush1.bf16.msra.mxu0 0
        %8945 = vmatprep.subr.bf16.mxu0 0
        %8946 = vmatpush1.bf16.msra.mxu0 0
        %8947 = vmatprep.subr.bf16.mxu0 0
        %8948 = vmatpush1.bf16.msra.mxu0 0
        %8949 = vmatprep.subr.bf16.mxu0 0
        %8950 = vmatpush1.bf16.msra.mxu0 0
        %8951 = vmatprep.subr.bf16.mxu0 0
        %8952 = vmatpush1.bf16.msra.mxu0 0
        %8953 = vmatprep.subr.bf16.mxu0 0
        %8954 = vmatpush1.bf16.msra.mxu0 0
        %8955 = vmatprep.subr.bf16.mxu0 0
        %8956 = vmatpush1.bf16.msra.mxu0 0
        %8957 = vmatprep.subr.bf16.mxu0 0
        %8958 = vmatpush1.bf16.msra.mxu0 0
        %8959 = vmatprep.subr.bf16.mxu0 0
        %8960 = vmatpush1.bf16.msra.mxu0 0
        %8961 = vmatprep.subr.bf16.mxu0 0
        %8962 = vmatpush1.bf16.msra.mxu0 0
        %8963 = vmatprep.subr.bf16.mxu0 0
        %8964 = vmatpush1.bf16.msra.mxu0 0
        %8965 = vmatprep.subr.bf16.mxu0 0
        %8966 = vmatpush1.bf16.msra.mxu0 0
        %8967 = vmatprep.mubr.bf16.mxu0 0
        %8968 = vmatmul.mubr.bf16.gmra.mrb[0].mxu0 %v8933
        %v8969 = vpop.f32.mrb[0].mxu0
        %v8970 = vadd.f32 %v8915, %v8969
        %v8971 = vpop.f32.mrb[0].mxu0
        %v8972 = vadd.f32 %v8919, %v8971
        %v8973 = vpop.f32.mrb[0].mxu0
        %v8974 = vpop.f32.mrb[0].mxu0
        %8975 = vdwg.mxu0
        %8976 = vmatprep.subr.bf16.mxu0 %v8882
        %8977 = vmatpush1.bf16.msra.mxu0 %v8881
        %8978 = vmatprep.subr.bf16.mxu0 %v8886
        %8979 = vmatpush1.bf16.msra.mxu0 %v8885
        %8980 = vmatprep.subr.bf16.mxu0 %v8890
        %8981 = vmatpush1.bf16.msra.mxu0 %v8889
        %8982 = vmatprep.subr.bf16.mxu0 %v8894
        %8983 = vmatpush1.bf16.msra.mxu0 %v8893
        %8984 = vmatprep.subr.bf16.mxu0 0
        %8985 = vmatpush1.bf16.msra.mxu0 0
        %8986 = vmatprep.subr.bf16.mxu0 0
        %8987 = vmatpush1.bf16.msra.mxu0 0
        %8988 = vmatprep.subr.bf16.mxu0 0
        %8989 = vmatpush1.bf16.msra.mxu0 0
        %8990 = vmatprep.subr.bf16.mxu0 0
        %8991 = vmatpush1.bf16.msra.mxu0 0
        %8992 = vmatprep.subr.bf16.mxu0 0
        %8993 = vmatpush1.bf16.msra.mxu0 0
        %8994 = vmatprep.subr.bf16.mxu0 0
        %8995 = vmatpush1.bf16.msra.mxu0 0
        %8996 = vmatprep.subr.bf16.mxu0 0
        %8997 = vmatpush1.bf16.msra.mxu0 0
        %8998 = vmatprep.subr.bf16.mxu0 0
        %8999 = vmatpush1.bf16.msra.mxu0 0
        %9000 = vmatprep.subr.bf16.mxu0 0
        %9001 = vmatpush1.bf16.msra.mxu0 0
        %9002 = vmatprep.subr.bf16.mxu0 0
        %9003 = vmatpush1.bf16.msra.mxu0 0
        %9004 = vmatprep.subr.bf16.mxu0 0
        %9005 = vmatpush1.bf16.msra.mxu0 0
        %9006 = vmatprep.subr.bf16.mxu0 0
        %9007 = vmatpush1.bf16.msra.mxu0 0
        %9008 = vmatprep.mubr.bf16.mxu0 0
        %9009 = vmatmul.mubr.bf16.gmra.mrb[0].mxu0 %v8933
        %v9010 = vpop.f32.mrb[0].mxu0
        %v9011 = vadd.f32 %v8923, %v9010
        %v9012 = vpop.f32.mrb[0].mxu0
        %v9013 = vadd.f32 %v8927, %v9012
        %v9014 = vpop.f32.mrb[0].mxu0
        %v9015 = vpop.f32.mrb[0].mxu0
        %9016 = vdwg.mxu0
        %vm9017 = vcmp.gt.f32.partialorder %v8970, 0.0
        %vm9018 = vcmp.gt.f32.partialorder %v8972, 0.0
        %vm9019 = vcmp.gt.f32.partialorder %v9011, 0.0
        %vm9020 = vcmp.gt.f32.partialorder %v9013, 0.0
        %v9021 = vmul.f32 %v8970, 0.1
        %v9022 = vmul.f32 %v8972, 0.1
        %v9023 = vmul.f32 %v9011, 0.1
        %v9024 = vmul.f32 %v9013, 0.1
        %v9025 = vsel %vm9017, %v8970, %v9021
        %v9026 = vsel %vm9018, %v8972, %v9022
        %v9027 = vsel %vm9019, %v9011, %v9023
        %v9028 = vsel %vm9020, %v9013, %v9024
        %s9029 = scalar_lea.vmem %s4, 1
        %v9030 = vld [vmem:[%s9029] ss:$4 sm:$0xf]
        %v9032 = vlaneseq
        %v9033 = vshrl.u32 %v9032, 7
        %v9034 = vsub.s32 0, %v9033
        %v9035 = vrot.slane %v9030, %v9034
        %v9036 = vlaneseq
        %v9037 = vshrl.u32 %v9036, 7
        %v9038 = vsub.s32 1, %v9037
        %v9039 = vrot.slane %v9030, %v9038
        %v9040 = vlaneseq
        %v9041 = vshrl.u32 %v9040, 7
        %v9042 = vsub.s32 2, %v9041
        %v9043 = vrot.slane %v9030, %v9042
        %v9044 = vlaneseq
        %v9045 = vshrl.u32 %v9044, 7
        %v9046 = vsub.s32 3, %v9045
        %v9047 = vrot.slane %v9030, %v9046
        %v9052 = vmul.f32 %v9025, %v9035
        %v9053 = vmul.f32 %v9026, %v9039
        %v9054 = vmul.f32 %v9027, %v9043
        %v9055 = vmul.f32 %v9028, %v9047
        %s9056 = scalar_lea.vmem %s4, 2
        %v9057 = vld [vmem:[%s9056] ss:$4 sm:$0xf]
        %v9059 = vlaneseq
        %v9060 = vshrl.u32 %v9059, 7
        %v9061 = vsub.s32 0, %v9060
        %v9062 = vrot.slane %v9057, %v9061
        %v9063 = vlaneseq
        %v9064 = vshrl.u32 %v9063, 7
        %v9065 = vsub.s32 1, %v9064
        %v9066 = vrot.slane %v9057, %v9065
        %v9067 = vlaneseq
        %v9068 = vshrl.u32 %v9067, 7
        %v9069 = vsub.s32 2, %v9068
        %v9070 = vrot.slane %v9057, %v9069
        %v9071 = vlaneseq
        %v9072 = vshrl.u32 %v9071, 7
        %v9073 = vsub.s32 3, %v9072
        %v9074 = vrot.slane %v9057, %v9073
        %v9079 = vadd.f32 %v9052, %v9062
        %v9080 = vadd.f32 %v9053, %v9066
        %v9081 = vadd.f32 %v9054, %v9070
        %v9082 = vadd.f32 %v9055, %v9074
        %v9083 = vpack.c.bf16 %v9079, %v9079
        %v9084 = vpack.c.bf16 %v9080, %v9080
        %v9085 = vpack.c.bf16 %v9081, %v9081
        %v9086 = vpack.c.bf16 %v9082, %v9082
        %v9087 = vld [vmem:[%s5] sm:$0xf]
        %v9088 = vld [vmem:[%s5 + $0x4] sm:$0xf]
        %v9089 = vld [vmem:[%s5 + $0x8] sm:$0xf]
        %v9090 = vld [vmem:[%s5 + $0xc] sm:$0xf]
        %v9091 = vld [vmem:[%s5 + $0x10] sm:$0xf]
        %v9092 = vld [vmem:[%s5 + $0x14] sm:$0xf]
        %v9093 = vld [vmem:[%s5 + $0x18] sm:$0xf]
        %v9094 = vld [vmem:[%s5 + $0x1c] sm:$0xf]
        %v9095 = vld [vmem:[%s5 + $0x20] sm:$0xf]
        %v9096 = vld [vmem:[%s5 + $0x24] sm:$0xf]
        %v9097 = vld [vmem:[%s5 + $0x28] sm:$0xf]
        %v9098 = vld [vmem:[%s5 + $0x2c] sm:$0xf]
        %v9099 = vld [vmem:[%s5 + $0x30] sm:$0xf]
        %v9100 = vld [vmem:[%s5 + $0x34] sm:$0xf]
        %v9101 = vld [vmem:[%s5 + $0x38] sm:$0xf]
        %v9102 = vld [vmem:[%s5 + $0x3c] sm:$0xf]
        %v9103 = vld [vmem:[%s5 + $0x40] sm:$0xf]
        %v9104 = vld [vmem:[%s5 + $0x44] sm:$0xf]
        %v9105 = vld [vmem:[%s5 + $0x48] sm:$0xf]
        %v9106 = vld [vmem:[%s5 + $0x4c] sm:$0xf]
        %v9107 = vld [vmem:[%s5 + $0x50] sm:$0xf]
        %v9108 = vld [vmem:[%s5 + $0x54] sm:$0xf]
        %v9109 = vld [vmem:[%s5 + $0x58] sm:$0xf]
        %v9110 = vld [vmem:[%s5 + $0x5c] sm:$0xf]
        %v9111 = vld [vmem:[%s5 + $0x60] sm:$0xf]
        %v9112 = vld [vmem:[%s5 + $0x64] sm:$0xf]
        %v9113 = vld [vmem:[%s5 + $0x68] sm:$0xf]
        %v9114 = vld [vmem:[%s5 + $0x6c] sm:$0xf]
        %v9115 = vld [vmem:[%s5 + $0x70] sm:$0xf]
        %v9116 = vld [vmem:[%s5 + $0x74] sm:$0xf]
        %v9117 = vld [vmem:[%s5 + $0x78] sm:$0xf]
        %v9118 = vld [vmem:[%s5 + $0x7c] sm:$0xf]
        %v9119 = vld [vmem:[%s5 + $0x80] sm:$0xf]
        %v9120 = vld [vmem:[%s5 + $0x84] sm:$0xf]
        %v9121 = vld [vmem:[%s5 + $0x88] sm:$0xf]
        %v9122 = vld [vmem:[%s5 + $0x8c] sm:$0xf]
        %v9123 = vld [vmem:[%s5 + $0x90] sm:$0xf]
        %v9124 = vld [vmem:[%s5 + $0x94] sm:$0xf]
        %v9125 = vld [vmem:[%s5 + $0x98] sm:$0xf]
        %v9126 = vld [vmem:[%s5 + $0x9c] sm:$0xf]
        %v9127 = vld [vmem:[%s5 + $0xa0] sm:$0xf]
        %v9128 = vld [vmem:[%s5 + $0xa4] sm:$0xf]
        %v9129 = vld [vmem:[%s5 + $0xa8] sm:$0xf]
        %v9130 = vld [vmem:[%s5 + $0xac] sm:$0xf]
        %v9131 = vld [vmem:[%s5 + $0xb0] sm:$0xf]
        %v9132 = vld [vmem:[%s5 + $0xb4] sm:$0xf]
        %v9133 = vld [vmem:[%s5 + $0xb8] sm:$0xf]
        %v9134 = vld [vmem:[%s5 + $0xbc] sm:$0xf]
        %v9135 = vld [vmem:[%s5 + $0xc0] sm:$0xf]
        %v9136 = vld [vmem:[%s5 + $0xc4] sm:$0xf]
        %v9137 = vld [vmem:[%s5 + $0xc8] sm:$0xf]
        %v9138 = vld [vmem:[%s5 + $0xcc] sm:$0xf]
        %v9139 = vld [vmem:[%s5 + $0xd0] sm:$0xf]
        %v9140 = vld [vmem:[%s5 + $0xd4] sm:$0xf]
        %v9141 = vld [vmem:[%s5 + $0xd8] sm:$0xf]
        %v9142 = vld [vmem:[%s5 + $0xdc] sm:$0xf]
        %v9143 = vld [vmem:[%s5 + $0xe0] sm:$0xf]
        %v9144 = vld [vmem:[%s5 + $0xe4] sm:$0xf]
        %v9145 = vld [vmem:[%s5 + $0xe8] sm:$0xf]
        %v9146 = vld [vmem:[%s5 + $0xec] sm:$0xf]
        %v9147 = vld [vmem:[%s5 + $0xf0] sm:$0xf]
        %v9148 = vld [vmem:[%s5 + $0xf4] sm:$0xf]
        %v9149 = vld [vmem:[%s5 + $0xf8] sm:$0xf]
        %v9150 = vld [vmem:[%s5 + $0xfc] sm:$0xf]
        %v9151 = vld [vmem:[%s6] sm:$0x1]
        %v9216 = vunpack.c.l.b16 %v9087
        %v9217 = vunpack.c.l.b16 %v9088
        %v9218 = vunpack.c.l.b16 %v9089
        %v9219 = vunpack.c.l.b16 %v9090
        %v9220 = vunpack.c.l.b16 %v9091
        %v9221 = vunpack.c.l.b16 %v9092
        %v9222 = vunpack.c.l.b16 %v9093
        %v9223 = vunpack.c.l.b16 %v9094
        %v9224 = vunpack.c.l.b16 %v9095
        %v9225 = vunpack.c.l.b16 %v9096
        %v9226 = vunpack.c.l.b16 %v9097
        %v9227 = vunpack.c.l.b16 %v9098
        %v9228 = vunpack.c.l.b16 %v9099
        %v9229 = vunpack.c.l.b16 %v9100
        %v9230 = vunpack.c.l.b16 %v9101
        %v9231 = vunpack.c.l.b16 %v9102
        %v9232 = vunpack.c.l.b16 %v9103
        %v9233 = vunpack.c.l.b16 %v9104
        %v9234 = vunpack.c.l.b16 %v9105
        %v9235 = vunpack.c.l.b16 %v9106
        %v9236 = vunpack.c.l.b16 %v9107
        %v9237 = vunpack.c.l.b16 %v9108
        %v9238 = vunpack.c.l.b16 %v9109
        %v9239 = vunpack.c.l.b16 %v9110
        %v9240 = vunpack.c.l.b16 %v9111
        %v9241 = vunpack.c.l.b16 %v9112
        %v9242 = vunpack.c.l.b16 %v9113
        %v9243 = vunpack.c.l.b16 %v9114
        %v9244 = vunpack.c.l.b16 %v9115
        %v9245 = vunpack.c.l.b16 %v9116
        %v9246 = vunpack.c.l.b16 %v9117
        %v9247 = vunpack.c.l.b16 %v9118
        %v9248 = vunpack.c.l.b16 %v9119
        %v9249 = vunpack.c.l.b16 %v9120
        %v9250 = vunpack.c.l.b16 %v9121
        %v9251 = vunpack.c.l.b16 %v9122
        %v9252 = vunpack.c.l.b16 %v9123
        %v9253 = vunpack.c.l.b16 %v9124
        %v9254 = vunpack.c.l.b16 %v9125
        %v9255 = vunpack.c.l.b16 %v9126
        %v9256 = vunpack.c.l.b16 %v9127
        %v9257 = vunpack.c.l.b16 %v9128
        %v9258 = vunpack.c.l.b16 %v9129
        %v9259 = vunpack.c.l.b16 %v9130
        %v9260 = vunpack.c.l.b16 %v9131
        %v9261 = vunpack.c.l.b16 %v9132
        %v9262 = vunpack.c.l.b16 %v9133
        %v9263 = vunpack.c.l.b16 %v9134
        %v9264 = vunpack.c.l.b16 %v9135
        %v9265 = vunpack.c.l.b16 %v9136
        %v9266 = vunpack.c.l.b16 %v9137
        %v9267 = vunpack.c.l.b16 %v9138
        %v9268 = vunpack.c.l.b16 %v9139
        %v9269 = vunpack.c.l.b16 %v9140
        %v9270 = vunpack.c.l.b16 %v9141
        %v9271 = vunpack.c.l.b16 %v9142
        %v9272 = vunpack.c.l.b16 %v9143
        %v9273 = vunpack.c.l.b16 %v9144
        %v9274 = vunpack.c.l.b16 %v9145
        %v9275 = vunpack.c.l.b16 %v9146
        %v9276 = vunpack.c.l.b16 %v9147
        %v9277 = vunpack.c.l.b16 %v9148
        %v9278 = vunpack.c.l.b16 %v9149
        %v9279 = vunpack.c.l.b16 %v9150
        %v9280 = vpack.c.b16 %v9217, %v9216
        %v9281 = vpack.c.b16 %v9219, %v9218
        %v9282 = vpack.c.b16 %v9221, %v9220
        %v9283 = vpack.c.b16 %v9223, %v9222
        %v9284 = vpack.c.b16 %v9225, %v9224
        %v9285 = vpack.c.b16 %v9227, %v9226
        %v9286 = vpack.c.b16 %v9229, %v9228
        %v9287 = vpack.c.b16 %v9231, %v9230
        %v9288 = vpack.c.b16 %v9233, %v9232
        %v9289 = vpack.c.b16 %v9235, %v9234
        %v9290 = vpack.c.b16 %v9237, %v9236
        %v9291 = vpack.c.b16 %v9239, %v9238
        %v9292 = vpack.c.b16 %v9241, %v9240
        %v9293 = vpack.c.b16 %v9243, %v9242
        %v9294 = vpack.c.b16 %v9245, %v9244
        %v9295 = vpack.c.b16 %v9247, %v9246
        %v9296 = vpack.c.b16 %v9249, %v9248
        %v9297 = vpack.c.b16 %v9251, %v9250
        %v9298 = vpack.c.b16 %v9253, %v9252
        %v9299 = vpack.c.b16 %v9255, %v9254
        %v9300 = vpack.c.b16 %v9257, %v9256
        %v9301 = vpack.c.b16 %v9259, %v9258
        %v9302 = vpack.c.b16 %v9261, %v9260
        %v9303 = vpack.c.b16 %v9263, %v9262
        %v9304 = vpack.c.b16 %v9265, %v9264
        %v9305 = vpack.c.b16 %v9267, %v9266
        %v9306 = vpack.c.b16 %v9269, %v9268
        %v9307 = vpack.c.b16 %v9271, %v9270
        %v9308 = vpack.c.b16 %v9273, %v9272
        %v9309 = vpack.c.b16 %v9275, %v9274
        %v9310 = vpack.c.b16 %v9277, %v9276
        %v9311 = vpack.c.b16 %v9279, %v9278
        %9344 = vmatprep.subr.bf16.mxu0 0
        %9345 = vmatpush1.bf16.msra.mxu0 %v9280
        %9346 = vmatprep.subr.bf16.mxu0 0
        %9347 = vmatpush1.bf16.msra.mxu0 %v9281
        %9348 = vmatprep.subr.bf16.mxu0 0
        %9349 = vmatpush1.bf16.msra.mxu0 %v9282
        %9350 = vmatprep.subr.bf16.mxu0 0
        %9351 = vmatpush1.bf16.msra.mxu0 %v9283
        %9352 = vmatprep.subr.bf16.mxu0 0
        %9353 = vmatpush1.bf16.msra.mxu0 %v9284
        %9354 = vmatprep.subr.bf16.mxu0 0
        %9355 = vmatpush1.bf16.msra.mxu0 %v9285
        %9356 = vmatprep.subr.bf16.mxu0 0
        %9357 = vmatpush1.bf16.msra.mxu0 %v9286
        %9358 = vmatprep.subr.bf16.mxu0 0
        %9359 = vmatpush1.bf16.msra.mxu0 %v9287
        %9360 = vmatprep.subr.bf16.mxu0 0
        %9361 = vmatpush1.bf16.msra.mxu0 %v9288
        %9362 = vmatprep.subr.bf16.mxu0 0
        %9363 = vmatpush1.bf16.msra.mxu0 %v9289
        %9364 = vmatprep.subr.bf16.mxu0 0
        %9365 = vmatpush1.bf16.msra.mxu0 %v9290
        %9366 = vmatprep.subr.bf16.mxu0 0
        %9367 = vmatpush1.bf16.msra.mxu0 %v9291
        %9368 = vmatprep.subr.bf16.mxu0 0
        %9369 = vmatpush1.bf16.msra.mxu0 %v9292
        %9370 = vmatprep.subr.bf16.mxu0 0
        %9371 = vmatpush1.bf16.msra.mxu0 %v9293
        %9372 = vmatprep.subr.bf16.mxu0 0
        %9373 = vmatpush1.bf16.msra.mxu0 %v9294
        %9374 = vmatprep.subr.bf16.mxu0 0
        %9375 = vmatpush1.bf16.msra.mxu0 %v9295
        %9376 = vmatprep.mubr.bf16.mxu0 %v9084
        %9377 = vmatmul.mubr.bf16.gmra.mrb[0].mxu0 %v9083
        %v9378 = vpop.f32.mrb[0].mxu0
        %v9379 = vadd.f32 %v9151, %v9378
        %v9380 = vpop.f32.mrb[0].mxu0
        %v9381 = vpop.f32.mrb[0].mxu0
        %v9382 = vpop.f32.mrb[0].mxu0
        %9383 = vdwg.mxu0
        %9384 = vmatprep.subr.bf16.mxu0 0
        %9385 = vmatpush1.bf16.msra.mxu0 %v9296
        %9386 = vmatprep.subr.bf16.mxu0 0
        %9387 = vmatpush1.bf16.msra.mxu0 %v9297
        %9388 = vmatprep.subr.bf16.mxu0 0
        %9389 = vmatpush1.bf16.msra.mxu0 %v9298
        %9390 = vmatprep.subr.bf16.mxu0 0
        %9391 = vmatpush1.bf16.msra.mxu0 %v9299
        %9392 = vmatprep.subr.bf16.mxu0 0
        %9393 = vmatpush1.bf16.msra.mxu0 %v9300
        %9394 = vmatprep.subr.bf16.mxu0 0
        %9395 = vmatpush1.bf16.msra.mxu0 %v9301
        %9396 = vmatprep.subr.bf16.mxu0 0
        %9397 = vmatpush1.bf16.msra.mxu0 %v9302
        %9398 = vmatprep.subr.bf16.mxu0 0
        %9399 = vmatpush1.bf16.msra.mxu0 %v9303
        %9400 = vmatprep.subr.bf16.mxu0 0
        %9401 = vmatpush1.bf16.msra.mxu0 %v9304
        %9402 = vmatprep.subr.bf16.mxu0 0
        %9403 = vmatpush1.bf16.msra.mxu0 %v9305
        %9404 = vmatprep.subr.bf16.mxu0 0
        %9405 = vmatpush1.bf16.msra.mxu0 %v9306
        %9406 = vmatprep.subr.bf16.mxu0 0
        %9407 = vmatpush1.bf16.msra.mxu0 %v9307
        %9408 = vmatprep.subr.bf16.mxu0 0
        %9409 = vmatpush1.bf16.msra.mxu0 %v9308
        %9410 = vmatprep.subr.bf16.mxu0 0
        %9411 = vmatpush1.bf16.msra.mxu0 %v9309
        %9412 = vmatprep.subr.bf16.mxu0 0
        %9413 = vmatpush1.bf16.msra.mxu0 %v9310
        %9414 = vmatprep.subr.bf16.mxu0 0
        %9415 = vmatpush1.bf16.msra.mxu0 %v9311
        %9416 = vmatprep.mubr.bf16.mxu0 %v9086
        %9417 = vmatmul.mubr.bf16.gmra.mrb[0].mxu0 %v9085
        %v9418 = vpop.f32.mrb[0].mxu0
        %v9419 = vadd.f32 %v9379, %v9418
        %v9420 = vpop.f32.mrb[0].mxu0
        %v9421 = vpop.f32.mrb[0].mxu0
        %v9422 = vpop.f32.mrb[0].mxu0
        %9423 = vdwg.mxu0
        %9424 = vst [vmem:[%s270] sm:$0x1] %v9419
        %s9425 = sand.u32 %s181, 1
        %s9426 = scalar_lea.sflag [#allocation11], %s9425
        %s9427 = sand.u32 %s181, 1
        %s9428 = scalar_lea.vmem [#allocation10], %s9427
        // Predicated region
        $region49: #{tpu_custom_call.1} parent=47 // pred_check
          %p9429 = pneg %p191
        $region50: #{tpu_custom_call.1} parent=47 // pred_check_branch
          %9431 = sbr.rel (%p9429) target = $region52
        $region51: #{tpu_custom_call.1} parent=47 // pred_region
          %s9433 = ssub.s32 16, 16
          %9434 = vsyncadd %s9426, %s9433
          %s9435 = smul.addr %s21, 16
          %s9436 = scalar_lea.hbm %s7, %s9435
          %s9438 = sshll.u32 %s9428, 4
          %s9439 = int_to_ptr.vmem [resolvable:$true] %s9438
          %9441 = dma.vmem_to_hbm [thread:$0]  %s9439, 16, %s9436, %s9426
        $region52: #{tpu_custom_call.1} parent=47 // pred_fallthru
          _
      $region48: #{tpu_custom_call.1} parent=5 // pred_fallthru
        _
      %p9442 = scmp.le.s32.totalorder 2, %s16
      // Predicated region
      $region53: #{tpu_custom_call.1} parent=5 // pred_check
        %p9443 = pneg %p9442
      $region54: #{tpu_custom_call.1} parent=5 // pred_check_branch
        %9445 = sbr.rel (%p9443) target = $region56
      $region55: #{tpu_custom_call.1} parent=5 // pred_region
        %s9446 = ssub.s32 %s16, 2
        // Predicated region
        $region57: #{tpu_custom_call.1} parent=55 // pred_check
          %p9447 = pneg %p197
        $region58: #{tpu_custom_call.1} parent=55 // pred_check_branch
          %9449 = sbr.rel (%p9447) target = $region60
        $region59: #{tpu_custom_call.1} parent=55 // pred_region
          %s9450 = sand.u32 %s182, 1
          %s9451 = scalar_lea.sflag [#allocation11], %s9450
          %s9452 = sand.u32 %s182, 1
          %s9453 = scalar_lea.vmem [#allocation10], %s9452
          %9454 = dma.done %s9451, 16
        $region60: #{tpu_custom_call.1} parent=55 // pred_fallthru
          _
      $region56: #{tpu_custom_call.1} parent=5 // pred_fallthru
        _
    $region6: #{tpu_custom_call.1} parent=1 // loop_footer
      %s20 = sadd.s32 1, %s16
    $region7: #{tpu_custom_call.1} parent=1 // loop_footer_branch
      %15 = sbr.rel target = $region3
    $region8: #{tpu_custom_call.1} parent=1 // loop_exit
      _
    %9455 = vsyncpa [#allocation11], 1
    %s9456 = scalar_lea.sflag [#allocation11], 1
    %9457 = vsyncpa %s9456, 1

</llo_original>
